<compile_context>
chip_gen: v5e
topology: v5e:2x2
jax: 0.10.0
libtpu: 0.0.40
codegen_flags: <defaults>
</compile_context>

<pallas_src>
import functools

import jax
import jax.numpy as jnp
from jax.experimental import pallas as pl
from jax.experimental.pallas import tpu as pltpu

LANES = 128   # all channel dims are padded to the 128-lane vreg width


def _padded_width(w):
    """Padded scratch row width: >= w + 2 (left border + SAME right pad) and a multiple
    of 16 so bf16 (16,128)-tiled reshapes of the scratch stay layout-preserving."""
    pad = (-w) % 16
    if pad < 2:
        pad += 16
    return w + pad


# ----------------------------------------------------------------------------
# Fused kernel: conv1+pool -> conv2+pool -> conv3+pool -> GAP -> FC -> ReLU -> FC
# ----------------------------------------------------------------------------
def _fused_cnn_kernel(H, W,
                      p_ref, w1_ref, t1_ref,
                      w2_ref, t2_ref,
                      w3_ref, t3_ref,
                      fw1_ref, fb1_ref, fw2_ref, fb2_ref,
                      o_ref,
                      a2_ref, a3_ref, hp_ref):
    H2, W2 = H // 2, W // 2
    H3, W3 = H2 // 2, W2 // 2
    H4, W4 = H3 // 2, W3 // 2
    Wp2 = a2_ref.shape[1]
    Wp3 = a3_ref.shape[1]
    act_dt = a2_ref.dtype                       # bfloat16 activation scratches

    def pool2x2(v, hh, ww):
        """2x2 max pool. v: (hh*ww, LANES) f32, rows in (y, x) row-major order.
        Returns (hh//2 * ww//2, LANES) f32."""
        h2, w2 = hh // 2, ww // 2
        # H-pool: pair consecutive image rows (layout-preserving leading-dim reshape).
        v4 = v.reshape(h2, 2, ww, LANES)
        vh = jnp.maximum(v4[:, 0], v4[:, 1]).reshape(h2 * ww, LANES)
        # W-pool: even/odd columns via one scratch store + two stride-2 sublane reads.
        hp_ref[0:h2 * ww, :] = vh
        even = hp_ref[pl.ds(0, h2 * w2, 2), :]
        odd = hp_ref[pl.ds(1, h2 * w2, 2), :]
        return jnp.maximum(even, odd)

    def zero_border(a_ref, hh, wk, wp):
        """Zero only the border / junk columns (the interior is fully overwritten each
        grid step, so the old full-scratch zeroing was redundant vst traffic)."""
        a_ref[0:1, :, :] = jnp.zeros((1, wp, LANES), act_dt)                 # top pad row
        a_ref[hh + 1:hh + 3, :, :] = jnp.zeros((2, wp, LANES), act_dt)       # bottom pad rows
        a_ref[:, 0:1, :] = jnp.zeros((hh + 3, 1, LANES), act_dt)             # left pad col
        a_ref[:, wk + 1:wp, :] = jnp.zeros((hh + 3, wp - wk - 1, LANES), act_dt)  # junk cols

    def conv_flat(a_ref, w_ref, t_ref, hh, wp):
        """3x3 SAME conv from the zero-padded bf16 scratch, flat-window formulation:
        each tap is a contiguous window of the flattened scratch, fed to the MXU in
        bf16 with f32 accumulation. Output rows at junk columns are garbage and are
        dropped downstream (pool pairs never straddle the valid/junk boundary)."""
        m = hh * wp
        full = a_ref[...].reshape((hh + 3) * wp, LANES)     # layout-preserving (wp % 16 == 0)
        acc = jnp.zeros((m, LANES), jnp.float32)
        for dx in range(3):
            shifted = full[dx:dx + m + 2 * wp]              # one sublane shift per dx
            for dy in range(3):
                slab = shifted[dy * wp:dy * wp + m]         # tile-aligned, free
                acc = acc + jnp.dot(slab, w_ref[dy * 3 + dx],
                                    preferred_element_type=jnp.float32)
        return jnp.maximum(acc + t_ref[...], 0.0)           # (m, LANES) f32

    # ---- layer 1: conv(1 -> 24) as ONE (H*W, 9) x (9, 24) bf16 MXU matmul ----
    acc1 = jnp.dot(p_ref[0], w1_ref[...], preferred_element_type=jnp.float32)
    act1 = jnp.maximum(acc1 + t1_ref[...], 0.0)             # (H*W, LANES) f32
    p1 = pool2x2(act1, H, W)                                # (H2*W2, LANES) f32

    zero_border(a2_ref, H2, W2, Wp2)
    a2_ref[1:1 + H2, 1:1 + W2, :] = p1.reshape(H2, W2, LANES).astype(act_dt)

    # ---- layer 2: conv(24 -> 48) ----
    act2 = conv_flat(a2_ref, w2_ref, t2_ref, H2, Wp2)       # (H2*Wp2, LANES) f32
    p2 = pool2x2(act2, H2, Wp2)                             # (H3*(Wp2//2), LANES) f32
    p2_3d = p2.reshape(H3, Wp2 // 2, LANES)[:, :W3, :]      # drop junk columns

    zero_border(a3_ref, H3, W3, Wp3)
    a3_ref[1:1 + H3, 1:1 + W3, :] = p2_3d.astype(act_dt)

    # ---- layer 3: conv(48 -> 96) ----
    act3 = conv_flat(a3_ref, w3_ref, t3_ref, H3, Wp3)       # (H3*Wp3, LANES) f32
    p3 = pool2x2(act3, H3, Wp3)                             # (H4*(Wp3//2), LANES) f32

    # ---- head: masked global average pool + Linear(96,48) + ReLU + Linear(48,1) ----
    half3 = Wp3 // 2
    p3_3d = p3.reshape(H4, half3, LANES)
    col = jax.lax.broadcasted_iota(jnp.int32, (H4, half3, 1), 1)
    p3v = jnp.where(col < W4, p3_3d, 0.0)                   # mask junk columns
    feat = (jnp.sum(p3v, axis=(0, 1)) / float(H4 * W4)).reshape(1, LANES)
    feat = feat.astype(jnp.bfloat16)                        # padded channels stay 0
    hid = jnp.dot(feat, fw1_ref[...], preferred_element_type=jnp.float32) + fb1_ref[...]
    hid = jnp.maximum(hid, 0.0).astype(jnp.bfloat16)
    out = jnp.dot(hid, fw2_ref[...], preferred_element_type=jnp.float32) + fb2_ref[...]
    o_ref[...] = out.reshape(1, 1, LANES).astype(o_ref.dtype)   # logit in lane 0


# ----------------------------------------------------------------------------
# Host-side parameter folding / padding and the forward wrapper
# ----------------------------------------------------------------------------
def _pad_to(a, shape):
    out = jnp.zeros(shape, jnp.float32)
    return out.at[tuple(slice(0, s) for s in a.shape)].set(a.astype(jnp.float32))


def prepare_params(params):
    """Fold BN scale into conv weights, pad channel dims to 128 lanes, cast matmul
    weights to bf16 (accumulation stays f32 inside the kernel); shifts stay f32."""
    (w1, s1, t1), (w2, s2, t2), (w3, s3, t3) = params["convs"]
    w1p = _pad_to((w1 * s1).reshape(9, w1.shape[-1]), (9, LANES)).astype(jnp.bfloat16)
    t1p = _pad_to(t1.reshape(1, -1), (1, LANES))

    def pad_conv(w, s, t):
        wp = _pad_to(w * s, (3, 3, LANES, LANES)).reshape(9, LANES, LANES)
        return wp.astype(jnp.bfloat16), _pad_to(t.reshape(1, -1), (1, LANES))

    w2p, t2p = pad_conv(w2, s2, t2)
    w3p, t3p = pad_conv(w3, s3, t3)
    fw1 = _pad_to(params["w1"], (LANES, LANES)).astype(jnp.bfloat16)
    fb1 = _pad_to(params["b1"].reshape(1, -1), (1, LANES))
    fw2 = _pad_to(params["w2"], (LANES, LANES)).astype(jnp.bfloat16)   # logit in lane 0
    fb2 = _pad_to(params["b2"].reshape(1, -1), (1, LANES))
    return (w1p, t1p, w2p, t2p, w3p, t3p, fw1, fb1, fw2, fb2)


def _im2col_layer1(x_bhw):
    """(B, H, W) single-channel image -> (B, H*W, 9) patches, tap order (dy, dx)."""
    B, H, W = x_bhw.shape
    xp = jnp.pad(x_bhw, ((0, 0), (1, 1), (1, 1)))
    taps = [xp[:, dy:dy + H, dx:dx + W] for dy in range(3) for dx in range(3)]
    return jnp.stack(taps, axis=-1).reshape(B, H * W, 9)


def cnn_forward(x_nchw, params):
    """Equivalent of CNNModel.forward({'cnn_input': x}) -> logits (B, 1)."""
    if x_nchw.ndim == 3:                      # mirrors unsqueeze(1)
        x_nchw = x_nchw[:, None, :, :]
    B, C, H, W = x_nchw.shape
    assert C == 1, "CNNModel has in_channels=1"
    assert H % 8 == 0 and W % 32 == 0, "need H % 8 == 0 and W % 32 == 0"
    assert H * W <= 16384, "fused kernel keeps one image's activations in VMEM"
    # TODO(synk): row-strip tiling with halos would lift the H*W cap (review item).

    H2, W2, H3, W3 = H // 2, W // 2, H // 4, W // 4
    Wp2, Wp3 = _padded_width(W2), _padded_width(W3)

    patches = _im2col_layer1(x_nchw[:, 0].astype(jnp.float32)).astype(jnp.bfloat16)
    prepped = prepare_params(params)

    # Rough scoped-VMEM footprint: lane-padded patch block (x2 buffers), weights (x2),
    # bf16 conv scratches, f32 pool scratch, plus headroom for f32 accumulator temps.
    vmem_bytes = (
        2 * H * W * LANES * 2
        + 2 * (2 * 9 + 2) * LANES * LANES * 2
        + (H2 + 3) * Wp2 * LANES * 2 + (H3 + 3) * Wp3 * LANES * 2
        + H2 * W * LANES * 4
        + 3 * H * W * LANES * 4
    )
    vmem_limit = int(min(100 * 1024 * 1024, max(32 * 1024 * 1024, int(vmem_bytes * 1.25))))

    flops = 2 * B * (H * W * 9 * 1 * 24 + H2 * W2 * 9 * 24 * 48
                     + H3 * W3 * 9 * 48 * 96 + 96 * 48 + 48)
    bytes_accessed = int(patches.size) * 2 + B * LANES * 4
    bytes_accessed += sum(int(p.size) * p.dtype.itemsize for p in prepped)
    cost = pl.CostEstimate(flops=int(flops), transcendentals=0,
                           bytes_accessed=int(bytes_accessed))

    bcast2 = lambda b: (0, 0)
    bcast3 = lambda b: (0, 0, 0)
    out = pl.pallas_call(
        functools.partial(_fused_cnn_kernel, H, W),
        out_shape=jax.ShapeDtypeStruct((B, 1, LANES), jnp.float32),
        grid=(B,),
        in_specs=[
            pl.BlockSpec((1, H * W, 9), lambda b: (b, 0, 0)),   # layer-1 patches (bf16)
            pl.BlockSpec((9, LANES), bcast2),                   # w1 (scale folded, bf16)
            pl.BlockSpec((1, LANES), bcast2),                   # shift1 (f32)
            pl.BlockSpec((9, LANES, LANES), bcast3),            # w2 (bf16)
            pl.BlockSpec((1, LANES), bcast2),                   # shift2
            pl.BlockSpec((9, LANES, LANES), bcast3),            # w3 (bf16)
            pl.BlockSpec((1, LANES), bcast2),                   # shift3
            pl.BlockSpec((LANES, LANES), bcast2),               # fc1 w (bf16)
            pl.BlockSpec((1, LANES), bcast2),                   # fc1 b
            pl.BlockSpec((LANES, LANES), bcast2),               # fc2 w (bf16)
            pl.BlockSpec((1, LANES), bcast2),                   # fc2 b
        ],
        out_specs=pl.BlockSpec((1, 1, LANES), lambda b: (b, 0, 0)),
        scratch_shapes=[
            pltpu.VMEM((H2 + 3, Wp2, LANES), jnp.bfloat16),     # padded layer-2 input
            pltpu.VMEM((H3 + 3, Wp3, LANES), jnp.bfloat16),     # padded layer-3 input
            pltpu.VMEM((H2 * W, LANES), jnp.float32),           # W-pool scratch
        ],
        compiler_params=pltpu.CompilerParams(
            dimension_semantics=("parallel",),
            vmem_limit_bytes=vmem_limit),
        cost_estimate=cost,
    )(patches, *prepped)
    return out[:, 0, 0:1]                                       # (B, 1)


# ----------------------------------------------------------------------------
# Deterministic synthetic parameters (shapes from __init__; BN at default init)
# ----------------------------------------------------------------------------
def make_params(key):
    eps = 1e-5
    convs = []
    cin = 1
    for cout in (24, 48, 96):
        key, k1, k2 = jax.random.split(key, 3)
        w = jax.random.normal(k1, (3, 3, cin, cout), jnp.float32) * 0.1   # HWIO
        b = jax.random.normal(k2, (cout,), jnp.float32) * 0.1
        gamma = jnp.ones((cout,), jnp.float32)
        beta = jnp.zeros((cout,), jnp.float32)
        rmean = jnp.zeros((cout,), jnp.float32)
        rvar = jnp.ones((cout,), jnp.float32)
        scale = gamma / jnp.sqrt(rvar + eps)
        shift = beta + (b - rmean) * scale
        convs.append((w, scale, shift))
        cin = cout
    key, k1, k2, k3, k4 = jax.random.split(key, 5)
    w1 = jax.random.normal(k1, (96, 48), jnp.float32) * 0.1
    b1 = jax.random.normal(k2, (48,), jnp.float32) * 0.1
    w2 = jax.random.normal(k3, (48, 1), jnp.float32) * 0.1
    b2 = jax.random.normal(k4, (1,), jnp.float32) * 0.1
    return {"convs": convs, "w1": w1, "b1": b1, "w2": w2, "b2": b2}


# ----------------------------------------------------------------------------
# Pure-JAX reference (sanity check, f32)
# ----------------------------------------------------------------------------
def ref_forward(x_nchw, params):
    x = jnp.transpose(x_nchw, (0, 2, 3, 1))
    for (w, scale, shift) in params["convs"]:
        y = jax.lax.conv_general_dilated(
            x, w, window_strides=(1, 1), padding="SAME",
            dimension_numbers=("NHWC", "HWIO", "NHWC"),
            precision=jax.lax.Precision.HIGHEST)
        y = jnp.maximum(y * scale + shift, 0.0)
        B, H, W, C = y.shape
        x = y.reshape(B, H // 2, 2, W // 2, 2, C).max(axis=(2, 4))
    feats = x.mean(axis=(1, 2))
    h = jnp.maximum(feats @ params["w1"] + params["b1"], 0.0)
    return h @ params["w2"] + params["b2"]


if __name__ == "__main__":
    key = jax.random.PRNGKey(0)
    kx, kp = jax.random.split(key)
    # small image consistent with the module (1 input channel, 3x maxpool(2))
    x = jax.random.normal(kx, (2, 1, 32, 32), jnp.float32)
    params = make_params(kp)

    logits = jax.jit(cnn_forward)(x, params)
    logits = jax.block_until_ready(logits)
    assert logits.shape == (2, 1), logits.shape

    ref = ref_forward(x, params)
    # bf16 MXU operands with f32 accumulation -> slightly looser tolerance than f32.
    if not jnp.allclose(logits, ref, rtol=2e-2, atol=2e-2):
        raise AssertionError(
            f"mismatch: pallas={logits.ravel()} ref={ref.ravel()}")

    print("KERNEL_OK")
</pallas_src>

<mosaic_0001>
module attributes {stable_mosaic.version = 11 : i64} {
  func.func @_fused_cnn_kernel(%arg0: i32, %arg1: memref<1x1024x9xbf16, #tpu.memory_space<vmem>>, %arg2: memref<9x128xbf16, #tpu.memory_space<vmem>>, %arg3: memref<1x128xf32, #tpu.memory_space<vmem>>, %arg4: memref<9x128x128xbf16, #tpu.memory_space<vmem>>, %arg5: memref<1x128xf32, #tpu.memory_space<vmem>>, %arg6: memref<9x128x128xbf16, #tpu.memory_space<vmem>>, %arg7: memref<1x128xf32, #tpu.memory_space<vmem>>, %arg8: memref<128x128xbf16, #tpu.memory_space<vmem>>, %arg9: memref<1x128xf32, #tpu.memory_space<vmem>>, %arg10: memref<128x128xbf16, #tpu.memory_space<vmem>>, %arg11: memref<1x128xf32, #tpu.memory_space<vmem>>, %arg12: memref<1x1x128xf32, #tpu.memory_space<vmem>>, %arg13: memref<19x32x128xbf16, #tpu.memory_space<vmem>>, %arg14: memref<11x16x128xbf16, #tpu.memory_space<vmem>>, %arg15: memref<512x128xf32, #tpu.memory_space<vmem>>) attributes {dimension_semantics = [#tpu.dimension_semantics<parallel>], iteration_bounds = array<i64: 2>, scalar_prefetch = 0 : i64, scratch_operands = 3 : i64, tpu.core_type = #tpu.core_type<tc>, window_params = [{transform_indices = @transform_0, window_bounds = array<i64: 1, 1024, 9>}, {pipeline_mode = #tpu.pipeline_mode<synchronous>, transform_indices = @transform_1, window_bounds = array<i64: 9, 128>}, {pipeline_mode = #tpu.pipeline_mode<synchronous>, transform_indices = @transform_2, window_bounds = array<i64: 1, 128>}, {pipeline_mode = #tpu.pipeline_mode<synchronous>, transform_indices = @transform_3, window_bounds = array<i64: 9, 128, 128>}, {pipeline_mode = #tpu.pipeline_mode<synchronous>, transform_indices = @transform_4, window_bounds = array<i64: 1, 128>}, {pipeline_mode = #tpu.pipeline_mode<synchronous>, transform_indices = @transform_5, window_bounds = array<i64: 9, 128, 128>}, {pipeline_mode = #tpu.pipeline_mode<synchronous>, transform_indices = @transform_6, window_bounds = array<i64: 1, 128>}, {pipeline_mode = #tpu.pipeline_mode<synchronous>, transform_indices = @transform_7, window_bounds = array<i64: 128, 128>}, {pipeline_mode = #tpu.pipeline_mode<synchronous>, transform_indices = @transform_8, window_bounds = array<i64: 1, 128>}, {pipeline_mode = #tpu.pipeline_mode<synchronous>, transform_indices = @transform_9, window_bounds = array<i64: 128, 128>}, {pipeline_mode = #tpu.pipeline_mode<synchronous>, transform_indices = @transform_10, window_bounds = array<i64: 1, 128>}, {transform_indices = @transform_11, window_bounds = array<i64: 1, 1, 128>}]} {
    %c0 = arith.constant 0 : index
    %c0_0 = arith.constant 0 : index
    %c0_1 = arith.constant 0 : index
    %0 = vector.load %arg1[%c0, %c0_0, %c0_1] : memref<1x1024x9xbf16, #tpu.memory_space<vmem>>, vector<1x1024x9xbf16>
    %1 = vector.shape_cast %0 : vector<1x1024x9xbf16> to vector<1024x9xbf16>
    %c0_2 = arith.constant 0 : index
    %c0_3 = arith.constant 0 : index
    %2 = vector.load %arg2[%c0_2, %c0_3] : memref<9x128xbf16, #tpu.memory_space<vmem>>, vector<9x128xbf16>
    %cst = arith.constant dense<0.000000e+00> : vector<1024x128xf32>
    %3 = tpu.matmul %1, %2, %cst {dimension_numbers = #tpu.dot_dimension_numbers<[1], [0], [0], [1], [0, 0, 1, 1], [], []>} : vector<1024x9xbf16>, vector<9x128xbf16>, vector<1024x128xf32> -> vector<1024x128xf32>
    %c0_4 = arith.constant 0 : index
    %c0_5 = arith.constant 0 : index
    %4 = vector.load %arg3[%c0_4, %c0_5] : memref<1x128xf32, #tpu.memory_space<vmem>>, vector<1x128xf32>
    %5 = vector.broadcast %4 : vector<1x128xf32> to vector<1024x128xf32>
    %6 = arith.addf %3, %5 : vector<1024x128xf32>
    %cst_6 = arith.constant 0.000000e+00 : f32
    %7 = vector.broadcast %cst_6 : f32 to vector<1024x128xf32>
    %8 = arith.maximumf %6, %7 : vector<1024x128xf32>
    %9 = vector.shape_cast %8 : vector<1024x128xf32> to vector<16x2x32x128xf32>
    %10 = vector.extract_strided_slice %9 {offsets = [0, 0, 0, 0], sizes = [16, 1, 32, 128], strides = [1, 1, 1, 1]} : vector<16x2x32x128xf32> to vector<16x1x32x128xf32>
    %11 = vector.shape_cast %10 : vector<16x1x32x128xf32> to vector<16x32x128xf32>
    %12 = vector.extract_strided_slice %9 {offsets = [0, 1, 0, 0], sizes = [16, 1, 32, 128], strides = [1, 1, 1, 1]} : vector<16x2x32x128xf32> to vector<16x1x32x128xf32>
    %13 = vector.shape_cast %12 : vector<16x1x32x128xf32> to vector<16x32x128xf32>
    %14 = arith.maximumf %11, %13 : vector<16x32x128xf32>
    %15 = vector.shape_cast %14 : vector<16x32x128xf32> to vector<512x128xf32>
    %c0_7 = arith.constant 0 : index
    %c0_8 = arith.constant 0 : index
    %16 = vector.load %arg15[%c0_7, %c0_8] : memref<512x128xf32, #tpu.memory_space<vmem>>, vector<512x128xf32>
    tpu.vector_store %arg15[%c0_7, %c0_8], %15 {strides = array<i32>} : memref<512x128xf32, #tpu.memory_space<vmem>>, vector<512x128xf32>,
    %c0_9 = arith.constant 0 : index
    %c0_10 = arith.constant 0 : index
    %17 = tpu.strided_load %arg15[%c0_9, %c0_10] {strides = array<i32: 2, 1>} : memref<512x128xf32, #tpu.memory_space<vmem>>, vector<256x128xf32>
    %c1 = arith.constant 1 : index
    %c0_11 = arith.constant 0 : index
    %18 = tpu.strided_load %arg15[%c1, %c0_11] {strides = array<i32: 2, 1>} : memref<512x128xf32, #tpu.memory_space<vmem>>, vector<256x128xf32>
    %19 = arith.maximumf %17, %18 : vector<256x128xf32>
    %cst_12 = arith.constant 0.000000e+00 : bf16
    %20 = vector.broadcast %cst_12 : bf16 to vector<1x32x128xbf16>
    %c0_13 = arith.constant 0 : index
    %c0_14 = arith.constant 0 : index
    %c0_15 = arith.constant 0 : index
    %21 = vector.load %arg13[%c0_13, %c0_14, %c0_15] : memref<19x32x128xbf16, #tpu.memory_space<vmem>>, vector<1x32x128xbf16>
    tpu.vector_store %arg13[%c0_13, %c0_14, %c0_15], %20 {strides = array<i32>} : memref<19x32x128xbf16, #tpu.memory_space<vmem>>, vector<1x32x128xbf16>,
    %cst_16 = arith.constant 0.000000e+00 : bf16
    %22 = vector.broadcast %cst_16 : bf16 to vector<2x32x128xbf16>
    %c17 = arith.constant 17 : index
    %c0_17 = arith.constant 0 : index
    %c0_18 = arith.constant 0 : index
    %23 = vector.load %arg13[%c17, %c0_17, %c0_18] : memref<19x32x128xbf16, #tpu.memory_space<vmem>>, vector<2x32x128xbf16>
    tpu.vector_store %arg13[%c17, %c0_17, %c0_18], %22 {strides = array<i32>} : memref<19x32x128xbf16, #tpu.memory_space<vmem>>, vector<2x32x128xbf16>,
    %cst_19 = arith.constant 0.000000e+00 : bf16
    %24 = vector.broadcast %cst_19 : bf16 to vector<19x1x128xbf16>
    %c0_20 = arith.constant 0 : index
    %c0_21 = arith.constant 0 : index
    %c0_22 = arith.constant 0 : index
    %25 = vector.load %arg13[%c0_20, %c0_21, %c0_22] : memref<19x32x128xbf16, #tpu.memory_space<vmem>>, vector<19x1x128xbf16>
    tpu.vector_store %arg13[%c0_20, %c0_21, %c0_22], %24 {strides = array<i32>} : memref<19x32x128xbf16, #tpu.memory_space<vmem>>, vector<19x1x128xbf16>,
    %cst_23 = arith.constant 0.000000e+00 : bf16
    %26 = vector.broadcast %cst_23 : bf16 to vector<19x15x128xbf16>
    %c0_24 = arith.constant 0 : index
    %c17_25 = arith.constant 17 : index
    %c0_26 = arith.constant 0 : index
    %27 = vector.load %arg13[%c0_24, %c17_25, %c0_26] : memref<19x32x128xbf16, #tpu.memory_space<vmem>>, vector<19x15x128xbf16>
    tpu.vector_store %arg13[%c0_24, %c17_25, %c0_26], %26 {strides = array<i32>} : memref<19x32x128xbf16, #tpu.memory_space<vmem>>, vector<19x15x128xbf16>,
    %28 = vector.shape_cast %19 : vector<256x128xf32> to vector<16x16x128xf32>
    %29 = arith.truncf %28 : vector<16x16x128xf32> to vector<16x16x128xbf16>
    %c1_27 = arith.constant 1 : index
    %c1_28 = arith.constant 1 : index
    %c0_29 = arith.constant 0 : index
    %30 = vector.load %arg13[%c1_27, %c1_28, %c0_29] : memref<19x32x128xbf16, #tpu.memory_space<vmem>>, vector<16x16x128xbf16>
    tpu.vector_store %arg13[%c1_27, %c1_28, %c0_29], %29 {strides = array<i32>} : memref<19x32x128xbf16, #tpu.memory_space<vmem>>, vector<16x16x128xbf16>,
    %c0_30 = arith.constant 0 : index
    %c0_31 = arith.constant 0 : index
    %c0_32 = arith.constant 0 : index
    %31 = vector.load %arg13[%c0_30, %c0_31, %c0_32] : memref<19x32x128xbf16, #tpu.memory_space<vmem>>, vector<19x32x128xbf16>
    %32 = vector.shape_cast %31 : vector<19x32x128xbf16> to vector<608x128xbf16>
    %cst_33 = arith.constant 0.000000e+00 : f32
    %33 = vector.broadcast %cst_33 : f32 to vector<512x128xf32>
    %34 = vector.extract_strided_slice %32 {offsets = [0, 0], sizes = [576, 128], strides = [1, 1]} : vector<608x128xbf16> to vector<576x128xbf16>
    %35 = vector.extract_strided_slice %34 {offsets = [0, 0], sizes = [512, 128], strides = [1, 1]} : vector<576x128xbf16> to vector<512x128xbf16>
    %c0_34 = arith.constant 0 : index
    %c0_35 = arith.constant 0 : index
    %c0_36 = arith.constant 0 : index
    %36 = vector.load %arg4[%c0_34, %c0_35, %c0_36] : memref<9x128x128xbf16, #tpu.memory_space<vmem>>, vector<1x128x128xbf16>
    %37 = vector.shape_cast %36 : vector<1x128x128xbf16> to vector<128x128xbf16>
    %cst_37 = arith.constant dense<0.000000e+00> : vector<512x128xf32>
    %38 = tpu.matmul %35, %37, %cst_37 {dimension_numbers = #tpu.dot_dimension_numbers<[1], [0], [0], [1], [0, 0, 1, 1], [], []>} : vector<512x128xbf16>, vector<128x128xbf16>, vector<512x128xf32> -> vector<512x128xf32>
    %39 = arith.addf %33, %38 : vector<512x128xf32>
    %40 = vector.extract_strided_slice %34 {offsets = [32, 0], sizes = [512, 128], strides = [1, 1]} : vector<576x128xbf16> to vector<512x128xbf16>
    %c3 = arith.constant 3 : index
    %c0_38 = arith.constant 0 : index
    %c0_39 = arith.constant 0 : index
    %41 = vector.load %arg4[%c3, %c0_38, %c0_39] : memref<9x128x128xbf16, #tpu.memory_space<vmem>>, vector<1x128x128xbf16>
    %42 = vector.shape_cast %41 : vector<1x128x128xbf16> to vector<128x128xbf16>
    %cst_40 = arith.constant dense<0.000000e+00> : vector<512x128xf32>
    %43 = tpu.matmul %40, %42, %cst_40 {dimension_numbers = #tpu.dot_dimension_numbers<[1], [0], [0], [1], [0, 0, 1, 1], [], []>} : vector<512x128xbf16>, vector<128x128xbf16>, vector<512x128xf32> -> vector<512x128xf32>
    %44 = arith.addf %39, %43 : vector<512x128xf32>
    %45 = vector.extract_strided_slice %34 {offsets = [64, 0], sizes = [512, 128], strides = [1, 1]} : vector<576x128xbf16> to vector<512x128xbf16>
    %c6 = arith.constant 6 : index
    %c0_41 = arith.constant 0 : index
    %c0_42 = arith.constant 0 : index
    %46 = vector.load %arg4[%c6, %c0_41, %c0_42] : memref<9x128x128xbf16, #tpu.memory_space<vmem>>, vector<1x128x128xbf16>
    %47 = vector.shape_cast %46 : vector<1x128x128xbf16> to vector<128x128xbf16>
    %cst_43 = arith.constant dense<0.000000e+00> : vector<512x128xf32>
    %48 = tpu.matmul %45, %47, %cst_43 {dimension_numbers = #tpu.dot_dimension_numbers<[1], [0], [0], [1], [0, 0, 1, 1], [], []>} : vector<512x128xbf16>, vector<128x128xbf16>, vector<512x128xf32> -> vector<512x128xf32>
    %49 = arith.addf %44, %48 : vector<512x128xf32>
    %50 = vector.extract_strided_slice %32 {offsets = [1, 0], sizes = [576, 128], strides = [1, 1]} : vector<608x128xbf16> to vector<576x128xbf16>
    %51 = vector.extract_strided_slice %50 {offsets = [0, 0], sizes = [512, 128], strides = [1, 1]} : vector<576x128xbf16> to vector<512x128xbf16>
    %c1_44 = arith.constant 1 : index
    %c0_45 = arith.constant 0 : index
    %c0_46 = arith.constant 0 : index
    %52 = vector.load %arg4[%c1_44, %c0_45, %c0_46] : memref<9x128x128xbf16, #tpu.memory_space<vmem>>, vector<1x128x128xbf16>
    %53 = vector.shape_cast %52 : vector<1x128x128xbf16> to vector<128x128xbf16>
    %cst_47 = arith.constant dense<0.000000e+00> : vector<512x128xf32>
    %54 = tpu.matmul %51, %53, %cst_47 {dimension_numbers = #tpu.dot_dimension_numbers<[1], [0], [0], [1], [0, 0, 1, 1], [], []>} : vector<512x128xbf16>, vector<128x128xbf16>, vector<512x128xf32> -> vector<512x128xf32>
    %55 = arith.addf %49, %54 : vector<512x128xf32>
    %56 = vector.extract_strided_slice %50 {offsets = [32, 0], sizes = [512, 128], strides = [1, 1]} : vector<576x128xbf16> to vector<512x128xbf16>
    %c4 = arith.constant 4 : index
    %c0_48 = arith.constant 0 : index
    %c0_49 = arith.constant 0 : index
    %57 = vector.load %arg4[%c4, %c0_48, %c0_49] : memref<9x128x128xbf16, #tpu.memory_space<vmem>>, vector<1x128x128xbf16>
    %58 = vector.shape_cast %57 : vector<1x128x128xbf16> to vector<128x128xbf16>
    %cst_50 = arith.constant dense<0.000000e+00> : vector<512x128xf32>
    %59 = tpu.matmul %56, %58, %cst_50 {dimension_numbers = #tpu.dot_dimension_numbers<[1], [0], [0], [1], [0, 0, 1, 1], [], []>} : vector<512x128xbf16>, vector<128x128xbf16>, vector<512x128xf32> -> vector<512x128xf32>
    %60 = arith.addf %55, %59 : vector<512x128xf32>
    %61 = vector.extract_strided_slice %50 {offsets = [64, 0], sizes = [512, 128], strides = [1, 1]} : vector<576x128xbf16> to vector<512x128xbf16>
    %c7 = arith.constant 7 : index
    %c0_51 = arith.constant 0 : index
    %c0_52 = arith.constant 0 : index
    %62 = vector.load %arg4[%c7, %c0_51, %c0_52] : memref<9x128x128xbf16, #tpu.memory_space<vmem>>, vector<1x128x128xbf16>
    %63 = vector.shape_cast %62 : vector<1x128x128xbf16> to vector<128x128xbf16>
    %cst_53 = arith.constant dense<0.000000e+00> : vector<512x128xf32>
    %64 = tpu.matmul %61, %63, %cst_53 {dimension_numbers = #tpu.dot_dimension_numbers<[1], [0], [0], [1], [0, 0, 1, 1], [], []>} : vector<512x128xbf16>, vector<128x128xbf16>, vector<512x128xf32> -> vector<512x128xf32>
    %65 = arith.addf %60, %64 : vector<512x128xf32>
    %66 = vector.extract_strided_slice %32 {offsets = [2, 0], sizes = [576, 128], strides = [1, 1]} : vector<608x128xbf16> to vector<576x128xbf16>
    %67 = vector.extract_strided_slice %66 {offsets = [0, 0], sizes = [512, 128], strides = [1, 1]} : vector<576x128xbf16> to vector<512x128xbf16>
    %c2 = arith.constant 2 : index
    %c0_54 = arith.constant 0 : index
    %c0_55 = arith.constant 0 : index
    %68 = vector.load %arg4[%c2, %c0_54, %c0_55] : memref<9x128x128xbf16, #tpu.memory_space<vmem>>, vector<1x128x128xbf16>
    %69 = vector.shape_cast %68 : vector<1x128x128xbf16> to vector<128x128xbf16>
    %cst_56 = arith.constant dense<0.000000e+00> : vector<512x128xf32>
    %70 = tpu.matmul %67, %69, %cst_56 {dimension_numbers = #tpu.dot_dimension_numbers<[1], [0], [0], [1], [0, 0, 1, 1], [], []>} : vector<512x128xbf16>, vector<128x128xbf16>, vector<512x128xf32> -> vector<512x128xf32>
    %71 = arith.addf %65, %70 : vector<512x128xf32>
    %72 = vector.extract_strided_slice %66 {offsets = [32, 0], sizes = [512, 128], strides = [1, 1]} : vector<576x128xbf16> to vector<512x128xbf16>
    %c5 = arith.constant 5 : index
    %c0_57 = arith.constant 0 : index
    %c0_58 = arith.constant 0 : index
    %73 = vector.load %arg4[%c5, %c0_57, %c0_58] : memref<9x128x128xbf16, #tpu.memory_space<vmem>>, vector<1x128x128xbf16>
    %74 = vector.shape_cast %73 : vector<1x128x128xbf16> to vector<128x128xbf16>
    %cst_59 = arith.constant dense<0.000000e+00> : vector<512x128xf32>
    %75 = tpu.matmul %72, %74, %cst_59 {dimension_numbers = #tpu.dot_dimension_numbers<[1], [0], [0], [1], [0, 0, 1, 1], [], []>} : vector<512x128xbf16>, vector<128x128xbf16>, vector<512x128xf32> -> vector<512x128xf32>
    %76 = arith.addf %71, %75 : vector<512x128xf32>
    %77 = vector.extract_strided_slice %66 {offsets = [64, 0], sizes = [512, 128], strides = [1, 1]} : vector<576x128xbf16> to vector<512x128xbf16>
    %c8 = arith.constant 8 : index
    %c0_60 = arith.constant 0 : index
    %c0_61 = arith.constant 0 : index
    %78 = vector.load %arg4[%c8, %c0_60, %c0_61] : memref<9x128x128xbf16, #tpu.memory_space<vmem>>, vector<1x128x128xbf16>
    %79 = vector.shape_cast %78 : vector<1x128x128xbf16> to vector<128x128xbf16>
    %cst_62 = arith.constant dense<0.000000e+00> : vector<512x128xf32>
    %80 = tpu.matmul %77, %79, %cst_62 {dimension_numbers = #tpu.dot_dimension_numbers<[1], [0], [0], [1], [0, 0, 1, 1], [], []>} : vector<512x128xbf16>, vector<128x128xbf16>, vector<512x128xf32> -> vector<512x128xf32>
    %81 = arith.addf %76, %80 : vector<512x128xf32>
    %c0_63 = arith.constant 0 : index
    %c0_64 = arith.constant 0 : index
    %82 = vector.load %arg5[%c0_63, %c0_64] : memref<1x128xf32, #tpu.memory_space<vmem>>, vector<1x128xf32>
    %83 = vector.broadcast %82 : vector<1x128xf32> to vector<512x128xf32>
    %84 = arith.addf %81, %83 : vector<512x128xf32>
    %cst_65 = arith.constant 0.000000e+00 : f32
    %85 = vector.broadcast %cst_65 : f32 to vector<512x128xf32>
    %86 = arith.maximumf %84, %85 : vector<512x128xf32>
    %87 = vector.shape_cast %86 : vector<512x128xf32> to vector<8x2x32x128xf32>
    %88 = vector.extract_strided_slice %87 {offsets = [0, 0, 0, 0], sizes = [8, 1, 32, 128], strides = [1, 1, 1, 1]} : vector<8x2x32x128xf32> to vector<8x1x32x128xf32>
    %89 = vector.shape_cast %88 : vector<8x1x32x128xf32> to vector<8x32x128xf32>
    %90 = vector.extract_strided_slice %87 {offsets = [0, 1, 0, 0], sizes = [8, 1, 32, 128], strides = [1, 1, 1, 1]} : vector<8x2x32x128xf32> to vector<8x1x32x128xf32>
    %91 = vector.shape_cast %90 : vector<8x1x32x128xf32> to vector<8x32x128xf32>
    %92 = arith.maximumf %89, %91 : vector<8x32x128xf32>
    %93 = vector.shape_cast %92 : vector<8x32x128xf32> to vector<256x128xf32>
    %c0_66 = arith.constant 0 : index
    %c0_67 = arith.constant 0 : index
    %94 = vector.load %arg15[%c0_66, %c0_67] : memref<512x128xf32, #tpu.memory_space<vmem>>, vector<256x128xf32>
    tpu.vector_store %arg15[%c0_66, %c0_67], %93 {strides = array<i32>} : memref<512x128xf32, #tpu.memory_space<vmem>>, vector<256x128xf32>,
    %c0_68 = arith.constant 0 : index
    %c0_69 = arith.constant 0 : index
    %95 = tpu.strided_load %arg15[%c0_68, %c0_69] {strides = array<i32: 2, 1>} : memref<512x128xf32, #tpu.memory_space<vmem>>, vector<128x128xf32>
    %c1_70 = arith.constant 1 : index
    %c0_71 = arith.constant 0 : index
    %96 = tpu.strided_load %arg15[%c1_70, %c0_71] {strides = array<i32: 2, 1>} : memref<512x128xf32, #tpu.memory_space<vmem>>, vector<128x128xf32>
    %97 = arith.maximumf %95, %96 : vector<128x128xf32>
    %98 = vector.shape_cast %97 : vector<128x128xf32> to vector<8x16x128xf32>
    %99 = vector.extract_strided_slice %98 {offsets = [0, 0, 0], sizes = [8, 8, 128], strides = [1, 1, 1]} : vector<8x16x128xf32> to vector<8x8x128xf32>
    %cst_72 = arith.constant 0.000000e+00 : bf16
    %100 = vector.broadcast %cst_72 : bf16 to vector<1x16x128xbf16>
    %c0_73 = arith.constant 0 : index
    %c0_74 = arith.constant 0 : index
    %c0_75 = arith.constant 0 : index
    %101 = vector.load %arg14[%c0_73, %c0_74, %c0_75] : memref<11x16x128xbf16, #tpu.memory_space<vmem>>, vector<1x16x128xbf16>
    tpu.vector_store %arg14[%c0_73, %c0_74, %c0_75], %100 {strides = array<i32>} : memref<11x16x128xbf16, #tpu.memory_space<vmem>>, vector<1x16x128xbf16>,
    %cst_76 = arith.constant 0.000000e+00 : bf16
    %102 = vector.broadcast %cst_76 : bf16 to vector<2x16x128xbf16>
    %c9 = arith.constant 9 : index
    %c0_77 = arith.constant 0 : index
    %c0_78 = arith.constant 0 : index
    %103 = vector.load %arg14[%c9, %c0_77, %c0_78] : memref<11x16x128xbf16, #tpu.memory_space<vmem>>, vector<2x16x128xbf16>
    tpu.vector_store %arg14[%c9, %c0_77, %c0_78], %102 {strides = array<i32>} : memref<11x16x128xbf16, #tpu.memory_space<vmem>>, vector<2x16x128xbf16>,
    %cst_79 = arith.constant 0.000000e+00 : bf16
    %104 = vector.broadcast %cst_79 : bf16 to vector<11x1x128xbf16>
    %c0_80 = arith.constant 0 : index
    %c0_81 = arith.constant 0 : index
    %c0_82 = arith.constant 0 : index
    %105 = vector.load %arg14[%c0_80, %c0_81, %c0_82] : memref<11x16x128xbf16, #tpu.memory_space<vmem>>, vector<11x1x128xbf16>
    tpu.vector_store %arg14[%c0_80, %c0_81, %c0_82], %104 {strides = array<i32>} : memref<11x16x128xbf16, #tpu.memory_space<vmem>>, vector<11x1x128xbf16>,
    %cst_83 = arith.constant 0.000000e+00 : bf16
    %106 = vector.broadcast %cst_83 : bf16 to vector<11x7x128xbf16>
    %c0_84 = arith.constant 0 : index
    %c9_85 = arith.constant 9 : index
    %c0_86 = arith.constant 0 : index
    %107 = vector.load %arg14[%c0_84, %c9_85, %c0_86] : memref<11x16x128xbf16, #tpu.memory_space<vmem>>, vector<11x7x128xbf16>
    tpu.vector_store %arg14[%c0_84, %c9_85, %c0_86], %106 {strides = array<i32>} : memref<11x16x128xbf16, #tpu.memory_space<vmem>>, vector<11x7x128xbf16>,
    %108 = arith.truncf %99 : vector<8x8x128xf32> to vector<8x8x128xbf16>
    %c1_87 = arith.constant 1 : index
    %c1_88 = arith.constant 1 : index
    %c0_89 = arith.constant 0 : index
    %109 = vector.load %arg14[%c1_87, %c1_88, %c0_89] : memref<11x16x128xbf16, #tpu.memory_space<vmem>>, vector<8x8x128xbf16>
    tpu.vector_store %arg14[%c1_87, %c1_88, %c0_89], %108 {strides = array<i32>} : memref<11x16x128xbf16, #tpu.memory_space<vmem>>, vector<8x8x128xbf16>,
    %c0_90 = arith.constant 0 : index
    %c0_91 = arith.constant 0 : index
    %c0_92 = arith.constant 0 : index
    %110 = vector.load %arg14[%c0_90, %c0_91, %c0_92] : memref<11x16x128xbf16, #tpu.memory_space<vmem>>, vector<11x16x128xbf16>
    %111 = vector.shape_cast %110 : vector<11x16x128xbf16> to vector<176x128xbf16>
    %cst_93 = arith.constant 0.000000e+00 : f32
    %112 = vector.broadcast %cst_93 : f32 to vector<128x128xf32>
    %113 = vector.extract_strided_slice %111 {offsets = [0, 0], sizes = [160, 128], strides = [1, 1]} : vector<176x128xbf16> to vector<160x128xbf16>
    %114 = vector.extract_strided_slice %113 {offsets = [0, 0], sizes = [128, 128], strides = [1, 1]} : vector<160x128xbf16> to vector<128x128xbf16>
    %c0_94 = arith.constant 0 : index
    %c0_95 = arith.constant 0 : index
    %c0_96 = arith.constant 0 : index
    %115 = vector.load %arg6[%c0_94, %c0_95, %c0_96] : memref<9x128x128xbf16, #tpu.memory_space<vmem>>, vector<1x128x128xbf16>
    %116 = vector.shape_cast %115 : vector<1x128x128xbf16> to vector<128x128xbf16>
    %cst_97 = arith.constant dense<0.000000e+00> : vector<128x128xf32>
    %117 = tpu.matmul %114, %116, %cst_97 {dimension_numbers = #tpu.dot_dimension_numbers<[1], [0], [0], [1], [0, 0, 1, 1], [], []>} : vector<128x128xbf16>, vector<128x128xbf16>, vector<128x128xf32> -> vector<128x128xf32>
    %118 = arith.addf %112, %117 : vector<128x128xf32>
    %119 = vector.extract_strided_slice %113 {offsets = [16, 0], sizes = [128, 128], strides = [1, 1]} : vector<160x128xbf16> to vector<128x128xbf16>
    %c3_98 = arith.constant 3 : index
    %c0_99 = arith.constant 0 : index
    %c0_100 = arith.constant 0 : index
    %120 = vector.load %arg6[%c3_98, %c0_99, %c0_100] : memref<9x128x128xbf16, #tpu.memory_space<vmem>>, vector<1x128x128xbf16>
    %121 = vector.shape_cast %120 : vector<1x128x128xbf16> to vector<128x128xbf16>
    %cst_101 = arith.constant dense<0.000000e+00> : vector<128x128xf32>
    %122 = tpu.matmul %119, %121, %cst_101 {dimension_numbers = #tpu.dot_dimension_numbers<[1], [0], [0], [1], [0, 0, 1, 1], [], []>} : vector<128x128xbf16>, vector<128x128xbf16>, vector<128x128xf32> -> vector<128x128xf32>
    %123 = arith.addf %118, %122 : vector<128x128xf32>
    %124 = vector.extract_strided_slice %113 {offsets = [32, 0], sizes = [128, 128], strides = [1, 1]} : vector<160x128xbf16> to vector<128x128xbf16>
    %c6_102 = arith.constant 6 : index
    %c0_103 = arith.constant 0 : index
    %c0_104 = arith.constant 0 : index
    %125 = vector.load %arg6[%c6_102, %c0_103, %c0_104] : memref<9x128x128xbf16, #tpu.memory_space<vmem>>, vector<1x128x128xbf16>
    %126 = vector.shape_cast %125 : vector<1x128x128xbf16> to vector<128x128xbf16>
    %cst_105 = arith.constant dense<0.000000e+00> : vector<128x128xf32>
    %127 = tpu.matmul %124, %126, %cst_105 {dimension_numbers = #tpu.dot_dimension_numbers<[1], [0], [0], [1], [0, 0, 1, 1], [], []>} : vector<128x128xbf16>, vector<128x128xbf16>, vector<128x128xf32> -> vector<128x128xf32>
    %128 = arith.addf %123, %127 : vector<128x128xf32>
    %129 = vector.extract_strided_slice %111 {offsets = [1, 0], sizes = [160, 128], strides = [1, 1]} : vector<176x128xbf16> to vector<160x128xbf16>
    %130 = vector.extract_strided_slice %129 {offsets = [0, 0], sizes = [128, 128], strides = [1, 1]} : vector<160x128xbf16> to vector<128x128xbf16>
    %c1_106 = arith.constant 1 : index
    %c0_107 = arith.constant 0 : index
    %c0_108 = arith.constant 0 : index
    %131 = vector.load %arg6[%c1_106, %c0_107, %c0_108] : memref<9x128x128xbf16, #tpu.memory_space<vmem>>, vector<1x128x128xbf16>
    %132 = vector.shape_cast %131 : vector<1x128x128xbf16> to vector<128x128xbf16>
    %cst_109 = arith.constant dense<0.000000e+00> : vector<128x128xf32>
    %133 = tpu.matmul %130, %132, %cst_109 {dimension_numbers = #tpu.dot_dimension_numbers<[1], [0], [0], [1], [0, 0, 1, 1], [], []>} : vector<128x128xbf16>, vector<128x128xbf16>, vector<128x128xf32> -> vector<128x128xf32>
    %134 = arith.addf %128, %133 : vector<128x128xf32>
    %135 = vector.extract_strided_slice %129 {offsets = [16, 0], sizes = [128, 128], strides = [1, 1]} : vector<160x128xbf16> to vector<128x128xbf16>
    %c4_110 = arith.constant 4 : index
    %c0_111 = arith.constant 0 : index
    %c0_112 = arith.constant 0 : index
    %136 = vector.load %arg6[%c4_110, %c0_111, %c0_112] : memref<9x128x128xbf16, #tpu.memory_space<vmem>>, vector<1x128x128xbf16>
    %137 = vector.shape_cast %136 : vector<1x128x128xbf16> to vector<128x128xbf16>
    %cst_113 = arith.constant dense<0.000000e+00> : vector<128x128xf32>
    %138 = tpu.matmul %135, %137, %cst_113 {dimension_numbers = #tpu.dot_dimension_numbers<[1], [0], [0], [1], [0, 0, 1, 1], [], []>} : vector<128x128xbf16>, vector<128x128xbf16>, vector<128x128xf32> -> vector<128x128xf32>
    %139 = arith.addf %134, %138 : vector<128x128xf32>
    %140 = vector.extract_strided_slice %129 {offsets = [32, 0], sizes = [128, 128], strides = [1, 1]} : vector<160x128xbf16> to vector<128x128xbf16>
    %c7_114 = arith.constant 7 : index
    %c0_115 = arith.constant 0 : index
    %c0_116 = arith.constant 0 : index
    %141 = vector.load %arg6[%c7_114, %c0_115, %c0_116] : memref<9x128x128xbf16, #tpu.memory_space<vmem>>, vector<1x128x128xbf16>
    %142 = vector.shape_cast %141 : vector<1x128x128xbf16> to vector<128x128xbf16>
    %cst_117 = arith.constant dense<0.000000e+00> : vector<128x128xf32>
    %143 = tpu.matmul %140, %142, %cst_117 {dimension_numbers = #tpu.dot_dimension_numbers<[1], [0], [0], [1], [0, 0, 1, 1], [], []>} : vector<128x128xbf16>, vector<128x128xbf16>, vector<128x128xf32> -> vector<128x128xf32>
    %144 = arith.addf %139, %143 : vector<128x128xf32>
    %145 = vector.extract_strided_slice %111 {offsets = [2, 0], sizes = [160, 128], strides = [1, 1]} : vector<176x128xbf16> to vector<160x128xbf16>
    %146 = vector.extract_strided_slice %145 {offsets = [0, 0], sizes = [128, 128], strides = [1, 1]} : vector<160x128xbf16> to vector<128x128xbf16>
    %c2_118 = arith.constant 2 : index
    %c0_119 = arith.constant 0 : index
    %c0_120 = arith.constant 0 : index
    %147 = vector.load %arg6[%c2_118, %c0_119, %c0_120] : memref<9x128x128xbf16, #tpu.memory_space<vmem>>, vector<1x128x128xbf16>
    %148 = vector.shape_cast %147 : vector<1x128x128xbf16> to vector<128x128xbf16>
    %cst_121 = arith.constant dense<0.000000e+00> : vector<128x128xf32>
    %149 = tpu.matmul %146, %148, %cst_121 {dimension_numbers = #tpu.dot_dimension_numbers<[1], [0], [0], [1], [0, 0, 1, 1], [], []>} : vector<128x128xbf16>, vector<128x128xbf16>, vector<128x128xf32> -> vector<128x128xf32>
    %150 = arith.addf %144, %149 : vector<128x128xf32>
    %151 = vector.extract_strided_slice %145 {offsets = [16, 0], sizes = [128, 128], strides = [1, 1]} : vector<160x128xbf16> to vector<128x128xbf16>
    %c5_122 = arith.constant 5 : index
    %c0_123 = arith.constant 0 : index
    %c0_124 = arith.constant 0 : index
    %152 = vector.load %arg6[%c5_122, %c0_123, %c0_124] : memref<9x128x128xbf16, #tpu.memory_space<vmem>>, vector<1x128x128xbf16>
    %153 = vector.shape_cast %152 : vector<1x128x128xbf16> to vector<128x128xbf16>
    %cst_125 = arith.constant dense<0.000000e+00> : vector<128x128xf32>
    %154 = tpu.matmul %151, %153, %cst_125 {dimension_numbers = #tpu.dot_dimension_numbers<[1], [0], [0], [1], [0, 0, 1, 1], [], []>} : vector<128x128xbf16>, vector<128x128xbf16>, vector<128x128xf32> -> vector<128x128xf32>
    %155 = arith.addf %150, %154 : vector<128x128xf32>
    %156 = vector.extract_strided_slice %145 {offsets = [32, 0], sizes = [128, 128], strides = [1, 1]} : vector<160x128xbf16> to vector<128x128xbf16>
    %c8_126 = arith.constant 8 : index
    %c0_127 = arith.constant 0 : index
    %c0_128 = arith.constant 0 : index
    %157 = vector.load %arg6[%c8_126, %c0_127, %c0_128] : memref<9x128x128xbf16, #tpu.memory_space<vmem>>, vector<1x128x128xbf16>
    %158 = vector.shape_cast %157 : vector<1x128x128xbf16> to vector<128x128xbf16>
    %cst_129 = arith.constant dense<0.000000e+00> : vector<128x128xf32>
    %159 = tpu.matmul %156, %158, %cst_129 {dimension_numbers = #tpu.dot_dimension_numbers<[1], [0], [0], [1], [0, 0, 1, 1], [], []>} : vector<128x128xbf16>, vector<128x128xbf16>, vector<128x128xf32> -> vector<128x128xf32>
    %160 = arith.addf %155, %159 : vector<128x128xf32>
    %c0_130 = arith.constant 0 : index
    %c0_131 = arith.constant 0 : index
    %161 = vector.load %arg7[%c0_130, %c0_131] : memref<1x128xf32, #tpu.memory_space<vmem>>, vector<1x128xf32>
    %162 = vector.broadcast %161 : vector<1x128xf32> to vector<128x128xf32>
    %163 = arith.addf %160, %162 : vector<128x128xf32>
    %cst_132 = arith.constant 0.000000e+00 : f32
    %164 = vector.broadcast %cst_132 : f32 to vector<128x128xf32>
    %165 = arith.maximumf %163, %164 : vector<128x128xf32>
    %166 = vector.shape_cast %165 : vector<128x128xf32> to vector<4x2x16x128xf32>
    %167 = vector.extract_strided_slice %166 {offsets = [0, 0, 0, 0], sizes = [4, 1, 16, 128], strides = [1, 1, 1, 1]} : vector<4x2x16x128xf32> to vector<4x1x16x128xf32>
    %168 = vector.shape_cast %167 : vector<4x1x16x128xf32> to vector<4x16x128xf32>
    %169 = vector.extract_strided_slice %166 {offsets = [0, 1, 0, 0], sizes = [4, 1, 16, 128], strides = [1, 1, 1, 1]} : vector<4x2x16x128xf32> to vector<4x1x16x128xf32>
    %170 = vector.shape_cast %169 : vector<4x1x16x128xf32> to vector<4x16x128xf32>
    %171 = arith.maximumf %168, %170 : vector<4x16x128xf32>
    %172 = vector.shape_cast %171 : vector<4x16x128xf32> to vector<64x128xf32>
    %c0_133 = arith.constant 0 : index
    %c0_134 = arith.constant 0 : index
    %173 = vector.load %arg15[%c0_133, %c0_134] : memref<512x128xf32, #tpu.memory_space<vmem>>, vector<64x128xf32>
    tpu.vector_store %arg15[%c0_133, %c0_134], %172 {strides = array<i32>} : memref<512x128xf32, #tpu.memory_space<vmem>>, vector<64x128xf32>,
    %c0_135 = arith.constant 0 : index
    %c0_136 = arith.constant 0 : index
    %174 = tpu.strided_load %arg15[%c0_135, %c0_136] {strides = array<i32: 2, 1>} : memref<512x128xf32, #tpu.memory_space<vmem>>, vector<32x128xf32>
    %c1_137 = arith.constant 1 : index
    %c0_138 = arith.constant 0 : index
    %175 = tpu.strided_load %arg15[%c1_137, %c0_138] {strides = array<i32: 2, 1>} : memref<512x128xf32, #tpu.memory_space<vmem>>, vector<32x128xf32>
    %176 = arith.maximumf %174, %175 : vector<32x128xf32>
    %177 = vector.shape_cast %176 : vector<32x128xf32> to vector<4x8x128xf32>
    %178 = tpu.iota {dimensions = array<i32: 1>} : vector<4x8x1xi32>
    %c4_i32 = arith.constant 4 : i32
    %179 = vector.broadcast %c4_i32 : i32 to vector<4x8x1xi32>
    %180 = arith.cmpi slt, %178, %179 : vector<4x8x1xi32>
    %cst_139 = arith.constant 0.000000e+00 : f32
    %181 = vector.shape_cast %180 : vector<4x8x1xi1> to vector<4x8x1xi1>
    %182 = vector.broadcast %181 : vector<4x8x1xi1> to vector<4x8x128xi1>
    %183 = vector.broadcast %cst_139 : f32 to vector<4x8x128xf32>
    %184 = arith.select %182, %177, %183 : vector<4x8x128xi1>, vector<4x8x128xf32>
    %cst_140 = arith.constant dense<0.000000e+00> : vector<128xf32>
    %185 = vector.multi_reduction <add>, %184, %cst_140 [0, 1] : vector<4x8x128xf32> to vector<128xf32>
    %cst_141 = arith.constant 1.600000e+01 : f32
    %186 = vector.broadcast %cst_141 : f32 to vector<128xf32>
    %187 = arith.divf %185, %186 : vector<128xf32>
    %188 = vector.shape_cast %187 : vector<128xf32> to vector<1x128xf32>
    %189 = arith.truncf %188 : vector<1x128xf32> to vector<1x128xbf16>
    %c0_142 = arith.constant 0 : index
    %c0_143 = arith.constant 0 : index
    %190 = vector.load %arg8[%c0_142, %c0_143] : memref<128x128xbf16, #tpu.memory_space<vmem>>, vector<128x128xbf16>
    %cst_144 = arith.constant dense<0.000000e+00> : vector<1x128xf32>
    %191 = tpu.matmul %189, %190, %cst_144 {dimension_numbers = #tpu.dot_dimension_numbers<[1], [0], [0], [1], [0, 0, 1, 1], [], []>} : vector<1x128xbf16>, vector<128x128xbf16>, vector<1x128xf32> -> vector<1x128xf32>
    %c0_145 = arith.constant 0 : index
    %c0_146 = arith.constant 0 : index
    %192 = vector.load %arg9[%c0_145, %c0_146] : memref<1x128xf32, #tpu.memory_space<vmem>>, vector<1x128xf32>
    %193 = arith.addf %191, %192 : vector<1x128xf32>
    %cst_147 = arith.constant 0.000000e+00 : f32
    %194 = vector.broadcast %cst_147 : f32 to vector<1x128xf32>
    %195 = arith.maximumf %193, %194 : vector<1x128xf32>
    %196 = arith.truncf %195 : vector<1x128xf32> to vector<1x128xbf16>
    %c0_148 = arith.constant 0 : index
    %c0_149 = arith.constant 0 : index
    %197 = vector.load %arg10[%c0_148, %c0_149] : memref<128x128xbf16, #tpu.memory_space<vmem>>, vector<128x128xbf16>
    %cst_150 = arith.constant dense<0.000000e+00> : vector<1x128xf32>
    %198 = tpu.matmul %196, %197, %cst_150 {dimension_numbers = #tpu.dot_dimension_numbers<[1], [0], [0], [1], [0, 0, 1, 1], [], []>} : vector<1x128xbf16>, vector<128x128xbf16>, vector<1x128xf32> -> vector<1x128xf32>
    %c0_151 = arith.constant 0 : index
    %c0_152 = arith.constant 0 : index
    %199 = vector.load %arg11[%c0_151, %c0_152] : memref<1x128xf32, #tpu.memory_space<vmem>>, vector<1x128xf32>
    %200 = arith.addf %198, %199 : vector<1x128xf32>
    %201 = vector.shape_cast %200 : vector<1x128xf32> to vector<1x1x128xf32>
    %c0_153 = arith.constant 0 : index
    %c0_154 = arith.constant 0 : index
    %c0_155 = arith.constant 0 : index
    %202 = vector.load %arg12[%c0_153, %c0_154, %c0_155] : memref<1x1x128xf32, #tpu.memory_space<vmem>>, vector<1x1x128xf32>
    tpu.vector_store %arg12[%c0_153, %c0_154, %c0_155], %201 {strides = array<i32>} : memref<1x1x128xf32, #tpu.memory_space<vmem>>, vector<1x1x128xf32>,
    return
  }
  func.func @transform_0(%arg0: i32) -> (i32, i32, i32) {
    %c0_i32 = arith.constant 0 : i32
    %c0_i32_0 = arith.constant 0 : i32
    %c0_i32_1 = arith.constant 0 : i32
    return %arg0, %c0_i32, %c0_i32_0 : i32, i32, i32
  }
  func.func @transform_1(%arg0: i32) -> (i32, i32) {
    %c0_i32 = arith.constant 0 : i32
    %c0_i32_0 = arith.constant 0 : i32
    %c0_i32_1 = arith.constant 0 : i32
    return %c0_i32, %c0_i32_0 : i32, i32
  }
  func.func @transform_2(%arg0: i32) -> (i32, i32) {
    %c0_i32 = arith.constant 0 : i32
    %c0_i32_0 = arith.constant 0 : i32
    %c0_i32_1 = arith.constant 0 : i32
    return %c0_i32, %c0_i32_0 : i32, i32
  }
  func.func @transform_3(%arg0: i32) -> (i32, i32, i32) {
    %c0_i32 = arith.constant 0 : i32
    %c0_i32_0 = arith.constant 0 : i32
    %c0_i32_1 = arith.constant 0 : i32
    %c0_i32_2 = arith.constant 0 : i32
    return %c0_i32, %c0_i32_0, %c0_i32_1 : i32, i32, i32
  }
  func.func @transform_4(%arg0: i32) -> (i32, i32) {
    %c0_i32 = arith.constant 0 : i32
    %c0_i32_0 = arith.constant 0 : i32
    %c0_i32_1 = arith.constant 0 : i32
    return %c0_i32, %c0_i32_0 : i32, i32
  }
  func.func @transform_5(%arg0: i32) -> (i32, i32, i32) {
    %c0_i32 = arith.constant 0 : i32
    %c0_i32_0 = arith.constant 0 : i32
    %c0_i32_1 = arith.constant 0 : i32
    %c0_i32_2 = arith.constant 0 : i32
    return %c0_i32, %c0_i32_0, %c0_i32_1 : i32, i32, i32
  }
  func.func @transform_6(%arg0: i32) -> (i32, i32) {
    %c0_i32 = arith.constant 0 : i32
    %c0_i32_0 = arith.constant 0 : i32
    %c0_i32_1 = arith.constant 0 : i32
    return %c0_i32, %c0_i32_0 : i32, i32
  }
  func.func @transform_7(%arg0: i32) -> (i32, i32) {
    %c0_i32 = arith.constant 0 : i32
    %c0_i32_0 = arith.constant 0 : i32
    %c0_i32_1 = arith.constant 0 : i32
    return %c0_i32, %c0_i32_0 : i32, i32
  }
  func.func @transform_8(%arg0: i32) -> (i32, i32) {
    %c0_i32 = arith.constant 0 : i32
    %c0_i32_0 = arith.constant 0 : i32
    %c0_i32_1 = arith.constant 0 : i32
    return %c0_i32, %c0_i32_0 : i32, i32
  }
  func.func @transform_9(%arg0: i32) -> (i32, i32) {
    %c0_i32 = arith.constant 0 : i32
    %c0_i32_0 = arith.constant 0 : i32
    %c0_i32_1 = arith.constant 0 : i32
    return %c0_i32, %c0_i32_0 : i32, i32
  }
  func.func @transform_10(%arg0: i32) -> (i32, i32) {
    %c0_i32 = arith.constant 0 : i32
    %c0_i32_0 = arith.constant 0 : i32
    %c0_i32_1 = arith.constant 0 : i32
    return %c0_i32, %c0_i32_0 : i32, i32
  }
  func.func @transform_11(%arg0: i32) -> (i32, i32, i32) {
    %c0_i32 = arith.constant 0 : i32
    %c0_i32_0 = arith.constant 0 : i32
    %c0_i32_1 = arith.constant 0 : i32
    return %arg0, %c0_i32, %c0_i32_0 : i32, i32, i32
  }
}

</mosaic_0001>

<llo_original>
// kernel: cnn_forward.1
$region0: #{cnn_forward.1}
  #allocation0 [shape = 'u32[]', space=smem, size = 0x4, offset = 0x4, fixed_abs, tag = 'smem constant byte address 0x4 - core index']
  #allocation1 [shape = 'u32[72,128]{1,0:T(1,128)}', space=vmem, size = 0x9000, scoped, tag = 'internal scratch']
  #allocation2 [shape = 'bf16[19,32,128]{2,1,0:T(8,128)(2,1)}', space=vmem, size = 0x26000, scoped, tag = 'scratch operand']
  #allocation3 [shape = 'bf16[11,16,128]{2,1,0:T(8,128)(2,1)}', space=vmem, size = 0xb000, scoped, tag = 'scratch operand']
  #allocation4 [shape = 'f32[512,128]{1,0:T(8,128)}', space=vmem, size = 0x40000, scoped, tag = 'scratch operand']
  %s0 = inlined_call_operand.vmem [shape: bf16[2,1024,9], index: 0, kind: input, shape index: {}]
  %s1 = inlined_call_operand.vmem [shape: bf16[9,128], index: 1, kind: input, shape index: {}]
  %s2 = inlined_call_operand.vmem [shape: f32[1,128], index: 2, kind: input, shape index: {}]
  %s3 = inlined_call_operand.vmem [shape: bf16[9,128,128], index: 3, kind: input, shape index: {}]
  %s4 = inlined_call_operand.vmem [shape: f32[1,128], index: 4, kind: input, shape index: {}]
  %s5 = inlined_call_operand.vmem [shape: bf16[9,128,128], index: 5, kind: input, shape index: {}]
  %s6 = inlined_call_operand.vmem [shape: f32[1,128], index: 6, kind: input, shape index: {}]
  %s7 = inlined_call_operand.vmem [shape: bf16[128,128], index: 7, kind: input, shape index: {}]
  %s8 = inlined_call_operand.vmem [shape: f32[1,128], index: 8, kind: input, shape index: {}]
  %s9 = inlined_call_operand.vmem [shape: bf16[128,128], index: 9, kind: input, shape index: {}]
  %s10 = inlined_call_operand.vmem [shape: f32[1,128], index: 10, kind: input, shape index: {}]
  %s11 = inlined_call_operand.vmem [shape: f32[2,1,128], index: 11, kind: output, shape index: {}]
  %s12 = sld [smem:[#allocation0]]
  $region77: #{cnn_forward.1} parent=0
    _
  %s14 = ssub.s32 1, %s12
  %s15 = scalar_select 0, %s14, %s12
  loop: start=0, step=1, limit=4
  $region2: #{cnn_forward.1} parent=0 // loop_pre_header
    _
  $region3: #{cnn_forward.1} parent=0 // loop_header
    %s17 = sphi 0, %s21
    %p18 = scmp.ge.s32.totalorder %s17, 4
    %s27 = sphi 0, %s29
    %s30 = sphi 0, %s27
    %s31 = sphi 0, %s30
    %s47 = sphi 0, %s31
    %s51 = sphi 0, %s51
    %s53 = sphi 0, %s51
    %s54 = sphi 0, %s53
    %s68 = sphi 0, %s54
    %s72 = sphi 0, %s72
    %s74 = sphi 0, %s72
    %s75 = sphi 0, %s74
    %s89 = sphi 0, %s75
    %s93 = sphi 0, %s93
    %s95 = sphi 0, %s93
    %s96 = sphi 0, %s95
    %s110 = sphi 0, %s96
    %s114 = sphi 0, %s114
    %s116 = sphi 0, %s114
    %s117 = sphi 0, %s116
    %s131 = sphi 0, %s117
    %s135 = sphi 0, %s135
    %s137 = sphi 0, %s135
    %s138 = sphi 0, %s137
    %s152 = sphi 0, %s138
    %s156 = sphi 0, %s156
    %s158 = sphi 0, %s156
    %s159 = sphi 0, %s158
    %s173 = sphi 0, %s159
    %s177 = sphi 0, %s177
    %s179 = sphi 0, %s177
    %s180 = sphi 0, %s179
    %s194 = sphi 0, %s180
    %s198 = sphi 0, %s198
    %s200 = sphi 0, %s198
    %s201 = sphi 0, %s200
    %s215 = sphi 0, %s201
    %s219 = sphi 0, %s219
    %s221 = sphi 0, %s219
    %s222 = sphi 0, %s221
    %s236 = sphi 0, %s222
    %s240 = sphi 0, %s240
    %s242 = sphi 0, %s240
    %s243 = sphi 0, %s242
    %s257 = sphi 0, %s243
    %s263 = sphi 0, %s265
    %s266 = sphi 0, %s263
    %s267 = sphi 0, %s266
    %s283 = sphi 0, %s267
  $region4: #{cnn_forward.1} parent=0 // loop_header_branch
    %20 = sbr.rel (%p18) target = $region8
  $region5: #{cnn_forward.1} parent=0 // loop_body
    %s22 = ssub.s32 %s17, 1
    %s23 = ssub.s32 %s17, 2
    %s24 = sadd.s32 %s17, 1
    %s25 = ssub.s32 %s17, %s24
    %p26 = scmp.eq.s32.totalorder %s25, 0
    %s28 = sadd.s32 %s27, 1
    %s29 = scalar_select %p26, %s27, %s28
    %p32 = pneg %p26
    %p33 = scmp.eq.s32.totalorder %s17, 1
    %p34 = por %p32, %p33
    %p35 = scmp.ne.s32.totalorder %s27, %s30
    %p36 = scmp.eq.s32.totalorder %s17, 0
    %p37 = por %p35, %p36
    %p38 = scmp.ne.s32.totalorder %s27, %s30
    %p39 = scmp.eq.s32.totalorder %s22, 1
    %p40 = por %p38, %p39
    %p41 = scmp.ne.s32.totalorder %s30, %s31
    %p42 = scmp.eq.s32.totalorder %s22, 0
    %p43 = por %p41, %p42
    %p44 = scmp.ne.s32.totalorder %s30, %s31
    %p45 = scmp.eq.s32.totalorder %s23, 1
    %p46 = por %p44, %p45
    %p48 = scmp.ne.s32.totalorder %s31, %s47
    %p49 = scmp.eq.s32.totalorder %s23, 0
    %p50 = por %p48, %p49
    %s52 = sadd.s32 %s51, 1
    %p55 = scmp.eq.s32.totalorder %s17, 1
    %p56 = scmp.ne.s32.totalorder %s51, %s53
    %p57 = scmp.eq.s32.totalorder %s17, 0
    %p58 = por %p56, %p57
    %p59 = scmp.ne.s32.totalorder %s51, %s53
    %p60 = scmp.eq.s32.totalorder %s22, 1
    %p61 = por %p59, %p60
    %p62 = scmp.ne.s32.totalorder %s53, %s54
    %p63 = scmp.eq.s32.totalorder %s22, 0
    %p64 = por %p62, %p63
    %p65 = scmp.ne.s32.totalorder %s53, %s54
    %p66 = scmp.eq.s32.totalorder %s23, 1
    %p67 = por %p65, %p66
    %p69 = scmp.ne.s32.totalorder %s54, %s68
    %p70 = scmp.eq.s32.totalorder %s23, 0
    %p71 = por %p69, %p70
    %s73 = sadd.s32 %s72, 1
    %p76 = scmp.eq.s32.totalorder %s17, 1
    %p77 = scmp.ne.s32.totalorder %s72, %s74
    %p78 = scmp.eq.s32.totalorder %s17, 0
    %p79 = por %p77, %p78
    %p80 = scmp.ne.s32.totalorder %s72, %s74
    %p81 = scmp.eq.s32.totalorder %s22, 1
    %p82 = por %p80, %p81
    %p83 = scmp.ne.s32.totalorder %s74, %s75
    %p84 = scmp.eq.s32.totalorder %s22, 0
    %p85 = por %p83, %p84
    %p86 = scmp.ne.s32.totalorder %s74, %s75
    %p87 = scmp.eq.s32.totalorder %s23, 1
    %p88 = por %p86, %p87
    %p90 = scmp.ne.s32.totalorder %s75, %s89
    %p91 = scmp.eq.s32.totalorder %s23, 0
    %p92 = por %p90, %p91
    %s94 = sadd.s32 %s93, 1
    %p97 = scmp.eq.s32.totalorder %s17, 1
    %p98 = scmp.ne.s32.totalorder %s93, %s95
    %p99 = scmp.eq.s32.totalorder %s17, 0
    %p100 = por %p98, %p99
    %p101 = scmp.ne.s32.totalorder %s93, %s95
    %p102 = scmp.eq.s32.totalorder %s22, 1
    %p103 = por %p101, %p102
    %p104 = scmp.ne.s32.totalorder %s95, %s96
    %p105 = scmp.eq.s32.totalorder %s22, 0
    %p106 = por %p104, %p105
    %p107 = scmp.ne.s32.totalorder %s95, %s96
    %p108 = scmp.eq.s32.totalorder %s23, 1
    %p109 = por %p107, %p108
    %p111 = scmp.ne.s32.totalorder %s96, %s110
    %p112 = scmp.eq.s32.totalorder %s23, 0
    %p113 = por %p111, %p112
    %s115 = sadd.s32 %s114, 1
    %p118 = scmp.eq.s32.totalorder %s17, 1
    %p119 = scmp.ne.s32.totalorder %s114, %s116
    %p120 = scmp.eq.s32.totalorder %s17, 0
    %p121 = por %p119, %p120
    %p122 = scmp.ne.s32.totalorder %s114, %s116
    %p123 = scmp.eq.s32.totalorder %s22, 1
    %p124 = por %p122, %p123
    %p125 = scmp.ne.s32.totalorder %s116, %s117
    %p126 = scmp.eq.s32.totalorder %s22, 0
    %p127 = por %p125, %p126
    %p128 = scmp.ne.s32.totalorder %s116, %s117
    %p129 = scmp.eq.s32.totalorder %s23, 1
    %p130 = por %p128, %p129
    %p132 = scmp.ne.s32.totalorder %s117, %s131
    %p133 = scmp.eq.s32.totalorder %s23, 0
    %p134 = por %p132, %p133
    %s136 = sadd.s32 %s135, 1
    %p139 = scmp.eq.s32.totalorder %s17, 1
    %p140 = scmp.ne.s32.totalorder %s135, %s137
    %p141 = scmp.eq.s32.totalorder %s17, 0
    %p142 = por %p140, %p141
    %p143 = scmp.ne.s32.totalorder %s135, %s137
    %p144 = scmp.eq.s32.totalorder %s22, 1
    %p145 = por %p143, %p144
    %p146 = scmp.ne.s32.totalorder %s137, %s138
    %p147 = scmp.eq.s32.totalorder %s22, 0
    %p148 = por %p146, %p147
    %p149 = scmp.ne.s32.totalorder %s137, %s138
    %p150 = scmp.eq.s32.totalorder %s23, 1
    %p151 = por %p149, %p150
    %p153 = scmp.ne.s32.totalorder %s138, %s152
    %p154 = scmp.eq.s32.totalorder %s23, 0
    %p155 = por %p153, %p154
    %s157 = sadd.s32 %s156, 1
    %p160 = scmp.eq.s32.totalorder %s17, 1
    %p161 = scmp.ne.s32.totalorder %s156, %s158
    %p162 = scmp.eq.s32.totalorder %s17, 0
    %p163 = por %p161, %p162
    %p164 = scmp.ne.s32.totalorder %s156, %s158
    %p165 = scmp.eq.s32.totalorder %s22, 1
    %p166 = por %p164, %p165
    %p167 = scmp.ne.s32.totalorder %s158, %s159
    %p168 = scmp.eq.s32.totalorder %s22, 0
    %p169 = por %p167, %p168
    %p170 = scmp.ne.s32.totalorder %s158, %s159
    %p171 = scmp.eq.s32.totalorder %s23, 1
    %p172 = por %p170, %p171
    %p174 = scmp.ne.s32.totalorder %s159, %s173
    %p175 = scmp.eq.s32.totalorder %s23, 0
    %p176 = por %p174, %p175
    %s178 = sadd.s32 %s177, 1
    %p181 = scmp.eq.s32.totalorder %s17, 1
    %p182 = scmp.ne.s32.totalorder %s177, %s179
    %p183 = scmp.eq.s32.totalorder %s17, 0
    %p184 = por %p182, %p183
    %p185 = scmp.ne.s32.totalorder %s177, %s179
    %p186 = scmp.eq.s32.totalorder %s22, 1
    %p187 = por %p185, %p186
    %p188 = scmp.ne.s32.totalorder %s179, %s180
    %p189 = scmp.eq.s32.totalorder %s22, 0
    %p190 = por %p188, %p189
    %p191 = scmp.ne.s32.totalorder %s179, %s180
    %p192 = scmp.eq.s32.totalorder %s23, 1
    %p193 = por %p191, %p192
    %p195 = scmp.ne.s32.totalorder %s180, %s194
    %p196 = scmp.eq.s32.totalorder %s23, 0
    %p197 = por %p195, %p196
    %s199 = sadd.s32 %s198, 1
    %p202 = scmp.eq.s32.totalorder %s17, 1
    %p203 = scmp.ne.s32.totalorder %s198, %s200
    %p204 = scmp.eq.s32.totalorder %s17, 0
    %p205 = por %p203, %p204
    %p206 = scmp.ne.s32.totalorder %s198, %s200
    %p207 = scmp.eq.s32.totalorder %s22, 1
    %p208 = por %p206, %p207
    %p209 = scmp.ne.s32.totalorder %s200, %s201
    %p210 = scmp.eq.s32.totalorder %s22, 0
    %p211 = por %p209, %p210
    %p212 = scmp.ne.s32.totalorder %s200, %s201
    %p213 = scmp.eq.s32.totalorder %s23, 1
    %p214 = por %p212, %p213
    %p216 = scmp.ne.s32.totalorder %s201, %s215
    %p217 = scmp.eq.s32.totalorder %s23, 0
    %p218 = por %p216, %p217
    %s220 = sadd.s32 %s219, 1
    %p223 = scmp.eq.s32.totalorder %s17, 1
    %p224 = scmp.ne.s32.totalorder %s219, %s221
    %p225 = scmp.eq.s32.totalorder %s17, 0
    %p226 = por %p224, %p225
    %p227 = scmp.ne.s32.totalorder %s219, %s221
    %p228 = scmp.eq.s32.totalorder %s22, 1
    %p229 = por %p227, %p228
    %p230 = scmp.ne.s32.totalorder %s221, %s222
    %p231 = scmp.eq.s32.totalorder %s22, 0
    %p232 = por %p230, %p231
    %p233 = scmp.ne.s32.totalorder %s221, %s222
    %p234 = scmp.eq.s32.totalorder %s23, 1
    %p235 = por %p233, %p234
    %p237 = scmp.ne.s32.totalorder %s222, %s236
    %p238 = scmp.eq.s32.totalorder %s23, 0
    %p239 = por %p237, %p238
    %s241 = sadd.s32 %s240, 1
    %p244 = scmp.eq.s32.totalorder %s17, 1
    %p245 = scmp.ne.s32.totalorder %s240, %s242
    %p246 = scmp.eq.s32.totalorder %s17, 0
    %p247 = por %p245, %p246
    %p248 = scmp.ne.s32.totalorder %s240, %s242
    %p249 = scmp.eq.s32.totalorder %s22, 1
    %p250 = por %p248, %p249
    %p251 = scmp.ne.s32.totalorder %s242, %s243
    %p252 = scmp.eq.s32.totalorder %s22, 0
    %p253 = por %p251, %p252
    %p254 = scmp.ne.s32.totalorder %s242, %s243
    %p255 = scmp.eq.s32.totalorder %s23, 1
    %p256 = por %p254, %p255
    %p258 = scmp.ne.s32.totalorder %s243, %s257
    %p259 = scmp.eq.s32.totalorder %s23, 0
    %p260 = por %p258, %p259
    %s261 = ssub.s32 %s17, %s24
    %p262 = scmp.eq.s32.totalorder %s261, 0
    %s264 = sadd.s32 %s263, 1
    %s265 = scalar_select %p262, %s263, %s264
    %p268 = pneg %p262
    %p269 = scmp.eq.s32.totalorder %s17, 1
    %p270 = por %p268, %p269
    %p271 = scmp.ne.s32.totalorder %s263, %s266
    %p272 = scmp.eq.s32.totalorder %s17, 0
    %p273 = por %p271, %p272
    %p274 = scmp.ne.s32.totalorder %s263, %s266
    %p275 = scmp.eq.s32.totalorder %s22, 1
    %p276 = por %p274, %p275
    %p277 = scmp.ne.s32.totalorder %s266, %s267
    %p278 = scmp.eq.s32.totalorder %s22, 0
    %p279 = por %p277, %p278
    %p280 = scmp.ne.s32.totalorder %s266, %s267
    %p281 = scmp.eq.s32.totalorder %s23, 1
    %p282 = por %p280, %p281
    %p284 = scmp.ne.s32.totalorder %s267, %s283
    %p285 = scmp.eq.s32.totalorder %s23, 0
    %p286 = por %p284, %p285
    %p287 = scmp.le.s32.totalorder 1, %s17
    %p288 = scmp.lt.s32.totalorder %s17, 3
    %p289 = pnand %p287, %p288
    %p290 = pneg %p289
    // Predicated region
    $region9: #{cnn_forward.1} parent=5 // pred_check
      _
    $region10: #{cnn_forward.1} parent=5 // pred_check_branch
      %292 = sbr.rel (%p289) target = $region12
    $region11: #{cnn_forward.1} parent=5 // pred_region
      %s293 = ssub.s32 %s17, 1
      // Predicated region
      $region13: #{cnn_forward.1} parent=11 // pred_check
        %p294 = pneg %p64
      $region14: #{cnn_forward.1} parent=11 // pred_check_branch
        %296 = sbr.rel (%p294) target = $region16
      $region15: #{cnn_forward.1} parent=11 // pred_region
        _
      $region16: #{cnn_forward.1} parent=11 // pred_fallthru
        _
      // Predicated region
      $region17: #{cnn_forward.1} parent=11 // pred_check
        %p297 = pneg %p85
      $region18: #{cnn_forward.1} parent=11 // pred_check_branch
        %299 = sbr.rel (%p297) target = $region20
      $region19: #{cnn_forward.1} parent=11 // pred_region
        _
      $region20: #{cnn_forward.1} parent=11 // pred_fallthru
        _
      // Predicated region
      $region21: #{cnn_forward.1} parent=11 // pred_check
        %p300 = pneg %p106
      $region22: #{cnn_forward.1} parent=11 // pred_check_branch
        %302 = sbr.rel (%p300) target = $region24
      $region23: #{cnn_forward.1} parent=11 // pred_region
        _
      $region24: #{cnn_forward.1} parent=11 // pred_fallthru
        _
      // Predicated region
      $region25: #{cnn_forward.1} parent=11 // pred_check
        %p303 = pneg %p127
      $region26: #{cnn_forward.1} parent=11 // pred_check_branch
        %305 = sbr.rel (%p303) target = $region28
      $region27: #{cnn_forward.1} parent=11 // pred_region
        _
      $region28: #{cnn_forward.1} parent=11 // pred_fallthru
        _
      // Predicated region
      $region29: #{cnn_forward.1} parent=11 // pred_check
        %p306 = pneg %p148
      $region30: #{cnn_forward.1} parent=11 // pred_check_branch
        %308 = sbr.rel (%p306) target = $region32
      $region31: #{cnn_forward.1} parent=11 // pred_region
        _
      $region32: #{cnn_forward.1} parent=11 // pred_fallthru
        _
      // Predicated region
      $region33: #{cnn_forward.1} parent=11 // pred_check
        %p309 = pneg %p169
      $region34: #{cnn_forward.1} parent=11 // pred_check_branch
        %311 = sbr.rel (%p309) target = $region36
      $region35: #{cnn_forward.1} parent=11 // pred_region
        _
      $region36: #{cnn_forward.1} parent=11 // pred_fallthru
        _
      // Predicated region
      $region37: #{cnn_forward.1} parent=11 // pred_check
        %p312 = pneg %p190
      $region38: #{cnn_forward.1} parent=11 // pred_check_branch
        %314 = sbr.rel (%p312) target = $region40
      $region39: #{cnn_forward.1} parent=11 // pred_region
        _
      $region40: #{cnn_forward.1} parent=11 // pred_fallthru
        _
      // Predicated region
      $region41: #{cnn_forward.1} parent=11 // pred_check
        %p315 = pneg %p211
      $region42: #{cnn_forward.1} parent=11 // pred_check_branch
        %317 = sbr.rel (%p315) target = $region44
      $region43: #{cnn_forward.1} parent=11 // pred_region
        _
      $region44: #{cnn_forward.1} parent=11 // pred_fallthru
        _
      // Predicated region
      $region45: #{cnn_forward.1} parent=11 // pred_check
        %p318 = pneg %p232
      $region46: #{cnn_forward.1} parent=11 // pred_check_branch
        %320 = sbr.rel (%p318) target = $region48
      $region47: #{cnn_forward.1} parent=11 // pred_region
        _
      $region48: #{cnn_forward.1} parent=11 // pred_fallthru
        _
      // Predicated region
      $region49: #{cnn_forward.1} parent=11 // pred_check
        %p321 = pneg %p253
      $region50: #{cnn_forward.1} parent=11 // pred_check_branch
        %323 = sbr.rel (%p321) target = $region52
      $region51: #{cnn_forward.1} parent=11 // pred_region
        _
      $region52: #{cnn_forward.1} parent=11 // pred_fallthru
        _
    $region12: #{cnn_forward.1} parent=5 // pred_fallthru
      _
    %p324 = scmp.lt.s32.totalorder %s17, 2
    // Predicated region
    $region53: #{cnn_forward.1} parent=5 // pred_check
      %p325 = pneg %p324
    $region54: #{cnn_forward.1} parent=5 // pred_check_branch
      %327 = sbr.rel (%p325) target = $region56
    $region55: #{cnn_forward.1} parent=5 // pred_region
      // Predicated region
      $region57: #{cnn_forward.1} parent=55 // pred_check
        %p328 = pneg %p37
      $region58: #{cnn_forward.1} parent=55 // pred_check_branch
        %330 = sbr.rel (%p328) target = $region60
      $region59: #{cnn_forward.1} parent=55 // pred_region
        %p331 = scmp.lt.s32.totalorder %s17, 1
        %s332 = scalar_select %p331, %s17, 1
        %s333 = smul.addr %s332, 128
        %s334 = smul.addr %s333, 4
        %s335 = scalar_lea.vmem %s0, %s334
      $region60: #{cnn_forward.1} parent=55 // pred_fallthru
        _
    $region56: #{cnn_forward.1} parent=5 // pred_fallthru
      _
    %p336 = scmp.le.s32.totalorder 1, %s17
    %p337 = scmp.lt.s32.totalorder %s17, 3
    %p338 = pnand %p336, %p337
    %p339 = pneg %p338
    // Predicated region
    $region61: #{cnn_forward.1} parent=5 // pred_check
      _
    $region62: #{cnn_forward.1} parent=5 // pred_check_branch
      %341 = sbr.rel (%p338) target = $region64
    $region63: #{cnn_forward.1} parent=5 // pred_region
      %s342 = ssub.s32 %s17, 1
      %p343 = scmp.lt.s32.totalorder %s22, 1
      %s344 = scalar_select %p343, %s22, 1
      %s345 = smul.addr %s344, 128
      %s346 = smul.addr %s345, 4
      %s347 = scalar_lea.vmem %s0, %s346
      %p348 = pneg %p43
      %p349 = pneg %p40
      %p350 = pneg %p64
      %p351 = pneg %p61
      %p352 = pneg %p85
      %p353 = pneg %p82
      %p354 = pneg %p106
      %p355 = pneg %p103
      %p356 = pneg %p127
      %p357 = pneg %p124
      %p358 = pneg %p148
      %p359 = pneg %p145
      %p360 = pneg %p169
      %p361 = pneg %p166
      %p362 = pneg %p190
      %p363 = pneg %p187
      %p364 = pneg %p211
      %p365 = pneg %p208
      %p366 = pneg %p232
      %p367 = pneg %p229
      %p368 = pneg %p253
      %p369 = pneg %p250
      %p370 = pneg %p279
      %p371 = pneg %p276
      %p372 = scmp.lt.s32.totalorder %s22, 1
      %s373 = scalar_select %p372, %s22, 1
      %s374 = scalar_lea.vmem %s11, %s373
      %p375 = scmp.lt.s32.totalorder %s22, 1
      %s376 = scalar_select %p375, %s22, 1
      %s377 = smul.addr %s376, 128
      %s378 = smul.addr %s377, 4
      %s379 = scalar_lea.vmem %s0, %s378
      %p380 = scmp.lt.s32.totalorder %s22, 1
      %s381 = scalar_select %p380, %s22, 1
      %s382 = scalar_lea.vmem %s11, %s381
      %v384 = vld [vmem:[%s379] sm:$0xf]
      %v385 = vld [vmem:[%s379 + $0x4] sm:$0xf]
      %v386 = vld [vmem:[%s379 + $0x8] sm:$0xf]
      %v387 = vld [vmem:[%s379 + $0xc] sm:$0xf]
      %v388 = vld [vmem:[%s379 + $0x10] sm:$0xf]
      %v389 = vld [vmem:[%s379 + $0x14] sm:$0xf]
      %v390 = vld [vmem:[%s379 + $0x18] sm:$0xf]
      %v391 = vld [vmem:[%s379 + $0x1c] sm:$0xf]
      %v392 = vld [vmem:[%s379 + $0x20] sm:$0xf]
      %v393 = vld [vmem:[%s379 + $0x24] sm:$0xf]
      %v394 = vld [vmem:[%s379 + $0x28] sm:$0xf]
      %v395 = vld [vmem:[%s379 + $0x2c] sm:$0xf]
      %v396 = vld [vmem:[%s379 + $0x30] sm:$0xf]
      %v397 = vld [vmem:[%s379 + $0x34] sm:$0xf]
      %v398 = vld [vmem:[%s379 + $0x38] sm:$0xf]
      %v399 = vld [vmem:[%s379 + $0x3c] sm:$0xf]
      %v400 = vld [vmem:[%s379 + $0x40] sm:$0xf]
      %v401 = vld [vmem:[%s379 + $0x44] sm:$0xf]
      %v402 = vld [vmem:[%s379 + $0x48] sm:$0xf]
      %v403 = vld [vmem:[%s379 + $0x4c] sm:$0xf]
      %v404 = vld [vmem:[%s379 + $0x50] sm:$0xf]
      %v405 = vld [vmem:[%s379 + $0x54] sm:$0xf]
      %v406 = vld [vmem:[%s379 + $0x58] sm:$0xf]
      %v407 = vld [vmem:[%s379 + $0x5c] sm:$0xf]
      %v408 = vld [vmem:[%s379 + $0x60] sm:$0xf]
      %v409 = vld [vmem:[%s379 + $0x64] sm:$0xf]
      %v410 = vld [vmem:[%s379 + $0x68] sm:$0xf]
      %v411 = vld [vmem:[%s379 + $0x6c] sm:$0xf]
      %v412 = vld [vmem:[%s379 + $0x70] sm:$0xf]
      %v413 = vld [vmem:[%s379 + $0x74] sm:$0xf]
      %v414 = vld [vmem:[%s379 + $0x78] sm:$0xf]
      %v415 = vld [vmem:[%s379 + $0x7c] sm:$0xf]
      %v416 = vld [vmem:[%s379 + $0x80] sm:$0xf]
      %v417 = vld [vmem:[%s379 + $0x84] sm:$0xf]
      %v418 = vld [vmem:[%s379 + $0x88] sm:$0xf]
      %v419 = vld [vmem:[%s379 + $0x8c] sm:$0xf]
      %v420 = vld [vmem:[%s379 + $0x90] sm:$0xf]
      %v421 = vld [vmem:[%s379 + $0x94] sm:$0xf]
      %v422 = vld [vmem:[%s379 + $0x98] sm:$0xf]
      %v423 = vld [vmem:[%s379 + $0x9c] sm:$0xf]
      %v424 = vld [vmem:[%s379 + $0xa0] sm:$0xf]
      %v425 = vld [vmem:[%s379 + $0xa4] sm:$0xf]
      %v426 = vld [vmem:[%s379 + $0xa8] sm:$0xf]
      %v427 = vld [vmem:[%s379 + $0xac] sm:$0xf]
      %v428 = vld [vmem:[%s379 + $0xb0] sm:$0xf]
      %v429 = vld [vmem:[%s379 + $0xb4] sm:$0xf]
      %v430 = vld [vmem:[%s379 + $0xb8] sm:$0xf]
      %v431 = vld [vmem:[%s379 + $0xbc] sm:$0xf]
      %v432 = vld [vmem:[%s379 + $0xc0] sm:$0xf]
      %v433 = vld [vmem:[%s379 + $0xc4] sm:$0xf]
      %v434 = vld [vmem:[%s379 + $0xc8] sm:$0xf]
      %v435 = vld [vmem:[%s379 + $0xcc] sm:$0xf]
      %v436 = vld [vmem:[%s379 + $0xd0] sm:$0xf]
      %v437 = vld [vmem:[%s379 + $0xd4] sm:$0xf]
      %v438 = vld [vmem:[%s379 + $0xd8] sm:$0xf]
      %v439 = vld [vmem:[%s379 + $0xdc] sm:$0xf]
      %v440 = vld [vmem:[%s379 + $0xe0] sm:$0xf]
      %v441 = vld [vmem:[%s379 + $0xe4] sm:$0xf]
      %v442 = vld [vmem:[%s379 + $0xe8] sm:$0xf]
      %v443 = vld [vmem:[%s379 + $0xec] sm:$0xf]
      %v444 = vld [vmem:[%s379 + $0xf0] sm:$0xf]
      %v445 = vld [vmem:[%s379 + $0xf4] sm:$0xf]
      %v446 = vld [vmem:[%s379 + $0xf8] sm:$0xf]
      %v447 = vld [vmem:[%s379 + $0xfc] sm:$0xf]
      %v448 = vld [vmem:[%s379 + $0x100] sm:$0xf]
      %v449 = vld [vmem:[%s379 + $0x104] sm:$0xf]
      %v450 = vld [vmem:[%s379 + $0x108] sm:$0xf]
      %v451 = vld [vmem:[%s379 + $0x10c] sm:$0xf]
      %v452 = vld [vmem:[%s379 + $0x110] sm:$0xf]
      %v453 = vld [vmem:[%s379 + $0x114] sm:$0xf]
      %v454 = vld [vmem:[%s379 + $0x118] sm:$0xf]
      %v455 = vld [vmem:[%s379 + $0x11c] sm:$0xf]
      %v456 = vld [vmem:[%s379 + $0x120] sm:$0xf]
      %v457 = vld [vmem:[%s379 + $0x124] sm:$0xf]
      %v458 = vld [vmem:[%s379 + $0x128] sm:$0xf]
      %v459 = vld [vmem:[%s379 + $0x12c] sm:$0xf]
      %v460 = vld [vmem:[%s379 + $0x130] sm:$0xf]
      %v461 = vld [vmem:[%s379 + $0x134] sm:$0xf]
      %v462 = vld [vmem:[%s379 + $0x138] sm:$0xf]
      %v463 = vld [vmem:[%s379 + $0x13c] sm:$0xf]
      %v464 = vld [vmem:[%s379 + $0x140] sm:$0xf]
      %v465 = vld [vmem:[%s379 + $0x144] sm:$0xf]
      %v466 = vld [vmem:[%s379 + $0x148] sm:$0xf]
      %v467 = vld [vmem:[%s379 + $0x14c] sm:$0xf]
      %v468 = vld [vmem:[%s379 + $0x150] sm:$0xf]
      %v469 = vld [vmem:[%s379 + $0x154] sm:$0xf]
      %v470 = vld [vmem:[%s379 + $0x158] sm:$0xf]
      %v471 = vld [vmem:[%s379 + $0x15c] sm:$0xf]
      %v472 = vld [vmem:[%s379 + $0x160] sm:$0xf]
      %v473 = vld [vmem:[%s379 + $0x164] sm:$0xf]
      %v474 = vld [vmem:[%s379 + $0x168] sm:$0xf]
      %v475 = vld [vmem:[%s379 + $0x16c] sm:$0xf]
      %v476 = vld [vmem:[%s379 + $0x170] sm:$0xf]
      %v477 = vld [vmem:[%s379 + $0x174] sm:$0xf]
      %v478 = vld [vmem:[%s379 + $0x178] sm:$0xf]
      %v479 = vld [vmem:[%s379 + $0x17c] sm:$0xf]
      %v480 = vld [vmem:[%s379 + $0x180] sm:$0xf]
      %v481 = vld [vmem:[%s379 + $0x184] sm:$0xf]
      %v482 = vld [vmem:[%s379 + $0x188] sm:$0xf]
      %v483 = vld [vmem:[%s379 + $0x18c] sm:$0xf]
      %v484 = vld [vmem:[%s379 + $0x190] sm:$0xf]
      %v485 = vld [vmem:[%s379 + $0x194] sm:$0xf]
      %v486 = vld [vmem:[%s379 + $0x198] sm:$0xf]
      %v487 = vld [vmem:[%s379 + $0x19c] sm:$0xf]
      %v488 = vld [vmem:[%s379 + $0x1a0] sm:$0xf]
      %v489 = vld [vmem:[%s379 + $0x1a4] sm:$0xf]
      %v490 = vld [vmem:[%s379 + $0x1a8] sm:$0xf]
      %v491 = vld [vmem:[%s379 + $0x1ac] sm:$0xf]
      %v492 = vld [vmem:[%s379 + $0x1b0] sm:$0xf]
      %v493 = vld [vmem:[%s379 + $0x1b4] sm:$0xf]
      %v494 = vld [vmem:[%s379 + $0x1b8] sm:$0xf]
      %v495 = vld [vmem:[%s379 + $0x1bc] sm:$0xf]
      %v496 = vld [vmem:[%s379 + $0x1c0] sm:$0xf]
      %v497 = vld [vmem:[%s379 + $0x1c4] sm:$0xf]
      %v498 = vld [vmem:[%s379 + $0x1c8] sm:$0xf]
      %v499 = vld [vmem:[%s379 + $0x1cc] sm:$0xf]
      %v500 = vld [vmem:[%s379 + $0x1d0] sm:$0xf]
      %v501 = vld [vmem:[%s379 + $0x1d4] sm:$0xf]
      %v502 = vld [vmem:[%s379 + $0x1d8] sm:$0xf]
      %v503 = vld [vmem:[%s379 + $0x1dc] sm:$0xf]
      %v504 = vld [vmem:[%s379 + $0x1e0] sm:$0xf]
      %v505 = vld [vmem:[%s379 + $0x1e4] sm:$0xf]
      %v506 = vld [vmem:[%s379 + $0x1e8] sm:$0xf]
      %v507 = vld [vmem:[%s379 + $0x1ec] sm:$0xf]
      %v508 = vld [vmem:[%s379 + $0x1f0] sm:$0xf]
      %v509 = vld [vmem:[%s379 + $0x1f4] sm:$0xf]
      %v510 = vld [vmem:[%s379 + $0x1f8] sm:$0xf]
      %v511 = vld [vmem:[%s379 + $0x1fc] sm:$0xf]
      %v512 = vld [vmem:[%s1] sm:$0xf]
      %v513 = vld [vmem:[%s1 + $0x4] sm:$0x1]
      %v514 = vld [vmem:[%s2] sm:$0x1]
      %v516 = vperm.slane %v514, 0
      %v646 = vunpack.c.l.b16 %v384
      %v647 = vunpack.c.l.b16 %v385
      %v648 = vunpack.c.l.b16 %v386
      %v649 = vunpack.c.l.b16 %v387
      %v650 = vunpack.c.l.b16 %v388
      %v651 = vunpack.c.l.b16 %v389
      %v652 = vunpack.c.l.b16 %v390
      %v653 = vunpack.c.l.b16 %v391
      %v654 = vunpack.c.l.b16 %v392
      %v655 = vunpack.c.l.b16 %v393
      %v656 = vunpack.c.l.b16 %v394
      %v657 = vunpack.c.l.b16 %v395
      %v658 = vunpack.c.l.b16 %v396
      %v659 = vunpack.c.l.b16 %v397
      %v660 = vunpack.c.l.b16 %v398
      %v661 = vunpack.c.l.b16 %v399
      %v662 = vunpack.c.l.b16 %v400
      %v663 = vunpack.c.l.b16 %v401
      %v664 = vunpack.c.l.b16 %v402
      %v665 = vunpack.c.l.b16 %v403
      %v666 = vunpack.c.l.b16 %v404
      %v667 = vunpack.c.l.b16 %v405
      %v668 = vunpack.c.l.b16 %v406
      %v669 = vunpack.c.l.b16 %v407
      %v670 = vunpack.c.l.b16 %v408
      %v671 = vunpack.c.l.b16 %v409
      %v672 = vunpack.c.l.b16 %v410
      %v673 = vunpack.c.l.b16 %v411
      %v674 = vunpack.c.l.b16 %v412
      %v675 = vunpack.c.l.b16 %v413
      %v676 = vunpack.c.l.b16 %v414
      %v677 = vunpack.c.l.b16 %v415
      %v678 = vunpack.c.l.b16 %v416
      %v679 = vunpack.c.l.b16 %v417
      %v680 = vunpack.c.l.b16 %v418
      %v681 = vunpack.c.l.b16 %v419
      %v682 = vunpack.c.l.b16 %v420
      %v683 = vunpack.c.l.b16 %v421
      %v684 = vunpack.c.l.b16 %v422
      %v685 = vunpack.c.l.b16 %v423
      %v686 = vunpack.c.l.b16 %v424
      %v687 = vunpack.c.l.b16 %v425
      %v688 = vunpack.c.l.b16 %v426
      %v689 = vunpack.c.l.b16 %v427
      %v690 = vunpack.c.l.b16 %v428
      %v691 = vunpack.c.l.b16 %v429
      %v692 = vunpack.c.l.b16 %v430
      %v693 = vunpack.c.l.b16 %v431
      %v694 = vunpack.c.l.b16 %v432
      %v695 = vunpack.c.l.b16 %v433
      %v696 = vunpack.c.l.b16 %v434
      %v697 = vunpack.c.l.b16 %v435
      %v698 = vunpack.c.l.b16 %v436
      %v699 = vunpack.c.l.b16 %v437
      %v700 = vunpack.c.l.b16 %v438
      %v701 = vunpack.c.l.b16 %v439
      %v702 = vunpack.c.l.b16 %v440
      %v703 = vunpack.c.l.b16 %v441
      %v704 = vunpack.c.l.b16 %v442
      %v705 = vunpack.c.l.b16 %v443
      %v706 = vunpack.c.l.b16 %v444
      %v707 = vunpack.c.l.b16 %v445
      %v708 = vunpack.c.l.b16 %v446
      %v709 = vunpack.c.l.b16 %v447
      %v710 = vunpack.c.l.b16 %v448
      %v711 = vunpack.c.l.b16 %v449
      %v712 = vunpack.c.l.b16 %v450
      %v713 = vunpack.c.l.b16 %v451
      %v714 = vunpack.c.l.b16 %v452
      %v715 = vunpack.c.l.b16 %v453
      %v716 = vunpack.c.l.b16 %v454
      %v717 = vunpack.c.l.b16 %v455
      %v718 = vunpack.c.l.b16 %v456
      %v719 = vunpack.c.l.b16 %v457
      %v720 = vunpack.c.l.b16 %v458
      %v721 = vunpack.c.l.b16 %v459
      %v722 = vunpack.c.l.b16 %v460
      %v723 = vunpack.c.l.b16 %v461
      %v724 = vunpack.c.l.b16 %v462
      %v725 = vunpack.c.l.b16 %v463
      %v726 = vunpack.c.l.b16 %v464
      %v727 = vunpack.c.l.b16 %v465
      %v728 = vunpack.c.l.b16 %v466
      %v729 = vunpack.c.l.b16 %v467
      %v730 = vunpack.c.l.b16 %v468
      %v731 = vunpack.c.l.b16 %v469
      %v732 = vunpack.c.l.b16 %v470
      %v733 = vunpack.c.l.b16 %v471
      %v734 = vunpack.c.l.b16 %v472
      %v735 = vunpack.c.l.b16 %v473
      %v736 = vunpack.c.l.b16 %v474
      %v737 = vunpack.c.l.b16 %v475
      %v738 = vunpack.c.l.b16 %v476
      %v739 = vunpack.c.l.b16 %v477
      %v740 = vunpack.c.l.b16 %v478
      %v741 = vunpack.c.l.b16 %v479
      %v742 = vunpack.c.l.b16 %v480
      %v743 = vunpack.c.l.b16 %v481
      %v744 = vunpack.c.l.b16 %v482
      %v745 = vunpack.c.l.b16 %v483
      %v746 = vunpack.c.l.b16 %v484
      %v747 = vunpack.c.l.b16 %v485
      %v748 = vunpack.c.l.b16 %v486
      %v749 = vunpack.c.l.b16 %v487
      %v750 = vunpack.c.l.b16 %v488
      %v751 = vunpack.c.l.b16 %v489
      %v752 = vunpack.c.l.b16 %v490
      %v753 = vunpack.c.l.b16 %v491
      %v754 = vunpack.c.l.b16 %v492
      %v755 = vunpack.c.l.b16 %v493
      %v756 = vunpack.c.l.b16 %v494
      %v757 = vunpack.c.l.b16 %v495
      %v758 = vunpack.c.l.b16 %v496
      %v759 = vunpack.c.l.b16 %v497
      %v760 = vunpack.c.l.b16 %v498
      %v761 = vunpack.c.l.b16 %v499
      %v762 = vunpack.c.l.b16 %v500
      %v763 = vunpack.c.l.b16 %v501
      %v764 = vunpack.c.l.b16 %v502
      %v765 = vunpack.c.l.b16 %v503
      %v766 = vunpack.c.l.b16 %v504
      %v767 = vunpack.c.l.b16 %v505
      %v768 = vunpack.c.l.b16 %v506
      %v769 = vunpack.c.l.b16 %v507
      %v770 = vunpack.c.l.b16 %v508
      %v771 = vunpack.c.l.b16 %v509
      %v772 = vunpack.c.l.b16 %v510
      %v773 = vunpack.c.l.b16 %v511
      %v774 = vpack.c.b16 %v647, %v646
      %v775 = vpack.c.b16 %v649, %v648
      %v776 = vpack.c.b16 %v651, %v650
      %v777 = vpack.c.b16 %v653, %v652
      %v778 = vpack.c.b16 %v655, %v654
      %v779 = vpack.c.b16 %v657, %v656
      %v780 = vpack.c.b16 %v659, %v658
      %v781 = vpack.c.b16 %v661, %v660
      %v782 = vpack.c.b16 %v663, %v662
      %v783 = vpack.c.b16 %v665, %v664
      %v784 = vpack.c.b16 %v667, %v666
      %v785 = vpack.c.b16 %v669, %v668
      %v786 = vpack.c.b16 %v671, %v670
      %v787 = vpack.c.b16 %v673, %v672
      %v788 = vpack.c.b16 %v675, %v674
      %v789 = vpack.c.b16 %v677, %v676
      %v790 = vpack.c.b16 %v679, %v678
      %v791 = vpack.c.b16 %v681, %v680
      %v792 = vpack.c.b16 %v683, %v682
      %v793 = vpack.c.b16 %v685, %v684
      %v794 = vpack.c.b16 %v687, %v686
      %v795 = vpack.c.b16 %v689, %v688
      %v796 = vpack.c.b16 %v691, %v690
      %v797 = vpack.c.b16 %v693, %v692
      %v798 = vpack.c.b16 %v695, %v694
      %v799 = vpack.c.b16 %v697, %v696
      %v800 = vpack.c.b16 %v699, %v698
      %v801 = vpack.c.b16 %v701, %v700
      %v802 = vpack.c.b16 %v703, %v702
      %v803 = vpack.c.b16 %v705, %v704
      %v804 = vpack.c.b16 %v707, %v706
      %v805 = vpack.c.b16 %v709, %v708
      %v806 = vpack.c.b16 %v711, %v710
      %v807 = vpack.c.b16 %v713, %v712
      %v808 = vpack.c.b16 %v715, %v714
      %v809 = vpack.c.b16 %v717, %v716
      %v810 = vpack.c.b16 %v719, %v718
      %v811 = vpack.c.b16 %v721, %v720
      %v812 = vpack.c.b16 %v723, %v722
      %v813 = vpack.c.b16 %v725, %v724
      %v814 = vpack.c.b16 %v727, %v726
      %v815 = vpack.c.b16 %v729, %v728
      %v816 = vpack.c.b16 %v731, %v730
      %v817 = vpack.c.b16 %v733, %v732
      %v818 = vpack.c.b16 %v735, %v734
      %v819 = vpack.c.b16 %v737, %v736
      %v820 = vpack.c.b16 %v739, %v738
      %v821 = vpack.c.b16 %v741, %v740
      %v822 = vpack.c.b16 %v743, %v742
      %v823 = vpack.c.b16 %v745, %v744
      %v824 = vpack.c.b16 %v747, %v746
      %v825 = vpack.c.b16 %v749, %v748
      %v826 = vpack.c.b16 %v751, %v750
      %v827 = vpack.c.b16 %v753, %v752
      %v828 = vpack.c.b16 %v755, %v754
      %v829 = vpack.c.b16 %v757, %v756
      %v830 = vpack.c.b16 %v759, %v758
      %v831 = vpack.c.b16 %v761, %v760
      %v832 = vpack.c.b16 %v763, %v762
      %v833 = vpack.c.b16 %v765, %v764
      %v834 = vpack.c.b16 %v767, %v766
      %v835 = vpack.c.b16 %v769, %v768
      %v836 = vpack.c.b16 %v771, %v770
      %v837 = vpack.c.b16 %v773, %v772
      %v840 = vunpack.c.l.b16 %v512
      %v841 = vunpack.c.l.b16 %v513
      %v842 = vpack.c.b16 %v841, %v840
      %vm843 = vcmask 72704
      %v845 = vsel %vm843, %v774, 0
      %v848 = vsel %vm843, %v775, 0
      %v851 = vsel %vm843, %v776, 0
      %v854 = vsel %vm843, %v777, 0
      %v857 = vsel %vm843, %v778, 0
      %v860 = vsel %vm843, %v779, 0
      %v863 = vsel %vm843, %v780, 0
      %v866 = vsel %vm843, %v781, 0
      %v869 = vsel %vm843, %v782, 0
      %v872 = vsel %vm843, %v783, 0
      %v875 = vsel %vm843, %v784, 0
      %v878 = vsel %vm843, %v785, 0
      %v881 = vsel %vm843, %v786, 0
      %v884 = vsel %vm843, %v787, 0
      %v887 = vsel %vm843, %v788, 0
      %v890 = vsel %vm843, %v789, 0
      %v893 = vsel %vm843, %v790, 0
      %v896 = vsel %vm843, %v791, 0
      %v899 = vsel %vm843, %v792, 0
      %v902 = vsel %vm843, %v793, 0
      %v905 = vsel %vm843, %v794, 0
      %v908 = vsel %vm843, %v795, 0
      %v911 = vsel %vm843, %v796, 0
      %v914 = vsel %vm843, %v797, 0
      %v917 = vsel %vm843, %v798, 0
      %v920 = vsel %vm843, %v799, 0
      %v923 = vsel %vm843, %v800, 0
      %v926 = vsel %vm843, %v801, 0
      %v929 = vsel %vm843, %v802, 0
      %v932 = vsel %vm843, %v803, 0
      %v935 = vsel %vm843, %v804, 0
      %v938 = vsel %vm843, %v805, 0
      %v941 = vsel %vm843, %v806, 0
      %v944 = vsel %vm843, %v807, 0
      %v947 = vsel %vm843, %v808, 0
      %v950 = vsel %vm843, %v809, 0
      %v953 = vsel %vm843, %v810, 0
      %v956 = vsel %vm843, %v811, 0
      %v959 = vsel %vm843, %v812, 0
      %v962 = vsel %vm843, %v813, 0
      %v965 = vsel %vm843, %v814, 0
      %v968 = vsel %vm843, %v815, 0
      %v971 = vsel %vm843, %v816, 0
      %v974 = vsel %vm843, %v817, 0
      %v977 = vsel %vm843, %v818, 0
      %v980 = vsel %vm843, %v819, 0
      %v983 = vsel %vm843, %v820, 0
      %v986 = vsel %vm843, %v821, 0
      %v989 = vsel %vm843, %v822, 0
      %v992 = vsel %vm843, %v823, 0
      %v995 = vsel %vm843, %v824, 0
      %v998 = vsel %vm843, %v825, 0
      %v1001 = vsel %vm843, %v826, 0
      %v1004 = vsel %vm843, %v827, 0
      %v1007 = vsel %vm843, %v828, 0
      %v1010 = vsel %vm843, %v829, 0
      %v1013 = vsel %vm843, %v830, 0
      %v1016 = vsel %vm843, %v831, 0
      %v1019 = vsel %vm843, %v832, 0
      %v1022 = vsel %vm843, %v833, 0
      %v1025 = vsel %vm843, %v834, 0
      %v1028 = vsel %vm843, %v835, 0
      %v1031 = vsel %vm843, %v836, 0
      %v1034 = vsel %vm843, %v837, 0
      %vm1036 = vcmask 1043456
      %vm1037 = vcmask 1044480
      %v1038 = vsel %vm1036, 4294967295, 65535
      %v1039 = vsel %vm1037, %v1038, 0
      %v1041 = vand.u32 %v842, %v1039
      %1043 = vmatpush.bf16.msra.mxu0 0
      %1044 = vmatpush.bf16.msra.mxu0 0
      %1045 = vmatpush.bf16.msra.mxu0 0
      %1046 = vmatpush.bf16.msra.mxu0 0
      %1047 = vmatpush.bf16.msra.mxu0 0
      %1048 = vmatpush.bf16.msra.mxu0 0
      %1049 = vmatpush.bf16.msra.mxu0 0
      %1050 = vmatpush.bf16.msra.mxu0 %v1041
      %1051 = vmatmul.bf16.gmra.mxu0 %v845
      %v1052 = vpop.f32.mrf.mxu0
      %v1053 = vadd.f32 %v516, %v1052
      %v1054 = vpop.f32.mrf.mxu0
      %v1055 = vadd.f32 %v516, %v1054
      %1056 = vmatmul.bf16.gmra.mxu0 %v848
      %v1057 = vpop.f32.mrf.mxu0
      %v1058 = vadd.f32 %v516, %v1057
      %v1059 = vpop.f32.mrf.mxu0
      %v1060 = vadd.f32 %v516, %v1059
      %1061 = vmatmul.bf16.gmra.mxu0 %v851
      %v1062 = vpop.f32.mrf.mxu0
      %v1063 = vadd.f32 %v516, %v1062
      %v1064 = vpop.f32.mrf.mxu0
      %v1065 = vadd.f32 %v516, %v1064
      %1066 = vmatmul.bf16.gmra.mxu0 %v854
      %v1067 = vpop.f32.mrf.mxu0
      %v1068 = vadd.f32 %v516, %v1067
      %v1069 = vpop.f32.mrf.mxu0
      %v1070 = vadd.f32 %v516, %v1069
      %1071 = vmatmul.bf16.gmra.mxu0 %v857
      %v1072 = vpop.f32.mrf.mxu0
      %v1073 = vadd.f32 %v516, %v1072
      %v1074 = vpop.f32.mrf.mxu0
      %v1075 = vadd.f32 %v516, %v1074
      %1076 = vmatmul.bf16.gmra.mxu0 %v860
      %v1077 = vpop.f32.mrf.mxu0
      %v1078 = vadd.f32 %v516, %v1077
      %v1079 = vpop.f32.mrf.mxu0
      %v1080 = vadd.f32 %v516, %v1079
      %1081 = vmatmul.bf16.gmra.mxu0 %v863
      %v1082 = vpop.f32.mrf.mxu0
      %v1083 = vadd.f32 %v516, %v1082
      %v1084 = vpop.f32.mrf.mxu0
      %v1085 = vadd.f32 %v516, %v1084
      %1086 = vmatmul.bf16.gmra.mxu0 %v866
      %v1087 = vpop.f32.mrf.mxu0
      %v1088 = vadd.f32 %v516, %v1087
      %v1089 = vpop.f32.mrf.mxu0
      %v1090 = vadd.f32 %v516, %v1089
      %1091 = vmatmul.bf16.gmra.mxu0 %v869
      %v1092 = vpop.f32.mrf.mxu0
      %v1093 = vadd.f32 %v516, %v1092
      %v1094 = vpop.f32.mrf.mxu0
      %v1095 = vadd.f32 %v516, %v1094
      %1096 = vmatmul.bf16.gmra.mxu0 %v872
      %v1097 = vpop.f32.mrf.mxu0
      %v1098 = vadd.f32 %v516, %v1097
      %v1099 = vpop.f32.mrf.mxu0
      %v1100 = vadd.f32 %v516, %v1099
      %1101 = vmatmul.bf16.gmra.mxu0 %v875
      %v1102 = vpop.f32.mrf.mxu0
      %v1103 = vadd.f32 %v516, %v1102
      %v1104 = vpop.f32.mrf.mxu0
      %v1105 = vadd.f32 %v516, %v1104
      %1106 = vmatmul.bf16.gmra.mxu0 %v878
      %v1107 = vpop.f32.mrf.mxu0
      %v1108 = vadd.f32 %v516, %v1107
      %v1109 = vpop.f32.mrf.mxu0
      %v1110 = vadd.f32 %v516, %v1109
      %1111 = vmatmul.bf16.gmra.mxu0 %v881
      %v1112 = vpop.f32.mrf.mxu0
      %v1113 = vadd.f32 %v516, %v1112
      %v1114 = vpop.f32.mrf.mxu0
      %v1115 = vadd.f32 %v516, %v1114
      %1116 = vmatmul.bf16.gmra.mxu0 %v884
      %v1117 = vpop.f32.mrf.mxu0
      %v1118 = vadd.f32 %v516, %v1117
      %v1119 = vpop.f32.mrf.mxu0
      %v1120 = vadd.f32 %v516, %v1119
      %1121 = vmatmul.bf16.gmra.mxu0 %v887
      %v1122 = vpop.f32.mrf.mxu0
      %v1123 = vadd.f32 %v516, %v1122
      %v1124 = vpop.f32.mrf.mxu0
      %v1125 = vadd.f32 %v516, %v1124
      %1126 = vmatmul.bf16.gmra.mxu0 %v890
      %v1127 = vpop.f32.mrf.mxu0
      %v1128 = vadd.f32 %v516, %v1127
      %v1129 = vpop.f32.mrf.mxu0
      %v1130 = vadd.f32 %v516, %v1129
      %1131 = vmatmul.bf16.gmra.mxu0 %v893
      %v1132 = vpop.f32.mrf.mxu0
      %v1133 = vadd.f32 %v516, %v1132
      %v1134 = vpop.f32.mrf.mxu0
      %v1135 = vadd.f32 %v516, %v1134
      %1136 = vmatmul.bf16.gmra.mxu0 %v896
      %v1137 = vpop.f32.mrf.mxu0
      %v1138 = vadd.f32 %v516, %v1137
      %v1139 = vpop.f32.mrf.mxu0
      %v1140 = vadd.f32 %v516, %v1139
      %1141 = vmatmul.bf16.gmra.mxu0 %v899
      %v1142 = vpop.f32.mrf.mxu0
      %v1143 = vadd.f32 %v516, %v1142
      %v1144 = vpop.f32.mrf.mxu0
      %v1145 = vadd.f32 %v516, %v1144
      %1146 = vmatmul.bf16.gmra.mxu0 %v902
      %v1147 = vpop.f32.mrf.mxu0
      %v1148 = vadd.f32 %v516, %v1147
      %v1149 = vpop.f32.mrf.mxu0
      %v1150 = vadd.f32 %v516, %v1149
      %1151 = vmatmul.bf16.gmra.mxu0 %v905
      %v1152 = vpop.f32.mrf.mxu0
      %v1153 = vadd.f32 %v516, %v1152
      %v1154 = vpop.f32.mrf.mxu0
      %v1155 = vadd.f32 %v516, %v1154
      %1156 = vmatmul.bf16.gmra.mxu0 %v908
      %v1157 = vpop.f32.mrf.mxu0
      %v1158 = vadd.f32 %v516, %v1157
      %v1159 = vpop.f32.mrf.mxu0
      %v1160 = vadd.f32 %v516, %v1159
      %1161 = vmatmul.bf16.gmra.mxu0 %v911
      %v1162 = vpop.f32.mrf.mxu0
      %v1163 = vadd.f32 %v516, %v1162
      %v1164 = vpop.f32.mrf.mxu0
      %v1165 = vadd.f32 %v516, %v1164
      %1166 = vmatmul.bf16.gmra.mxu0 %v914
      %v1167 = vpop.f32.mrf.mxu0
      %v1168 = vadd.f32 %v516, %v1167
      %v1169 = vpop.f32.mrf.mxu0
      %v1170 = vadd.f32 %v516, %v1169
      %1171 = vmatmul.bf16.gmra.mxu0 %v917
      %v1172 = vpop.f32.mrf.mxu0
      %v1173 = vadd.f32 %v516, %v1172
      %v1174 = vpop.f32.mrf.mxu0
      %v1175 = vadd.f32 %v516, %v1174
      %1176 = vmatmul.bf16.gmra.mxu0 %v920
      %v1177 = vpop.f32.mrf.mxu0
      %v1178 = vadd.f32 %v516, %v1177
      %v1179 = vpop.f32.mrf.mxu0
      %v1180 = vadd.f32 %v516, %v1179
      %1181 = vmatmul.bf16.gmra.mxu0 %v923
      %v1182 = vpop.f32.mrf.mxu0
      %v1183 = vadd.f32 %v516, %v1182
      %v1184 = vpop.f32.mrf.mxu0
      %v1185 = vadd.f32 %v516, %v1184
      %1186 = vmatmul.bf16.gmra.mxu0 %v926
      %v1187 = vpop.f32.mrf.mxu0
      %v1188 = vadd.f32 %v516, %v1187
      %v1189 = vpop.f32.mrf.mxu0
      %v1190 = vadd.f32 %v516, %v1189
      %1191 = vmatmul.bf16.gmra.mxu0 %v929
      %v1192 = vpop.f32.mrf.mxu0
      %v1193 = vadd.f32 %v516, %v1192
      %v1194 = vpop.f32.mrf.mxu0
      %v1195 = vadd.f32 %v516, %v1194
      %1196 = vmatmul.bf16.gmra.mxu0 %v932
      %v1197 = vpop.f32.mrf.mxu0
      %v1198 = vadd.f32 %v516, %v1197
      %v1199 = vpop.f32.mrf.mxu0
      %v1200 = vadd.f32 %v516, %v1199
      %1201 = vmatmul.bf16.gmra.mxu0 %v935
      %v1202 = vpop.f32.mrf.mxu0
      %v1203 = vadd.f32 %v516, %v1202
      %v1204 = vpop.f32.mrf.mxu0
      %v1205 = vadd.f32 %v516, %v1204
      %1206 = vmatmul.bf16.gmra.mxu0 %v938
      %v1207 = vpop.f32.mrf.mxu0
      %v1208 = vadd.f32 %v516, %v1207
      %v1209 = vpop.f32.mrf.mxu0
      %v1210 = vadd.f32 %v516, %v1209
      %1211 = vmatmul.bf16.gmra.mxu0 %v941
      %v1212 = vpop.f32.mrf.mxu0
      %v1213 = vadd.f32 %v516, %v1212
      %v1214 = vpop.f32.mrf.mxu0
      %v1215 = vadd.f32 %v516, %v1214
      %1216 = vmatmul.bf16.gmra.mxu0 %v944
      %v1217 = vpop.f32.mrf.mxu0
      %v1218 = vadd.f32 %v516, %v1217
      %v1219 = vpop.f32.mrf.mxu0
      %v1220 = vadd.f32 %v516, %v1219
      %1221 = vmatmul.bf16.gmra.mxu0 %v947
      %v1222 = vpop.f32.mrf.mxu0
      %v1223 = vadd.f32 %v516, %v1222
      %v1224 = vpop.f32.mrf.mxu0
      %v1225 = vadd.f32 %v516, %v1224
      %1226 = vmatmul.bf16.gmra.mxu0 %v950
      %v1227 = vpop.f32.mrf.mxu0
      %v1228 = vadd.f32 %v516, %v1227
      %v1229 = vpop.f32.mrf.mxu0
      %v1230 = vadd.f32 %v516, %v1229
      %1231 = vmatmul.bf16.gmra.mxu0 %v953
      %v1232 = vpop.f32.mrf.mxu0
      %v1233 = vadd.f32 %v516, %v1232
      %v1234 = vpop.f32.mrf.mxu0
      %v1235 = vadd.f32 %v516, %v1234
      %1236 = vmatmul.bf16.gmra.mxu0 %v956
      %v1237 = vpop.f32.mrf.mxu0
      %v1238 = vadd.f32 %v516, %v1237
      %v1239 = vpop.f32.mrf.mxu0
      %v1240 = vadd.f32 %v516, %v1239
      %1241 = vmatmul.bf16.gmra.mxu0 %v959
      %v1242 = vpop.f32.mrf.mxu0
      %v1243 = vadd.f32 %v516, %v1242
      %v1244 = vpop.f32.mrf.mxu0
      %v1245 = vadd.f32 %v516, %v1244
      %1246 = vmatmul.bf16.gmra.mxu0 %v962
      %v1247 = vpop.f32.mrf.mxu0
      %v1248 = vadd.f32 %v516, %v1247
      %v1249 = vpop.f32.mrf.mxu0
      %v1250 = vadd.f32 %v516, %v1249
      %1251 = vmatmul.bf16.gmra.mxu0 %v965
      %v1252 = vpop.f32.mrf.mxu0
      %v1253 = vadd.f32 %v516, %v1252
      %v1254 = vpop.f32.mrf.mxu0
      %v1255 = vadd.f32 %v516, %v1254
      %1256 = vmatmul.bf16.gmra.mxu0 %v968
      %v1257 = vpop.f32.mrf.mxu0
      %v1258 = vadd.f32 %v516, %v1257
      %v1259 = vpop.f32.mrf.mxu0
      %v1260 = vadd.f32 %v516, %v1259
      %1261 = vmatmul.bf16.gmra.mxu0 %v971
      %v1262 = vpop.f32.mrf.mxu0
      %v1263 = vadd.f32 %v516, %v1262
      %v1264 = vpop.f32.mrf.mxu0
      %v1265 = vadd.f32 %v516, %v1264
      %1266 = vmatmul.bf16.gmra.mxu0 %v974
      %v1267 = vpop.f32.mrf.mxu0
      %v1268 = vadd.f32 %v516, %v1267
      %v1269 = vpop.f32.mrf.mxu0
      %v1270 = vadd.f32 %v516, %v1269
      %1271 = vmatmul.bf16.gmra.mxu0 %v977
      %v1272 = vpop.f32.mrf.mxu0
      %v1273 = vadd.f32 %v516, %v1272
      %v1274 = vpop.f32.mrf.mxu0
      %v1275 = vadd.f32 %v516, %v1274
      %1276 = vmatmul.bf16.gmra.mxu0 %v980
      %v1277 = vpop.f32.mrf.mxu0
      %v1278 = vadd.f32 %v516, %v1277
      %v1279 = vpop.f32.mrf.mxu0
      %v1280 = vadd.f32 %v516, %v1279
      %1281 = vmatmul.bf16.gmra.mxu0 %v983
      %v1282 = vpop.f32.mrf.mxu0
      %v1283 = vadd.f32 %v516, %v1282
      %v1284 = vpop.f32.mrf.mxu0
      %v1285 = vadd.f32 %v516, %v1284
      %1286 = vmatmul.bf16.gmra.mxu0 %v986
      %v1287 = vpop.f32.mrf.mxu0
      %v1288 = vadd.f32 %v516, %v1287
      %v1289 = vpop.f32.mrf.mxu0
      %v1290 = vadd.f32 %v516, %v1289
      %1291 = vmatmul.bf16.gmra.mxu0 %v989
      %v1292 = vpop.f32.mrf.mxu0
      %v1293 = vadd.f32 %v516, %v1292
      %v1294 = vpop.f32.mrf.mxu0
      %v1295 = vadd.f32 %v516, %v1294
      %1296 = vmatmul.bf16.gmra.mxu0 %v992
      %v1297 = vpop.f32.mrf.mxu0
      %v1298 = vadd.f32 %v516, %v1297
      %v1299 = vpop.f32.mrf.mxu0
      %v1300 = vadd.f32 %v516, %v1299
      %1301 = vmatmul.bf16.gmra.mxu0 %v995
      %v1302 = vpop.f32.mrf.mxu0
      %v1303 = vadd.f32 %v516, %v1302
      %v1304 = vpop.f32.mrf.mxu0
      %v1305 = vadd.f32 %v516, %v1304
      %1306 = vmatmul.bf16.gmra.mxu0 %v998
      %v1307 = vpop.f32.mrf.mxu0
      %v1308 = vadd.f32 %v516, %v1307
      %v1309 = vpop.f32.mrf.mxu0
      %v1310 = vadd.f32 %v516, %v1309
      %1311 = vmatmul.bf16.gmra.mxu0 %v1001
      %v1312 = vpop.f32.mrf.mxu0
      %v1313 = vadd.f32 %v516, %v1312
      %v1314 = vpop.f32.mrf.mxu0
      %v1315 = vadd.f32 %v516, %v1314
      %1316 = vmatmul.bf16.gmra.mxu0 %v1004
      %v1317 = vpop.f32.mrf.mxu0
      %v1318 = vadd.f32 %v516, %v1317
      %v1319 = vpop.f32.mrf.mxu0
      %v1320 = vadd.f32 %v516, %v1319
      %1321 = vmatmul.bf16.gmra.mxu0 %v1007
      %v1322 = vpop.f32.mrf.mxu0
      %v1323 = vadd.f32 %v516, %v1322
      %v1324 = vpop.f32.mrf.mxu0
      %v1325 = vadd.f32 %v516, %v1324
      %1326 = vmatmul.bf16.gmra.mxu0 %v1010
      %v1327 = vpop.f32.mrf.mxu0
      %v1328 = vadd.f32 %v516, %v1327
      %v1329 = vpop.f32.mrf.mxu0
      %v1330 = vadd.f32 %v516, %v1329
      %1331 = vmatmul.bf16.gmra.mxu0 %v1013
      %v1332 = vpop.f32.mrf.mxu0
      %v1333 = vadd.f32 %v516, %v1332
      %v1334 = vpop.f32.mrf.mxu0
      %v1335 = vadd.f32 %v516, %v1334
      %1336 = vmatmul.bf16.gmra.mxu0 %v1016
      %v1337 = vpop.f32.mrf.mxu0
      %v1338 = vadd.f32 %v516, %v1337
      %v1339 = vpop.f32.mrf.mxu0
      %v1340 = vadd.f32 %v516, %v1339
      %1341 = vmatmul.bf16.gmra.mxu0 %v1019
      %v1342 = vpop.f32.mrf.mxu0
      %v1343 = vadd.f32 %v516, %v1342
      %v1344 = vpop.f32.mrf.mxu0
      %v1345 = vadd.f32 %v516, %v1344
      %1346 = vmatmul.bf16.gmra.mxu0 %v1022
      %v1347 = vpop.f32.mrf.mxu0
      %v1348 = vadd.f32 %v516, %v1347
      %v1349 = vpop.f32.mrf.mxu0
      %v1350 = vadd.f32 %v516, %v1349
      %1351 = vmatmul.bf16.gmra.mxu0 %v1025
      %v1352 = vpop.f32.mrf.mxu0
      %v1353 = vadd.f32 %v516, %v1352
      %v1354 = vpop.f32.mrf.mxu0
      %v1355 = vadd.f32 %v516, %v1354
      %1356 = vmatmul.bf16.gmra.mxu0 %v1028
      %v1357 = vpop.f32.mrf.mxu0
      %v1358 = vadd.f32 %v516, %v1357
      %v1359 = vpop.f32.mrf.mxu0
      %v1360 = vadd.f32 %v516, %v1359
      %1361 = vmatmul.bf16.gmra.mxu0 %v1031
      %v1362 = vpop.f32.mrf.mxu0
      %v1363 = vadd.f32 %v516, %v1362
      %v1364 = vpop.f32.mrf.mxu0
      %v1365 = vadd.f32 %v516, %v1364
      %1366 = vmatmul.bf16.gmra.mxu0 %v1034
      %v1367 = vpop.f32.mrf.mxu0
      %v1368 = vadd.f32 %v516, %v1367
      %v1369 = vpop.f32.mrf.mxu0
      %v1370 = vadd.f32 %v516, %v1369
      %1371 = vdwg.mxu0
      %v1372 = vmax.f32 %v1053, 0.0
      %v1373 = vmax.f32 %v1055, 0.0
      %v1374 = vmax.f32 %v1058, 0.0
      %v1375 = vmax.f32 %v1060, 0.0
      %v1376 = vmax.f32 %v1063, 0.0
      %v1377 = vmax.f32 %v1065, 0.0
      %v1378 = vmax.f32 %v1068, 0.0
      %v1379 = vmax.f32 %v1070, 0.0
      %v1380 = vmax.f32 %v1073, 0.0
      %v1381 = vmax.f32 %v1075, 0.0
      %v1382 = vmax.f32 %v1078, 0.0
      %v1383 = vmax.f32 %v1080, 0.0
      %v1384 = vmax.f32 %v1083, 0.0
      %v1385 = vmax.f32 %v1085, 0.0
      %v1386 = vmax.f32 %v1088, 0.0
      %v1387 = vmax.f32 %v1090, 0.0
      %v1388 = vmax.f32 %v1093, 0.0
      %v1389 = vmax.f32 %v1095, 0.0
      %v1390 = vmax.f32 %v1098, 0.0
      %v1391 = vmax.f32 %v1100, 0.0
      %v1392 = vmax.f32 %v1103, 0.0
      %v1393 = vmax.f32 %v1105, 0.0
      %v1394 = vmax.f32 %v1108, 0.0
      %v1395 = vmax.f32 %v1110, 0.0
      %v1396 = vmax.f32 %v1113, 0.0
      %v1397 = vmax.f32 %v1115, 0.0
      %v1398 = vmax.f32 %v1118, 0.0
      %v1399 = vmax.f32 %v1120, 0.0
      %v1400 = vmax.f32 %v1123, 0.0
      %v1401 = vmax.f32 %v1125, 0.0
      %v1402 = vmax.f32 %v1128, 0.0
      %v1403 = vmax.f32 %v1130, 0.0
      %v1404 = vmax.f32 %v1133, 0.0
      %v1405 = vmax.f32 %v1135, 0.0
      %v1406 = vmax.f32 %v1138, 0.0
      %v1407 = vmax.f32 %v1140, 0.0
      %v1408 = vmax.f32 %v1143, 0.0
      %v1409 = vmax.f32 %v1145, 0.0
      %v1410 = vmax.f32 %v1148, 0.0
      %v1411 = vmax.f32 %v1150, 0.0
      %v1412 = vmax.f32 %v1153, 0.0
      %v1413 = vmax.f32 %v1155, 0.0
      %v1414 = vmax.f32 %v1158, 0.0
      %v1415 = vmax.f32 %v1160, 0.0
      %v1416 = vmax.f32 %v1163, 0.0
      %v1417 = vmax.f32 %v1165, 0.0
      %v1418 = vmax.f32 %v1168, 0.0
      %v1419 = vmax.f32 %v1170, 0.0
      %v1420 = vmax.f32 %v1173, 0.0
      %v1421 = vmax.f32 %v1175, 0.0
      %v1422 = vmax.f32 %v1178, 0.0
      %v1423 = vmax.f32 %v1180, 0.0
      %v1424 = vmax.f32 %v1183, 0.0
      %v1425 = vmax.f32 %v1185, 0.0
      %v1426 = vmax.f32 %v1188, 0.0
      %v1427 = vmax.f32 %v1190, 0.0
      %v1428 = vmax.f32 %v1193, 0.0
      %v1429 = vmax.f32 %v1195, 0.0
      %v1430 = vmax.f32 %v1198, 0.0
      %v1431 = vmax.f32 %v1200, 0.0
      %v1432 = vmax.f32 %v1203, 0.0
      %v1433 = vmax.f32 %v1205, 0.0
      %v1434 = vmax.f32 %v1208, 0.0
      %v1435 = vmax.f32 %v1210, 0.0
      %v1436 = vmax.f32 %v1213, 0.0
      %v1437 = vmax.f32 %v1215, 0.0
      %v1438 = vmax.f32 %v1218, 0.0
      %v1439 = vmax.f32 %v1220, 0.0
      %v1440 = vmax.f32 %v1223, 0.0
      %v1441 = vmax.f32 %v1225, 0.0
      %v1442 = vmax.f32 %v1228, 0.0
      %v1443 = vmax.f32 %v1230, 0.0
      %v1444 = vmax.f32 %v1233, 0.0
      %v1445 = vmax.f32 %v1235, 0.0
      %v1446 = vmax.f32 %v1238, 0.0
      %v1447 = vmax.f32 %v1240, 0.0
      %v1448 = vmax.f32 %v1243, 0.0
      %v1449 = vmax.f32 %v1245, 0.0
      %v1450 = vmax.f32 %v1248, 0.0
      %v1451 = vmax.f32 %v1250, 0.0
      %v1452 = vmax.f32 %v1253, 0.0
      %v1453 = vmax.f32 %v1255, 0.0
      %v1454 = vmax.f32 %v1258, 0.0
      %v1455 = vmax.f32 %v1260, 0.0
      %v1456 = vmax.f32 %v1263, 0.0
      %v1457 = vmax.f32 %v1265, 0.0
      %v1458 = vmax.f32 %v1268, 0.0
      %v1459 = vmax.f32 %v1270, 0.0
      %v1460 = vmax.f32 %v1273, 0.0
      %v1461 = vmax.f32 %v1275, 0.0
      %v1462 = vmax.f32 %v1278, 0.0
      %v1463 = vmax.f32 %v1280, 0.0
      %v1464 = vmax.f32 %v1283, 0.0
      %v1465 = vmax.f32 %v1285, 0.0
      %v1466 = vmax.f32 %v1288, 0.0
      %v1467 = vmax.f32 %v1290, 0.0
      %v1468 = vmax.f32 %v1293, 0.0
      %v1469 = vmax.f32 %v1295, 0.0
      %v1470 = vmax.f32 %v1298, 0.0
      %v1471 = vmax.f32 %v1300, 0.0
      %v1472 = vmax.f32 %v1303, 0.0
      %v1473 = vmax.f32 %v1305, 0.0
      %v1474 = vmax.f32 %v1308, 0.0
      %v1475 = vmax.f32 %v1310, 0.0
      %v1476 = vmax.f32 %v1313, 0.0
      %v1477 = vmax.f32 %v1315, 0.0
      %v1478 = vmax.f32 %v1318, 0.0
      %v1479 = vmax.f32 %v1320, 0.0
      %v1480 = vmax.f32 %v1323, 0.0
      %v1481 = vmax.f32 %v1325, 0.0
      %v1482 = vmax.f32 %v1328, 0.0
      %v1483 = vmax.f32 %v1330, 0.0
      %v1484 = vmax.f32 %v1333, 0.0
      %v1485 = vmax.f32 %v1335, 0.0
      %v1486 = vmax.f32 %v1338, 0.0
      %v1487 = vmax.f32 %v1340, 0.0
      %v1488 = vmax.f32 %v1343, 0.0
      %v1489 = vmax.f32 %v1345, 0.0
      %v1490 = vmax.f32 %v1348, 0.0
      %v1491 = vmax.f32 %v1350, 0.0
      %v1492 = vmax.f32 %v1353, 0.0
      %v1493 = vmax.f32 %v1355, 0.0
      %v1494 = vmax.f32 %v1358, 0.0
      %v1495 = vmax.f32 %v1360, 0.0
      %v1496 = vmax.f32 %v1363, 0.0
      %v1497 = vmax.f32 %v1365, 0.0
      %v1498 = vmax.f32 %v1368, 0.0
      %v1499 = vmax.f32 %v1370, 0.0
      %v1500 = vmax.f32 %v1372, %v1376
      %v1501 = vmax.f32 %v1373, %v1377
      %v1502 = vmax.f32 %v1374, %v1378
      %v1503 = vmax.f32 %v1375, %v1379
      %v1504 = vmax.f32 %v1380, %v1384
      %v1505 = vmax.f32 %v1381, %v1385
      %v1506 = vmax.f32 %v1382, %v1386
      %v1507 = vmax.f32 %v1383, %v1387
      %v1508 = vmax.f32 %v1388, %v1392
      %v1509 = vmax.f32 %v1389, %v1393
      %v1510 = vmax.f32 %v1390, %v1394
      %v1511 = vmax.f32 %v1391, %v1395
      %v1512 = vmax.f32 %v1396, %v1400
      %v1513 = vmax.f32 %v1397, %v1401
      %v1514 = vmax.f32 %v1398, %v1402
      %v1515 = vmax.f32 %v1399, %v1403
      %v1516 = vmax.f32 %v1404, %v1408
      %v1517 = vmax.f32 %v1405, %v1409
      %v1518 = vmax.f32 %v1406, %v1410
      %v1519 = vmax.f32 %v1407, %v1411
      %v1520 = vmax.f32 %v1412, %v1416
      %v1521 = vmax.f32 %v1413, %v1417
      %v1522 = vmax.f32 %v1414, %v1418
      %v1523 = vmax.f32 %v1415, %v1419
      %v1524 = vmax.f32 %v1420, %v1424
      %v1525 = vmax.f32 %v1421, %v1425
      %v1526 = vmax.f32 %v1422, %v1426
      %v1527 = vmax.f32 %v1423, %v1427
      %v1528 = vmax.f32 %v1428, %v1432
      %v1529 = vmax.f32 %v1429, %v1433
      %v1530 = vmax.f32 %v1430, %v1434
      %v1531 = vmax.f32 %v1431, %v1435
      %v1532 = vmax.f32 %v1436, %v1440
      %v1533 = vmax.f32 %v1437, %v1441
      %v1534 = vmax.f32 %v1438, %v1442
      %v1535 = vmax.f32 %v1439, %v1443
      %v1536 = vmax.f32 %v1444, %v1448
      %v1537 = vmax.f32 %v1445, %v1449
      %v1538 = vmax.f32 %v1446, %v1450
      %v1539 = vmax.f32 %v1447, %v1451
      %v1540 = vmax.f32 %v1452, %v1456
      %v1541 = vmax.f32 %v1453, %v1457
      %v1542 = vmax.f32 %v1454, %v1458
      %v1543 = vmax.f32 %v1455, %v1459
      %v1544 = vmax.f32 %v1460, %v1464
      %v1545 = vmax.f32 %v1461, %v1465
      %v1546 = vmax.f32 %v1462, %v1466
      %v1547 = vmax.f32 %v1463, %v1467
      %v1548 = vmax.f32 %v1468, %v1472
      %v1549 = vmax.f32 %v1469, %v1473
      %v1550 = vmax.f32 %v1470, %v1474
      %v1551 = vmax.f32 %v1471, %v1475
      %v1552 = vmax.f32 %v1476, %v1480
      %v1553 = vmax.f32 %v1477, %v1481
      %v1554 = vmax.f32 %v1478, %v1482
      %v1555 = vmax.f32 %v1479, %v1483
      %v1556 = vmax.f32 %v1484, %v1488
      %v1557 = vmax.f32 %v1485, %v1489
      %v1558 = vmax.f32 %v1486, %v1490
      %v1559 = vmax.f32 %v1487, %v1491
      %v1560 = vmax.f32 %v1492, %v1496
      %v1561 = vmax.f32 %v1493, %v1497
      %v1562 = vmax.f32 %v1494, %v1498
      %v1563 = vmax.f32 %v1495, %v1499
      %1564 = vst [vmem:[#allocation4] sm:$0xff] %v1500
      %1565 = vst [vmem:[#allocation4 + $0x8] sm:$0xff] %v1501
      %1566 = vst [vmem:[#allocation4 + $0x10] sm:$0xff] %v1502
      %1567 = vst [vmem:[#allocation4 + $0x18] sm:$0xff] %v1503
      %1568 = vst [vmem:[#allocation4 + $0x20] sm:$0xff] %v1504
      %1569 = vst [vmem:[#allocation4 + $0x28] sm:$0xff] %v1505
      %1570 = vst [vmem:[#allocation4 + $0x30] sm:$0xff] %v1506
      %1571 = vst [vmem:[#allocation4 + $0x38] sm:$0xff] %v1507
      %1572 = vst [vmem:[#allocation4 + $0x40] sm:$0xff] %v1508
      %1573 = vst [vmem:[#allocation4 + $0x48] sm:$0xff] %v1509
      %1574 = vst [vmem:[#allocation4 + $0x50] sm:$0xff] %v1510
      %1575 = vst [vmem:[#allocation4 + $0x58] sm:$0xff] %v1511
      %1576 = vst [vmem:[#allocation4 + $0x60] sm:$0xff] %v1512
      %1577 = vst [vmem:[#allocation4 + $0x68] sm:$0xff] %v1513
      %1578 = vst [vmem:[#allocation4 + $0x70] sm:$0xff] %v1514
      %1579 = vst [vmem:[#allocation4 + $0x78] sm:$0xff] %v1515
      %1580 = vst [vmem:[#allocation4 + $0x80] sm:$0xff] %v1516
      %1581 = vst [vmem:[#allocation4 + $0x88] sm:$0xff] %v1517
      %1582 = vst [vmem:[#allocation4 + $0x90] sm:$0xff] %v1518
      %1583 = vst [vmem:[#allocation4 + $0x98] sm:$0xff] %v1519
      %1584 = vst [vmem:[#allocation4 + $0xa0] sm:$0xff] %v1520
      %1585 = vst [vmem:[#allocation4 + $0xa8] sm:$0xff] %v1521
      %1586 = vst [vmem:[#allocation4 + $0xb0] sm:$0xff] %v1522
      %1587 = vst [vmem:[#allocation4 + $0xb8] sm:$0xff] %v1523
      %1588 = vst [vmem:[#allocation4 + $0xc0] sm:$0xff] %v1524
      %1589 = vst [vmem:[#allocation4 + $0xc8] sm:$0xff] %v1525
      %1590 = vst [vmem:[#allocation4 + $0xd0] sm:$0xff] %v1526
      %1591 = vst [vmem:[#allocation4 + $0xd8] sm:$0xff] %v1527
      %1592 = vst [vmem:[#allocation4 + $0xe0] sm:$0xff] %v1528
      %1593 = vst [vmem:[#allocation4 + $0xe8] sm:$0xff] %v1529
      %1594 = vst [vmem:[#allocation4 + $0xf0] sm:$0xff] %v1530
      %1595 = vst [vmem:[#allocation4 + $0xf8] sm:$0xff] %v1531
      %1596 = vst [vmem:[#allocation4 + $0x100] sm:$0xff] %v1532
      %1597 = vst [vmem:[#allocation4 + $0x108] sm:$0xff] %v1533
      %1598 = vst [vmem:[#allocation4 + $0x110] sm:$0xff] %v1534
      %1599 = vst [vmem:[#allocation4 + $0x118] sm:$0xff] %v1535
      %1600 = vst [vmem:[#allocation4 + $0x120] sm:$0xff] %v1536
      %1601 = vst [vmem:[#allocation4 + $0x128] sm:$0xff] %v1537
      %1602 = vst [vmem:[#allocation4 + $0x130] sm:$0xff] %v1538
      %1603 = vst [vmem:[#allocation4 + $0x138] sm:$0xff] %v1539
      %1604 = vst [vmem:[#allocation4 + $0x140] sm:$0xff] %v1540
      %1605 = vst [vmem:[#allocation4 + $0x148] sm:$0xff] %v1541
      %1606 = vst [vmem:[#allocation4 + $0x150] sm:$0xff] %v1542
      %1607 = vst [vmem:[#allocation4 + $0x158] sm:$0xff] %v1543
      %1608 = vst [vmem:[#allocation4 + $0x160] sm:$0xff] %v1544
      %1609 = vst [vmem:[#allocation4 + $0x168] sm:$0xff] %v1545
      %1610 = vst [vmem:[#allocation4 + $0x170] sm:$0xff] %v1546
      %1611 = vst [vmem:[#allocation4 + $0x178] sm:$0xff] %v1547
      %1612 = vst [vmem:[#allocation4 + $0x180] sm:$0xff] %v1548
      %1613 = vst [vmem:[#allocation4 + $0x188] sm:$0xff] %v1549
      %1614 = vst [vmem:[#allocation4 + $0x190] sm:$0xff] %v1550
      %1615 = vst [vmem:[#allocation4 + $0x198] sm:$0xff] %v1551
      %1616 = vst [vmem:[#allocation4 + $0x1a0] sm:$0xff] %v1552
      %1617 = vst [vmem:[#allocation4 + $0x1a8] sm:$0xff] %v1553
      %1618 = vst [vmem:[#allocation4 + $0x1b0] sm:$0xff] %v1554
      %1619 = vst [vmem:[#allocation4 + $0x1b8] sm:$0xff] %v1555
      %1620 = vst [vmem:[#allocation4 + $0x1c0] sm:$0xff] %v1556
      %1621 = vst [vmem:[#allocation4 + $0x1c8] sm:$0xff] %v1557
      %1622 = vst [vmem:[#allocation4 + $0x1d0] sm:$0xff] %v1558
      %1623 = vst [vmem:[#allocation4 + $0x1d8] sm:$0xff] %v1559
      %1624 = vst [vmem:[#allocation4 + $0x1e0] sm:$0xff] %v1560
      %1625 = vst [vmem:[#allocation4 + $0x1e8] sm:$0xff] %v1561
      %1626 = vst [vmem:[#allocation4 + $0x1f0] sm:$0xff] %v1562
      %1627 = vst [vmem:[#allocation4 + $0x1f8] sm:$0xff] %v1563
      %v1628 = vld [vmem:[#allocation4] ss:$2 sm:$0xff]
      %s1629 = scalar_lea.vmem [#allocation4], 16
      %v1630 = vld [vmem:[%s1629] ss:$2 sm:$0xff]
      %s1631 = scalar_lea.vmem [#allocation4], 32
      %v1632 = vld [vmem:[%s1631] ss:$2 sm:$0xff]
      %s1633 = scalar_lea.vmem [#allocation4], 48
      %v1634 = vld [vmem:[%s1633] ss:$2 sm:$0xff]
      %s1635 = scalar_lea.vmem [#allocation4], 64
      %v1636 = vld [vmem:[%s1635] ss:$2 sm:$0xff]
      %s1637 = scalar_lea.vmem [#allocation4], 80
      %v1638 = vld [vmem:[%s1637] ss:$2 sm:$0xff]
      %s1639 = scalar_lea.vmem [#allocation4], 96
      %v1640 = vld [vmem:[%s1639] ss:$2 sm:$0xff]
      %s1641 = scalar_lea.vmem [#allocation4], 112
      %v1642 = vld [vmem:[%s1641] ss:$2 sm:$0xff]
      %s1643 = scalar_lea.vmem [#allocation4], 128
      %v1644 = vld [vmem:[%s1643] ss:$2 sm:$0xff]
      %s1645 = scalar_lea.vmem [#allocation4], 144
      %v1646 = vld [vmem:[%s1645] ss:$2 sm:$0xff]
      %s1647 = scalar_lea.vmem [#allocation4], 160
      %v1648 = vld [vmem:[%s1647] ss:$2 sm:$0xff]
      %s1649 = scalar_lea.vmem [#allocation4], 176
      %v1650 = vld [vmem:[%s1649] ss:$2 sm:$0xff]
      %s1651 = scalar_lea.vmem [#allocation4], 192
      %v1652 = vld [vmem:[%s1651] ss:$2 sm:$0xff]
      %s1653 = scalar_lea.vmem [#allocation4], 208
      %v1654 = vld [vmem:[%s1653] ss:$2 sm:$0xff]
      %s1655 = scalar_lea.vmem [#allocation4], 224
      %v1656 = vld [vmem:[%s1655] ss:$2 sm:$0xff]
      %s1657 = scalar_lea.vmem [#allocation4], 240
      %v1658 = vld [vmem:[%s1657] ss:$2 sm:$0xff]
      %s1659 = scalar_lea.vmem [#allocation4], 256
      %v1660 = vld [vmem:[%s1659] ss:$2 sm:$0xff]
      %s1661 = scalar_lea.vmem [#allocation4], 272
      %v1662 = vld [vmem:[%s1661] ss:$2 sm:$0xff]
      %s1663 = scalar_lea.vmem [#allocation4], 288
      %v1664 = vld [vmem:[%s1663] ss:$2 sm:$0xff]
      %s1665 = scalar_lea.vmem [#allocation4], 304
      %v1666 = vld [vmem:[%s1665] ss:$2 sm:$0xff]
      %s1667 = scalar_lea.vmem [#allocation4], 320
      %v1668 = vld [vmem:[%s1667] ss:$2 sm:$0xff]
      %s1669 = scalar_lea.vmem [#allocation4], 336
      %v1670 = vld [vmem:[%s1669] ss:$2 sm:$0xff]
      %s1671 = scalar_lea.vmem [#allocation4], 352
      %v1672 = vld [vmem:[%s1671] ss:$2 sm:$0xff]
      %s1673 = scalar_lea.vmem [#allocation4], 368
      %v1674 = vld [vmem:[%s1673] ss:$2 sm:$0xff]
      %s1675 = scalar_lea.vmem [#allocation4], 384
      %v1676 = vld [vmem:[%s1675] ss:$2 sm:$0xff]
      %s1677 = scalar_lea.vmem [#allocation4], 400
      %v1678 = vld [vmem:[%s1677] ss:$2 sm:$0xff]
      %s1679 = scalar_lea.vmem [#allocation4], 416
      %v1680 = vld [vmem:[%s1679] ss:$2 sm:$0xff]
      %s1681 = scalar_lea.vmem [#allocation4], 432
      %v1682 = vld [vmem:[%s1681] ss:$2 sm:$0xff]
      %s1683 = scalar_lea.vmem [#allocation4], 448
      %v1684 = vld [vmem:[%s1683] ss:$2 sm:$0xff]
      %s1685 = scalar_lea.vmem [#allocation4], 464
      %v1686 = vld [vmem:[%s1685] ss:$2 sm:$0xff]
      %s1687 = scalar_lea.vmem [#allocation4], 480
      %v1688 = vld [vmem:[%s1687] ss:$2 sm:$0xff]
      %s1689 = scalar_lea.vmem [#allocation4], 496
      %v1690 = vld [vmem:[%s1689] ss:$2 sm:$0xff]
      %s1691 = scalar_lea.vmem [#allocation4], 1
      %v1692 = vld [vmem:[%s1691] ss:$2 sm:$0xff]
      %s1693 = scalar_lea.vmem [#allocation4], 17
      %v1694 = vld [vmem:[%s1693] ss:$2 sm:$0xff]
      %s1695 = scalar_lea.vmem [#allocation4], 33
      %v1696 = vld [vmem:[%s1695] ss:$2 sm:$0xff]
      %s1697 = scalar_lea.vmem [#allocation4], 49
      %v1698 = vld [vmem:[%s1697] ss:$2 sm:$0xff]
      %s1699 = scalar_lea.vmem [#allocation4], 65
      %v1700 = vld [vmem:[%s1699] ss:$2 sm:$0xff]
      %s1701 = scalar_lea.vmem [#allocation4], 81
      %v1702 = vld [vmem:[%s1701] ss:$2 sm:$0xff]
      %s1703 = scalar_lea.vmem [#allocation4], 97
      %v1704 = vld [vmem:[%s1703] ss:$2 sm:$0xff]
      %s1705 = scalar_lea.vmem [#allocation4], 113
      %v1706 = vld [vmem:[%s1705] ss:$2 sm:$0xff]
      %s1707 = scalar_lea.vmem [#allocation4], 129
      %v1708 = vld [vmem:[%s1707] ss:$2 sm:$0xff]
      %s1709 = scalar_lea.vmem [#allocation4], 145
      %v1710 = vld [vmem:[%s1709] ss:$2 sm:$0xff]
      %s1711 = scalar_lea.vmem [#allocation4], 161
      %v1712 = vld [vmem:[%s1711] ss:$2 sm:$0xff]
      %s1713 = scalar_lea.vmem [#allocation4], 177
      %v1714 = vld [vmem:[%s1713] ss:$2 sm:$0xff]
      %s1715 = scalar_lea.vmem [#allocation4], 193
      %v1716 = vld [vmem:[%s1715] ss:$2 sm:$0xff]
      %s1717 = scalar_lea.vmem [#allocation4], 209
      %v1718 = vld [vmem:[%s1717] ss:$2 sm:$0xff]
      %s1719 = scalar_lea.vmem [#allocation4], 225
      %v1720 = vld [vmem:[%s1719] ss:$2 sm:$0xff]
      %s1721 = scalar_lea.vmem [#allocation4], 241
      %v1722 = vld [vmem:[%s1721] ss:$2 sm:$0xff]
      %s1723 = scalar_lea.vmem [#allocation4], 257
      %v1724 = vld [vmem:[%s1723] ss:$2 sm:$0xff]
      %s1725 = scalar_lea.vmem [#allocation4], 273
      %v1726 = vld [vmem:[%s1725] ss:$2 sm:$0xff]
      %s1727 = scalar_lea.vmem [#allocation4], 289
      %v1728 = vld [vmem:[%s1727] ss:$2 sm:$0xff]
      %s1729 = scalar_lea.vmem [#allocation4], 305
      %v1730 = vld [vmem:[%s1729] ss:$2 sm:$0xff]
      %s1731 = scalar_lea.vmem [#allocation4], 321
      %v1732 = vld [vmem:[%s1731] ss:$2 sm:$0xff]
      %s1733 = scalar_lea.vmem [#allocation4], 337
      %v1734 = vld [vmem:[%s1733] ss:$2 sm:$0xff]
      %s1735 = scalar_lea.vmem [#allocation4], 353
      %v1736 = vld [vmem:[%s1735] ss:$2 sm:$0xff]
      %s1737 = scalar_lea.vmem [#allocation4], 369
      %v1738 = vld [vmem:[%s1737] ss:$2 sm:$0xff]
      %s1739 = scalar_lea.vmem [#allocation4], 385
      %v1740 = vld [vmem:[%s1739] ss:$2 sm:$0xff]
      %s1741 = scalar_lea.vmem [#allocation4], 401
      %v1742 = vld [vmem:[%s1741] ss:$2 sm:$0xff]
      %s1743 = scalar_lea.vmem [#allocation4], 417
      %v1744 = vld [vmem:[%s1743] ss:$2 sm:$0xff]
      %s1745 = scalar_lea.vmem [#allocation4], 433
      %v1746 = vld [vmem:[%s1745] ss:$2 sm:$0xff]
      %s1747 = scalar_lea.vmem [#allocation4], 449
      %v1748 = vld [vmem:[%s1747] ss:$2 sm:$0xff]
      %s1749 = scalar_lea.vmem [#allocation4], 465
      %v1750 = vld [vmem:[%s1749] ss:$2 sm:$0xff]
      %s1751 = scalar_lea.vmem [#allocation4], 481
      %v1752 = vld [vmem:[%s1751] ss:$2 sm:$0xff]
      %s1753 = scalar_lea.vmem [#allocation4], 497
      %v1754 = vld [vmem:[%s1753] ss:$2 sm:$0xff]
      %v1755 = vmax.f32 %v1628, %v1692
      %v1756 = vmax.f32 %v1630, %v1694
      %v1757 = vmax.f32 %v1632, %v1696
      %v1758 = vmax.f32 %v1634, %v1698
      %v1759 = vmax.f32 %v1636, %v1700
      %v1760 = vmax.f32 %v1638, %v1702
      %v1761 = vmax.f32 %v1640, %v1704
      %v1762 = vmax.f32 %v1642, %v1706
      %v1763 = vmax.f32 %v1644, %v1708
      %v1764 = vmax.f32 %v1646, %v1710
      %v1765 = vmax.f32 %v1648, %v1712
      %v1766 = vmax.f32 %v1650, %v1714
      %v1767 = vmax.f32 %v1652, %v1716
      %v1768 = vmax.f32 %v1654, %v1718
      %v1769 = vmax.f32 %v1656, %v1720
      %v1770 = vmax.f32 %v1658, %v1722
      %v1771 = vmax.f32 %v1660, %v1724
      %v1772 = vmax.f32 %v1662, %v1726
      %v1773 = vmax.f32 %v1664, %v1728
      %v1774 = vmax.f32 %v1666, %v1730
      %v1775 = vmax.f32 %v1668, %v1732
      %v1776 = vmax.f32 %v1670, %v1734
      %v1777 = vmax.f32 %v1672, %v1736
      %v1778 = vmax.f32 %v1674, %v1738
      %v1779 = vmax.f32 %v1676, %v1740
      %v1780 = vmax.f32 %v1678, %v1742
      %v1781 = vmax.f32 %v1680, %v1744
      %v1782 = vmax.f32 %v1682, %v1746
      %v1783 = vmax.f32 %v1684, %v1748
      %v1784 = vmax.f32 %v1686, %v1750
      %v1785 = vmax.f32 %v1688, %v1752
      %v1786 = vmax.f32 %v1690, %v1754
      %1787 = vst [vmem:[#allocation2] sm:$0xf] 0
      %1788 = vst [vmem:[#allocation2 + $0x4] sm:$0xf] 0
      %1789 = vst [vmem:[#allocation2 + $0x8] sm:$0xf] 0
      %1790 = vst [vmem:[#allocation2 + $0xc] sm:$0xf] 0
      %s1791 = scalar_lea.vmem [#allocation2], 272
      %1792 = vst [vmem:[%s1791] sm:$0xf] 0
      %1793 = vst [vmem:[%s1791 + $0x4] sm:$0xf] 0
      %1794 = vst [vmem:[%s1791 + $0x8] sm:$0xf] 0
      %1795 = vst [vmem:[%s1791 + $0xc] sm:$0xf] 0
      %1796 = vst [vmem:[%s1791 + $0x10] sm:$0xf] 0
      %1797 = vst [vmem:[%s1791 + $0x14] sm:$0xf] 0
      %1798 = vst [vmem:[%s1791 + $0x18] sm:$0xf] 0
      %1799 = vst [vmem:[%s1791 + $0x1c] sm:$0xf] 0
      %vm1800 = vcmask 1040384
      %vm1801 = vsmask.f32 256
      %vm1802 = vmand %vm1800, %vm1801
      %v1803 = vld [vmem:[#allocation2] sm:$0x1]
      %v1804 = vsel %vm1802, 0, %v1803
      %1805 = vst [vmem:[#allocation2] sm:$0x1] %v1804
      %v1806 = vld [vmem:[#allocation2 + $0x10] sm:$0x1]
      %v1807 = vsel %vm1802, 0, %v1806
      %1808 = vst [vmem:[#allocation2 + $0x10] sm:$0x1] %v1807
      %v1809 = vld [vmem:[#allocation2 + $0x20] sm:$0x1]
      %v1810 = vsel %vm1802, 0, %v1809
      %1811 = vst [vmem:[#allocation2 + $0x20] sm:$0x1] %v1810
      %v1812 = vld [vmem:[#allocation2 + $0x30] sm:$0x1]
      %v1813 = vsel %vm1802, 0, %v1812
      %1814 = vst [vmem:[#allocation2 + $0x30] sm:$0x1] %v1813
      %v1815 = vld [vmem:[#allocation2 + $0x40] sm:$0x1]
      %v1816 = vsel %vm1802, 0, %v1815
      %1817 = vst [vmem:[#allocation2 + $0x40] sm:$0x1] %v1816
      %v1818 = vld [vmem:[#allocation2 + $0x50] sm:$0x1]
      %v1819 = vsel %vm1802, 0, %v1818
      %1820 = vst [vmem:[#allocation2 + $0x50] sm:$0x1] %v1819
      %v1821 = vld [vmem:[#allocation2 + $0x60] sm:$0x1]
      %v1822 = vsel %vm1802, 0, %v1821
      %1823 = vst [vmem:[#allocation2 + $0x60] sm:$0x1] %v1822
      %v1824 = vld [vmem:[#allocation2 + $0x70] sm:$0x1]
      %v1825 = vsel %vm1802, 0, %v1824
      %1826 = vst [vmem:[#allocation2 + $0x70] sm:$0x1] %v1825
      %v1827 = vld [vmem:[#allocation2 + $0x80] sm:$0x1]
      %v1828 = vsel %vm1802, 0, %v1827
      %1829 = vst [vmem:[#allocation2 + $0x80] sm:$0x1] %v1828
      %v1830 = vld [vmem:[#allocation2 + $0x90] sm:$0x1]
      %v1831 = vsel %vm1802, 0, %v1830
      %1832 = vst [vmem:[#allocation2 + $0x90] sm:$0x1] %v1831
      %v1833 = vld [vmem:[#allocation2 + $0xa0] sm:$0x1]
      %v1834 = vsel %vm1802, 0, %v1833
      %1835 = vst [vmem:[#allocation2 + $0xa0] sm:$0x1] %v1834
      %v1836 = vld [vmem:[#allocation2 + $0xb0] sm:$0x1]
      %v1837 = vsel %vm1802, 0, %v1836
      %1838 = vst [vmem:[#allocation2 + $0xb0] sm:$0x1] %v1837
      %v1839 = vld [vmem:[#allocation2 + $0xc0] sm:$0x1]
      %v1840 = vsel %vm1802, 0, %v1839
      %1841 = vst [vmem:[#allocation2 + $0xc0] sm:$0x1] %v1840
      %v1842 = vld [vmem:[#allocation2 + $0xd0] sm:$0x1]
      %v1843 = vsel %vm1802, 0, %v1842
      %1844 = vst [vmem:[#allocation2 + $0xd0] sm:$0x1] %v1843
      %v1845 = vld [vmem:[#allocation2 + $0xe0] sm:$0x1]
      %v1846 = vsel %vm1802, 0, %v1845
      %1847 = vst [vmem:[#allocation2 + $0xe0] sm:$0x1] %v1846
      %v1848 = vld [vmem:[#allocation2 + $0xf0] sm:$0x1]
      %v1849 = vsel %vm1802, 0, %v1848
      %1850 = vst [vmem:[#allocation2 + $0xf0] sm:$0x1] %v1849
      %v1851 = vld [vmem:[#allocation2 + $0x100] sm:$0x1]
      %v1852 = vsel %vm1802, 0, %v1851
      %1853 = vst [vmem:[#allocation2 + $0x100] sm:$0x1] %v1852
      %v1854 = vld [vmem:[#allocation2 + $0x110] sm:$0x1]
      %v1855 = vsel %vm1802, 0, %v1854
      %1856 = vst [vmem:[#allocation2 + $0x110] sm:$0x1] %v1855
      %v1857 = vld [vmem:[#allocation2 + $0x120] sm:$0x1]
      %v1858 = vsel %vm1802, 0, %v1857
      %1859 = vst [vmem:[#allocation2 + $0x120] sm:$0x1] %v1858
      %vm1860 = vcmask 1043456
      %vm1861 = vsmask.f32 7938
      %vm1862 = vmand %vm1860, %vm1861
      %v1863 = vld [vmem:[#allocation2 + $0x8] sm:$0xf]
      %v1864 = vsel %vm1862, 0, %v1863
      %1865 = vst [vmem:[#allocation2 + $0x8] sm:$0xf] %v1864
      %1866 = vst [vmem:[#allocation2 + $0xc] sm:$0xf] 0
      %v1867 = vld [vmem:[#allocation2 + $0x18] sm:$0xf]
      %v1868 = vsel %vm1862, 0, %v1867
      %1869 = vst [vmem:[#allocation2 + $0x18] sm:$0xf] %v1868
      %1870 = vst [vmem:[#allocation2 + $0x1c] sm:$0xf] 0
      %v1871 = vld [vmem:[#allocation2 + $0x28] sm:$0xf]
      %v1872 = vsel %vm1862, 0, %v1871
      %1873 = vst [vmem:[#allocation2 + $0x28] sm:$0xf] %v1872
      %1874 = vst [vmem:[#allocation2 + $0x2c] sm:$0xf] 0
      %v1875 = vld [vmem:[#allocation2 + $0x38] sm:$0xf]
      %v1876 = vsel %vm1862, 0, %v1875
      %1877 = vst [vmem:[#allocation2 + $0x38] sm:$0xf] %v1876
      %1878 = vst [vmem:[#allocation2 + $0x3c] sm:$0xf] 0
      %v1879 = vld [vmem:[#allocation2 + $0x48] sm:$0xf]
      %v1880 = vsel %vm1862, 0, %v1879
      %1881 = vst [vmem:[#allocation2 + $0x48] sm:$0xf] %v1880
      %1882 = vst [vmem:[#allocation2 + $0x4c] sm:$0xf] 0
      %v1883 = vld [vmem:[#allocation2 + $0x58] sm:$0xf]
      %v1884 = vsel %vm1862, 0, %v1883
      %1885 = vst [vmem:[#allocation2 + $0x58] sm:$0xf] %v1884
      %1886 = vst [vmem:[#allocation2 + $0x5c] sm:$0xf] 0
      %v1887 = vld [vmem:[#allocation2 + $0x68] sm:$0xf]
      %v1888 = vsel %vm1862, 0, %v1887
      %1889 = vst [vmem:[#allocation2 + $0x68] sm:$0xf] %v1888
      %1890 = vst [vmem:[#allocation2 + $0x6c] sm:$0xf] 0
      %v1891 = vld [vmem:[#allocation2 + $0x78] sm:$0xf]
      %v1892 = vsel %vm1862, 0, %v1891
      %1893 = vst [vmem:[#allocation2 + $0x78] sm:$0xf] %v1892
      %1894 = vst [vmem:[#allocation2 + $0x7c] sm:$0xf] 0
      %v1895 = vld [vmem:[#allocation2 + $0x88] sm:$0xf]
      %v1896 = vsel %vm1862, 0, %v1895
      %1897 = vst [vmem:[#allocation2 + $0x88] sm:$0xf] %v1896
      %1898 = vst [vmem:[#allocation2 + $0x8c] sm:$0xf] 0
      %v1899 = vld [vmem:[#allocation2 + $0x98] sm:$0xf]
      %v1900 = vsel %vm1862, 0, %v1899
      %1901 = vst [vmem:[#allocation2 + $0x98] sm:$0xf] %v1900
      %1902 = vst [vmem:[#allocation2 + $0x9c] sm:$0xf] 0
      %v1903 = vld [vmem:[#allocation2 + $0xa8] sm:$0xf]
      %v1904 = vsel %vm1862, 0, %v1903
      %1905 = vst [vmem:[#allocation2 + $0xa8] sm:$0xf] %v1904
      %1906 = vst [vmem:[#allocation2 + $0xac] sm:$0xf] 0
      %v1907 = vld [vmem:[#allocation2 + $0xb8] sm:$0xf]
      %v1908 = vsel %vm1862, 0, %v1907
      %1909 = vst [vmem:[#allocation2 + $0xb8] sm:$0xf] %v1908
      %1910 = vst [vmem:[#allocation2 + $0xbc] sm:$0xf] 0
      %v1911 = vld [vmem:[#allocation2 + $0xc8] sm:$0xf]
      %v1912 = vsel %vm1862, 0, %v1911
      %1913 = vst [vmem:[#allocation2 + $0xc8] sm:$0xf] %v1912
      %1914 = vst [vmem:[#allocation2 + $0xcc] sm:$0xf] 0
      %v1915 = vld [vmem:[#allocation2 + $0xd8] sm:$0xf]
      %v1916 = vsel %vm1862, 0, %v1915
      %1917 = vst [vmem:[#allocation2 + $0xd8] sm:$0xf] %v1916
      %1918 = vst [vmem:[#allocation2 + $0xdc] sm:$0xf] 0
      %v1919 = vld [vmem:[#allocation2 + $0xe8] sm:$0xf]
      %v1920 = vsel %vm1862, 0, %v1919
      %1921 = vst [vmem:[#allocation2 + $0xe8] sm:$0xf] %v1920
      %1922 = vst [vmem:[#allocation2 + $0xec] sm:$0xf] 0
      %v1923 = vld [vmem:[#allocation2 + $0xf8] sm:$0xf]
      %v1924 = vsel %vm1862, 0, %v1923
      %1925 = vst [vmem:[#allocation2 + $0xf8] sm:$0xf] %v1924
      %1926 = vst [vmem:[#allocation2 + $0xfc] sm:$0xf] 0
      %v1927 = vld [vmem:[#allocation2 + $0x108] sm:$0xf]
      %v1928 = vsel %vm1862, 0, %v1927
      %1929 = vst [vmem:[#allocation2 + $0x108] sm:$0xf] %v1928
      %1930 = vst [vmem:[#allocation2 + $0x10c] sm:$0xf] 0
      %v1931 = vld [vmem:[#allocation2 + $0x118] sm:$0xf]
      %v1932 = vsel %vm1862, 0, %v1931
      %1933 = vst [vmem:[#allocation2 + $0x118] sm:$0xf] %v1932
      %1934 = vst [vmem:[#allocation2 + $0x11c] sm:$0xf] 0
      %v1935 = vld [vmem:[#allocation2 + $0x128] sm:$0xf]
      %v1936 = vsel %vm1862, 0, %v1935
      %1937 = vst [vmem:[#allocation2 + $0x128] sm:$0xf] %v1936
      %1938 = vst [vmem:[#allocation2 + $0x12c] sm:$0xf] 0
      %v1939 = vpack.c.bf16 %v1755, %v1755
      %v1940 = vpack.c.bf16 %v1756, %v1756
      %v1941 = vpack.c.bf16 %v1757, %v1757
      %v1942 = vpack.c.bf16 %v1758, %v1758
      %v1943 = vpack.c.bf16 %v1759, %v1759
      %v1944 = vpack.c.bf16 %v1760, %v1760
      %v1945 = vpack.c.bf16 %v1761, %v1761
      %v1946 = vpack.c.bf16 %v1762, %v1762
      %v1947 = vpack.c.bf16 %v1763, %v1763
      %v1948 = vpack.c.bf16 %v1764, %v1764
      %v1949 = vpack.c.bf16 %v1765, %v1765
      %v1950 = vpack.c.bf16 %v1766, %v1766
      %v1951 = vpack.c.bf16 %v1767, %v1767
      %v1952 = vpack.c.bf16 %v1768, %v1768
      %v1953 = vpack.c.bf16 %v1769, %v1769
      %v1954 = vpack.c.bf16 %v1770, %v1770
      %v1955 = vpack.c.bf16 %v1771, %v1771
      %v1956 = vpack.c.bf16 %v1772, %v1772
      %v1957 = vpack.c.bf16 %v1773, %v1773
      %v1958 = vpack.c.bf16 %v1774, %v1774
      %v1959 = vpack.c.bf16 %v1775, %v1775
      %v1960 = vpack.c.bf16 %v1776, %v1776
      %v1961 = vpack.c.bf16 %v1777, %v1777
      %v1962 = vpack.c.bf16 %v1778, %v1778
      %v1963 = vpack.c.bf16 %v1779, %v1779
      %v1964 = vpack.c.bf16 %v1780, %v1780
      %v1965 = vpack.c.bf16 %v1781, %v1781
      %v1966 = vpack.c.bf16 %v1782, %v1782
      %v1967 = vpack.c.bf16 %v1783, %v1783
      %v1968 = vpack.c.bf16 %v1784, %v1784
      %v1969 = vpack.c.bf16 %v1785, %v1785
      %v1970 = vpack.c.bf16 %v1786, %v1786
      %vm1971 = vsmask.f32 4368
      %vm1972 = vmor %vm1801, %vm1971
      %v1974 = vshrl.u32 %v1939, 16
      %v1976 = vrot.slane %v1974, 7
      %v1977 = vshll.u32 %v1939, 16
      %v1979 = vor.u32 %v1976, %v1977
      %v1980 = vrot.slane %v1976, 4
      %v1982 = vshrl.u32 %v1940, 16
      %v1984 = vrot.slane %v1982, 7
      %v1985 = vshll.u32 %v1940, 16
      %v1987 = vor.u32 %v1984, %v1985
      %v1988 = vsel %vm1972, %v1980, %v1987
      %v1989 = vrot.slane %v1984, 4
      %v1991 = vshrl.u32 %v1941, 16
      %v1993 = vrot.slane %v1991, 7
      %v1994 = vshll.u32 %v1941, 16
      %v1996 = vor.u32 %v1993, %v1994
      %v1997 = vrot.slane %v1993, 4
      %v1999 = vshrl.u32 %v1942, 16
      %v2001 = vrot.slane %v1999, 7
      %v2002 = vshll.u32 %v1942, 16
      %v2004 = vor.u32 %v2001, %v2002
      %v2005 = vsel %vm1972, %v1997, %v2004
      %v2006 = vrot.slane %v2001, 4
      %v2008 = vshrl.u32 %v1943, 16
      %v2010 = vrot.slane %v2008, 7
      %v2011 = vshll.u32 %v1943, 16
      %v2013 = vor.u32 %v2010, %v2011
      %v2014 = vrot.slane %v2010, 4
      %v2016 = vshrl.u32 %v1944, 16
      %v2018 = vrot.slane %v2016, 7
      %v2019 = vshll.u32 %v1944, 16
      %v2021 = vor.u32 %v2018, %v2019
      %v2022 = vsel %vm1972, %v2014, %v2021
      %v2023 = vrot.slane %v2018, 4
      %v2025 = vshrl.u32 %v1945, 16
      %v2027 = vrot.slane %v2025, 7
      %v2028 = vshll.u32 %v1945, 16
      %v2030 = vor.u32 %v2027, %v2028
      %v2031 = vrot.slane %v2027, 4
      %v2033 = vshrl.u32 %v1946, 16
      %v2035 = vrot.slane %v2033, 7
      %v2036 = vshll.u32 %v1946, 16
      %v2038 = vor.u32 %v2035, %v2036
      %v2039 = vsel %vm1972, %v2031, %v2038
      %v2040 = vrot.slane %v2035, 4
      %v2042 = vshrl.u32 %v1947, 16
      %v2044 = vrot.slane %v2042, 7
      %v2045 = vshll.u32 %v1947, 16
      %v2047 = vor.u32 %v2044, %v2045
      %v2048 = vrot.slane %v2044, 4
      %v2050 = vshrl.u32 %v1948, 16
      %v2052 = vrot.slane %v2050, 7
      %v2053 = vshll.u32 %v1948, 16
      %v2055 = vor.u32 %v2052, %v2053
      %v2056 = vsel %vm1972, %v2048, %v2055
      %v2057 = vrot.slane %v2052, 4
      %v2059 = vshrl.u32 %v1949, 16
      %v2061 = vrot.slane %v2059, 7
      %v2062 = vshll.u32 %v1949, 16
      %v2064 = vor.u32 %v2061, %v2062
      %v2065 = vrot.slane %v2061, 4
      %v2067 = vshrl.u32 %v1950, 16
      %v2069 = vrot.slane %v2067, 7
      %v2070 = vshll.u32 %v1950, 16
      %v2072 = vor.u32 %v2069, %v2070
      %v2073 = vsel %vm1972, %v2065, %v2072
      %v2074 = vrot.slane %v2069, 4
      %v2076 = vshrl.u32 %v1951, 16
      %v2078 = vrot.slane %v2076, 7
      %v2079 = vshll.u32 %v1951, 16
      %v2081 = vor.u32 %v2078, %v2079
      %v2082 = vrot.slane %v2078, 4
      %v2084 = vshrl.u32 %v1952, 16
      %v2086 = vrot.slane %v2084, 7
      %v2087 = vshll.u32 %v1952, 16
      %v2089 = vor.u32 %v2086, %v2087
      %v2090 = vsel %vm1972, %v2082, %v2089
      %v2091 = vrot.slane %v2086, 4
      %v2093 = vshrl.u32 %v1953, 16
      %v2095 = vrot.slane %v2093, 7
      %v2096 = vshll.u32 %v1953, 16
      %v2098 = vor.u32 %v2095, %v2096
      %v2099 = vrot.slane %v2095, 4
      %v2101 = vshrl.u32 %v1954, 16
      %v2103 = vrot.slane %v2101, 7
      %v2104 = vshll.u32 %v1954, 16
      %v2106 = vor.u32 %v2103, %v2104
      %v2107 = vsel %vm1972, %v2099, %v2106
      %v2108 = vrot.slane %v2103, 4
      %v2110 = vshrl.u32 %v1955, 16
      %v2112 = vrot.slane %v2110, 7
      %v2113 = vshll.u32 %v1955, 16
      %v2115 = vor.u32 %v2112, %v2113
      %v2116 = vrot.slane %v2112, 4
      %v2118 = vshrl.u32 %v1956, 16
      %v2120 = vrot.slane %v2118, 7
      %v2121 = vshll.u32 %v1956, 16
      %v2123 = vor.u32 %v2120, %v2121
      %v2124 = vsel %vm1972, %v2116, %v2123
      %v2125 = vrot.slane %v2120, 4
      %v2127 = vshrl.u32 %v1957, 16
      %v2129 = vrot.slane %v2127, 7
      %v2130 = vshll.u32 %v1957, 16
      %v2132 = vor.u32 %v2129, %v2130
      %v2133 = vrot.slane %v2129, 4
      %v2135 = vshrl.u32 %v1958, 16
      %v2137 = vrot.slane %v2135, 7
      %v2138 = vshll.u32 %v1958, 16
      %v2140 = vor.u32 %v2137, %v2138
      %v2141 = vsel %vm1972, %v2133, %v2140
      %v2142 = vrot.slane %v2137, 4
      %v2144 = vshrl.u32 %v1959, 16
      %v2146 = vrot.slane %v2144, 7
      %v2147 = vshll.u32 %v1959, 16
      %v2149 = vor.u32 %v2146, %v2147
      %v2150 = vrot.slane %v2146, 4
      %v2152 = vshrl.u32 %v1960, 16
      %v2154 = vrot.slane %v2152, 7
      %v2155 = vshll.u32 %v1960, 16
      %v2157 = vor.u32 %v2154, %v2155
      %v2158 = vsel %vm1972, %v2150, %v2157
      %v2159 = vrot.slane %v2154, 4
      %v2161 = vshrl.u32 %v1961, 16
      %v2163 = vrot.slane %v2161, 7
      %v2164 = vshll.u32 %v1961, 16
      %v2166 = vor.u32 %v2163, %v2164
      %v2167 = vrot.slane %v2163, 4
      %v2169 = vshrl.u32 %v1962, 16
      %v2171 = vrot.slane %v2169, 7
      %v2172 = vshll.u32 %v1962, 16
      %v2174 = vor.u32 %v2171, %v2172
      %v2175 = vsel %vm1972, %v2167, %v2174
      %v2176 = vrot.slane %v2171, 4
      %v2178 = vshrl.u32 %v1963, 16
      %v2180 = vrot.slane %v2178, 7
      %v2181 = vshll.u32 %v1963, 16
      %v2183 = vor.u32 %v2180, %v2181
      %v2184 = vrot.slane %v2180, 4
      %v2186 = vshrl.u32 %v1964, 16
      %v2188 = vrot.slane %v2186, 7
      %v2189 = vshll.u32 %v1964, 16
      %v2191 = vor.u32 %v2188, %v2189
      %v2192 = vsel %vm1972, %v2184, %v2191
      %v2193 = vrot.slane %v2188, 4
      %v2195 = vshrl.u32 %v1965, 16
      %v2197 = vrot.slane %v2195, 7
      %v2198 = vshll.u32 %v1965, 16
      %v2200 = vor.u32 %v2197, %v2198
      %v2201 = vrot.slane %v2197, 4
      %v2203 = vshrl.u32 %v1966, 16
      %v2205 = vrot.slane %v2203, 7
      %v2206 = vshll.u32 %v1966, 16
      %v2208 = vor.u32 %v2205, %v2206
      %v2209 = vsel %vm1972, %v2201, %v2208
      %v2210 = vrot.slane %v2205, 4
      %v2212 = vshrl.u32 %v1967, 16
      %v2214 = vrot.slane %v2212, 7
      %v2215 = vshll.u32 %v1967, 16
      %v2217 = vor.u32 %v2214, %v2215
      %v2218 = vrot.slane %v2214, 4
      %v2220 = vshrl.u32 %v1968, 16
      %v2222 = vrot.slane %v2220, 7
      %v2223 = vshll.u32 %v1968, 16
      %v2225 = vor.u32 %v2222, %v2223
      %v2226 = vsel %vm1972, %v2218, %v2225
      %v2227 = vrot.slane %v2222, 4
      %v2229 = vshrl.u32 %v1969, 16
      %v2231 = vrot.slane %v2229, 7
      %v2232 = vshll.u32 %v1969, 16
      %v2234 = vor.u32 %v2231, %v2232
      %v2235 = vrot.slane %v2231, 4
      %v2237 = vshrl.u32 %v1970, 16
      %v2239 = vrot.slane %v2237, 7
      %v2240 = vshll.u32 %v1970, 16
      %v2242 = vor.u32 %v2239, %v2240
      %v2243 = vsel %vm1972, %v2235, %v2242
      %v2244 = vrot.slane %v2239, 4
      %s2293 = scalar_lea.vmem [#allocation2], 16
      %v2294 = vld [vmem:[%s2293] sm:$0xf]
      %v2295 = vsel %vm1862, %v1979, %v2294
      %2296 = vst [vmem:[%s2293] sm:$0xf] %v2295
      %2297 = vst [vmem:[%s2293 + $0x4] sm:$0xf] %v1988
      %v2298 = vld [vmem:[%s2293 + $0x8] sm:$0x1]
      %v2299 = vsel %vm1802, %v1989, %v2298
      %2300 = vst [vmem:[%s2293 + $0x8] sm:$0x1] %v2299
      %v2301 = vld [vmem:[%s2293 + $0x10] sm:$0xf]
      %v2302 = vsel %vm1862, %v1996, %v2301
      %2303 = vst [vmem:[%s2293 + $0x10] sm:$0xf] %v2302
      %2304 = vst [vmem:[%s2293 + $0x14] sm:$0xf] %v2005
      %v2305 = vld [vmem:[%s2293 + $0x18] sm:$0x1]
      %v2306 = vsel %vm1802, %v2006, %v2305
      %2307 = vst [vmem:[%s2293 + $0x18] sm:$0x1] %v2306
      %v2308 = vld [vmem:[%s2293 + $0x20] sm:$0xf]
      %v2309 = vsel %vm1862, %v2013, %v2308
      %2310 = vst [vmem:[%s2293 + $0x20] sm:$0xf] %v2309
      %2311 = vst [vmem:[%s2293 + $0x24] sm:$0xf] %v2022
      %v2312 = vld [vmem:[%s2293 + $0x28] sm:$0x1]
      %v2313 = vsel %vm1802, %v2023, %v2312
      %2314 = vst [vmem:[%s2293 + $0x28] sm:$0x1] %v2313
      %v2315 = vld [vmem:[%s2293 + $0x30] sm:$0xf]
      %v2316 = vsel %vm1862, %v2030, %v2315
      %2317 = vst [vmem:[%s2293 + $0x30] sm:$0xf] %v2316
      %2318 = vst [vmem:[%s2293 + $0x34] sm:$0xf] %v2039
      %v2319 = vld [vmem:[%s2293 + $0x38] sm:$0x1]
      %v2320 = vsel %vm1802, %v2040, %v2319
      %2321 = vst [vmem:[%s2293 + $0x38] sm:$0x1] %v2320
      %v2322 = vld [vmem:[%s2293 + $0x40] sm:$0xf]
      %v2323 = vsel %vm1862, %v2047, %v2322
      %2324 = vst [vmem:[%s2293 + $0x40] sm:$0xf] %v2323
      %2325 = vst [vmem:[%s2293 + $0x44] sm:$0xf] %v2056
      %v2326 = vld [vmem:[%s2293 + $0x48] sm:$0x1]
      %v2327 = vsel %vm1802, %v2057, %v2326
      %2328 = vst [vmem:[%s2293 + $0x48] sm:$0x1] %v2327
      %v2329 = vld [vmem:[%s2293 + $0x50] sm:$0xf]
      %v2330 = vsel %vm1862, %v2064, %v2329
      %2331 = vst [vmem:[%s2293 + $0x50] sm:$0xf] %v2330
      %2332 = vst [vmem:[%s2293 + $0x54] sm:$0xf] %v2073
      %v2333 = vld [vmem:[%s2293 + $0x58] sm:$0x1]
      %v2334 = vsel %vm1802, %v2074, %v2333
      %2335 = vst [vmem:[%s2293 + $0x58] sm:$0x1] %v2334
      %v2336 = vld [vmem:[%s2293 + $0x60] sm:$0xf]
      %v2337 = vsel %vm1862, %v2081, %v2336
      %2338 = vst [vmem:[%s2293 + $0x60] sm:$0xf] %v2337
      %2339 = vst [vmem:[%s2293 + $0x64] sm:$0xf] %v2090
      %v2340 = vld [vmem:[%s2293 + $0x68] sm:$0x1]
      %v2341 = vsel %vm1802, %v2091, %v2340
      %2342 = vst [vmem:[%s2293 + $0x68] sm:$0x1] %v2341
      %v2343 = vld [vmem:[%s2293 + $0x70] sm:$0xf]
      %v2344 = vsel %vm1862, %v2098, %v2343
      %2345 = vst [vmem:[%s2293 + $0x70] sm:$0xf] %v2344
      %2346 = vst [vmem:[%s2293 + $0x74] sm:$0xf] %v2107
      %v2347 = vld [vmem:[%s2293 + $0x78] sm:$0x1]
      %v2348 = vsel %vm1802, %v2108, %v2347
      %2349 = vst [vmem:[%s2293 + $0x78] sm:$0x1] %v2348
      %v2350 = vld [vmem:[%s2293 + $0x80] sm:$0xf]
      %v2351 = vsel %vm1862, %v2115, %v2350
      %2352 = vst [vmem:[%s2293 + $0x80] sm:$0xf] %v2351
      %2353 = vst [vmem:[%s2293 + $0x84] sm:$0xf] %v2124
      %v2354 = vld [vmem:[%s2293 + $0x88] sm:$0x1]
      %v2355 = vsel %vm1802, %v2125, %v2354
      %2356 = vst [vmem:[%s2293 + $0x88] sm:$0x1] %v2355
      %v2357 = vld [vmem:[%s2293 + $0x90] sm:$0xf]
      %v2358 = vsel %vm1862, %v2132, %v2357
      %2359 = vst [vmem:[%s2293 + $0x90] sm:$0xf] %v2358
      %2360 = vst [vmem:[%s2293 + $0x94] sm:$0xf] %v2141
      %v2361 = vld [vmem:[%s2293 + $0x98] sm:$0x1]
      %v2362 = vsel %vm1802, %v2142, %v2361
      %2363 = vst [vmem:[%s2293 + $0x98] sm:$0x1] %v2362
      %v2364 = vld [vmem:[%s2293 + $0xa0] sm:$0xf]
      %v2365 = vsel %vm1862, %v2149, %v2364
      %2366 = vst [vmem:[%s2293 + $0xa0] sm:$0xf] %v2365
      %2367 = vst [vmem:[%s2293 + $0xa4] sm:$0xf] %v2158
      %v2368 = vld [vmem:[%s2293 + $0xa8] sm:$0x1]
      %v2369 = vsel %vm1802, %v2159, %v2368
      %2370 = vst [vmem:[%s2293 + $0xa8] sm:$0x1] %v2369
      %v2371 = vld [vmem:[%s2293 + $0xb0] sm:$0xf]
      %v2372 = vsel %vm1862, %v2166, %v2371
      %2373 = vst [vmem:[%s2293 + $0xb0] sm:$0xf] %v2372
      %2374 = vst [vmem:[%s2293 + $0xb4] sm:$0xf] %v2175
      %v2375 = vld [vmem:[%s2293 + $0xb8] sm:$0x1]
      %v2376 = vsel %vm1802, %v2176, %v2375
      %2377 = vst [vmem:[%s2293 + $0xb8] sm:$0x1] %v2376
      %v2378 = vld [vmem:[%s2293 + $0xc0] sm:$0xf]
      %v2379 = vsel %vm1862, %v2183, %v2378
      %2380 = vst [vmem:[%s2293 + $0xc0] sm:$0xf] %v2379
      %2381 = vst [vmem:[%s2293 + $0xc4] sm:$0xf] %v2192
      %v2382 = vld [vmem:[%s2293 + $0xc8] sm:$0x1]
      %v2383 = vsel %vm1802, %v2193, %v2382
      %2384 = vst [vmem:[%s2293 + $0xc8] sm:$0x1] %v2383
      %v2385 = vld [vmem:[%s2293 + $0xd0] sm:$0xf]
      %v2386 = vsel %vm1862, %v2200, %v2385
      %2387 = vst [vmem:[%s2293 + $0xd0] sm:$0xf] %v2386
      %2388 = vst [vmem:[%s2293 + $0xd4] sm:$0xf] %v2209
      %v2389 = vld [vmem:[%s2293 + $0xd8] sm:$0x1]
      %v2390 = vsel %vm1802, %v2210, %v2389
      %2391 = vst [vmem:[%s2293 + $0xd8] sm:$0x1] %v2390
      %v2392 = vld [vmem:[%s2293 + $0xe0] sm:$0xf]
      %v2393 = vsel %vm1862, %v2217, %v2392
      %2394 = vst [vmem:[%s2293 + $0xe0] sm:$0xf] %v2393
      %2395 = vst [vmem:[%s2293 + $0xe4] sm:$0xf] %v2226
      %v2396 = vld [vmem:[%s2293 + $0xe8] sm:$0x1]
      %v2397 = vsel %vm1802, %v2227, %v2396
      %2398 = vst [vmem:[%s2293 + $0xe8] sm:$0x1] %v2397
      %v2399 = vld [vmem:[%s2293 + $0xf0] sm:$0xf]
      %v2400 = vsel %vm1862, %v2234, %v2399
      %2401 = vst [vmem:[%s2293 + $0xf0] sm:$0xf] %v2400
      %2402 = vst [vmem:[%s2293 + $0xf4] sm:$0xf] %v2243
      %v2403 = vld [vmem:[%s2293 + $0xf8] sm:$0x1]
      %v2404 = vsel %vm1802, %v2244, %v2403
      %2405 = vst [vmem:[%s2293 + $0xf8] sm:$0x1] %v2404
      %v2406 = vld [vmem:[#allocation2] sm:$0xf]
      %v2407 = vld [vmem:[#allocation2 + $0x4] sm:$0xf]
      %v2408 = vld [vmem:[#allocation2 + $0x8] sm:$0xf]
      %v2409 = vld [vmem:[#allocation2 + $0xc] sm:$0xf]
      %v2410 = vld [vmem:[#allocation2 + $0x10] sm:$0xf]
      %v2411 = vld [vmem:[#allocation2 + $0x14] sm:$0xf]
      %v2412 = vld [vmem:[#allocation2 + $0x18] sm:$0xf]
      %v2413 = vld [vmem:[#allocation2 + $0x1c] sm:$0xf]
      %v2414 = vld [vmem:[#allocation2 + $0x20] sm:$0xf]
      %v2415 = vld [vmem:[#allocation2 + $0x24] sm:$0xf]
      %v2416 = vld [vmem:[#allocation2 + $0x28] sm:$0xf]
      %v2417 = vld [vmem:[#allocation2 + $0x2c] sm:$0xf]
      %v2418 = vld [vmem:[#allocation2 + $0x30] sm:$0xf]
      %v2419 = vld [vmem:[#allocation2 + $0x34] sm:$0xf]
      %v2420 = vld [vmem:[#allocation2 + $0x38] sm:$0xf]
      %v2421 = vld [vmem:[#allocation2 + $0x3c] sm:$0xf]
      %v2422 = vld [vmem:[#allocation2 + $0x40] sm:$0xf]
      %v2423 = vld [vmem:[#allocation2 + $0x44] sm:$0xf]
      %v2424 = vld [vmem:[#allocation2 + $0x48] sm:$0xf]
      %v2425 = vld [vmem:[#allocation2 + $0x4c] sm:$0xf]
      %v2426 = vld [vmem:[#allocation2 + $0x50] sm:$0xf]
      %v2427 = vld [vmem:[#allocation2 + $0x54] sm:$0xf]
      %v2428 = vld [vmem:[#allocation2 + $0x58] sm:$0xf]
      %v2429 = vld [vmem:[#allocation2 + $0x5c] sm:$0xf]
      %v2430 = vld [vmem:[#allocation2 + $0x60] sm:$0xf]
      %v2431 = vld [vmem:[#allocation2 + $0x64] sm:$0xf]
      %v2432 = vld [vmem:[#allocation2 + $0x68] sm:$0xf]
      %v2433 = vld [vmem:[#allocation2 + $0x6c] sm:$0xf]
      %v2434 = vld [vmem:[#allocation2 + $0x70] sm:$0xf]
      %v2435 = vld [vmem:[#allocation2 + $0x74] sm:$0xf]
      %v2436 = vld [vmem:[#allocation2 + $0x78] sm:$0xf]
      %v2437 = vld [vmem:[#allocation2 + $0x7c] sm:$0xf]
      %v2438 = vld [vmem:[#allocation2 + $0x80] sm:$0xf]
      %v2439 = vld [vmem:[#allocation2 + $0x84] sm:$0xf]
      %v2440 = vld [vmem:[#allocation2 + $0x88] sm:$0xf]
      %v2441 = vld [vmem:[#allocation2 + $0x8c] sm:$0xf]
      %v2442 = vld [vmem:[#allocation2 + $0x90] sm:$0xf]
      %v2443 = vld [vmem:[#allocation2 + $0x94] sm:$0xf]
      %v2444 = vld [vmem:[#allocation2 + $0x98] sm:$0xf]
      %v2445 = vld [vmem:[#allocation2 + $0x9c] sm:$0xf]
      %v2446 = vld [vmem:[#allocation2 + $0xa0] sm:$0xf]
      %v2447 = vld [vmem:[#allocation2 + $0xa4] sm:$0xf]
      %v2448 = vld [vmem:[#allocation2 + $0xa8] sm:$0xf]
      %v2449 = vld [vmem:[#allocation2 + $0xac] sm:$0xf]
      %v2450 = vld [vmem:[#allocation2 + $0xb0] sm:$0xf]
      %v2451 = vld [vmem:[#allocation2 + $0xb4] sm:$0xf]
      %v2452 = vld [vmem:[#allocation2 + $0xb8] sm:$0xf]
      %v2453 = vld [vmem:[#allocation2 + $0xbc] sm:$0xf]
      %v2454 = vld [vmem:[#allocation2 + $0xc0] sm:$0xf]
      %v2455 = vld [vmem:[#allocation2 + $0xc4] sm:$0xf]
      %v2456 = vld [vmem:[#allocation2 + $0xc8] sm:$0xf]
      %v2457 = vld [vmem:[#allocation2 + $0xcc] sm:$0xf]
      %v2458 = vld [vmem:[#allocation2 + $0xd0] sm:$0xf]
      %v2459 = vld [vmem:[#allocation2 + $0xd4] sm:$0xf]
      %v2460 = vld [vmem:[#allocation2 + $0xd8] sm:$0xf]
      %v2461 = vld [vmem:[#allocation2 + $0xdc] sm:$0xf]
      %v2462 = vld [vmem:[#allocation2 + $0xe0] sm:$0xf]
      %v2463 = vld [vmem:[#allocation2 + $0xe4] sm:$0xf]
      %v2464 = vld [vmem:[#allocation2 + $0xe8] sm:$0xf]
      %v2465 = vld [vmem:[#allocation2 + $0xec] sm:$0xf]
      %v2466 = vld [vmem:[#allocation2 + $0xf0] sm:$0xf]
      %v2467 = vld [vmem:[#allocation2 + $0xf4] sm:$0xf]
      %v2468 = vld [vmem:[#allocation2 + $0xf8] sm:$0xf]
      %v2469 = vld [vmem:[#allocation2 + $0xfc] sm:$0xf]
      %v2470 = vld [vmem:[#allocation2 + $0x100] sm:$0xf]
      %v2471 = vld [vmem:[#allocation2 + $0x104] sm:$0xf]
      %v2472 = vld [vmem:[#allocation2 + $0x108] sm:$0xf]
      %v2473 = vld [vmem:[#allocation2 + $0x10c] sm:$0xf]
      %v2474 = vld [vmem:[#allocation2 + $0x110] sm:$0xf]
      %v2475 = vld [vmem:[#allocation2 + $0x114] sm:$0xf]
      %v2476 = vld [vmem:[#allocation2 + $0x118] sm:$0xf]
      %v2477 = vld [vmem:[#allocation2 + $0x11c] sm:$0xf]
      %v2478 = vld [vmem:[#allocation2 + $0x120] sm:$0xf]
      %v2479 = vld [vmem:[%s3] sm:$0xf]
      %v2480 = vld [vmem:[%s3 + $0x4] sm:$0xf]
      %v2481 = vld [vmem:[%s3 + $0x8] sm:$0xf]
      %v2482 = vld [vmem:[%s3 + $0xc] sm:$0xf]
      %v2483 = vld [vmem:[%s3 + $0x10] sm:$0xf]
      %v2484 = vld [vmem:[%s3 + $0x14] sm:$0xf]
      %v2485 = vld [vmem:[%s3 + $0x18] sm:$0xf]
      %v2486 = vld [vmem:[%s3 + $0x1c] sm:$0xf]
      %v2487 = vld [vmem:[%s3 + $0x20] sm:$0xf]
      %v2488 = vld [vmem:[%s3 + $0x24] sm:$0xf]
      %v2489 = vld [vmem:[%s3 + $0x28] sm:$0xf]
      %v2490 = vld [vmem:[%s3 + $0x2c] sm:$0xf]
      %v2491 = vld [vmem:[%s3 + $0x30] sm:$0xf]
      %v2492 = vld [vmem:[%s3 + $0x34] sm:$0xf]
      %v2493 = vld [vmem:[%s3 + $0x38] sm:$0xf]
      %v2494 = vld [vmem:[%s3 + $0x3c] sm:$0xf]
      %s2495 = scalar_lea.vmem %s3, 192
      %v2496 = vld [vmem:[%s2495] sm:$0xf]
      %v2497 = vld [vmem:[%s2495 + $0x4] sm:$0xf]
      %v2498 = vld [vmem:[%s2495 + $0x8] sm:$0xf]
      %v2499 = vld [vmem:[%s2495 + $0xc] sm:$0xf]
      %v2500 = vld [vmem:[%s2495 + $0x10] sm:$0xf]
      %v2501 = vld [vmem:[%s2495 + $0x14] sm:$0xf]
      %v2502 = vld [vmem:[%s2495 + $0x18] sm:$0xf]
      %v2503 = vld [vmem:[%s2495 + $0x1c] sm:$0xf]
      %v2504 = vld [vmem:[%s2495 + $0x20] sm:$0xf]
      %v2505 = vld [vmem:[%s2495 + $0x24] sm:$0xf]
      %v2506 = vld [vmem:[%s2495 + $0x28] sm:$0xf]
      %v2507 = vld [vmem:[%s2495 + $0x2c] sm:$0xf]
      %v2508 = vld [vmem:[%s2495 + $0x30] sm:$0xf]
      %v2509 = vld [vmem:[%s2495 + $0x34] sm:$0xf]
      %v2510 = vld [vmem:[%s2495 + $0x38] sm:$0xf]
      %v2511 = vld [vmem:[%s2495 + $0x3c] sm:$0xf]
      %v2576 = vunpack.c.l.b16 %v2410
      %v2577 = vunpack.c.l.b16 %v2411
      %v2578 = vunpack.c.l.b16 %v2412
      %v2579 = vunpack.c.l.b16 %v2413
      %v2580 = vunpack.c.l.b16 %v2414
      %v2581 = vunpack.c.l.b16 %v2415
      %v2582 = vunpack.c.l.b16 %v2416
      %v2583 = vunpack.c.l.b16 %v2417
      %v2584 = vunpack.c.l.b16 %v2418
      %v2585 = vunpack.c.l.b16 %v2419
      %v2586 = vunpack.c.l.b16 %v2420
      %v2587 = vunpack.c.l.b16 %v2421
      %v2588 = vunpack.c.l.b16 %v2422
      %v2589 = vunpack.c.l.b16 %v2423
      %v2590 = vunpack.c.l.b16 %v2424
      %v2591 = vunpack.c.l.b16 %v2425
      %v2592 = vunpack.c.l.b16 %v2426
      %v2593 = vunpack.c.l.b16 %v2427
      %v2594 = vunpack.c.l.b16 %v2428
      %v2595 = vunpack.c.l.b16 %v2429
      %v2596 = vunpack.c.l.b16 %v2430
      %v2597 = vunpack.c.l.b16 %v2431
      %v2598 = vunpack.c.l.b16 %v2432
      %v2599 = vunpack.c.l.b16 %v2433
      %v2600 = vunpack.c.l.b16 %v2434
      %v2601 = vunpack.c.l.b16 %v2435
      %v2602 = vunpack.c.l.b16 %v2436
      %v2603 = vunpack.c.l.b16 %v2437
      %v2604 = vunpack.c.l.b16 %v2438
      %v2605 = vunpack.c.l.b16 %v2439
      %v2606 = vunpack.c.l.b16 %v2440
      %v2607 = vunpack.c.l.b16 %v2441
      %v2608 = vunpack.c.l.b16 %v2442
      %v2609 = vunpack.c.l.b16 %v2443
      %v2610 = vunpack.c.l.b16 %v2444
      %v2611 = vunpack.c.l.b16 %v2445
      %v2612 = vunpack.c.l.b16 %v2446
      %v2613 = vunpack.c.l.b16 %v2447
      %v2614 = vunpack.c.l.b16 %v2448
      %v2615 = vunpack.c.l.b16 %v2449
      %v2616 = vunpack.c.l.b16 %v2450
      %v2617 = vunpack.c.l.b16 %v2451
      %v2618 = vunpack.c.l.b16 %v2452
      %v2619 = vunpack.c.l.b16 %v2453
      %v2620 = vunpack.c.l.b16 %v2454
      %v2621 = vunpack.c.l.b16 %v2455
      %v2622 = vunpack.c.l.b16 %v2456
      %v2623 = vunpack.c.l.b16 %v2457
      %v2624 = vunpack.c.l.b16 %v2458
      %v2625 = vunpack.c.l.b16 %v2459
      %v2626 = vunpack.c.l.b16 %v2460
      %v2627 = vunpack.c.l.b16 %v2461
      %v2628 = vunpack.c.l.b16 %v2462
      %v2629 = vunpack.c.l.b16 %v2463
      %v2630 = vunpack.c.l.b16 %v2464
      %v2631 = vunpack.c.l.b16 %v2465
      %v2632 = vunpack.c.l.b16 %v2466
      %v2633 = vunpack.c.l.b16 %v2467
      %v2634 = vunpack.c.l.b16 %v2468
      %v2635 = vunpack.c.l.b16 %v2469
      %v2636 = vunpack.c.l.b16 %v2470
      %v2637 = vunpack.c.l.b16 %v2471
      %v2638 = vunpack.c.l.b16 %v2472
      %v2639 = vunpack.c.l.b16 %v2473
      %v2640 = vpack.c.b16 %v2577, %v2576
      %v2641 = vpack.c.b16 %v2579, %v2578
      %v2642 = vpack.c.b16 %v2581, %v2580
      %v2643 = vpack.c.b16 %v2583, %v2582
      %v2644 = vpack.c.b16 %v2585, %v2584
      %v2645 = vpack.c.b16 %v2587, %v2586
      %v2646 = vpack.c.b16 %v2589, %v2588
      %v2647 = vpack.c.b16 %v2591, %v2590
      %v2648 = vpack.c.b16 %v2593, %v2592
      %v2649 = vpack.c.b16 %v2595, %v2594
      %v2650 = vpack.c.b16 %v2597, %v2596
      %v2651 = vpack.c.b16 %v2599, %v2598
      %v2652 = vpack.c.b16 %v2601, %v2600
      %v2653 = vpack.c.b16 %v2603, %v2602
      %v2654 = vpack.c.b16 %v2605, %v2604
      %v2655 = vpack.c.b16 %v2607, %v2606
      %v2656 = vpack.c.b16 %v2609, %v2608
      %v2657 = vpack.c.b16 %v2611, %v2610
      %v2658 = vpack.c.b16 %v2613, %v2612
      %v2659 = vpack.c.b16 %v2615, %v2614
      %v2660 = vpack.c.b16 %v2617, %v2616
      %v2661 = vpack.c.b16 %v2619, %v2618
      %v2662 = vpack.c.b16 %v2621, %v2620
      %v2663 = vpack.c.b16 %v2623, %v2622
      %v2664 = vpack.c.b16 %v2625, %v2624
      %v2665 = vpack.c.b16 %v2627, %v2626
      %v2666 = vpack.c.b16 %v2629, %v2628
      %v2667 = vpack.c.b16 %v2631, %v2630
      %v2668 = vpack.c.b16 %v2633, %v2632
      %v2669 = vpack.c.b16 %v2635, %v2634
      %v2670 = vpack.c.b16 %v2637, %v2636
      %v2671 = vpack.c.b16 %v2639, %v2638
      %v2720 = vunpack.c.l.b16 %v2496
      %v2721 = vunpack.c.l.b16 %v2497
      %v2722 = vunpack.c.l.b16 %v2498
      %v2723 = vunpack.c.l.b16 %v2499
      %v2724 = vunpack.c.l.b16 %v2500
      %v2725 = vunpack.c.l.b16 %v2501
      %v2726 = vunpack.c.l.b16 %v2502
      %v2727 = vunpack.c.l.b16 %v2503
      %v2728 = vunpack.c.l.b16 %v2504
      %v2729 = vunpack.c.l.b16 %v2505
      %v2730 = vunpack.c.l.b16 %v2506
      %v2731 = vunpack.c.l.b16 %v2507
      %v2732 = vunpack.c.l.b16 %v2508
      %v2733 = vunpack.c.l.b16 %v2509
      %v2734 = vunpack.c.l.b16 %v2510
      %v2735 = vunpack.c.l.b16 %v2511
      %v2736 = vpack.c.b16 %v2721, %v2720
      %v2737 = vpack.c.b16 %v2723, %v2722
      %v2738 = vpack.c.b16 %v2725, %v2724
      %v2739 = vpack.c.b16 %v2727, %v2726
      %v2740 = vpack.c.b16 %v2729, %v2728
      %v2741 = vpack.c.b16 %v2731, %v2730
      %v2742 = vpack.c.b16 %v2733, %v2732
      %v2743 = vpack.c.b16 %v2735, %v2734
      %2752 = vmatpush.bf16.msra.mxu0 %v2743
      %2753 = vmatpush.bf16.msra.mxu0 %v2742
      %2754 = vmatpush.bf16.msra.mxu0 %v2741
      %2755 = vmatpush.bf16.msra.mxu0 %v2740
      %2756 = vmatpush.bf16.msra.mxu0 %v2739
      %2757 = vmatpush.bf16.msra.mxu0 %v2738
      %2758 = vmatpush.bf16.msra.mxu0 %v2737
      %2759 = vmatpush.bf16.msra.mxu0 %v2736
      %2760 = vmatmul.bf16.gmra.mxu0 %v2640
      %v2761 = vpop.f32.mrf.mxu0
      %v2762 = vadd.f32 0.0, %v2761
      %v2763 = vpop.f32.mrf.mxu0
      %v2764 = vadd.f32 0.0, %v2763
      %2765 = vmatmul.bf16.gmra.mxu0 %v2641
      %v2766 = vpop.f32.mrf.mxu0
      %v2767 = vadd.f32 0.0, %v2766
      %v2768 = vpop.f32.mrf.mxu0
      %v2769 = vadd.f32 0.0, %v2768
      %2770 = vmatmul.bf16.gmra.mxu0 %v2642
      %v2771 = vpop.f32.mrf.mxu0
      %v2772 = vadd.f32 0.0, %v2771
      %v2773 = vpop.f32.mrf.mxu0
      %v2774 = vadd.f32 0.0, %v2773
      %2775 = vmatmul.bf16.gmra.mxu0 %v2643
      %v2776 = vpop.f32.mrf.mxu0
      %v2777 = vadd.f32 0.0, %v2776
      %v2778 = vpop.f32.mrf.mxu0
      %v2779 = vadd.f32 0.0, %v2778
      %2780 = vmatmul.bf16.gmra.mxu0 %v2644
      %v2781 = vpop.f32.mrf.mxu0
      %v2782 = vadd.f32 0.0, %v2781
      %v2783 = vpop.f32.mrf.mxu0
      %v2784 = vadd.f32 0.0, %v2783
      %2785 = vmatmul.bf16.gmra.mxu0 %v2645
      %v2786 = vpop.f32.mrf.mxu0
      %v2787 = vadd.f32 0.0, %v2786
      %v2788 = vpop.f32.mrf.mxu0
      %v2789 = vadd.f32 0.0, %v2788
      %2790 = vmatmul.bf16.gmra.mxu0 %v2646
      %v2791 = vpop.f32.mrf.mxu0
      %v2792 = vadd.f32 0.0, %v2791
      %v2793 = vpop.f32.mrf.mxu0
      %v2794 = vadd.f32 0.0, %v2793
      %2795 = vmatmul.bf16.gmra.mxu0 %v2647
      %v2796 = vpop.f32.mrf.mxu0
      %v2797 = vadd.f32 0.0, %v2796
      %v2798 = vpop.f32.mrf.mxu0
      %v2799 = vadd.f32 0.0, %v2798
      %2800 = vmatmul.bf16.gmra.mxu0 %v2648
      %v2801 = vpop.f32.mrf.mxu0
      %v2802 = vadd.f32 0.0, %v2801
      %v2803 = vpop.f32.mrf.mxu0
      %v2804 = vadd.f32 0.0, %v2803
      %2805 = vmatmul.bf16.gmra.mxu0 %v2649
      %v2806 = vpop.f32.mrf.mxu0
      %v2807 = vadd.f32 0.0, %v2806
      %v2808 = vpop.f32.mrf.mxu0
      %v2809 = vadd.f32 0.0, %v2808
      %2810 = vmatmul.bf16.gmra.mxu0 %v2650
      %v2811 = vpop.f32.mrf.mxu0
      %v2812 = vadd.f32 0.0, %v2811
      %v2813 = vpop.f32.mrf.mxu0
      %v2814 = vadd.f32 0.0, %v2813
      %2815 = vmatmul.bf16.gmra.mxu0 %v2651
      %v2816 = vpop.f32.mrf.mxu0
      %v2817 = vadd.f32 0.0, %v2816
      %v2818 = vpop.f32.mrf.mxu0
      %v2819 = vadd.f32 0.0, %v2818
      %2820 = vmatmul.bf16.gmra.mxu0 %v2652
      %v2821 = vpop.f32.mrf.mxu0
      %v2822 = vadd.f32 0.0, %v2821
      %v2823 = vpop.f32.mrf.mxu0
      %v2824 = vadd.f32 0.0, %v2823
      %2825 = vmatmul.bf16.gmra.mxu0 %v2653
      %v2826 = vpop.f32.mrf.mxu0
      %v2827 = vadd.f32 0.0, %v2826
      %v2828 = vpop.f32.mrf.mxu0
      %v2829 = vadd.f32 0.0, %v2828
      %2830 = vmatmul.bf16.gmra.mxu0 %v2654
      %v2831 = vpop.f32.mrf.mxu0
      %v2832 = vadd.f32 0.0, %v2831
      %v2833 = vpop.f32.mrf.mxu0
      %v2834 = vadd.f32 0.0, %v2833
      %2835 = vmatmul.bf16.gmra.mxu0 %v2655
      %v2836 = vpop.f32.mrf.mxu0
      %v2837 = vadd.f32 0.0, %v2836
      %v2838 = vpop.f32.mrf.mxu0
      %v2839 = vadd.f32 0.0, %v2838
      %2840 = vmatmul.bf16.gmra.mxu0 %v2656
      %v2841 = vpop.f32.mrf.mxu0
      %v2842 = vadd.f32 0.0, %v2841
      %v2843 = vpop.f32.mrf.mxu0
      %v2844 = vadd.f32 0.0, %v2843
      %2845 = vmatmul.bf16.gmra.mxu0 %v2657
      %v2846 = vpop.f32.mrf.mxu0
      %v2847 = vadd.f32 0.0, %v2846
      %v2848 = vpop.f32.mrf.mxu0
      %v2849 = vadd.f32 0.0, %v2848
      %2850 = vmatmul.bf16.gmra.mxu0 %v2658
      %v2851 = vpop.f32.mrf.mxu0
      %v2852 = vadd.f32 0.0, %v2851
      %v2853 = vpop.f32.mrf.mxu0
      %v2854 = vadd.f32 0.0, %v2853
      %2855 = vmatmul.bf16.gmra.mxu0 %v2659
      %v2856 = vpop.f32.mrf.mxu0
      %v2857 = vadd.f32 0.0, %v2856
      %v2858 = vpop.f32.mrf.mxu0
      %v2859 = vadd.f32 0.0, %v2858
      %2860 = vmatmul.bf16.gmra.mxu0 %v2660
      %v2861 = vpop.f32.mrf.mxu0
      %v2862 = vadd.f32 0.0, %v2861
      %v2863 = vpop.f32.mrf.mxu0
      %v2864 = vadd.f32 0.0, %v2863
      %2865 = vmatmul.bf16.gmra.mxu0 %v2661
      %v2866 = vpop.f32.mrf.mxu0
      %v2867 = vadd.f32 0.0, %v2866
      %v2868 = vpop.f32.mrf.mxu0
      %v2869 = vadd.f32 0.0, %v2868
      %2870 = vmatmul.bf16.gmra.mxu0 %v2662
      %v2871 = vpop.f32.mrf.mxu0
      %v2872 = vadd.f32 0.0, %v2871
      %v2873 = vpop.f32.mrf.mxu0
      %v2874 = vadd.f32 0.0, %v2873
      %2875 = vmatmul.bf16.gmra.mxu0 %v2663
      %v2876 = vpop.f32.mrf.mxu0
      %v2877 = vadd.f32 0.0, %v2876
      %v2878 = vpop.f32.mrf.mxu0
      %v2879 = vadd.f32 0.0, %v2878
      %2880 = vmatmul.bf16.gmra.mxu0 %v2664
      %v2881 = vpop.f32.mrf.mxu0
      %v2882 = vadd.f32 0.0, %v2881
      %v2883 = vpop.f32.mrf.mxu0
      %v2884 = vadd.f32 0.0, %v2883
      %2885 = vmatmul.bf16.gmra.mxu0 %v2665
      %v2886 = vpop.f32.mrf.mxu0
      %v2887 = vadd.f32 0.0, %v2886
      %v2888 = vpop.f32.mrf.mxu0
      %v2889 = vadd.f32 0.0, %v2888
      %2890 = vmatmul.bf16.gmra.mxu0 %v2666
      %v2891 = vpop.f32.mrf.mxu0
      %v2892 = vadd.f32 0.0, %v2891
      %v2893 = vpop.f32.mrf.mxu0
      %v2894 = vadd.f32 0.0, %v2893
      %2895 = vmatmul.bf16.gmra.mxu0 %v2667
      %v2896 = vpop.f32.mrf.mxu0
      %v2897 = vadd.f32 0.0, %v2896
      %v2898 = vpop.f32.mrf.mxu0
      %v2899 = vadd.f32 0.0, %v2898
      %2900 = vmatmul.bf16.gmra.mxu0 %v2668
      %v2901 = vpop.f32.mrf.mxu0
      %v2902 = vadd.f32 0.0, %v2901
      %v2903 = vpop.f32.mrf.mxu0
      %v2904 = vadd.f32 0.0, %v2903
      %2905 = vmatmul.bf16.gmra.mxu0 %v2669
      %v2906 = vpop.f32.mrf.mxu0
      %v2907 = vadd.f32 0.0, %v2906
      %v2908 = vpop.f32.mrf.mxu0
      %v2909 = vadd.f32 0.0, %v2908
      %2910 = vmatmul.bf16.gmra.mxu0 %v2670
      %v2911 = vpop.f32.mrf.mxu0
      %v2912 = vadd.f32 0.0, %v2911
      %v2913 = vpop.f32.mrf.mxu0
      %v2914 = vadd.f32 0.0, %v2913
      %2915 = vmatmul.bf16.gmra.mxu0 %v2671
      %v2916 = vpop.f32.mrf.mxu0
      %v2917 = vadd.f32 0.0, %v2916
      %v2918 = vpop.f32.mrf.mxu0
      %v2919 = vadd.f32 0.0, %v2918
      %2920 = vdwg.mxu0
      %v2925 = vunpack.c.l.b16 %v2406
      %v2926 = vunpack.c.l.b16 %v2407
      %v2927 = vunpack.c.l.b16 %v2408
      %v2928 = vunpack.c.l.b16 %v2409
      %v2929 = vpack.c.b16 %v2926, %v2925
      %v2930 = vpack.c.b16 %v2928, %v2927
      %v2949 = vunpack.c.l.b16 %v2479
      %v2950 = vunpack.c.l.b16 %v2480
      %v2951 = vunpack.c.l.b16 %v2481
      %v2952 = vunpack.c.l.b16 %v2482
      %v2953 = vunpack.c.l.b16 %v2483
      %v2954 = vunpack.c.l.b16 %v2484
      %v2955 = vunpack.c.l.b16 %v2485
      %v2956 = vunpack.c.l.b16 %v2486
      %v2957 = vunpack.c.l.b16 %v2487
      %v2958 = vunpack.c.l.b16 %v2488
      %v2959 = vunpack.c.l.b16 %v2489
      %v2960 = vunpack.c.l.b16 %v2490
      %v2961 = vunpack.c.l.b16 %v2491
      %v2962 = vunpack.c.l.b16 %v2492
      %v2963 = vunpack.c.l.b16 %v2493
      %v2964 = vunpack.c.l.b16 %v2494
      %v2965 = vpack.c.b16 %v2950, %v2949
      %v2966 = vpack.c.b16 %v2952, %v2951
      %v2967 = vpack.c.b16 %v2954, %v2953
      %v2968 = vpack.c.b16 %v2956, %v2955
      %v2969 = vpack.c.b16 %v2958, %v2957
      %v2970 = vpack.c.b16 %v2960, %v2959
      %v2971 = vpack.c.b16 %v2962, %v2961
      %v2972 = vpack.c.b16 %v2964, %v2963
      %2981 = vmatpush.bf16.msra.mxu0 %v2972
      %2982 = vmatpush.bf16.msra.mxu0 %v2971
      %2983 = vmatpush.bf16.msra.mxu0 %v2970
      %2984 = vmatpush.bf16.msra.mxu0 %v2969
      %2985 = vmatpush.bf16.msra.mxu0 %v2968
      %2986 = vmatpush.bf16.msra.mxu0 %v2967
      %2987 = vmatpush.bf16.msra.mxu0 %v2966
      %2988 = vmatpush.bf16.msra.mxu0 %v2965
      %2989 = vmatmul.bf16.gmra.mxu0 %v2929
      %v2990 = vpop.f32.mrf.mxu0
      %v2991 = vadd.f32 %v2762, %v2990
      %v2992 = vpop.f32.mrf.mxu0
      %v2993 = vadd.f32 %v2764, %v2992
      %2994 = vmatmul.bf16.gmra.mxu0 %v2930
      %v2995 = vpop.f32.mrf.mxu0
      %v2996 = vadd.f32 %v2767, %v2995
      %v2997 = vpop.f32.mrf.mxu0
      %v2998 = vadd.f32 %v2769, %v2997
      %2999 = vmatmul.bf16.gmra.mxu0 %v2640
      %v3000 = vpop.f32.mrf.mxu0
      %v3001 = vadd.f32 %v2772, %v3000
      %v3002 = vpop.f32.mrf.mxu0
      %v3003 = vadd.f32 %v2774, %v3002
      %3004 = vmatmul.bf16.gmra.mxu0 %v2641
      %v3005 = vpop.f32.mrf.mxu0
      %v3006 = vadd.f32 %v2777, %v3005
      %v3007 = vpop.f32.mrf.mxu0
      %v3008 = vadd.f32 %v2779, %v3007
      %3009 = vmatmul.bf16.gmra.mxu0 %v2642
      %v3010 = vpop.f32.mrf.mxu0
      %v3011 = vadd.f32 %v2782, %v3010
      %v3012 = vpop.f32.mrf.mxu0
      %v3013 = vadd.f32 %v2784, %v3012
      %3014 = vmatmul.bf16.gmra.mxu0 %v2643
      %v3015 = vpop.f32.mrf.mxu0
      %v3016 = vadd.f32 %v2787, %v3015
      %v3017 = vpop.f32.mrf.mxu0
      %v3018 = vadd.f32 %v2789, %v3017
      %3019 = vmatmul.bf16.gmra.mxu0 %v2644
      %v3020 = vpop.f32.mrf.mxu0
      %v3021 = vadd.f32 %v2792, %v3020
      %v3022 = vpop.f32.mrf.mxu0
      %v3023 = vadd.f32 %v2794, %v3022
      %3024 = vmatmul.bf16.gmra.mxu0 %v2645
      %v3025 = vpop.f32.mrf.mxu0
      %v3026 = vadd.f32 %v2797, %v3025
      %v3027 = vpop.f32.mrf.mxu0
      %v3028 = vadd.f32 %v2799, %v3027
      %3029 = vmatmul.bf16.gmra.mxu0 %v2646
      %v3030 = vpop.f32.mrf.mxu0
      %v3031 = vadd.f32 %v2802, %v3030
      %v3032 = vpop.f32.mrf.mxu0
      %v3033 = vadd.f32 %v2804, %v3032
      %3034 = vmatmul.bf16.gmra.mxu0 %v2647
      %v3035 = vpop.f32.mrf.mxu0
      %v3036 = vadd.f32 %v2807, %v3035
      %v3037 = vpop.f32.mrf.mxu0
      %v3038 = vadd.f32 %v2809, %v3037
      %3039 = vmatmul.bf16.gmra.mxu0 %v2648
      %v3040 = vpop.f32.mrf.mxu0
      %v3041 = vadd.f32 %v2812, %v3040
      %v3042 = vpop.f32.mrf.mxu0
      %v3043 = vadd.f32 %v2814, %v3042
      %3044 = vmatmul.bf16.gmra.mxu0 %v2649
      %v3045 = vpop.f32.mrf.mxu0
      %v3046 = vadd.f32 %v2817, %v3045
      %v3047 = vpop.f32.mrf.mxu0
      %v3048 = vadd.f32 %v2819, %v3047
      %3049 = vmatmul.bf16.gmra.mxu0 %v2650
      %v3050 = vpop.f32.mrf.mxu0
      %v3051 = vadd.f32 %v2822, %v3050
      %v3052 = vpop.f32.mrf.mxu0
      %v3053 = vadd.f32 %v2824, %v3052
      %3054 = vmatmul.bf16.gmra.mxu0 %v2651
      %v3055 = vpop.f32.mrf.mxu0
      %v3056 = vadd.f32 %v2827, %v3055
      %v3057 = vpop.f32.mrf.mxu0
      %v3058 = vadd.f32 %v2829, %v3057
      %3059 = vmatmul.bf16.gmra.mxu0 %v2652
      %v3060 = vpop.f32.mrf.mxu0
      %v3061 = vadd.f32 %v2832, %v3060
      %v3062 = vpop.f32.mrf.mxu0
      %v3063 = vadd.f32 %v2834, %v3062
      %3064 = vmatmul.bf16.gmra.mxu0 %v2653
      %v3065 = vpop.f32.mrf.mxu0
      %v3066 = vadd.f32 %v2837, %v3065
      %v3067 = vpop.f32.mrf.mxu0
      %v3068 = vadd.f32 %v2839, %v3067
      %3069 = vmatmul.bf16.gmra.mxu0 %v2654
      %v3070 = vpop.f32.mrf.mxu0
      %v3071 = vadd.f32 %v2842, %v3070
      %v3072 = vpop.f32.mrf.mxu0
      %v3073 = vadd.f32 %v2844, %v3072
      %3074 = vmatmul.bf16.gmra.mxu0 %v2655
      %v3075 = vpop.f32.mrf.mxu0
      %v3076 = vadd.f32 %v2847, %v3075
      %v3077 = vpop.f32.mrf.mxu0
      %v3078 = vadd.f32 %v2849, %v3077
      %3079 = vmatmul.bf16.gmra.mxu0 %v2656
      %v3080 = vpop.f32.mrf.mxu0
      %v3081 = vadd.f32 %v2852, %v3080
      %v3082 = vpop.f32.mrf.mxu0
      %v3083 = vadd.f32 %v2854, %v3082
      %3084 = vmatmul.bf16.gmra.mxu0 %v2657
      %v3085 = vpop.f32.mrf.mxu0
      %v3086 = vadd.f32 %v2857, %v3085
      %v3087 = vpop.f32.mrf.mxu0
      %v3088 = vadd.f32 %v2859, %v3087
      %3089 = vmatmul.bf16.gmra.mxu0 %v2658
      %v3090 = vpop.f32.mrf.mxu0
      %v3091 = vadd.f32 %v2862, %v3090
      %v3092 = vpop.f32.mrf.mxu0
      %v3093 = vadd.f32 %v2864, %v3092
      %3094 = vmatmul.bf16.gmra.mxu0 %v2659
      %v3095 = vpop.f32.mrf.mxu0
      %v3096 = vadd.f32 %v2867, %v3095
      %v3097 = vpop.f32.mrf.mxu0
      %v3098 = vadd.f32 %v2869, %v3097
      %3099 = vmatmul.bf16.gmra.mxu0 %v2660
      %v3100 = vpop.f32.mrf.mxu0
      %v3101 = vadd.f32 %v2872, %v3100
      %v3102 = vpop.f32.mrf.mxu0
      %v3103 = vadd.f32 %v2874, %v3102
      %3104 = vmatmul.bf16.gmra.mxu0 %v2661
      %v3105 = vpop.f32.mrf.mxu0
      %v3106 = vadd.f32 %v2877, %v3105
      %v3107 = vpop.f32.mrf.mxu0
      %v3108 = vadd.f32 %v2879, %v3107
      %3109 = vmatmul.bf16.gmra.mxu0 %v2662
      %v3110 = vpop.f32.mrf.mxu0
      %v3111 = vadd.f32 %v2882, %v3110
      %v3112 = vpop.f32.mrf.mxu0
      %v3113 = vadd.f32 %v2884, %v3112
      %3114 = vmatmul.bf16.gmra.mxu0 %v2663
      %v3115 = vpop.f32.mrf.mxu0
      %v3116 = vadd.f32 %v2887, %v3115
      %v3117 = vpop.f32.mrf.mxu0
      %v3118 = vadd.f32 %v2889, %v3117
      %3119 = vmatmul.bf16.gmra.mxu0 %v2664
      %v3120 = vpop.f32.mrf.mxu0
      %v3121 = vadd.f32 %v2892, %v3120
      %v3122 = vpop.f32.mrf.mxu0
      %v3123 = vadd.f32 %v2894, %v3122
      %3124 = vmatmul.bf16.gmra.mxu0 %v2665
      %v3125 = vpop.f32.mrf.mxu0
      %v3126 = vadd.f32 %v2897, %v3125
      %v3127 = vpop.f32.mrf.mxu0
      %v3128 = vadd.f32 %v2899, %v3127
      %3129 = vmatmul.bf16.gmra.mxu0 %v2666
      %v3130 = vpop.f32.mrf.mxu0
      %v3131 = vadd.f32 %v2902, %v3130
      %v3132 = vpop.f32.mrf.mxu0
      %v3133 = vadd.f32 %v2904, %v3132
      %3134 = vmatmul.bf16.gmra.mxu0 %v2667
      %v3135 = vpop.f32.mrf.mxu0
      %v3136 = vadd.f32 %v2907, %v3135
      %v3137 = vpop.f32.mrf.mxu0
      %v3138 = vadd.f32 %v2909, %v3137
      %3139 = vmatmul.bf16.gmra.mxu0 %v2668
      %v3140 = vpop.f32.mrf.mxu0
      %v3141 = vadd.f32 %v2912, %v3140
      %v3142 = vpop.f32.mrf.mxu0
      %v3143 = vadd.f32 %v2914, %v3142
      %3144 = vmatmul.bf16.gmra.mxu0 %v2669
      %v3145 = vpop.f32.mrf.mxu0
      %v3146 = vadd.f32 %v2917, %v3145
      %v3147 = vpop.f32.mrf.mxu0
      %v3148 = vadd.f32 %v2919, %v3147
      %3149 = vdwg.mxu0
      %s3150 = scalar_lea.vmem %s3, 384
      %v3151 = vld [vmem:[%s3150] sm:$0xf]
      %v3152 = vld [vmem:[%s3150 + $0x4] sm:$0xf]
      %v3153 = vld [vmem:[%s3150 + $0x8] sm:$0xf]
      %v3154 = vld [vmem:[%s3150 + $0xc] sm:$0xf]
      %v3155 = vld [vmem:[%s3150 + $0x10] sm:$0xf]
      %v3156 = vld [vmem:[%s3150 + $0x14] sm:$0xf]
      %v3157 = vld [vmem:[%s3150 + $0x18] sm:$0xf]
      %v3158 = vld [vmem:[%s3150 + $0x1c] sm:$0xf]
      %v3159 = vld [vmem:[%s3150 + $0x20] sm:$0xf]
      %v3160 = vld [vmem:[%s3150 + $0x24] sm:$0xf]
      %v3161 = vld [vmem:[%s3150 + $0x28] sm:$0xf]
      %v3162 = vld [vmem:[%s3150 + $0x2c] sm:$0xf]
      %v3163 = vld [vmem:[%s3150 + $0x30] sm:$0xf]
      %v3164 = vld [vmem:[%s3150 + $0x34] sm:$0xf]
      %v3165 = vld [vmem:[%s3150 + $0x38] sm:$0xf]
      %v3166 = vld [vmem:[%s3150 + $0x3c] sm:$0xf]
      %v3171 = vunpack.c.l.b16 %v2474
      %v3172 = vunpack.c.l.b16 %v2475
      %v3173 = vunpack.c.l.b16 %v2476
      %v3174 = vunpack.c.l.b16 %v2477
      %v3175 = vpack.c.b16 %v3172, %v3171
      %v3176 = vpack.c.b16 %v3174, %v3173
      %v3195 = vunpack.c.l.b16 %v3151
      %v3196 = vunpack.c.l.b16 %v3152
      %v3197 = vunpack.c.l.b16 %v3153
      %v3198 = vunpack.c.l.b16 %v3154
      %v3199 = vunpack.c.l.b16 %v3155
      %v3200 = vunpack.c.l.b16 %v3156
      %v3201 = vunpack.c.l.b16 %v3157
      %v3202 = vunpack.c.l.b16 %v3158
      %v3203 = vunpack.c.l.b16 %v3159
      %v3204 = vunpack.c.l.b16 %v3160
      %v3205 = vunpack.c.l.b16 %v3161
      %v3206 = vunpack.c.l.b16 %v3162
      %v3207 = vunpack.c.l.b16 %v3163
      %v3208 = vunpack.c.l.b16 %v3164
      %v3209 = vunpack.c.l.b16 %v3165
      %v3210 = vunpack.c.l.b16 %v3166
      %v3211 = vpack.c.b16 %v3196, %v3195
      %v3212 = vpack.c.b16 %v3198, %v3197
      %v3213 = vpack.c.b16 %v3200, %v3199
      %v3214 = vpack.c.b16 %v3202, %v3201
      %v3215 = vpack.c.b16 %v3204, %v3203
      %v3216 = vpack.c.b16 %v3206, %v3205
      %v3217 = vpack.c.b16 %v3208, %v3207
      %v3218 = vpack.c.b16 %v3210, %v3209
      %3227 = vmatpush.bf16.msra.mxu0 %v3218
      %3228 = vmatpush.bf16.msra.mxu0 %v3217
      %3229 = vmatpush.bf16.msra.mxu0 %v3216
      %3230 = vmatpush.bf16.msra.mxu0 %v3215
      %3231 = vmatpush.bf16.msra.mxu0 %v3214
      %3232 = vmatpush.bf16.msra.mxu0 %v3213
      %3233 = vmatpush.bf16.msra.mxu0 %v3212
      %3234 = vmatpush.bf16.msra.mxu0 %v3211
      %3235 = vmatmul.bf16.gmra.mxu0 %v2642
      %v3236 = vpop.f32.mrf.mxu0
      %v3237 = vadd.f32 0.0, %v3236
      %v3238 = vpop.f32.mrf.mxu0
      %v3239 = vadd.f32 0.0, %v3238
      %3240 = vmatmul.bf16.gmra.mxu0 %v2643
      %v3241 = vpop.f32.mrf.mxu0
      %v3242 = vadd.f32 0.0, %v3241
      %v3243 = vpop.f32.mrf.mxu0
      %v3244 = vadd.f32 0.0, %v3243
      %3245 = vmatmul.bf16.gmra.mxu0 %v2644
      %v3246 = vpop.f32.mrf.mxu0
      %v3247 = vadd.f32 0.0, %v3246
      %v3248 = vpop.f32.mrf.mxu0
      %v3249 = vadd.f32 0.0, %v3248
      %3250 = vmatmul.bf16.gmra.mxu0 %v2645
      %v3251 = vpop.f32.mrf.mxu0
      %v3252 = vadd.f32 0.0, %v3251
      %v3253 = vpop.f32.mrf.mxu0
      %v3254 = vadd.f32 0.0, %v3253
      %3255 = vmatmul.bf16.gmra.mxu0 %v2646
      %v3256 = vpop.f32.mrf.mxu0
      %v3257 = vadd.f32 0.0, %v3256
      %v3258 = vpop.f32.mrf.mxu0
      %v3259 = vadd.f32 0.0, %v3258
      %3260 = vmatmul.bf16.gmra.mxu0 %v2647
      %v3261 = vpop.f32.mrf.mxu0
      %v3262 = vadd.f32 0.0, %v3261
      %v3263 = vpop.f32.mrf.mxu0
      %v3264 = vadd.f32 0.0, %v3263
      %3265 = vmatmul.bf16.gmra.mxu0 %v2648
      %v3266 = vpop.f32.mrf.mxu0
      %v3267 = vadd.f32 0.0, %v3266
      %v3268 = vpop.f32.mrf.mxu0
      %v3269 = vadd.f32 0.0, %v3268
      %3270 = vmatmul.bf16.gmra.mxu0 %v2649
      %v3271 = vpop.f32.mrf.mxu0
      %v3272 = vadd.f32 0.0, %v3271
      %v3273 = vpop.f32.mrf.mxu0
      %v3274 = vadd.f32 0.0, %v3273
      %3275 = vmatmul.bf16.gmra.mxu0 %v2650
      %v3276 = vpop.f32.mrf.mxu0
      %v3277 = vadd.f32 0.0, %v3276
      %v3278 = vpop.f32.mrf.mxu0
      %v3279 = vadd.f32 0.0, %v3278
      %3280 = vmatmul.bf16.gmra.mxu0 %v2651
      %v3281 = vpop.f32.mrf.mxu0
      %v3282 = vadd.f32 0.0, %v3281
      %v3283 = vpop.f32.mrf.mxu0
      %v3284 = vadd.f32 0.0, %v3283
      %3285 = vmatmul.bf16.gmra.mxu0 %v2652
      %v3286 = vpop.f32.mrf.mxu0
      %v3287 = vadd.f32 0.0, %v3286
      %v3288 = vpop.f32.mrf.mxu0
      %v3289 = vadd.f32 0.0, %v3288
      %3290 = vmatmul.bf16.gmra.mxu0 %v2653
      %v3291 = vpop.f32.mrf.mxu0
      %v3292 = vadd.f32 0.0, %v3291
      %v3293 = vpop.f32.mrf.mxu0
      %v3294 = vadd.f32 0.0, %v3293
      %3295 = vmatmul.bf16.gmra.mxu0 %v2654
      %v3296 = vpop.f32.mrf.mxu0
      %v3297 = vadd.f32 0.0, %v3296
      %v3298 = vpop.f32.mrf.mxu0
      %v3299 = vadd.f32 0.0, %v3298
      %3300 = vmatmul.bf16.gmra.mxu0 %v2655
      %v3301 = vpop.f32.mrf.mxu0
      %v3302 = vadd.f32 0.0, %v3301
      %v3303 = vpop.f32.mrf.mxu0
      %v3304 = vadd.f32 0.0, %v3303
      %3305 = vmatmul.bf16.gmra.mxu0 %v2656
      %v3306 = vpop.f32.mrf.mxu0
      %v3307 = vadd.f32 0.0, %v3306
      %v3308 = vpop.f32.mrf.mxu0
      %v3309 = vadd.f32 0.0, %v3308
      %3310 = vmatmul.bf16.gmra.mxu0 %v2657
      %v3311 = vpop.f32.mrf.mxu0
      %v3312 = vadd.f32 0.0, %v3311
      %v3313 = vpop.f32.mrf.mxu0
      %v3314 = vadd.f32 0.0, %v3313
      %3315 = vmatmul.bf16.gmra.mxu0 %v2658
      %v3316 = vpop.f32.mrf.mxu0
      %v3317 = vadd.f32 0.0, %v3316
      %v3318 = vpop.f32.mrf.mxu0
      %v3319 = vadd.f32 0.0, %v3318
      %3320 = vmatmul.bf16.gmra.mxu0 %v2659
      %v3321 = vpop.f32.mrf.mxu0
      %v3322 = vadd.f32 0.0, %v3321
      %v3323 = vpop.f32.mrf.mxu0
      %v3324 = vadd.f32 0.0, %v3323
      %3325 = vmatmul.bf16.gmra.mxu0 %v2660
      %v3326 = vpop.f32.mrf.mxu0
      %v3327 = vadd.f32 0.0, %v3326
      %v3328 = vpop.f32.mrf.mxu0
      %v3329 = vadd.f32 0.0, %v3328
      %3330 = vmatmul.bf16.gmra.mxu0 %v2661
      %v3331 = vpop.f32.mrf.mxu0
      %v3332 = vadd.f32 0.0, %v3331
      %v3333 = vpop.f32.mrf.mxu0
      %v3334 = vadd.f32 0.0, %v3333
      %3335 = vmatmul.bf16.gmra.mxu0 %v2662
      %v3336 = vpop.f32.mrf.mxu0
      %v3337 = vadd.f32 0.0, %v3336
      %v3338 = vpop.f32.mrf.mxu0
      %v3339 = vadd.f32 0.0, %v3338
      %3340 = vmatmul.bf16.gmra.mxu0 %v2663
      %v3341 = vpop.f32.mrf.mxu0
      %v3342 = vadd.f32 0.0, %v3341
      %v3343 = vpop.f32.mrf.mxu0
      %v3344 = vadd.f32 0.0, %v3343
      %3345 = vmatmul.bf16.gmra.mxu0 %v2664
      %v3346 = vpop.f32.mrf.mxu0
      %v3347 = vadd.f32 0.0, %v3346
      %v3348 = vpop.f32.mrf.mxu0
      %v3349 = vadd.f32 0.0, %v3348
      %3350 = vmatmul.bf16.gmra.mxu0 %v2665
      %v3351 = vpop.f32.mrf.mxu0
      %v3352 = vadd.f32 0.0, %v3351
      %v3353 = vpop.f32.mrf.mxu0
      %v3354 = vadd.f32 0.0, %v3353
      %3355 = vmatmul.bf16.gmra.mxu0 %v2666
      %v3356 = vpop.f32.mrf.mxu0
      %v3357 = vadd.f32 0.0, %v3356
      %v3358 = vpop.f32.mrf.mxu0
      %v3359 = vadd.f32 0.0, %v3358
      %3360 = vmatmul.bf16.gmra.mxu0 %v2667
      %v3361 = vpop.f32.mrf.mxu0
      %v3362 = vadd.f32 0.0, %v3361
      %v3363 = vpop.f32.mrf.mxu0
      %v3364 = vadd.f32 0.0, %v3363
      %3365 = vmatmul.bf16.gmra.mxu0 %v2668
      %v3366 = vpop.f32.mrf.mxu0
      %v3367 = vadd.f32 0.0, %v3366
      %v3368 = vpop.f32.mrf.mxu0
      %v3369 = vadd.f32 0.0, %v3368
      %3370 = vmatmul.bf16.gmra.mxu0 %v2669
      %v3371 = vpop.f32.mrf.mxu0
      %v3372 = vadd.f32 0.0, %v3371
      %v3373 = vpop.f32.mrf.mxu0
      %v3374 = vadd.f32 0.0, %v3373
      %3375 = vmatmul.bf16.gmra.mxu0 %v2670
      %v3376 = vpop.f32.mrf.mxu0
      %v3377 = vadd.f32 0.0, %v3376
      %v3378 = vpop.f32.mrf.mxu0
      %v3379 = vadd.f32 0.0, %v3378
      %3380 = vmatmul.bf16.gmra.mxu0 %v2671
      %v3381 = vpop.f32.mrf.mxu0
      %v3382 = vadd.f32 0.0, %v3381
      %v3383 = vpop.f32.mrf.mxu0
      %v3384 = vadd.f32 0.0, %v3383
      %3385 = vmatmul.bf16.gmra.mxu0 %v3175
      %v3386 = vpop.f32.mrf.mxu0
      %v3387 = vadd.f32 0.0, %v3386
      %v3388 = vpop.f32.mrf.mxu0
      %v3389 = vadd.f32 0.0, %v3388
      %3390 = vmatmul.bf16.gmra.mxu0 %v3176
      %v3391 = vpop.f32.mrf.mxu0
      %v3392 = vadd.f32 0.0, %v3391
      %v3393 = vpop.f32.mrf.mxu0
      %v3394 = vadd.f32 0.0, %v3393
      %3395 = vdwg.mxu0
      %v3396 = vadd.f32 %v2991, %v3237
      %v3397 = vadd.f32 %v2993, %v3239
      %v3398 = vadd.f32 %v2996, %v3242
      %v3399 = vadd.f32 %v2998, %v3244
      %v3400 = vadd.f32 %v3001, %v3247
      %v3401 = vadd.f32 %v3003, %v3249
      %v3402 = vadd.f32 %v3006, %v3252
      %v3403 = vadd.f32 %v3008, %v3254
      %v3404 = vadd.f32 %v3011, %v3257
      %v3405 = vadd.f32 %v3013, %v3259
      %v3406 = vadd.f32 %v3016, %v3262
      %v3407 = vadd.f32 %v3018, %v3264
      %v3408 = vadd.f32 %v3021, %v3267
      %v3409 = vadd.f32 %v3023, %v3269
      %v3410 = vadd.f32 %v3026, %v3272
      %v3411 = vadd.f32 %v3028, %v3274
      %v3412 = vadd.f32 %v3031, %v3277
      %v3413 = vadd.f32 %v3033, %v3279
      %v3414 = vadd.f32 %v3036, %v3282
      %v3415 = vadd.f32 %v3038, %v3284
      %v3416 = vadd.f32 %v3041, %v3287
      %v3417 = vadd.f32 %v3043, %v3289
      %v3418 = vadd.f32 %v3046, %v3292
      %v3419 = vadd.f32 %v3048, %v3294
      %v3420 = vadd.f32 %v3051, %v3297
      %v3421 = vadd.f32 %v3053, %v3299
      %v3422 = vadd.f32 %v3056, %v3302
      %v3423 = vadd.f32 %v3058, %v3304
      %v3424 = vadd.f32 %v3061, %v3307
      %v3425 = vadd.f32 %v3063, %v3309
      %v3426 = vadd.f32 %v3066, %v3312
      %v3427 = vadd.f32 %v3068, %v3314
      %v3428 = vadd.f32 %v3071, %v3317
      %v3429 = vadd.f32 %v3073, %v3319
      %v3430 = vadd.f32 %v3076, %v3322
      %v3431 = vadd.f32 %v3078, %v3324
      %v3432 = vadd.f32 %v3081, %v3327
      %v3433 = vadd.f32 %v3083, %v3329
      %v3434 = vadd.f32 %v3086, %v3332
      %v3435 = vadd.f32 %v3088, %v3334
      %v3436 = vadd.f32 %v3091, %v3337
      %v3437 = vadd.f32 %v3093, %v3339
      %v3438 = vadd.f32 %v3096, %v3342
      %v3439 = vadd.f32 %v3098, %v3344
      %v3440 = vadd.f32 %v3101, %v3347
      %v3441 = vadd.f32 %v3103, %v3349
      %v3442 = vadd.f32 %v3106, %v3352
      %v3443 = vadd.f32 %v3108, %v3354
      %v3444 = vadd.f32 %v3111, %v3357
      %v3445 = vadd.f32 %v3113, %v3359
      %v3446 = vadd.f32 %v3116, %v3362
      %v3447 = vadd.f32 %v3118, %v3364
      %v3448 = vadd.f32 %v3121, %v3367
      %v3449 = vadd.f32 %v3123, %v3369
      %v3450 = vadd.f32 %v3126, %v3372
      %v3451 = vadd.f32 %v3128, %v3374
      %v3452 = vadd.f32 %v3131, %v3377
      %v3453 = vadd.f32 %v3133, %v3379
      %v3454 = vadd.f32 %v3136, %v3382
      %v3455 = vadd.f32 %v3138, %v3384
      %v3456 = vadd.f32 %v3141, %v3387
      %v3457 = vadd.f32 %v3143, %v3389
      %v3458 = vadd.f32 %v3146, %v3392
      %v3459 = vadd.f32 %v3148, %v3394
      %s3460 = scalar_lea.vmem %s3, 64
      %v3461 = vld [vmem:[%s3460] sm:$0xf]
      %v3462 = vld [vmem:[%s3460 + $0x4] sm:$0xf]
      %v3463 = vld [vmem:[%s3460 + $0x8] sm:$0xf]
      %v3464 = vld [vmem:[%s3460 + $0xc] sm:$0xf]
      %v3465 = vld [vmem:[%s3460 + $0x10] sm:$0xf]
      %v3466 = vld [vmem:[%s3460 + $0x14] sm:$0xf]
      %v3467 = vld [vmem:[%s3460 + $0x18] sm:$0xf]
      %v3468 = vld [vmem:[%s3460 + $0x1c] sm:$0xf]
      %v3469 = vld [vmem:[%s3460 + $0x20] sm:$0xf]
      %v3470 = vld [vmem:[%s3460 + $0x24] sm:$0xf]
      %v3471 = vld [vmem:[%s3460 + $0x28] sm:$0xf]
      %v3472 = vld [vmem:[%s3460 + $0x2c] sm:$0xf]
      %v3473 = vld [vmem:[%s3460 + $0x30] sm:$0xf]
      %v3474 = vld [vmem:[%s3460 + $0x34] sm:$0xf]
      %v3475 = vld [vmem:[%s3460 + $0x38] sm:$0xf]
      %v3476 = vld [vmem:[%s3460 + $0x3c] sm:$0xf]
      %v3477 = vpack.c.b16 %v2636, %v2636
      %vm3478 = vsmask.f32 7424
      %v3480 = vshrl.u32 %v2929, 16
      %v3482 = vshll.u32 %v2929, 16
      %v3484 = vrot.slane %v3482, 1
      %v3485 = vor.u32 %v3480, %v3484
      %v3487 = vshll.u32 %v2930, 16
      %v3489 = vrot.slane %v3487, 1
      %v3490 = vsel %vm3478, %v3485, %v3489
      %v3491 = vshrl.u32 %v2930, 16
      %v3493 = vor.u32 %v3491, %v3489
      %v3495 = vshll.u32 %v2640, 16
      %v3497 = vrot.slane %v3495, 1
      %v3498 = vsel %vm3478, %v3493, %v3497
      %v3499 = vshrl.u32 %v2640, 16
      %v3501 = vor.u32 %v3499, %v3497
      %v3503 = vshll.u32 %v2641, 16
      %v3505 = vrot.slane %v3503, 1
      %v3506 = vsel %vm3478, %v3501, %v3505
      %v3507 = vshrl.u32 %v2641, 16
      %v3509 = vor.u32 %v3507, %v3505
      %v3511 = vshll.u32 %v2642, 16
      %v3513 = vrot.slane %v3511, 1
      %v3514 = vsel %vm3478, %v3509, %v3513
      %v3515 = vshrl.u32 %v2642, 16
      %v3517 = vor.u32 %v3515, %v3513
      %v3519 = vshll.u32 %v2643, 16
      %v3521 = vrot.slane %v3519, 1
      %v3522 = vsel %vm3478, %v3517, %v3521
      %v3523 = vshrl.u32 %v2643, 16
      %v3525 = vor.u32 %v3523, %v3521
      %v3527 = vshll.u32 %v2644, 16
      %v3529 = vrot.slane %v3527, 1
      %v3530 = vsel %vm3478, %v3525, %v3529
      %v3531 = vshrl.u32 %v2644, 16
      %v3533 = vor.u32 %v3531, %v3529
      %v3535 = vshll.u32 %v2645, 16
      %v3537 = vrot.slane %v3535, 1
      %v3538 = vsel %vm3478, %v3533, %v3537
      %v3539 = vshrl.u32 %v2645, 16
      %v3541 = vor.u32 %v3539, %v3537
      %v3543 = vshll.u32 %v2646, 16
      %v3545 = vrot.slane %v3543, 1
      %v3546 = vsel %vm3478, %v3541, %v3545
      %v3547 = vshrl.u32 %v2646, 16
      %v3549 = vor.u32 %v3547, %v3545
      %v3551 = vshll.u32 %v2647, 16
      %v3553 = vrot.slane %v3551, 1
      %v3554 = vsel %vm3478, %v3549, %v3553
      %v3555 = vshrl.u32 %v2647, 16
      %v3557 = vor.u32 %v3555, %v3553
      %v3559 = vshll.u32 %v2648, 16
      %v3561 = vrot.slane %v3559, 1
      %v3562 = vsel %vm3478, %v3557, %v3561
      %v3563 = vshrl.u32 %v2648, 16
      %v3565 = vor.u32 %v3563, %v3561
      %v3567 = vshll.u32 %v2649, 16
      %v3569 = vrot.slane %v3567, 1
      %v3570 = vsel %vm3478, %v3565, %v3569
      %v3571 = vshrl.u32 %v2649, 16
      %v3573 = vor.u32 %v3571, %v3569
      %v3575 = vshll.u32 %v2650, 16
      %v3577 = vrot.slane %v3575, 1
      %v3578 = vsel %vm3478, %v3573, %v3577
      %v3579 = vshrl.u32 %v2650, 16
      %v3581 = vor.u32 %v3579, %v3577
      %v3583 = vshll.u32 %v2651, 16
      %v3585 = vrot.slane %v3583, 1
      %v3586 = vsel %vm3478, %v3581, %v3585
      %v3587 = vshrl.u32 %v2651, 16
      %v3589 = vor.u32 %v3587, %v3585
      %v3591 = vshll.u32 %v2652, 16
      %v3593 = vrot.slane %v3591, 1
      %v3594 = vsel %vm3478, %v3589, %v3593
      %v3595 = vshrl.u32 %v2652, 16
      %v3597 = vor.u32 %v3595, %v3593
      %v3599 = vshll.u32 %v2653, 16
      %v3601 = vrot.slane %v3599, 1
      %v3602 = vsel %vm3478, %v3597, %v3601
      %v3603 = vshrl.u32 %v2653, 16
      %v3605 = vor.u32 %v3603, %v3601
      %v3607 = vshll.u32 %v2654, 16
      %v3609 = vrot.slane %v3607, 1
      %v3610 = vsel %vm3478, %v3605, %v3609
      %v3611 = vshrl.u32 %v2654, 16
      %v3613 = vor.u32 %v3611, %v3609
      %v3615 = vshll.u32 %v2655, 16
      %v3617 = vrot.slane %v3615, 1
      %v3618 = vsel %vm3478, %v3613, %v3617
      %v3619 = vshrl.u32 %v2655, 16
      %v3621 = vor.u32 %v3619, %v3617
      %v3623 = vshll.u32 %v2656, 16
      %v3625 = vrot.slane %v3623, 1
      %v3626 = vsel %vm3478, %v3621, %v3625
      %v3627 = vshrl.u32 %v2656, 16
      %v3629 = vor.u32 %v3627, %v3625
      %v3631 = vshll.u32 %v2657, 16
      %v3633 = vrot.slane %v3631, 1
      %v3634 = vsel %vm3478, %v3629, %v3633
      %v3635 = vshrl.u32 %v2657, 16
      %v3637 = vor.u32 %v3635, %v3633
      %v3639 = vshll.u32 %v2658, 16
      %v3641 = vrot.slane %v3639, 1
      %v3642 = vsel %vm3478, %v3637, %v3641
      %v3643 = vshrl.u32 %v2658, 16
      %v3645 = vor.u32 %v3643, %v3641
      %v3647 = vshll.u32 %v2659, 16
      %v3649 = vrot.slane %v3647, 1
      %v3650 = vsel %vm3478, %v3645, %v3649
      %v3651 = vshrl.u32 %v2659, 16
      %v3653 = vor.u32 %v3651, %v3649
      %v3655 = vshll.u32 %v2660, 16
      %v3657 = vrot.slane %v3655, 1
      %v3658 = vsel %vm3478, %v3653, %v3657
      %v3659 = vshrl.u32 %v2660, 16
      %v3661 = vor.u32 %v3659, %v3657
      %v3663 = vshll.u32 %v2661, 16
      %v3665 = vrot.slane %v3663, 1
      %v3666 = vsel %vm3478, %v3661, %v3665
      %v3667 = vshrl.u32 %v2661, 16
      %v3669 = vor.u32 %v3667, %v3665
      %v3671 = vshll.u32 %v2662, 16
      %v3673 = vrot.slane %v3671, 1
      %v3674 = vsel %vm3478, %v3669, %v3673
      %v3675 = vshrl.u32 %v2662, 16
      %v3677 = vor.u32 %v3675, %v3673
      %v3679 = vshll.u32 %v2663, 16
      %v3681 = vrot.slane %v3679, 1
      %v3682 = vsel %vm3478, %v3677, %v3681
      %v3683 = vshrl.u32 %v2663, 16
      %v3685 = vor.u32 %v3683, %v3681
      %v3687 = vshll.u32 %v2664, 16
      %v3689 = vrot.slane %v3687, 1
      %v3690 = vsel %vm3478, %v3685, %v3689
      %v3691 = vshrl.u32 %v2664, 16
      %v3693 = vor.u32 %v3691, %v3689
      %v3695 = vshll.u32 %v2665, 16
      %v3697 = vrot.slane %v3695, 1
      %v3698 = vsel %vm3478, %v3693, %v3697
      %v3699 = vshrl.u32 %v2665, 16
      %v3701 = vor.u32 %v3699, %v3697
      %v3703 = vshll.u32 %v2666, 16
      %v3705 = vrot.slane %v3703, 1
      %v3706 = vsel %vm3478, %v3701, %v3705
      %v3707 = vshrl.u32 %v2666, 16
      %v3709 = vor.u32 %v3707, %v3705
      %v3711 = vshll.u32 %v2667, 16
      %v3713 = vrot.slane %v3711, 1
      %v3714 = vsel %vm3478, %v3709, %v3713
      %v3715 = vshrl.u32 %v2667, 16
      %v3717 = vor.u32 %v3715, %v3713
      %v3719 = vshll.u32 %v2668, 16
      %v3721 = vrot.slane %v3719, 1
      %v3722 = vsel %vm3478, %v3717, %v3721
      %v3723 = vshrl.u32 %v2668, 16
      %v3725 = vor.u32 %v3723, %v3721
      %v3727 = vshll.u32 %v2669, 16
      %v3729 = vrot.slane %v3727, 1
      %v3730 = vsel %vm3478, %v3725, %v3729
      %v3731 = vshrl.u32 %v2669, 16
      %v3733 = vor.u32 %v3731, %v3729
      %v3735 = vshll.u32 %v3477, 16
      %v3737 = vrot.slane %v3735, 1
      %v3738 = vsel %vm3478, %v3733, %v3737
      %v3787 = vunpack.c.l.b16 %v3461
      %v3788 = vunpack.c.l.b16 %v3462
      %v3789 = vunpack.c.l.b16 %v3463
      %v3790 = vunpack.c.l.b16 %v3464
      %v3791 = vunpack.c.l.b16 %v3465
      %v3792 = vunpack.c.l.b16 %v3466
      %v3793 = vunpack.c.l.b16 %v3467
      %v3794 = vunpack.c.l.b16 %v3468
      %v3795 = vunpack.c.l.b16 %v3469
      %v3796 = vunpack.c.l.b16 %v3470
      %v3797 = vunpack.c.l.b16 %v3471
      %v3798 = vunpack.c.l.b16 %v3472
      %v3799 = vunpack.c.l.b16 %v3473
      %v3800 = vunpack.c.l.b16 %v3474
      %v3801 = vunpack.c.l.b16 %v3475
      %v3802 = vunpack.c.l.b16 %v3476
      %v3803 = vpack.c.b16 %v3788, %v3787
      %v3804 = vpack.c.b16 %v3790, %v3789
      %v3805 = vpack.c.b16 %v3792, %v3791
      %v3806 = vpack.c.b16 %v3794, %v3793
      %v3807 = vpack.c.b16 %v3796, %v3795
      %v3808 = vpack.c.b16 %v3798, %v3797
      %v3809 = vpack.c.b16 %v3800, %v3799
      %v3810 = vpack.c.b16 %v3802, %v3801
      %3819 = vmatpush.bf16.msra.mxu0 %v3810
      %3820 = vmatpush.bf16.msra.mxu0 %v3809
      %3821 = vmatpush.bf16.msra.mxu0 %v3808
      %3822 = vmatpush.bf16.msra.mxu0 %v3807
      %3823 = vmatpush.bf16.msra.mxu0 %v3806
      %3824 = vmatpush.bf16.msra.mxu0 %v3805
      %3825 = vmatpush.bf16.msra.mxu0 %v3804
      %3826 = vmatpush.bf16.msra.mxu0 %v3803
      %3827 = vmatmul.bf16.gmra.mxu0 %v3490
      %v3828 = vpop.f32.mrf.mxu0
      %v3829 = vadd.f32 0.0, %v3828
      %v3830 = vpop.f32.mrf.mxu0
      %v3831 = vadd.f32 0.0, %v3830
      %3832 = vmatmul.bf16.gmra.mxu0 %v3498
      %v3833 = vpop.f32.mrf.mxu0
      %v3834 = vadd.f32 0.0, %v3833
      %v3835 = vpop.f32.mrf.mxu0
      %v3836 = vadd.f32 0.0, %v3835
      %3837 = vmatmul.bf16.gmra.mxu0 %v3506
      %v3838 = vpop.f32.mrf.mxu0
      %v3839 = vadd.f32 0.0, %v3838
      %v3840 = vpop.f32.mrf.mxu0
      %v3841 = vadd.f32 0.0, %v3840
      %3842 = vmatmul.bf16.gmra.mxu0 %v3514
      %v3843 = vpop.f32.mrf.mxu0
      %v3844 = vadd.f32 0.0, %v3843
      %v3845 = vpop.f32.mrf.mxu0
      %v3846 = vadd.f32 0.0, %v3845
      %3847 = vmatmul.bf16.gmra.mxu0 %v3522
      %v3848 = vpop.f32.mrf.mxu0
      %v3849 = vadd.f32 0.0, %v3848
      %v3850 = vpop.f32.mrf.mxu0
      %v3851 = vadd.f32 0.0, %v3850
      %3852 = vmatmul.bf16.gmra.mxu0 %v3530
      %v3853 = vpop.f32.mrf.mxu0
      %v3854 = vadd.f32 0.0, %v3853
      %v3855 = vpop.f32.mrf.mxu0
      %v3856 = vadd.f32 0.0, %v3855
      %3857 = vmatmul.bf16.gmra.mxu0 %v3538
      %v3858 = vpop.f32.mrf.mxu0
      %v3859 = vadd.f32 0.0, %v3858
      %v3860 = vpop.f32.mrf.mxu0
      %v3861 = vadd.f32 0.0, %v3860
      %3862 = vmatmul.bf16.gmra.mxu0 %v3546
      %v3863 = vpop.f32.mrf.mxu0
      %v3864 = vadd.f32 0.0, %v3863
      %v3865 = vpop.f32.mrf.mxu0
      %v3866 = vadd.f32 0.0, %v3865
      %3867 = vmatmul.bf16.gmra.mxu0 %v3554
      %v3868 = vpop.f32.mrf.mxu0
      %v3869 = vadd.f32 0.0, %v3868
      %v3870 = vpop.f32.mrf.mxu0
      %v3871 = vadd.f32 0.0, %v3870
      %3872 = vmatmul.bf16.gmra.mxu0 %v3562
      %v3873 = vpop.f32.mrf.mxu0
      %v3874 = vadd.f32 0.0, %v3873
      %v3875 = vpop.f32.mrf.mxu0
      %v3876 = vadd.f32 0.0, %v3875
      %3877 = vmatmul.bf16.gmra.mxu0 %v3570
      %v3878 = vpop.f32.mrf.mxu0
      %v3879 = vadd.f32 0.0, %v3878
      %v3880 = vpop.f32.mrf.mxu0
      %v3881 = vadd.f32 0.0, %v3880
      %3882 = vmatmul.bf16.gmra.mxu0 %v3578
      %v3883 = vpop.f32.mrf.mxu0
      %v3884 = vadd.f32 0.0, %v3883
      %v3885 = vpop.f32.mrf.mxu0
      %v3886 = vadd.f32 0.0, %v3885
      %3887 = vmatmul.bf16.gmra.mxu0 %v3586
      %v3888 = vpop.f32.mrf.mxu0
      %v3889 = vadd.f32 0.0, %v3888
      %v3890 = vpop.f32.mrf.mxu0
      %v3891 = vadd.f32 0.0, %v3890
      %3892 = vmatmul.bf16.gmra.mxu0 %v3594
      %v3893 = vpop.f32.mrf.mxu0
      %v3894 = vadd.f32 0.0, %v3893
      %v3895 = vpop.f32.mrf.mxu0
      %v3896 = vadd.f32 0.0, %v3895
      %3897 = vmatmul.bf16.gmra.mxu0 %v3602
      %v3898 = vpop.f32.mrf.mxu0
      %v3899 = vadd.f32 0.0, %v3898
      %v3900 = vpop.f32.mrf.mxu0
      %v3901 = vadd.f32 0.0, %v3900
      %3902 = vmatmul.bf16.gmra.mxu0 %v3610
      %v3903 = vpop.f32.mrf.mxu0
      %v3904 = vadd.f32 0.0, %v3903
      %v3905 = vpop.f32.mrf.mxu0
      %v3906 = vadd.f32 0.0, %v3905
      %3907 = vmatmul.bf16.gmra.mxu0 %v3618
      %v3908 = vpop.f32.mrf.mxu0
      %v3909 = vadd.f32 0.0, %v3908
      %v3910 = vpop.f32.mrf.mxu0
      %v3911 = vadd.f32 0.0, %v3910
      %3912 = vmatmul.bf16.gmra.mxu0 %v3626
      %v3913 = vpop.f32.mrf.mxu0
      %v3914 = vadd.f32 0.0, %v3913
      %v3915 = vpop.f32.mrf.mxu0
      %v3916 = vadd.f32 0.0, %v3915
      %3917 = vmatmul.bf16.gmra.mxu0 %v3634
      %v3918 = vpop.f32.mrf.mxu0
      %v3919 = vadd.f32 0.0, %v3918
      %v3920 = vpop.f32.mrf.mxu0
      %v3921 = vadd.f32 0.0, %v3920
      %3922 = vmatmul.bf16.gmra.mxu0 %v3642
      %v3923 = vpop.f32.mrf.mxu0
      %v3924 = vadd.f32 0.0, %v3923
      %v3925 = vpop.f32.mrf.mxu0
      %v3926 = vadd.f32 0.0, %v3925
      %3927 = vmatmul.bf16.gmra.mxu0 %v3650
      %v3928 = vpop.f32.mrf.mxu0
      %v3929 = vadd.f32 0.0, %v3928
      %v3930 = vpop.f32.mrf.mxu0
      %v3931 = vadd.f32 0.0, %v3930
      %3932 = vmatmul.bf16.gmra.mxu0 %v3658
      %v3933 = vpop.f32.mrf.mxu0
      %v3934 = vadd.f32 0.0, %v3933
      %v3935 = vpop.f32.mrf.mxu0
      %v3936 = vadd.f32 0.0, %v3935
      %3937 = vmatmul.bf16.gmra.mxu0 %v3666
      %v3938 = vpop.f32.mrf.mxu0
      %v3939 = vadd.f32 0.0, %v3938
      %v3940 = vpop.f32.mrf.mxu0
      %v3941 = vadd.f32 0.0, %v3940
      %3942 = vmatmul.bf16.gmra.mxu0 %v3674
      %v3943 = vpop.f32.mrf.mxu0
      %v3944 = vadd.f32 0.0, %v3943
      %v3945 = vpop.f32.mrf.mxu0
      %v3946 = vadd.f32 0.0, %v3945
      %3947 = vmatmul.bf16.gmra.mxu0 %v3682
      %v3948 = vpop.f32.mrf.mxu0
      %v3949 = vadd.f32 0.0, %v3948
      %v3950 = vpop.f32.mrf.mxu0
      %v3951 = vadd.f32 0.0, %v3950
      %3952 = vmatmul.bf16.gmra.mxu0 %v3690
      %v3953 = vpop.f32.mrf.mxu0
      %v3954 = vadd.f32 0.0, %v3953
      %v3955 = vpop.f32.mrf.mxu0
      %v3956 = vadd.f32 0.0, %v3955
      %3957 = vmatmul.bf16.gmra.mxu0 %v3698
      %v3958 = vpop.f32.mrf.mxu0
      %v3959 = vadd.f32 0.0, %v3958
      %v3960 = vpop.f32.mrf.mxu0
      %v3961 = vadd.f32 0.0, %v3960
      %3962 = vmatmul.bf16.gmra.mxu0 %v3706
      %v3963 = vpop.f32.mrf.mxu0
      %v3964 = vadd.f32 0.0, %v3963
      %v3965 = vpop.f32.mrf.mxu0
      %v3966 = vadd.f32 0.0, %v3965
      %3967 = vmatmul.bf16.gmra.mxu0 %v3714
      %v3968 = vpop.f32.mrf.mxu0
      %v3969 = vadd.f32 0.0, %v3968
      %v3970 = vpop.f32.mrf.mxu0
      %v3971 = vadd.f32 0.0, %v3970
      %3972 = vmatmul.bf16.gmra.mxu0 %v3722
      %v3973 = vpop.f32.mrf.mxu0
      %v3974 = vadd.f32 0.0, %v3973
      %v3975 = vpop.f32.mrf.mxu0
      %v3976 = vadd.f32 0.0, %v3975
      %3977 = vmatmul.bf16.gmra.mxu0 %v3730
      %v3978 = vpop.f32.mrf.mxu0
      %v3979 = vadd.f32 0.0, %v3978
      %v3980 = vpop.f32.mrf.mxu0
      %v3981 = vadd.f32 0.0, %v3980
      %3982 = vmatmul.bf16.gmra.mxu0 %v3738
      %v3983 = vpop.f32.mrf.mxu0
      %v3984 = vadd.f32 0.0, %v3983
      %v3985 = vpop.f32.mrf.mxu0
      %v3986 = vadd.f32 0.0, %v3985
      %3987 = vdwg.mxu0
      %v3988 = vadd.f32 %v3396, %v3829
      %v3989 = vadd.f32 %v3397, %v3831
      %v3990 = vadd.f32 %v3398, %v3834
      %v3991 = vadd.f32 %v3399, %v3836
      %v3992 = vadd.f32 %v3400, %v3839
      %v3993 = vadd.f32 %v3401, %v3841
      %v3994 = vadd.f32 %v3402, %v3844
      %v3995 = vadd.f32 %v3403, %v3846
      %v3996 = vadd.f32 %v3404, %v3849
      %v3997 = vadd.f32 %v3405, %v3851
      %v3998 = vadd.f32 %v3406, %v3854
      %v3999 = vadd.f32 %v3407, %v3856
      %v4000 = vadd.f32 %v3408, %v3859
      %v4001 = vadd.f32 %v3409, %v3861
      %v4002 = vadd.f32 %v3410, %v3864
      %v4003 = vadd.f32 %v3411, %v3866
      %v4004 = vadd.f32 %v3412, %v3869
      %v4005 = vadd.f32 %v3413, %v3871
      %v4006 = vadd.f32 %v3414, %v3874
      %v4007 = vadd.f32 %v3415, %v3876
      %v4008 = vadd.f32 %v3416, %v3879
      %v4009 = vadd.f32 %v3417, %v3881
      %v4010 = vadd.f32 %v3418, %v3884
      %v4011 = vadd.f32 %v3419, %v3886
      %v4012 = vadd.f32 %v3420, %v3889
      %v4013 = vadd.f32 %v3421, %v3891
      %v4014 = vadd.f32 %v3422, %v3894
      %v4015 = vadd.f32 %v3423, %v3896
      %v4016 = vadd.f32 %v3424, %v3899
      %v4017 = vadd.f32 %v3425, %v3901
      %v4018 = vadd.f32 %v3426, %v3904
      %v4019 = vadd.f32 %v3427, %v3906
      %v4020 = vadd.f32 %v3428, %v3909
      %v4021 = vadd.f32 %v3429, %v3911
      %v4022 = vadd.f32 %v3430, %v3914
      %v4023 = vadd.f32 %v3431, %v3916
      %v4024 = vadd.f32 %v3432, %v3919
      %v4025 = vadd.f32 %v3433, %v3921
      %v4026 = vadd.f32 %v3434, %v3924
      %v4027 = vadd.f32 %v3435, %v3926
      %v4028 = vadd.f32 %v3436, %v3929
      %v4029 = vadd.f32 %v3437, %v3931
      %v4030 = vadd.f32 %v3438, %v3934
      %v4031 = vadd.f32 %v3439, %v3936
      %v4032 = vadd.f32 %v3440, %v3939
      %v4033 = vadd.f32 %v3441, %v3941
      %v4034 = vadd.f32 %v3442, %v3944
      %v4035 = vadd.f32 %v3443, %v3946
      %v4036 = vadd.f32 %v3444, %v3949
      %v4037 = vadd.f32 %v3445, %v3951
      %v4038 = vadd.f32 %v3446, %v3954
      %v4039 = vadd.f32 %v3447, %v3956
      %v4040 = vadd.f32 %v3448, %v3959
      %v4041 = vadd.f32 %v3449, %v3961
      %v4042 = vadd.f32 %v3450, %v3964
      %v4043 = vadd.f32 %v3451, %v3966
      %v4044 = vadd.f32 %v3452, %v3969
      %v4045 = vadd.f32 %v3453, %v3971
      %v4046 = vadd.f32 %v3454, %v3974
      %v4047 = vadd.f32 %v3455, %v3976
      %v4048 = vadd.f32 %v3456, %v3979
      %v4049 = vadd.f32 %v3457, %v3981
      %v4050 = vadd.f32 %v3458, %v3984
      %v4051 = vadd.f32 %v3459, %v3986
      %s4052 = scalar_lea.vmem %s3, 256
      %v4053 = vld [vmem:[%s4052] sm:$0xf]
      %v4054 = vld [vmem:[%s4052 + $0x4] sm:$0xf]
      %v4055 = vld [vmem:[%s4052 + $0x8] sm:$0xf]
      %v4056 = vld [vmem:[%s4052 + $0xc] sm:$0xf]
      %v4057 = vld [vmem:[%s4052 + $0x10] sm:$0xf]
      %v4058 = vld [vmem:[%s4052 + $0x14] sm:$0xf]
      %v4059 = vld [vmem:[%s4052 + $0x18] sm:$0xf]
      %v4060 = vld [vmem:[%s4052 + $0x1c] sm:$0xf]
      %v4061 = vld [vmem:[%s4052 + $0x20] sm:$0xf]
      %v4062 = vld [vmem:[%s4052 + $0x24] sm:$0xf]
      %v4063 = vld [vmem:[%s4052 + $0x28] sm:$0xf]
      %v4064 = vld [vmem:[%s4052 + $0x2c] sm:$0xf]
      %v4065 = vld [vmem:[%s4052 + $0x30] sm:$0xf]
      %v4066 = vld [vmem:[%s4052 + $0x34] sm:$0xf]
      %v4067 = vld [vmem:[%s4052 + $0x38] sm:$0xf]
      %v4068 = vld [vmem:[%s4052 + $0x3c] sm:$0xf]
      %v4069 = vpack.c.b16 %v3171, %v3171
      %v4071 = vshll.u32 %v2670, 16
      %v4073 = vrot.slane %v4071, 1
      %v4074 = vsel %vm3478, %v3733, %v4073
      %v4075 = vshrl.u32 %v2670, 16
      %v4077 = vor.u32 %v4075, %v4073
      %v4079 = vshll.u32 %v2671, 16
      %v4081 = vrot.slane %v4079, 1
      %v4082 = vsel %vm3478, %v4077, %v4081
      %v4083 = vshrl.u32 %v2671, 16
      %v4085 = vor.u32 %v4083, %v4081
      %v4087 = vshll.u32 %v4069, 16
      %v4089 = vrot.slane %v4087, 1
      %v4090 = vsel %vm3478, %v4085, %v4089
      %v4110 = vunpack.c.l.b16 %v4053
      %v4111 = vunpack.c.l.b16 %v4054
      %v4112 = vunpack.c.l.b16 %v4055
      %v4113 = vunpack.c.l.b16 %v4056
      %v4114 = vunpack.c.l.b16 %v4057
      %v4115 = vunpack.c.l.b16 %v4058
      %v4116 = vunpack.c.l.b16 %v4059
      %v4117 = vunpack.c.l.b16 %v4060
      %v4118 = vunpack.c.l.b16 %v4061
      %v4119 = vunpack.c.l.b16 %v4062
      %v4120 = vunpack.c.l.b16 %v4063
      %v4121 = vunpack.c.l.b16 %v4064
      %v4122 = vunpack.c.l.b16 %v4065
      %v4123 = vunpack.c.l.b16 %v4066
      %v4124 = vunpack.c.l.b16 %v4067
      %v4125 = vunpack.c.l.b16 %v4068
      %v4126 = vpack.c.b16 %v4111, %v4110
      %v4127 = vpack.c.b16 %v4113, %v4112
      %v4128 = vpack.c.b16 %v4115, %v4114
      %v4129 = vpack.c.b16 %v4117, %v4116
      %v4130 = vpack.c.b16 %v4119, %v4118
      %v4131 = vpack.c.b16 %v4121, %v4120
      %v4132 = vpack.c.b16 %v4123, %v4122
      %v4133 = vpack.c.b16 %v4125, %v4124
      %4142 = vmatpush.bf16.msra.mxu0 %v4133
      %4143 = vmatpush.bf16.msra.mxu0 %v4132
      %4144 = vmatpush.bf16.msra.mxu0 %v4131
      %4145 = vmatpush.bf16.msra.mxu0 %v4130
      %4146 = vmatpush.bf16.msra.mxu0 %v4129
      %4147 = vmatpush.bf16.msra.mxu0 %v4128
      %4148 = vmatpush.bf16.msra.mxu0 %v4127
      %4149 = vmatpush.bf16.msra.mxu0 %v4126
      %4150 = vmatmul.bf16.gmra.mxu0 %v3506
      %v4151 = vpop.f32.mrf.mxu0
      %v4152 = vadd.f32 0.0, %v4151
      %v4153 = vpop.f32.mrf.mxu0
      %v4154 = vadd.f32 0.0, %v4153
      %4155 = vmatmul.bf16.gmra.mxu0 %v3514
      %v4156 = vpop.f32.mrf.mxu0
      %v4157 = vadd.f32 0.0, %v4156
      %v4158 = vpop.f32.mrf.mxu0
      %v4159 = vadd.f32 0.0, %v4158
      %4160 = vmatmul.bf16.gmra.mxu0 %v3522
      %v4161 = vpop.f32.mrf.mxu0
      %v4162 = vadd.f32 0.0, %v4161
      %v4163 = vpop.f32.mrf.mxu0
      %v4164 = vadd.f32 0.0, %v4163
      %4165 = vmatmul.bf16.gmra.mxu0 %v3530
      %v4166 = vpop.f32.mrf.mxu0
      %v4167 = vadd.f32 0.0, %v4166
      %v4168 = vpop.f32.mrf.mxu0
      %v4169 = vadd.f32 0.0, %v4168
      %4170 = vmatmul.bf16.gmra.mxu0 %v3538
      %v4171 = vpop.f32.mrf.mxu0
      %v4172 = vadd.f32 0.0, %v4171
      %v4173 = vpop.f32.mrf.mxu0
      %v4174 = vadd.f32 0.0, %v4173
      %4175 = vmatmul.bf16.gmra.mxu0 %v3546
      %v4176 = vpop.f32.mrf.mxu0
      %v4177 = vadd.f32 0.0, %v4176
      %v4178 = vpop.f32.mrf.mxu0
      %v4179 = vadd.f32 0.0, %v4178
      %4180 = vmatmul.bf16.gmra.mxu0 %v3554
      %v4181 = vpop.f32.mrf.mxu0
      %v4182 = vadd.f32 0.0, %v4181
      %v4183 = vpop.f32.mrf.mxu0
      %v4184 = vadd.f32 0.0, %v4183
      %4185 = vmatmul.bf16.gmra.mxu0 %v3562
      %v4186 = vpop.f32.mrf.mxu0
      %v4187 = vadd.f32 0.0, %v4186
      %v4188 = vpop.f32.mrf.mxu0
      %v4189 = vadd.f32 0.0, %v4188
      %4190 = vmatmul.bf16.gmra.mxu0 %v3570
      %v4191 = vpop.f32.mrf.mxu0
      %v4192 = vadd.f32 0.0, %v4191
      %v4193 = vpop.f32.mrf.mxu0
      %v4194 = vadd.f32 0.0, %v4193
      %4195 = vmatmul.bf16.gmra.mxu0 %v3578
      %v4196 = vpop.f32.mrf.mxu0
      %v4197 = vadd.f32 0.0, %v4196
      %v4198 = vpop.f32.mrf.mxu0
      %v4199 = vadd.f32 0.0, %v4198
      %4200 = vmatmul.bf16.gmra.mxu0 %v3586
      %v4201 = vpop.f32.mrf.mxu0
      %v4202 = vadd.f32 0.0, %v4201
      %v4203 = vpop.f32.mrf.mxu0
      %v4204 = vadd.f32 0.0, %v4203
      %4205 = vmatmul.bf16.gmra.mxu0 %v3594
      %v4206 = vpop.f32.mrf.mxu0
      %v4207 = vadd.f32 0.0, %v4206
      %v4208 = vpop.f32.mrf.mxu0
      %v4209 = vadd.f32 0.0, %v4208
      %4210 = vmatmul.bf16.gmra.mxu0 %v3602
      %v4211 = vpop.f32.mrf.mxu0
      %v4212 = vadd.f32 0.0, %v4211
      %v4213 = vpop.f32.mrf.mxu0
      %v4214 = vadd.f32 0.0, %v4213
      %4215 = vmatmul.bf16.gmra.mxu0 %v3610
      %v4216 = vpop.f32.mrf.mxu0
      %v4217 = vadd.f32 0.0, %v4216
      %v4218 = vpop.f32.mrf.mxu0
      %v4219 = vadd.f32 0.0, %v4218
      %4220 = vmatmul.bf16.gmra.mxu0 %v3618
      %v4221 = vpop.f32.mrf.mxu0
      %v4222 = vadd.f32 0.0, %v4221
      %v4223 = vpop.f32.mrf.mxu0
      %v4224 = vadd.f32 0.0, %v4223
      %4225 = vmatmul.bf16.gmra.mxu0 %v3626
      %v4226 = vpop.f32.mrf.mxu0
      %v4227 = vadd.f32 0.0, %v4226
      %v4228 = vpop.f32.mrf.mxu0
      %v4229 = vadd.f32 0.0, %v4228
      %4230 = vmatmul.bf16.gmra.mxu0 %v3634
      %v4231 = vpop.f32.mrf.mxu0
      %v4232 = vadd.f32 0.0, %v4231
      %v4233 = vpop.f32.mrf.mxu0
      %v4234 = vadd.f32 0.0, %v4233
      %4235 = vmatmul.bf16.gmra.mxu0 %v3642
      %v4236 = vpop.f32.mrf.mxu0
      %v4237 = vadd.f32 0.0, %v4236
      %v4238 = vpop.f32.mrf.mxu0
      %v4239 = vadd.f32 0.0, %v4238
      %4240 = vmatmul.bf16.gmra.mxu0 %v3650
      %v4241 = vpop.f32.mrf.mxu0
      %v4242 = vadd.f32 0.0, %v4241
      %v4243 = vpop.f32.mrf.mxu0
      %v4244 = vadd.f32 0.0, %v4243
      %4245 = vmatmul.bf16.gmra.mxu0 %v3658
      %v4246 = vpop.f32.mrf.mxu0
      %v4247 = vadd.f32 0.0, %v4246
      %v4248 = vpop.f32.mrf.mxu0
      %v4249 = vadd.f32 0.0, %v4248
      %4250 = vmatmul.bf16.gmra.mxu0 %v3666
      %v4251 = vpop.f32.mrf.mxu0
      %v4252 = vadd.f32 0.0, %v4251
      %v4253 = vpop.f32.mrf.mxu0
      %v4254 = vadd.f32 0.0, %v4253
      %4255 = vmatmul.bf16.gmra.mxu0 %v3674
      %v4256 = vpop.f32.mrf.mxu0
      %v4257 = vadd.f32 0.0, %v4256
      %v4258 = vpop.f32.mrf.mxu0
      %v4259 = vadd.f32 0.0, %v4258
      %4260 = vmatmul.bf16.gmra.mxu0 %v3682
      %v4261 = vpop.f32.mrf.mxu0
      %v4262 = vadd.f32 0.0, %v4261
      %v4263 = vpop.f32.mrf.mxu0
      %v4264 = vadd.f32 0.0, %v4263
      %4265 = vmatmul.bf16.gmra.mxu0 %v3690
      %v4266 = vpop.f32.mrf.mxu0
      %v4267 = vadd.f32 0.0, %v4266
      %v4268 = vpop.f32.mrf.mxu0
      %v4269 = vadd.f32 0.0, %v4268
      %4270 = vmatmul.bf16.gmra.mxu0 %v3698
      %v4271 = vpop.f32.mrf.mxu0
      %v4272 = vadd.f32 0.0, %v4271
      %v4273 = vpop.f32.mrf.mxu0
      %v4274 = vadd.f32 0.0, %v4273
      %4275 = vmatmul.bf16.gmra.mxu0 %v3706
      %v4276 = vpop.f32.mrf.mxu0
      %v4277 = vadd.f32 0.0, %v4276
      %v4278 = vpop.f32.mrf.mxu0
      %v4279 = vadd.f32 0.0, %v4278
      %4280 = vmatmul.bf16.gmra.mxu0 %v3714
      %v4281 = vpop.f32.mrf.mxu0
      %v4282 = vadd.f32 0.0, %v4281
      %v4283 = vpop.f32.mrf.mxu0
      %v4284 = vadd.f32 0.0, %v4283
      %4285 = vmatmul.bf16.gmra.mxu0 %v3722
      %v4286 = vpop.f32.mrf.mxu0
      %v4287 = vadd.f32 0.0, %v4286
      %v4288 = vpop.f32.mrf.mxu0
      %v4289 = vadd.f32 0.0, %v4288
      %4290 = vmatmul.bf16.gmra.mxu0 %v3730
      %v4291 = vpop.f32.mrf.mxu0
      %v4292 = vadd.f32 0.0, %v4291
      %v4293 = vpop.f32.mrf.mxu0
      %v4294 = vadd.f32 0.0, %v4293
      %4295 = vmatmul.bf16.gmra.mxu0 %v4074
      %v4296 = vpop.f32.mrf.mxu0
      %v4297 = vadd.f32 0.0, %v4296
      %v4298 = vpop.f32.mrf.mxu0
      %v4299 = vadd.f32 0.0, %v4298
      %4300 = vmatmul.bf16.gmra.mxu0 %v4082
      %v4301 = vpop.f32.mrf.mxu0
      %v4302 = vadd.f32 0.0, %v4301
      %v4303 = vpop.f32.mrf.mxu0
      %v4304 = vadd.f32 0.0, %v4303
      %4305 = vmatmul.bf16.gmra.mxu0 %v4090
      %v4306 = vpop.f32.mrf.mxu0
      %v4307 = vadd.f32 0.0, %v4306
      %v4308 = vpop.f32.mrf.mxu0
      %v4309 = vadd.f32 0.0, %v4308
      %4310 = vdwg.mxu0
      %v4311 = vadd.f32 %v3988, %v4152
      %v4312 = vadd.f32 %v3989, %v4154
      %v4313 = vadd.f32 %v3990, %v4157
      %v4314 = vadd.f32 %v3991, %v4159
      %v4315 = vadd.f32 %v3992, %v4162
      %v4316 = vadd.f32 %v3993, %v4164
      %v4317 = vadd.f32 %v3994, %v4167
      %v4318 = vadd.f32 %v3995, %v4169
      %v4319 = vadd.f32 %v3996, %v4172
      %v4320 = vadd.f32 %v3997, %v4174
      %v4321 = vadd.f32 %v3998, %v4177
      %v4322 = vadd.f32 %v3999, %v4179
      %v4323 = vadd.f32 %v4000, %v4182
      %v4324 = vadd.f32 %v4001, %v4184
      %v4325 = vadd.f32 %v4002, %v4187
      %v4326 = vadd.f32 %v4003, %v4189
      %v4327 = vadd.f32 %v4004, %v4192
      %v4328 = vadd.f32 %v4005, %v4194
      %v4329 = vadd.f32 %v4006, %v4197
      %v4330 = vadd.f32 %v4007, %v4199
      %v4331 = vadd.f32 %v4008, %v4202
      %v4332 = vadd.f32 %v4009, %v4204
      %v4333 = vadd.f32 %v4010, %v4207
      %v4334 = vadd.f32 %v4011, %v4209
      %v4335 = vadd.f32 %v4012, %v4212
      %v4336 = vadd.f32 %v4013, %v4214
      %v4337 = vadd.f32 %v4014, %v4217
      %v4338 = vadd.f32 %v4015, %v4219
      %v4339 = vadd.f32 %v4016, %v4222
      %v4340 = vadd.f32 %v4017, %v4224
      %v4341 = vadd.f32 %v4018, %v4227
      %v4342 = vadd.f32 %v4019, %v4229
      %v4343 = vadd.f32 %v4020, %v4232
      %v4344 = vadd.f32 %v4021, %v4234
      %v4345 = vadd.f32 %v4022, %v4237
      %v4346 = vadd.f32 %v4023, %v4239
      %v4347 = vadd.f32 %v4024, %v4242
      %v4348 = vadd.f32 %v4025, %v4244
      %v4349 = vadd.f32 %v4026, %v4247
      %v4350 = vadd.f32 %v4027, %v4249
      %v4351 = vadd.f32 %v4028, %v4252
      %v4352 = vadd.f32 %v4029, %v4254
      %v4353 = vadd.f32 %v4030, %v4257
      %v4354 = vadd.f32 %v4031, %v4259
      %v4355 = vadd.f32 %v4032, %v4262
      %v4356 = vadd.f32 %v4033, %v4264
      %v4357 = vadd.f32 %v4034, %v4267
      %v4358 = vadd.f32 %v4035, %v4269
      %v4359 = vadd.f32 %v4036, %v4272
      %v4360 = vadd.f32 %v4037, %v4274
      %v4361 = vadd.f32 %v4038, %v4277
      %v4362 = vadd.f32 %v4039, %v4279
      %v4363 = vadd.f32 %v4040, %v4282
      %v4364 = vadd.f32 %v4041, %v4284
      %v4365 = vadd.f32 %v4042, %v4287
      %v4366 = vadd.f32 %v4043, %v4289
      %v4367 = vadd.f32 %v4044, %v4292
      %v4368 = vadd.f32 %v4045, %v4294
      %v4369 = vadd.f32 %v4046, %v4297
      %v4370 = vadd.f32 %v4047, %v4299
      %v4371 = vadd.f32 %v4048, %v4302
      %v4372 = vadd.f32 %v4049, %v4304
      %v4373 = vadd.f32 %v4050, %v4307
      %v4374 = vadd.f32 %v4051, %v4309
      %s4375 = scalar_lea.vmem %s3, 448
      %v4376 = vld [vmem:[%s4375] sm:$0xf]
      %v4377 = vld [vmem:[%s4375 + $0x4] sm:$0xf]
      %v4378 = vld [vmem:[%s4375 + $0x8] sm:$0xf]
      %v4379 = vld [vmem:[%s4375 + $0xc] sm:$0xf]
      %v4380 = vld [vmem:[%s4375 + $0x10] sm:$0xf]
      %v4381 = vld [vmem:[%s4375 + $0x14] sm:$0xf]
      %v4382 = vld [vmem:[%s4375 + $0x18] sm:$0xf]
      %v4383 = vld [vmem:[%s4375 + $0x1c] sm:$0xf]
      %v4384 = vld [vmem:[%s4375 + $0x20] sm:$0xf]
      %v4385 = vld [vmem:[%s4375 + $0x24] sm:$0xf]
      %v4386 = vld [vmem:[%s4375 + $0x28] sm:$0xf]
      %v4387 = vld [vmem:[%s4375 + $0x2c] sm:$0xf]
      %v4388 = vld [vmem:[%s4375 + $0x30] sm:$0xf]
      %v4389 = vld [vmem:[%s4375 + $0x34] sm:$0xf]
      %v4390 = vld [vmem:[%s4375 + $0x38] sm:$0xf]
      %v4391 = vld [vmem:[%s4375 + $0x3c] sm:$0xf]
      %v4393 = vunpack.c.l.b16 %v2478
      %v4394 = vpack.c.b16 %v4393, %v4393
      %v4396 = vshll.u32 %v3175, 16
      %v4398 = vrot.slane %v4396, 1
      %v4399 = vsel %vm3478, %v4085, %v4398
      %v4400 = vshrl.u32 %v3175, 16
      %v4402 = vor.u32 %v4400, %v4398
      %v4404 = vshll.u32 %v3176, 16
      %v4406 = vrot.slane %v4404, 1
      %v4407 = vsel %vm3478, %v4402, %v4406
      %v4408 = vshrl.u32 %v3176, 16
      %v4410 = vor.u32 %v4408, %v4406
      %v4412 = vshll.u32 %v4394, 16
      %v4414 = vrot.slane %v4412, 1
      %v4415 = vsel %vm3478, %v4410, %v4414
      %v4435 = vunpack.c.l.b16 %v4376
      %v4436 = vunpack.c.l.b16 %v4377
      %v4437 = vunpack.c.l.b16 %v4378
      %v4438 = vunpack.c.l.b16 %v4379
      %v4439 = vunpack.c.l.b16 %v4380
      %v4440 = vunpack.c.l.b16 %v4381
      %v4441 = vunpack.c.l.b16 %v4382
      %v4442 = vunpack.c.l.b16 %v4383
      %v4443 = vunpack.c.l.b16 %v4384
      %v4444 = vunpack.c.l.b16 %v4385
      %v4445 = vunpack.c.l.b16 %v4386
      %v4446 = vunpack.c.l.b16 %v4387
      %v4447 = vunpack.c.l.b16 %v4388
      %v4448 = vunpack.c.l.b16 %v4389
      %v4449 = vunpack.c.l.b16 %v4390
      %v4450 = vunpack.c.l.b16 %v4391
      %v4451 = vpack.c.b16 %v4436, %v4435
      %v4452 = vpack.c.b16 %v4438, %v4437
      %v4453 = vpack.c.b16 %v4440, %v4439
      %v4454 = vpack.c.b16 %v4442, %v4441
      %v4455 = vpack.c.b16 %v4444, %v4443
      %v4456 = vpack.c.b16 %v4446, %v4445
      %v4457 = vpack.c.b16 %v4448, %v4447
      %v4458 = vpack.c.b16 %v4450, %v4449
      %4467 = vmatpush.bf16.msra.mxu0 %v4458
      %4468 = vmatpush.bf16.msra.mxu0 %v4457
      %4469 = vmatpush.bf16.msra.mxu0 %v4456
      %4470 = vmatpush.bf16.msra.mxu0 %v4455
      %4471 = vmatpush.bf16.msra.mxu0 %v4454
      %4472 = vmatpush.bf16.msra.mxu0 %v4453
      %4473 = vmatpush.bf16.msra.mxu0 %v4452
      %4474 = vmatpush.bf16.msra.mxu0 %v4451
      %4475 = vmatmul.bf16.gmra.mxu0 %v3522
      %v4476 = vpop.f32.mrf.mxu0
      %v4477 = vadd.f32 0.0, %v4476
      %v4478 = vpop.f32.mrf.mxu0
      %v4479 = vadd.f32 0.0, %v4478
      %4480 = vmatmul.bf16.gmra.mxu0 %v3530
      %v4481 = vpop.f32.mrf.mxu0
      %v4482 = vadd.f32 0.0, %v4481
      %v4483 = vpop.f32.mrf.mxu0
      %v4484 = vadd.f32 0.0, %v4483
      %4485 = vmatmul.bf16.gmra.mxu0 %v3538
      %v4486 = vpop.f32.mrf.mxu0
      %v4487 = vadd.f32 0.0, %v4486
      %v4488 = vpop.f32.mrf.mxu0
      %v4489 = vadd.f32 0.0, %v4488
      %4490 = vmatmul.bf16.gmra.mxu0 %v3546
      %v4491 = vpop.f32.mrf.mxu0
      %v4492 = vadd.f32 0.0, %v4491
      %v4493 = vpop.f32.mrf.mxu0
      %v4494 = vadd.f32 0.0, %v4493
      %4495 = vmatmul.bf16.gmra.mxu0 %v3554
      %v4496 = vpop.f32.mrf.mxu0
      %v4497 = vadd.f32 0.0, %v4496
      %v4498 = vpop.f32.mrf.mxu0
      %v4499 = vadd.f32 0.0, %v4498
      %4500 = vmatmul.bf16.gmra.mxu0 %v3562
      %v4501 = vpop.f32.mrf.mxu0
      %v4502 = vadd.f32 0.0, %v4501
      %v4503 = vpop.f32.mrf.mxu0
      %v4504 = vadd.f32 0.0, %v4503
      %4505 = vmatmul.bf16.gmra.mxu0 %v3570
      %v4506 = vpop.f32.mrf.mxu0
      %v4507 = vadd.f32 0.0, %v4506
      %v4508 = vpop.f32.mrf.mxu0
      %v4509 = vadd.f32 0.0, %v4508
      %4510 = vmatmul.bf16.gmra.mxu0 %v3578
      %v4511 = vpop.f32.mrf.mxu0
      %v4512 = vadd.f32 0.0, %v4511
      %v4513 = vpop.f32.mrf.mxu0
      %v4514 = vadd.f32 0.0, %v4513
      %4515 = vmatmul.bf16.gmra.mxu0 %v3586
      %v4516 = vpop.f32.mrf.mxu0
      %v4517 = vadd.f32 0.0, %v4516
      %v4518 = vpop.f32.mrf.mxu0
      %v4519 = vadd.f32 0.0, %v4518
      %4520 = vmatmul.bf16.gmra.mxu0 %v3594
      %v4521 = vpop.f32.mrf.mxu0
      %v4522 = vadd.f32 0.0, %v4521
      %v4523 = vpop.f32.mrf.mxu0
      %v4524 = vadd.f32 0.0, %v4523
      %4525 = vmatmul.bf16.gmra.mxu0 %v3602
      %v4526 = vpop.f32.mrf.mxu0
      %v4527 = vadd.f32 0.0, %v4526
      %v4528 = vpop.f32.mrf.mxu0
      %v4529 = vadd.f32 0.0, %v4528
      %4530 = vmatmul.bf16.gmra.mxu0 %v3610
      %v4531 = vpop.f32.mrf.mxu0
      %v4532 = vadd.f32 0.0, %v4531
      %v4533 = vpop.f32.mrf.mxu0
      %v4534 = vadd.f32 0.0, %v4533
      %4535 = vmatmul.bf16.gmra.mxu0 %v3618
      %v4536 = vpop.f32.mrf.mxu0
      %v4537 = vadd.f32 0.0, %v4536
      %v4538 = vpop.f32.mrf.mxu0
      %v4539 = vadd.f32 0.0, %v4538
      %4540 = vmatmul.bf16.gmra.mxu0 %v3626
      %v4541 = vpop.f32.mrf.mxu0
      %v4542 = vadd.f32 0.0, %v4541
      %v4543 = vpop.f32.mrf.mxu0
      %v4544 = vadd.f32 0.0, %v4543
      %4545 = vmatmul.bf16.gmra.mxu0 %v3634
      %v4546 = vpop.f32.mrf.mxu0
      %v4547 = vadd.f32 0.0, %v4546
      %v4548 = vpop.f32.mrf.mxu0
      %v4549 = vadd.f32 0.0, %v4548
      %4550 = vmatmul.bf16.gmra.mxu0 %v3642
      %v4551 = vpop.f32.mrf.mxu0
      %v4552 = vadd.f32 0.0, %v4551
      %v4553 = vpop.f32.mrf.mxu0
      %v4554 = vadd.f32 0.0, %v4553
      %4555 = vmatmul.bf16.gmra.mxu0 %v3650
      %v4556 = vpop.f32.mrf.mxu0
      %v4557 = vadd.f32 0.0, %v4556
      %v4558 = vpop.f32.mrf.mxu0
      %v4559 = vadd.f32 0.0, %v4558
      %4560 = vmatmul.bf16.gmra.mxu0 %v3658
      %v4561 = vpop.f32.mrf.mxu0
      %v4562 = vadd.f32 0.0, %v4561
      %v4563 = vpop.f32.mrf.mxu0
      %v4564 = vadd.f32 0.0, %v4563
      %4565 = vmatmul.bf16.gmra.mxu0 %v3666
      %v4566 = vpop.f32.mrf.mxu0
      %v4567 = vadd.f32 0.0, %v4566
      %v4568 = vpop.f32.mrf.mxu0
      %v4569 = vadd.f32 0.0, %v4568
      %4570 = vmatmul.bf16.gmra.mxu0 %v3674
      %v4571 = vpop.f32.mrf.mxu0
      %v4572 = vadd.f32 0.0, %v4571
      %v4573 = vpop.f32.mrf.mxu0
      %v4574 = vadd.f32 0.0, %v4573
      %4575 = vmatmul.bf16.gmra.mxu0 %v3682
      %v4576 = vpop.f32.mrf.mxu0
      %v4577 = vadd.f32 0.0, %v4576
      %v4578 = vpop.f32.mrf.mxu0
      %v4579 = vadd.f32 0.0, %v4578
      %4580 = vmatmul.bf16.gmra.mxu0 %v3690
      %v4581 = vpop.f32.mrf.mxu0
      %v4582 = vadd.f32 0.0, %v4581
      %v4583 = vpop.f32.mrf.mxu0
      %v4584 = vadd.f32 0.0, %v4583
      %4585 = vmatmul.bf16.gmra.mxu0 %v3698
      %v4586 = vpop.f32.mrf.mxu0
      %v4587 = vadd.f32 0.0, %v4586
      %v4588 = vpop.f32.mrf.mxu0
      %v4589 = vadd.f32 0.0, %v4588
      %4590 = vmatmul.bf16.gmra.mxu0 %v3706
      %v4591 = vpop.f32.mrf.mxu0
      %v4592 = vadd.f32 0.0, %v4591
      %v4593 = vpop.f32.mrf.mxu0
      %v4594 = vadd.f32 0.0, %v4593
      %4595 = vmatmul.bf16.gmra.mxu0 %v3714
      %v4596 = vpop.f32.mrf.mxu0
      %v4597 = vadd.f32 0.0, %v4596
      %v4598 = vpop.f32.mrf.mxu0
      %v4599 = vadd.f32 0.0, %v4598
      %4600 = vmatmul.bf16.gmra.mxu0 %v3722
      %v4601 = vpop.f32.mrf.mxu0
      %v4602 = vadd.f32 0.0, %v4601
      %v4603 = vpop.f32.mrf.mxu0
      %v4604 = vadd.f32 0.0, %v4603
      %4605 = vmatmul.bf16.gmra.mxu0 %v3730
      %v4606 = vpop.f32.mrf.mxu0
      %v4607 = vadd.f32 0.0, %v4606
      %v4608 = vpop.f32.mrf.mxu0
      %v4609 = vadd.f32 0.0, %v4608
      %4610 = vmatmul.bf16.gmra.mxu0 %v4074
      %v4611 = vpop.f32.mrf.mxu0
      %v4612 = vadd.f32 0.0, %v4611
      %v4613 = vpop.f32.mrf.mxu0
      %v4614 = vadd.f32 0.0, %v4613
      %4615 = vmatmul.bf16.gmra.mxu0 %v4082
      %v4616 = vpop.f32.mrf.mxu0
      %v4617 = vadd.f32 0.0, %v4616
      %v4618 = vpop.f32.mrf.mxu0
      %v4619 = vadd.f32 0.0, %v4618
      %4620 = vmatmul.bf16.gmra.mxu0 %v4399
      %v4621 = vpop.f32.mrf.mxu0
      %v4622 = vadd.f32 0.0, %v4621
      %v4623 = vpop.f32.mrf.mxu0
      %v4624 = vadd.f32 0.0, %v4623
      %4625 = vmatmul.bf16.gmra.mxu0 %v4407
      %v4626 = vpop.f32.mrf.mxu0
      %v4627 = vadd.f32 0.0, %v4626
      %v4628 = vpop.f32.mrf.mxu0
      %v4629 = vadd.f32 0.0, %v4628
      %4630 = vmatmul.bf16.gmra.mxu0 %v4415
      %v4631 = vpop.f32.mrf.mxu0
      %v4632 = vadd.f32 0.0, %v4631
      %v4633 = vpop.f32.mrf.mxu0
      %v4634 = vadd.f32 0.0, %v4633
      %4635 = vdwg.mxu0
      %v4636 = vadd.f32 %v4311, %v4477
      %v4637 = vadd.f32 %v4312, %v4479
      %v4638 = vadd.f32 %v4313, %v4482
      %v4639 = vadd.f32 %v4314, %v4484
      %v4640 = vadd.f32 %v4315, %v4487
      %v4641 = vadd.f32 %v4316, %v4489
      %v4642 = vadd.f32 %v4317, %v4492
      %v4643 = vadd.f32 %v4318, %v4494
      %v4644 = vadd.f32 %v4319, %v4497
      %v4645 = vadd.f32 %v4320, %v4499
      %v4646 = vadd.f32 %v4321, %v4502
      %v4647 = vadd.f32 %v4322, %v4504
      %v4648 = vadd.f32 %v4323, %v4507
      %v4649 = vadd.f32 %v4324, %v4509
      %v4650 = vadd.f32 %v4325, %v4512
      %v4651 = vadd.f32 %v4326, %v4514
      %v4652 = vadd.f32 %v4327, %v4517
      %v4653 = vadd.f32 %v4328, %v4519
      %v4654 = vadd.f32 %v4329, %v4522
      %v4655 = vadd.f32 %v4330, %v4524
      %v4656 = vadd.f32 %v4331, %v4527
      %v4657 = vadd.f32 %v4332, %v4529
      %v4658 = vadd.f32 %v4333, %v4532
      %v4659 = vadd.f32 %v4334, %v4534
      %v4660 = vadd.f32 %v4335, %v4537
      %v4661 = vadd.f32 %v4336, %v4539
      %v4662 = vadd.f32 %v4337, %v4542
      %v4663 = vadd.f32 %v4338, %v4544
      %v4664 = vadd.f32 %v4339, %v4547
      %v4665 = vadd.f32 %v4340, %v4549
      %v4666 = vadd.f32 %v4341, %v4552
      %v4667 = vadd.f32 %v4342, %v4554
      %v4668 = vadd.f32 %v4343, %v4557
      %v4669 = vadd.f32 %v4344, %v4559
      %v4670 = vadd.f32 %v4345, %v4562
      %v4671 = vadd.f32 %v4346, %v4564
      %v4672 = vadd.f32 %v4347, %v4567
      %v4673 = vadd.f32 %v4348, %v4569
      %v4674 = vadd.f32 %v4349, %v4572
      %v4675 = vadd.f32 %v4350, %v4574
      %v4676 = vadd.f32 %v4351, %v4577
      %v4677 = vadd.f32 %v4352, %v4579
      %v4678 = vadd.f32 %v4353, %v4582
      %v4679 = vadd.f32 %v4354, %v4584
      %v4680 = vadd.f32 %v4355, %v4587
      %v4681 = vadd.f32 %v4356, %v4589
      %v4682 = vadd.f32 %v4357, %v4592
      %v4683 = vadd.f32 %v4358, %v4594
      %v4684 = vadd.f32 %v4359, %v4597
      %v4685 = vadd.f32 %v4360, %v4599
      %v4686 = vadd.f32 %v4361, %v4602
      %v4687 = vadd.f32 %v4362, %v4604
      %v4688 = vadd.f32 %v4363, %v4607
      %v4689 = vadd.f32 %v4364, %v4609
      %v4690 = vadd.f32 %v4365, %v4612
      %v4691 = vadd.f32 %v4366, %v4614
      %v4692 = vadd.f32 %v4367, %v4617
      %v4693 = vadd.f32 %v4368, %v4619
      %v4694 = vadd.f32 %v4369, %v4622
      %v4695 = vadd.f32 %v4370, %v4624
      %v4696 = vadd.f32 %v4371, %v4627
      %v4697 = vadd.f32 %v4372, %v4629
      %v4698 = vadd.f32 %v4373, %v4632
      %v4699 = vadd.f32 %v4374, %v4634
      %s4700 = scalar_lea.vmem %s3, 128
      %v4701 = vld [vmem:[%s4700] sm:$0xf]
      %v4702 = vld [vmem:[%s4700 + $0x4] sm:$0xf]
      %v4703 = vld [vmem:[%s4700 + $0x8] sm:$0xf]
      %v4704 = vld [vmem:[%s4700 + $0xc] sm:$0xf]
      %v4705 = vld [vmem:[%s4700 + $0x10] sm:$0xf]
      %v4706 = vld [vmem:[%s4700 + $0x14] sm:$0xf]
      %v4707 = vld [vmem:[%s4700 + $0x18] sm:$0xf]
      %v4708 = vld [vmem:[%s4700 + $0x1c] sm:$0xf]
      %v4709 = vld [vmem:[%s4700 + $0x20] sm:$0xf]
      %v4710 = vld [vmem:[%s4700 + $0x24] sm:$0xf]
      %v4711 = vld [vmem:[%s4700 + $0x28] sm:$0xf]
      %v4712 = vld [vmem:[%s4700 + $0x2c] sm:$0xf]
      %v4713 = vld [vmem:[%s4700 + $0x30] sm:$0xf]
      %v4714 = vld [vmem:[%s4700 + $0x34] sm:$0xf]
      %v4715 = vld [vmem:[%s4700 + $0x38] sm:$0xf]
      %v4716 = vld [vmem:[%s4700 + $0x3c] sm:$0xf]
      %vm4717 = vcmask 1046528
      %v4718 = vrot.slane %v2929, 1
      %v4719 = vrot.slane %v2930, 1
      %v4720 = vsel %vm4717, %v4718, %v4719
      %v4721 = vrot.slane %v2640, 1
      %v4722 = vsel %vm4717, %v4719, %v4721
      %v4723 = vrot.slane %v2641, 1
      %v4724 = vsel %vm4717, %v4721, %v4723
      %v4725 = vrot.slane %v2642, 1
      %v4726 = vsel %vm4717, %v4723, %v4725
      %v4727 = vrot.slane %v2643, 1
      %v4728 = vsel %vm4717, %v4725, %v4727
      %v4729 = vrot.slane %v2644, 1
      %v4730 = vsel %vm4717, %v4727, %v4729
      %v4731 = vrot.slane %v2645, 1
      %v4732 = vsel %vm4717, %v4729, %v4731
      %v4733 = vrot.slane %v2646, 1
      %v4734 = vsel %vm4717, %v4731, %v4733
      %v4735 = vrot.slane %v2647, 1
      %v4736 = vsel %vm4717, %v4733, %v4735
      %v4737 = vrot.slane %v2648, 1
      %v4738 = vsel %vm4717, %v4735, %v4737
      %v4739 = vrot.slane %v2649, 1
      %v4740 = vsel %vm4717, %v4737, %v4739
      %v4741 = vrot.slane %v2650, 1
      %v4742 = vsel %vm4717, %v4739, %v4741
      %v4743 = vrot.slane %v2651, 1
      %v4744 = vsel %vm4717, %v4741, %v4743
      %v4745 = vrot.slane %v2652, 1
      %v4746 = vsel %vm4717, %v4743, %v4745
      %v4747 = vrot.slane %v2653, 1
      %v4748 = vsel %vm4717, %v4745, %v4747
      %v4749 = vrot.slane %v2654, 1
      %v4750 = vsel %vm4717, %v4747, %v4749
      %v4751 = vrot.slane %v2655, 1
      %v4752 = vsel %vm4717, %v4749, %v4751
      %v4753 = vrot.slane %v2656, 1
      %v4754 = vsel %vm4717, %v4751, %v4753
      %v4755 = vrot.slane %v2657, 1
      %v4756 = vsel %vm4717, %v4753, %v4755
      %v4757 = vrot.slane %v2658, 1
      %v4758 = vsel %vm4717, %v4755, %v4757
      %v4759 = vrot.slane %v2659, 1
      %v4760 = vsel %vm4717, %v4757, %v4759
      %v4761 = vrot.slane %v2660, 1
      %v4762 = vsel %vm4717, %v4759, %v4761
      %v4763 = vrot.slane %v2661, 1
      %v4764 = vsel %vm4717, %v4761, %v4763
      %v4765 = vrot.slane %v2662, 1
      %v4766 = vsel %vm4717, %v4763, %v4765
      %v4767 = vrot.slane %v2663, 1
      %v4768 = vsel %vm4717, %v4765, %v4767
      %v4769 = vrot.slane %v2664, 1
      %v4770 = vsel %vm4717, %v4767, %v4769
      %v4771 = vrot.slane %v2665, 1
      %v4772 = vsel %vm4717, %v4769, %v4771
      %v4773 = vrot.slane %v2666, 1
      %v4774 = vsel %vm4717, %v4771, %v4773
      %v4775 = vrot.slane %v2667, 1
      %v4776 = vsel %vm4717, %v4773, %v4775
      %v4777 = vrot.slane %v2668, 1
      %v4778 = vsel %vm4717, %v4775, %v4777
      %v4779 = vrot.slane %v2669, 1
      %v4780 = vsel %vm4717, %v4777, %v4779
      %v4781 = vrot.slane %v3477, 1
      %v4782 = vsel %vm4717, %v4779, %v4781
      %v4831 = vunpack.c.l.b16 %v4701
      %v4832 = vunpack.c.l.b16 %v4702
      %v4833 = vunpack.c.l.b16 %v4703
      %v4834 = vunpack.c.l.b16 %v4704
      %v4835 = vunpack.c.l.b16 %v4705
      %v4836 = vunpack.c.l.b16 %v4706
      %v4837 = vunpack.c.l.b16 %v4707
      %v4838 = vunpack.c.l.b16 %v4708
      %v4839 = vunpack.c.l.b16 %v4709
      %v4840 = vunpack.c.l.b16 %v4710
      %v4841 = vunpack.c.l.b16 %v4711
      %v4842 = vunpack.c.l.b16 %v4712
      %v4843 = vunpack.c.l.b16 %v4713
      %v4844 = vunpack.c.l.b16 %v4714
      %v4845 = vunpack.c.l.b16 %v4715
      %v4846 = vunpack.c.l.b16 %v4716
      %v4847 = vpack.c.b16 %v4832, %v4831
      %v4848 = vpack.c.b16 %v4834, %v4833
      %v4849 = vpack.c.b16 %v4836, %v4835
      %v4850 = vpack.c.b16 %v4838, %v4837
      %v4851 = vpack.c.b16 %v4840, %v4839
      %v4852 = vpack.c.b16 %v4842, %v4841
      %v4853 = vpack.c.b16 %v4844, %v4843
      %v4854 = vpack.c.b16 %v4846, %v4845
      %4863 = vmatpush.bf16.msra.mxu0 %v4854
      %4864 = vmatpush.bf16.msra.mxu0 %v4853
      %4865 = vmatpush.bf16.msra.mxu0 %v4852
      %4866 = vmatpush.bf16.msra.mxu0 %v4851
      %4867 = vmatpush.bf16.msra.mxu0 %v4850
      %4868 = vmatpush.bf16.msra.mxu0 %v4849
      %4869 = vmatpush.bf16.msra.mxu0 %v4848
      %4870 = vmatpush.bf16.msra.mxu0 %v4847
      %4871 = vmatmul.bf16.gmra.mxu0 %v4720
      %v4872 = vpop.f32.mrf.mxu0
      %v4873 = vadd.f32 0.0, %v4872
      %v4874 = vpop.f32.mrf.mxu0
      %v4875 = vadd.f32 0.0, %v4874
      %4876 = vmatmul.bf16.gmra.mxu0 %v4722
      %v4877 = vpop.f32.mrf.mxu0
      %v4878 = vadd.f32 0.0, %v4877
      %v4879 = vpop.f32.mrf.mxu0
      %v4880 = vadd.f32 0.0, %v4879
      %4881 = vmatmul.bf16.gmra.mxu0 %v4724
      %v4882 = vpop.f32.mrf.mxu0
      %v4883 = vadd.f32 0.0, %v4882
      %v4884 = vpop.f32.mrf.mxu0
      %v4885 = vadd.f32 0.0, %v4884
      %4886 = vmatmul.bf16.gmra.mxu0 %v4726
      %v4887 = vpop.f32.mrf.mxu0
      %v4888 = vadd.f32 0.0, %v4887
      %v4889 = vpop.f32.mrf.mxu0
      %v4890 = vadd.f32 0.0, %v4889
      %4891 = vmatmul.bf16.gmra.mxu0 %v4728
      %v4892 = vpop.f32.mrf.mxu0
      %v4893 = vadd.f32 0.0, %v4892
      %v4894 = vpop.f32.mrf.mxu0
      %v4895 = vadd.f32 0.0, %v4894
      %4896 = vmatmul.bf16.gmra.mxu0 %v4730
      %v4897 = vpop.f32.mrf.mxu0
      %v4898 = vadd.f32 0.0, %v4897
      %v4899 = vpop.f32.mrf.mxu0
      %v4900 = vadd.f32 0.0, %v4899
      %4901 = vmatmul.bf16.gmra.mxu0 %v4732
      %v4902 = vpop.f32.mrf.mxu0
      %v4903 = vadd.f32 0.0, %v4902
      %v4904 = vpop.f32.mrf.mxu0
      %v4905 = vadd.f32 0.0, %v4904
      %4906 = vmatmul.bf16.gmra.mxu0 %v4734
      %v4907 = vpop.f32.mrf.mxu0
      %v4908 = vadd.f32 0.0, %v4907
      %v4909 = vpop.f32.mrf.mxu0
      %v4910 = vadd.f32 0.0, %v4909
      %4911 = vmatmul.bf16.gmra.mxu0 %v4736
      %v4912 = vpop.f32.mrf.mxu0
      %v4913 = vadd.f32 0.0, %v4912
      %v4914 = vpop.f32.mrf.mxu0
      %v4915 = vadd.f32 0.0, %v4914
      %4916 = vmatmul.bf16.gmra.mxu0 %v4738
      %v4917 = vpop.f32.mrf.mxu0
      %v4918 = vadd.f32 0.0, %v4917
      %v4919 = vpop.f32.mrf.mxu0
      %v4920 = vadd.f32 0.0, %v4919
      %4921 = vmatmul.bf16.gmra.mxu0 %v4740
      %v4922 = vpop.f32.mrf.mxu0
      %v4923 = vadd.f32 0.0, %v4922
      %v4924 = vpop.f32.mrf.mxu0
      %v4925 = vadd.f32 0.0, %v4924
      %4926 = vmatmul.bf16.gmra.mxu0 %v4742
      %v4927 = vpop.f32.mrf.mxu0
      %v4928 = vadd.f32 0.0, %v4927
      %v4929 = vpop.f32.mrf.mxu0
      %v4930 = vadd.f32 0.0, %v4929
      %4931 = vmatmul.bf16.gmra.mxu0 %v4744
      %v4932 = vpop.f32.mrf.mxu0
      %v4933 = vadd.f32 0.0, %v4932
      %v4934 = vpop.f32.mrf.mxu0
      %v4935 = vadd.f32 0.0, %v4934
      %4936 = vmatmul.bf16.gmra.mxu0 %v4746
      %v4937 = vpop.f32.mrf.mxu0
      %v4938 = vadd.f32 0.0, %v4937
      %v4939 = vpop.f32.mrf.mxu0
      %v4940 = vadd.f32 0.0, %v4939
      %4941 = vmatmul.bf16.gmra.mxu0 %v4748
      %v4942 = vpop.f32.mrf.mxu0
      %v4943 = vadd.f32 0.0, %v4942
      %v4944 = vpop.f32.mrf.mxu0
      %v4945 = vadd.f32 0.0, %v4944
      %4946 = vmatmul.bf16.gmra.mxu0 %v4750
      %v4947 = vpop.f32.mrf.mxu0
      %v4948 = vadd.f32 0.0, %v4947
      %v4949 = vpop.f32.mrf.mxu0
      %v4950 = vadd.f32 0.0, %v4949
      %4951 = vmatmul.bf16.gmra.mxu0 %v4752
      %v4952 = vpop.f32.mrf.mxu0
      %v4953 = vadd.f32 0.0, %v4952
      %v4954 = vpop.f32.mrf.mxu0
      %v4955 = vadd.f32 0.0, %v4954
      %4956 = vmatmul.bf16.gmra.mxu0 %v4754
      %v4957 = vpop.f32.mrf.mxu0
      %v4958 = vadd.f32 0.0, %v4957
      %v4959 = vpop.f32.mrf.mxu0
      %v4960 = vadd.f32 0.0, %v4959
      %4961 = vmatmul.bf16.gmra.mxu0 %v4756
      %v4962 = vpop.f32.mrf.mxu0
      %v4963 = vadd.f32 0.0, %v4962
      %v4964 = vpop.f32.mrf.mxu0
      %v4965 = vadd.f32 0.0, %v4964
      %4966 = vmatmul.bf16.gmra.mxu0 %v4758
      %v4967 = vpop.f32.mrf.mxu0
      %v4968 = vadd.f32 0.0, %v4967
      %v4969 = vpop.f32.mrf.mxu0
      %v4970 = vadd.f32 0.0, %v4969
      %4971 = vmatmul.bf16.gmra.mxu0 %v4760
      %v4972 = vpop.f32.mrf.mxu0
      %v4973 = vadd.f32 0.0, %v4972
      %v4974 = vpop.f32.mrf.mxu0
      %v4975 = vadd.f32 0.0, %v4974
      %4976 = vmatmul.bf16.gmra.mxu0 %v4762
      %v4977 = vpop.f32.mrf.mxu0
      %v4978 = vadd.f32 0.0, %v4977
      %v4979 = vpop.f32.mrf.mxu0
      %v4980 = vadd.f32 0.0, %v4979
      %4981 = vmatmul.bf16.gmra.mxu0 %v4764
      %v4982 = vpop.f32.mrf.mxu0
      %v4983 = vadd.f32 0.0, %v4982
      %v4984 = vpop.f32.mrf.mxu0
      %v4985 = vadd.f32 0.0, %v4984
      %4986 = vmatmul.bf16.gmra.mxu0 %v4766
      %v4987 = vpop.f32.mrf.mxu0
      %v4988 = vadd.f32 0.0, %v4987
      %v4989 = vpop.f32.mrf.mxu0
      %v4990 = vadd.f32 0.0, %v4989
      %4991 = vmatmul.bf16.gmra.mxu0 %v4768
      %v4992 = vpop.f32.mrf.mxu0
      %v4993 = vadd.f32 0.0, %v4992
      %v4994 = vpop.f32.mrf.mxu0
      %v4995 = vadd.f32 0.0, %v4994
      %4996 = vmatmul.bf16.gmra.mxu0 %v4770
      %v4997 = vpop.f32.mrf.mxu0
      %v4998 = vadd.f32 0.0, %v4997
      %v4999 = vpop.f32.mrf.mxu0
      %v5000 = vadd.f32 0.0, %v4999
      %5001 = vmatmul.bf16.gmra.mxu0 %v4772
      %v5002 = vpop.f32.mrf.mxu0
      %v5003 = vadd.f32 0.0, %v5002
      %v5004 = vpop.f32.mrf.mxu0
      %v5005 = vadd.f32 0.0, %v5004
      %5006 = vmatmul.bf16.gmra.mxu0 %v4774
      %v5007 = vpop.f32.mrf.mxu0
      %v5008 = vadd.f32 0.0, %v5007
      %v5009 = vpop.f32.mrf.mxu0
      %v5010 = vadd.f32 0.0, %v5009
      %5011 = vmatmul.bf16.gmra.mxu0 %v4776
      %v5012 = vpop.f32.mrf.mxu0
      %v5013 = vadd.f32 0.0, %v5012
      %v5014 = vpop.f32.mrf.mxu0
      %v5015 = vadd.f32 0.0, %v5014
      %5016 = vmatmul.bf16.gmra.mxu0 %v4778
      %v5017 = vpop.f32.mrf.mxu0
      %v5018 = vadd.f32 0.0, %v5017
      %v5019 = vpop.f32.mrf.mxu0
      %v5020 = vadd.f32 0.0, %v5019
      %5021 = vmatmul.bf16.gmra.mxu0 %v4780
      %v5022 = vpop.f32.mrf.mxu0
      %v5023 = vadd.f32 0.0, %v5022
      %v5024 = vpop.f32.mrf.mxu0
      %v5025 = vadd.f32 0.0, %v5024
      %5026 = vmatmul.bf16.gmra.mxu0 %v4782
      %v5027 = vpop.f32.mrf.mxu0
      %v5028 = vadd.f32 0.0, %v5027
      %v5029 = vpop.f32.mrf.mxu0
      %v5030 = vadd.f32 0.0, %v5029
      %5031 = vdwg.mxu0
      %v5032 = vadd.f32 %v4636, %v4873
      %v5033 = vadd.f32 %v4637, %v4875
      %v5034 = vadd.f32 %v4638, %v4878
      %v5035 = vadd.f32 %v4639, %v4880
      %v5036 = vadd.f32 %v4640, %v4883
      %v5037 = vadd.f32 %v4641, %v4885
      %v5038 = vadd.f32 %v4642, %v4888
      %v5039 = vadd.f32 %v4643, %v4890
      %v5040 = vadd.f32 %v4644, %v4893
      %v5041 = vadd.f32 %v4645, %v4895
      %v5042 = vadd.f32 %v4646, %v4898
      %v5043 = vadd.f32 %v4647, %v4900
      %v5044 = vadd.f32 %v4648, %v4903
      %v5045 = vadd.f32 %v4649, %v4905
      %v5046 = vadd.f32 %v4650, %v4908
      %v5047 = vadd.f32 %v4651, %v4910
      %v5048 = vadd.f32 %v4652, %v4913
      %v5049 = vadd.f32 %v4653, %v4915
      %v5050 = vadd.f32 %v4654, %v4918
      %v5051 = vadd.f32 %v4655, %v4920
      %v5052 = vadd.f32 %v4656, %v4923
      %v5053 = vadd.f32 %v4657, %v4925
      %v5054 = vadd.f32 %v4658, %v4928
      %v5055 = vadd.f32 %v4659, %v4930
      %v5056 = vadd.f32 %v4660, %v4933
      %v5057 = vadd.f32 %v4661, %v4935
      %v5058 = vadd.f32 %v4662, %v4938
      %v5059 = vadd.f32 %v4663, %v4940
      %v5060 = vadd.f32 %v4664, %v4943
      %v5061 = vadd.f32 %v4665, %v4945
      %v5062 = vadd.f32 %v4666, %v4948
      %v5063 = vadd.f32 %v4667, %v4950
      %v5064 = vadd.f32 %v4668, %v4953
      %v5065 = vadd.f32 %v4669, %v4955
      %v5066 = vadd.f32 %v4670, %v4958
      %v5067 = vadd.f32 %v4671, %v4960
      %v5068 = vadd.f32 %v4672, %v4963
      %v5069 = vadd.f32 %v4673, %v4965
      %v5070 = vadd.f32 %v4674, %v4968
      %v5071 = vadd.f32 %v4675, %v4970
      %v5072 = vadd.f32 %v4676, %v4973
      %v5073 = vadd.f32 %v4677, %v4975
      %v5074 = vadd.f32 %v4678, %v4978
      %v5075 = vadd.f32 %v4679, %v4980
      %v5076 = vadd.f32 %v4680, %v4983
      %v5077 = vadd.f32 %v4681, %v4985
      %v5078 = vadd.f32 %v4682, %v4988
      %v5079 = vadd.f32 %v4683, %v4990
      %v5080 = vadd.f32 %v4684, %v4993
      %v5081 = vadd.f32 %v4685, %v4995
      %v5082 = vadd.f32 %v4686, %v4998
      %v5083 = vadd.f32 %v4687, %v5000
      %v5084 = vadd.f32 %v4688, %v5003
      %v5085 = vadd.f32 %v4689, %v5005
      %v5086 = vadd.f32 %v4690, %v5008
      %v5087 = vadd.f32 %v4691, %v5010
      %v5088 = vadd.f32 %v4692, %v5013
      %v5089 = vadd.f32 %v4693, %v5015
      %v5090 = vadd.f32 %v4694, %v5018
      %v5091 = vadd.f32 %v4695, %v5020
      %v5092 = vadd.f32 %v4696, %v5023
      %v5093 = vadd.f32 %v4697, %v5025
      %v5094 = vadd.f32 %v4698, %v5028
      %v5095 = vadd.f32 %v4699, %v5030
      %s5096 = scalar_lea.vmem %s3, 320
      %v5097 = vld [vmem:[%s5096] sm:$0xf]
      %v5098 = vld [vmem:[%s5096 + $0x4] sm:$0xf]
      %v5099 = vld [vmem:[%s5096 + $0x8] sm:$0xf]
      %v5100 = vld [vmem:[%s5096 + $0xc] sm:$0xf]
      %v5101 = vld [vmem:[%s5096 + $0x10] sm:$0xf]
      %v5102 = vld [vmem:[%s5096 + $0x14] sm:$0xf]
      %v5103 = vld [vmem:[%s5096 + $0x18] sm:$0xf]
      %v5104 = vld [vmem:[%s5096 + $0x1c] sm:$0xf]
      %v5105 = vld [vmem:[%s5096 + $0x20] sm:$0xf]
      %v5106 = vld [vmem:[%s5096 + $0x24] sm:$0xf]
      %v5107 = vld [vmem:[%s5096 + $0x28] sm:$0xf]
      %v5108 = vld [vmem:[%s5096 + $0x2c] sm:$0xf]
      %v5109 = vld [vmem:[%s5096 + $0x30] sm:$0xf]
      %v5110 = vld [vmem:[%s5096 + $0x34] sm:$0xf]
      %v5111 = vld [vmem:[%s5096 + $0x38] sm:$0xf]
      %v5112 = vld [vmem:[%s5096 + $0x3c] sm:$0xf]
      %v5113 = vrot.slane %v2670, 1
      %v5114 = vsel %vm4717, %v4779, %v5113
      %v5115 = vrot.slane %v2671, 1
      %v5116 = vsel %vm4717, %v5113, %v5115
      %v5117 = vrot.slane %v4069, 1
      %v5118 = vsel %vm4717, %v5115, %v5117
      %v5138 = vunpack.c.l.b16 %v5097
      %v5139 = vunpack.c.l.b16 %v5098
      %v5140 = vunpack.c.l.b16 %v5099
      %v5141 = vunpack.c.l.b16 %v5100
      %v5142 = vunpack.c.l.b16 %v5101
      %v5143 = vunpack.c.l.b16 %v5102
      %v5144 = vunpack.c.l.b16 %v5103
      %v5145 = vunpack.c.l.b16 %v5104
      %v5146 = vunpack.c.l.b16 %v5105
      %v5147 = vunpack.c.l.b16 %v5106
      %v5148 = vunpack.c.l.b16 %v5107
      %v5149 = vunpack.c.l.b16 %v5108
      %v5150 = vunpack.c.l.b16 %v5109
      %v5151 = vunpack.c.l.b16 %v5110
      %v5152 = vunpack.c.l.b16 %v5111
      %v5153 = vunpack.c.l.b16 %v5112
      %v5154 = vpack.c.b16 %v5139, %v5138
      %v5155 = vpack.c.b16 %v5141, %v5140
      %v5156 = vpack.c.b16 %v5143, %v5142
      %v5157 = vpack.c.b16 %v5145, %v5144
      %v5158 = vpack.c.b16 %v5147, %v5146
      %v5159 = vpack.c.b16 %v5149, %v5148
      %v5160 = vpack.c.b16 %v5151, %v5150
      %v5161 = vpack.c.b16 %v5153, %v5152
      %5170 = vmatpush.bf16.msra.mxu0 %v5161
      %5171 = vmatpush.bf16.msra.mxu0 %v5160
      %5172 = vmatpush.bf16.msra.mxu0 %v5159
      %5173 = vmatpush.bf16.msra.mxu0 %v5158
      %5174 = vmatpush.bf16.msra.mxu0 %v5157
      %5175 = vmatpush.bf16.msra.mxu0 %v5156
      %5176 = vmatpush.bf16.msra.mxu0 %v5155
      %5177 = vmatpush.bf16.msra.mxu0 %v5154
      %5178 = vmatmul.bf16.gmra.mxu0 %v4724
      %v5179 = vpop.f32.mrf.mxu0
      %v5180 = vadd.f32 0.0, %v5179
      %v5181 = vpop.f32.mrf.mxu0
      %v5182 = vadd.f32 0.0, %v5181
      %5183 = vmatmul.bf16.gmra.mxu0 %v4726
      %v5184 = vpop.f32.mrf.mxu0
      %v5185 = vadd.f32 0.0, %v5184
      %v5186 = vpop.f32.mrf.mxu0
      %v5187 = vadd.f32 0.0, %v5186
      %5188 = vmatmul.bf16.gmra.mxu0 %v4728
      %v5189 = vpop.f32.mrf.mxu0
      %v5190 = vadd.f32 0.0, %v5189
      %v5191 = vpop.f32.mrf.mxu0
      %v5192 = vadd.f32 0.0, %v5191
      %5193 = vmatmul.bf16.gmra.mxu0 %v4730
      %v5194 = vpop.f32.mrf.mxu0
      %v5195 = vadd.f32 0.0, %v5194
      %v5196 = vpop.f32.mrf.mxu0
      %v5197 = vadd.f32 0.0, %v5196
      %5198 = vmatmul.bf16.gmra.mxu0 %v4732
      %v5199 = vpop.f32.mrf.mxu0
      %v5200 = vadd.f32 0.0, %v5199
      %v5201 = vpop.f32.mrf.mxu0
      %v5202 = vadd.f32 0.0, %v5201
      %5203 = vmatmul.bf16.gmra.mxu0 %v4734
      %v5204 = vpop.f32.mrf.mxu0
      %v5205 = vadd.f32 0.0, %v5204
      %v5206 = vpop.f32.mrf.mxu0
      %v5207 = vadd.f32 0.0, %v5206
      %5208 = vmatmul.bf16.gmra.mxu0 %v4736
      %v5209 = vpop.f32.mrf.mxu0
      %v5210 = vadd.f32 0.0, %v5209
      %v5211 = vpop.f32.mrf.mxu0
      %v5212 = vadd.f32 0.0, %v5211
      %5213 = vmatmul.bf16.gmra.mxu0 %v4738
      %v5214 = vpop.f32.mrf.mxu0
      %v5215 = vadd.f32 0.0, %v5214
      %v5216 = vpop.f32.mrf.mxu0
      %v5217 = vadd.f32 0.0, %v5216
      %5218 = vmatmul.bf16.gmra.mxu0 %v4740
      %v5219 = vpop.f32.mrf.mxu0
      %v5220 = vadd.f32 0.0, %v5219
      %v5221 = vpop.f32.mrf.mxu0
      %v5222 = vadd.f32 0.0, %v5221
      %5223 = vmatmul.bf16.gmra.mxu0 %v4742
      %v5224 = vpop.f32.mrf.mxu0
      %v5225 = vadd.f32 0.0, %v5224
      %v5226 = vpop.f32.mrf.mxu0
      %v5227 = vadd.f32 0.0, %v5226
      %5228 = vmatmul.bf16.gmra.mxu0 %v4744
      %v5229 = vpop.f32.mrf.mxu0
      %v5230 = vadd.f32 0.0, %v5229
      %v5231 = vpop.f32.mrf.mxu0
      %v5232 = vadd.f32 0.0, %v5231
      %5233 = vmatmul.bf16.gmra.mxu0 %v4746
      %v5234 = vpop.f32.mrf.mxu0
      %v5235 = vadd.f32 0.0, %v5234
      %v5236 = vpop.f32.mrf.mxu0
      %v5237 = vadd.f32 0.0, %v5236
      %5238 = vmatmul.bf16.gmra.mxu0 %v4748
      %v5239 = vpop.f32.mrf.mxu0
      %v5240 = vadd.f32 0.0, %v5239
      %v5241 = vpop.f32.mrf.mxu0
      %v5242 = vadd.f32 0.0, %v5241
      %5243 = vmatmul.bf16.gmra.mxu0 %v4750
      %v5244 = vpop.f32.mrf.mxu0
      %v5245 = vadd.f32 0.0, %v5244
      %v5246 = vpop.f32.mrf.mxu0
      %v5247 = vadd.f32 0.0, %v5246
      %5248 = vmatmul.bf16.gmra.mxu0 %v4752
      %v5249 = vpop.f32.mrf.mxu0
      %v5250 = vadd.f32 0.0, %v5249
      %v5251 = vpop.f32.mrf.mxu0
      %v5252 = vadd.f32 0.0, %v5251
      %5253 = vmatmul.bf16.gmra.mxu0 %v4754
      %v5254 = vpop.f32.mrf.mxu0
      %v5255 = vadd.f32 0.0, %v5254
      %v5256 = vpop.f32.mrf.mxu0
      %v5257 = vadd.f32 0.0, %v5256
      %5258 = vmatmul.bf16.gmra.mxu0 %v4756
      %v5259 = vpop.f32.mrf.mxu0
      %v5260 = vadd.f32 0.0, %v5259
      %v5261 = vpop.f32.mrf.mxu0
      %v5262 = vadd.f32 0.0, %v5261
      %5263 = vmatmul.bf16.gmra.mxu0 %v4758
      %v5264 = vpop.f32.mrf.mxu0
      %v5265 = vadd.f32 0.0, %v5264
      %v5266 = vpop.f32.mrf.mxu0
      %v5267 = vadd.f32 0.0, %v5266
      %5268 = vmatmul.bf16.gmra.mxu0 %v4760
      %v5269 = vpop.f32.mrf.mxu0
      %v5270 = vadd.f32 0.0, %v5269
      %v5271 = vpop.f32.mrf.mxu0
      %v5272 = vadd.f32 0.0, %v5271
      %5273 = vmatmul.bf16.gmra.mxu0 %v4762
      %v5274 = vpop.f32.mrf.mxu0
      %v5275 = vadd.f32 0.0, %v5274
      %v5276 = vpop.f32.mrf.mxu0
      %v5277 = vadd.f32 0.0, %v5276
      %5278 = vmatmul.bf16.gmra.mxu0 %v4764
      %v5279 = vpop.f32.mrf.mxu0
      %v5280 = vadd.f32 0.0, %v5279
      %v5281 = vpop.f32.mrf.mxu0
      %v5282 = vadd.f32 0.0, %v5281
      %5283 = vmatmul.bf16.gmra.mxu0 %v4766
      %v5284 = vpop.f32.mrf.mxu0
      %v5285 = vadd.f32 0.0, %v5284
      %v5286 = vpop.f32.mrf.mxu0
      %v5287 = vadd.f32 0.0, %v5286
      %5288 = vmatmul.bf16.gmra.mxu0 %v4768
      %v5289 = vpop.f32.mrf.mxu0
      %v5290 = vadd.f32 0.0, %v5289
      %v5291 = vpop.f32.mrf.mxu0
      %v5292 = vadd.f32 0.0, %v5291
      %5293 = vmatmul.bf16.gmra.mxu0 %v4770
      %v5294 = vpop.f32.mrf.mxu0
      %v5295 = vadd.f32 0.0, %v5294
      %v5296 = vpop.f32.mrf.mxu0
      %v5297 = vadd.f32 0.0, %v5296
      %5298 = vmatmul.bf16.gmra.mxu0 %v4772
      %v5299 = vpop.f32.mrf.mxu0
      %v5300 = vadd.f32 0.0, %v5299
      %v5301 = vpop.f32.mrf.mxu0
      %v5302 = vadd.f32 0.0, %v5301
      %5303 = vmatmul.bf16.gmra.mxu0 %v4774
      %v5304 = vpop.f32.mrf.mxu0
      %v5305 = vadd.f32 0.0, %v5304
      %v5306 = vpop.f32.mrf.mxu0
      %v5307 = vadd.f32 0.0, %v5306
      %5308 = vmatmul.bf16.gmra.mxu0 %v4776
      %v5309 = vpop.f32.mrf.mxu0
      %v5310 = vadd.f32 0.0, %v5309
      %v5311 = vpop.f32.mrf.mxu0
      %v5312 = vadd.f32 0.0, %v5311
      %5313 = vmatmul.bf16.gmra.mxu0 %v4778
      %v5314 = vpop.f32.mrf.mxu0
      %v5315 = vadd.f32 0.0, %v5314
      %v5316 = vpop.f32.mrf.mxu0
      %v5317 = vadd.f32 0.0, %v5316
      %5318 = vmatmul.bf16.gmra.mxu0 %v4780
      %v5319 = vpop.f32.mrf.mxu0
      %v5320 = vadd.f32 0.0, %v5319
      %v5321 = vpop.f32.mrf.mxu0
      %v5322 = vadd.f32 0.0, %v5321
      %5323 = vmatmul.bf16.gmra.mxu0 %v5114
      %v5324 = vpop.f32.mrf.mxu0
      %v5325 = vadd.f32 0.0, %v5324
      %v5326 = vpop.f32.mrf.mxu0
      %v5327 = vadd.f32 0.0, %v5326
      %5328 = vmatmul.bf16.gmra.mxu0 %v5116
      %v5329 = vpop.f32.mrf.mxu0
      %v5330 = vadd.f32 0.0, %v5329
      %v5331 = vpop.f32.mrf.mxu0
      %v5332 = vadd.f32 0.0, %v5331
      %5333 = vmatmul.bf16.gmra.mxu0 %v5118
      %v5334 = vpop.f32.mrf.mxu0
      %v5335 = vadd.f32 0.0, %v5334
      %v5336 = vpop.f32.mrf.mxu0
      %v5337 = vadd.f32 0.0, %v5336
      %5338 = vdwg.mxu0
      %v5339 = vadd.f32 %v5032, %v5180
      %v5340 = vadd.f32 %v5033, %v5182
      %v5341 = vadd.f32 %v5034, %v5185
      %v5342 = vadd.f32 %v5035, %v5187
      %v5343 = vadd.f32 %v5036, %v5190
      %v5344 = vadd.f32 %v5037, %v5192
      %v5345 = vadd.f32 %v5038, %v5195
      %v5346 = vadd.f32 %v5039, %v5197
      %v5347 = vadd.f32 %v5040, %v5200
      %v5348 = vadd.f32 %v5041, %v5202
      %v5349 = vadd.f32 %v5042, %v5205
      %v5350 = vadd.f32 %v5043, %v5207
      %v5351 = vadd.f32 %v5044, %v5210
      %v5352 = vadd.f32 %v5045, %v5212
      %v5353 = vadd.f32 %v5046, %v5215
      %v5354 = vadd.f32 %v5047, %v5217
      %v5355 = vadd.f32 %v5048, %v5220
      %v5356 = vadd.f32 %v5049, %v5222
      %v5357 = vadd.f32 %v5050, %v5225
      %v5358 = vadd.f32 %v5051, %v5227
      %v5359 = vadd.f32 %v5052, %v5230
      %v5360 = vadd.f32 %v5053, %v5232
      %v5361 = vadd.f32 %v5054, %v5235
      %v5362 = vadd.f32 %v5055, %v5237
      %v5363 = vadd.f32 %v5056, %v5240
      %v5364 = vadd.f32 %v5057, %v5242
      %v5365 = vadd.f32 %v5058, %v5245
      %v5366 = vadd.f32 %v5059, %v5247
      %v5367 = vadd.f32 %v5060, %v5250
      %v5368 = vadd.f32 %v5061, %v5252
      %v5369 = vadd.f32 %v5062, %v5255
      %v5370 = vadd.f32 %v5063, %v5257
      %v5371 = vadd.f32 %v5064, %v5260
      %v5372 = vadd.f32 %v5065, %v5262
      %v5373 = vadd.f32 %v5066, %v5265
      %v5374 = vadd.f32 %v5067, %v5267
      %v5375 = vadd.f32 %v5068, %v5270
      %v5376 = vadd.f32 %v5069, %v5272
      %v5377 = vadd.f32 %v5070, %v5275
      %v5378 = vadd.f32 %v5071, %v5277
      %v5379 = vadd.f32 %v5072, %v5280
      %v5380 = vadd.f32 %v5073, %v5282
      %v5381 = vadd.f32 %v5074, %v5285
      %v5382 = vadd.f32 %v5075, %v5287
      %v5383 = vadd.f32 %v5076, %v5290
      %v5384 = vadd.f32 %v5077, %v5292
      %v5385 = vadd.f32 %v5078, %v5295
      %v5386 = vadd.f32 %v5079, %v5297
      %v5387 = vadd.f32 %v5080, %v5300
      %v5388 = vadd.f32 %v5081, %v5302
      %v5389 = vadd.f32 %v5082, %v5305
      %v5390 = vadd.f32 %v5083, %v5307
      %v5391 = vadd.f32 %v5084, %v5310
      %v5392 = vadd.f32 %v5085, %v5312
      %v5393 = vadd.f32 %v5086, %v5315
      %v5394 = vadd.f32 %v5087, %v5317
      %v5395 = vadd.f32 %v5088, %v5320
      %v5396 = vadd.f32 %v5089, %v5322
      %v5397 = vadd.f32 %v5090, %v5325
      %v5398 = vadd.f32 %v5091, %v5327
      %v5399 = vadd.f32 %v5092, %v5330
      %v5400 = vadd.f32 %v5093, %v5332
      %v5401 = vadd.f32 %v5094, %v5335
      %v5402 = vadd.f32 %v5095, %v5337
      %s5403 = scalar_lea.vmem %s3, 512
      %v5404 = vld [vmem:[%s5403] sm:$0xf]
      %v5405 = vld [vmem:[%s5403 + $0x4] sm:$0xf]
      %v5406 = vld [vmem:[%s5403 + $0x8] sm:$0xf]
      %v5407 = vld [vmem:[%s5403 + $0xc] sm:$0xf]
      %v5408 = vld [vmem:[%s5403 + $0x10] sm:$0xf]
      %v5409 = vld [vmem:[%s5403 + $0x14] sm:$0xf]
      %v5410 = vld [vmem:[%s5403 + $0x18] sm:$0xf]
      %v5411 = vld [vmem:[%s5403 + $0x1c] sm:$0xf]
      %v5412 = vld [vmem:[%s5403 + $0x20] sm:$0xf]
      %v5413 = vld [vmem:[%s5403 + $0x24] sm:$0xf]
      %v5414 = vld [vmem:[%s5403 + $0x28] sm:$0xf]
      %v5415 = vld [vmem:[%s5403 + $0x2c] sm:$0xf]
      %v5416 = vld [vmem:[%s5403 + $0x30] sm:$0xf]
      %v5417 = vld [vmem:[%s5403 + $0x34] sm:$0xf]
      %v5418 = vld [vmem:[%s5403 + $0x38] sm:$0xf]
      %v5419 = vld [vmem:[%s5403 + $0x3c] sm:$0xf]
      %v5420 = vrot.slane %v3175, 1
      %v5421 = vsel %vm4717, %v5115, %v5420
      %v5422 = vrot.slane %v3176, 1
      %v5423 = vsel %vm4717, %v5420, %v5422
      %v5424 = vrot.slane %v4394, 1
      %v5425 = vsel %vm4717, %v5422, %v5424
      %v5445 = vunpack.c.l.b16 %v5404
      %v5446 = vunpack.c.l.b16 %v5405
      %v5447 = vunpack.c.l.b16 %v5406
      %v5448 = vunpack.c.l.b16 %v5407
      %v5449 = vunpack.c.l.b16 %v5408
      %v5450 = vunpack.c.l.b16 %v5409
      %v5451 = vunpack.c.l.b16 %v5410
      %v5452 = vunpack.c.l.b16 %v5411
      %v5453 = vunpack.c.l.b16 %v5412
      %v5454 = vunpack.c.l.b16 %v5413
      %v5455 = vunpack.c.l.b16 %v5414
      %v5456 = vunpack.c.l.b16 %v5415
      %v5457 = vunpack.c.l.b16 %v5416
      %v5458 = vunpack.c.l.b16 %v5417
      %v5459 = vunpack.c.l.b16 %v5418
      %v5460 = vunpack.c.l.b16 %v5419
      %v5461 = vpack.c.b16 %v5446, %v5445
      %v5462 = vpack.c.b16 %v5448, %v5447
      %v5463 = vpack.c.b16 %v5450, %v5449
      %v5464 = vpack.c.b16 %v5452, %v5451
      %v5465 = vpack.c.b16 %v5454, %v5453
      %v5466 = vpack.c.b16 %v5456, %v5455
      %v5467 = vpack.c.b16 %v5458, %v5457
      %v5468 = vpack.c.b16 %v5460, %v5459
      %5477 = vmatpush.bf16.msra.mxu0 %v5468
      %5478 = vmatpush.bf16.msra.mxu0 %v5467
      %5479 = vmatpush.bf16.msra.mxu0 %v5466
      %5480 = vmatpush.bf16.msra.mxu0 %v5465
      %5481 = vmatpush.bf16.msra.mxu0 %v5464
      %5482 = vmatpush.bf16.msra.mxu0 %v5463
      %5483 = vmatpush.bf16.msra.mxu0 %v5462
      %5484 = vmatpush.bf16.msra.mxu0 %v5461
      %5485 = vmatmul.bf16.gmra.mxu0 %v4728
      %v5486 = vpop.f32.mrf.mxu0
      %v5487 = vadd.f32 0.0, %v5486
      %v5488 = vpop.f32.mrf.mxu0
      %v5489 = vadd.f32 0.0, %v5488
      %5490 = vmatmul.bf16.gmra.mxu0 %v4730
      %v5491 = vpop.f32.mrf.mxu0
      %v5492 = vadd.f32 0.0, %v5491
      %v5493 = vpop.f32.mrf.mxu0
      %v5494 = vadd.f32 0.0, %v5493
      %5495 = vmatmul.bf16.gmra.mxu0 %v4732
      %v5496 = vpop.f32.mrf.mxu0
      %v5497 = vadd.f32 0.0, %v5496
      %v5498 = vpop.f32.mrf.mxu0
      %v5499 = vadd.f32 0.0, %v5498
      %5500 = vmatmul.bf16.gmra.mxu0 %v4734
      %v5501 = vpop.f32.mrf.mxu0
      %v5502 = vadd.f32 0.0, %v5501
      %v5503 = vpop.f32.mrf.mxu0
      %v5504 = vadd.f32 0.0, %v5503
      %5505 = vmatmul.bf16.gmra.mxu0 %v4736
      %v5506 = vpop.f32.mrf.mxu0
      %v5507 = vadd.f32 0.0, %v5506
      %v5508 = vpop.f32.mrf.mxu0
      %v5509 = vadd.f32 0.0, %v5508
      %5510 = vmatmul.bf16.gmra.mxu0 %v4738
      %v5511 = vpop.f32.mrf.mxu0
      %v5512 = vadd.f32 0.0, %v5511
      %v5513 = vpop.f32.mrf.mxu0
      %v5514 = vadd.f32 0.0, %v5513
      %5515 = vmatmul.bf16.gmra.mxu0 %v4740
      %v5516 = vpop.f32.mrf.mxu0
      %v5517 = vadd.f32 0.0, %v5516
      %v5518 = vpop.f32.mrf.mxu0
      %v5519 = vadd.f32 0.0, %v5518
      %5520 = vmatmul.bf16.gmra.mxu0 %v4742
      %v5521 = vpop.f32.mrf.mxu0
      %v5522 = vadd.f32 0.0, %v5521
      %v5523 = vpop.f32.mrf.mxu0
      %v5524 = vadd.f32 0.0, %v5523
      %5525 = vmatmul.bf16.gmra.mxu0 %v4744
      %v5526 = vpop.f32.mrf.mxu0
      %v5527 = vadd.f32 0.0, %v5526
      %v5528 = vpop.f32.mrf.mxu0
      %v5529 = vadd.f32 0.0, %v5528
      %5530 = vmatmul.bf16.gmra.mxu0 %v4746
      %v5531 = vpop.f32.mrf.mxu0
      %v5532 = vadd.f32 0.0, %v5531
      %v5533 = vpop.f32.mrf.mxu0
      %v5534 = vadd.f32 0.0, %v5533
      %5535 = vmatmul.bf16.gmra.mxu0 %v4748
      %v5536 = vpop.f32.mrf.mxu0
      %v5537 = vadd.f32 0.0, %v5536
      %v5538 = vpop.f32.mrf.mxu0
      %v5539 = vadd.f32 0.0, %v5538
      %5540 = vmatmul.bf16.gmra.mxu0 %v4750
      %v5541 = vpop.f32.mrf.mxu0
      %v5542 = vadd.f32 0.0, %v5541
      %v5543 = vpop.f32.mrf.mxu0
      %v5544 = vadd.f32 0.0, %v5543
      %5545 = vmatmul.bf16.gmra.mxu0 %v4752
      %v5546 = vpop.f32.mrf.mxu0
      %v5547 = vadd.f32 0.0, %v5546
      %v5548 = vpop.f32.mrf.mxu0
      %v5549 = vadd.f32 0.0, %v5548
      %5550 = vmatmul.bf16.gmra.mxu0 %v4754
      %v5551 = vpop.f32.mrf.mxu0
      %v5552 = vadd.f32 0.0, %v5551
      %v5553 = vpop.f32.mrf.mxu0
      %v5554 = vadd.f32 0.0, %v5553
      %5555 = vmatmul.bf16.gmra.mxu0 %v4756
      %v5556 = vpop.f32.mrf.mxu0
      %v5557 = vadd.f32 0.0, %v5556
      %v5558 = vpop.f32.mrf.mxu0
      %v5559 = vadd.f32 0.0, %v5558
      %5560 = vmatmul.bf16.gmra.mxu0 %v4758
      %v5561 = vpop.f32.mrf.mxu0
      %v5562 = vadd.f32 0.0, %v5561
      %v5563 = vpop.f32.mrf.mxu0
      %v5564 = vadd.f32 0.0, %v5563
      %5565 = vmatmul.bf16.gmra.mxu0 %v4760
      %v5566 = vpop.f32.mrf.mxu0
      %v5567 = vadd.f32 0.0, %v5566
      %v5568 = vpop.f32.mrf.mxu0
      %v5569 = vadd.f32 0.0, %v5568
      %5570 = vmatmul.bf16.gmra.mxu0 %v4762
      %v5571 = vpop.f32.mrf.mxu0
      %v5572 = vadd.f32 0.0, %v5571
      %v5573 = vpop.f32.mrf.mxu0
      %v5574 = vadd.f32 0.0, %v5573
      %5575 = vmatmul.bf16.gmra.mxu0 %v4764
      %v5576 = vpop.f32.mrf.mxu0
      %v5577 = vadd.f32 0.0, %v5576
      %v5578 = vpop.f32.mrf.mxu0
      %v5579 = vadd.f32 0.0, %v5578
      %5580 = vmatmul.bf16.gmra.mxu0 %v4766
      %v5581 = vpop.f32.mrf.mxu0
      %v5582 = vadd.f32 0.0, %v5581
      %v5583 = vpop.f32.mrf.mxu0
      %v5584 = vadd.f32 0.0, %v5583
      %5585 = vmatmul.bf16.gmra.mxu0 %v4768
      %v5586 = vpop.f32.mrf.mxu0
      %v5587 = vadd.f32 0.0, %v5586
      %v5588 = vpop.f32.mrf.mxu0
      %v5589 = vadd.f32 0.0, %v5588
      %5590 = vmatmul.bf16.gmra.mxu0 %v4770
      %v5591 = vpop.f32.mrf.mxu0
      %v5592 = vadd.f32 0.0, %v5591
      %v5593 = vpop.f32.mrf.mxu0
      %v5594 = vadd.f32 0.0, %v5593
      %5595 = vmatmul.bf16.gmra.mxu0 %v4772
      %v5596 = vpop.f32.mrf.mxu0
      %v5597 = vadd.f32 0.0, %v5596
      %v5598 = vpop.f32.mrf.mxu0
      %v5599 = vadd.f32 0.0, %v5598
      %5600 = vmatmul.bf16.gmra.mxu0 %v4774
      %v5601 = vpop.f32.mrf.mxu0
      %v5602 = vadd.f32 0.0, %v5601
      %v5603 = vpop.f32.mrf.mxu0
      %v5604 = vadd.f32 0.0, %v5603
      %5605 = vmatmul.bf16.gmra.mxu0 %v4776
      %v5606 = vpop.f32.mrf.mxu0
      %v5607 = vadd.f32 0.0, %v5606
      %v5608 = vpop.f32.mrf.mxu0
      %v5609 = vadd.f32 0.0, %v5608
      %5610 = vmatmul.bf16.gmra.mxu0 %v4778
      %v5611 = vpop.f32.mrf.mxu0
      %v5612 = vadd.f32 0.0, %v5611
      %v5613 = vpop.f32.mrf.mxu0
      %v5614 = vadd.f32 0.0, %v5613
      %5615 = vmatmul.bf16.gmra.mxu0 %v4780
      %v5616 = vpop.f32.mrf.mxu0
      %v5617 = vadd.f32 0.0, %v5616
      %v5618 = vpop.f32.mrf.mxu0
      %v5619 = vadd.f32 0.0, %v5618
      %5620 = vmatmul.bf16.gmra.mxu0 %v5114
      %v5621 = vpop.f32.mrf.mxu0
      %v5622 = vadd.f32 0.0, %v5621
      %v5623 = vpop.f32.mrf.mxu0
      %v5624 = vadd.f32 0.0, %v5623
      %5625 = vmatmul.bf16.gmra.mxu0 %v5116
      %v5626 = vpop.f32.mrf.mxu0
      %v5627 = vadd.f32 0.0, %v5626
      %v5628 = vpop.f32.mrf.mxu0
      %v5629 = vadd.f32 0.0, %v5628
      %5630 = vmatmul.bf16.gmra.mxu0 %v5421
      %v5631 = vpop.f32.mrf.mxu0
      %v5632 = vadd.f32 0.0, %v5631
      %v5633 = vpop.f32.mrf.mxu0
      %v5634 = vadd.f32 0.0, %v5633
      %5635 = vmatmul.bf16.gmra.mxu0 %v5423
      %v5636 = vpop.f32.mrf.mxu0
      %v5637 = vadd.f32 0.0, %v5636
      %v5638 = vpop.f32.mrf.mxu0
      %v5639 = vadd.f32 0.0, %v5638
      %5640 = vmatmul.bf16.gmra.mxu0 %v5425
      %v5641 = vpop.f32.mrf.mxu0
      %v5642 = vadd.f32 0.0, %v5641
      %v5643 = vpop.f32.mrf.mxu0
      %v5644 = vadd.f32 0.0, %v5643
      %5645 = vdwg.mxu0
      %v5646 = vadd.f32 %v5339, %v5487
      %v5647 = vadd.f32 %v5340, %v5489
      %v5648 = vadd.f32 %v5341, %v5492
      %v5649 = vadd.f32 %v5342, %v5494
      %v5650 = vadd.f32 %v5343, %v5497
      %v5651 = vadd.f32 %v5344, %v5499
      %v5652 = vadd.f32 %v5345, %v5502
      %v5653 = vadd.f32 %v5346, %v5504
      %v5654 = vadd.f32 %v5347, %v5507
      %v5655 = vadd.f32 %v5348, %v5509
      %v5656 = vadd.f32 %v5349, %v5512
      %v5657 = vadd.f32 %v5350, %v5514
      %v5658 = vadd.f32 %v5351, %v5517
      %v5659 = vadd.f32 %v5352, %v5519
      %v5660 = vadd.f32 %v5353, %v5522
      %v5661 = vadd.f32 %v5354, %v5524
      %v5662 = vadd.f32 %v5355, %v5527
      %v5663 = vadd.f32 %v5356, %v5529
      %v5664 = vadd.f32 %v5357, %v5532
      %v5665 = vadd.f32 %v5358, %v5534
      %v5666 = vadd.f32 %v5359, %v5537
      %v5667 = vadd.f32 %v5360, %v5539
      %v5668 = vadd.f32 %v5361, %v5542
      %v5669 = vadd.f32 %v5362, %v5544
      %v5670 = vadd.f32 %v5363, %v5547
      %v5671 = vadd.f32 %v5364, %v5549
      %v5672 = vadd.f32 %v5365, %v5552
      %v5673 = vadd.f32 %v5366, %v5554
      %v5674 = vadd.f32 %v5367, %v5557
      %v5675 = vadd.f32 %v5368, %v5559
      %v5676 = vadd.f32 %v5369, %v5562
      %v5677 = vadd.f32 %v5370, %v5564
      %v5678 = vadd.f32 %v5371, %v5567
      %v5679 = vadd.f32 %v5372, %v5569
      %v5680 = vadd.f32 %v5373, %v5572
      %v5681 = vadd.f32 %v5374, %v5574
      %v5682 = vadd.f32 %v5375, %v5577
      %v5683 = vadd.f32 %v5376, %v5579
      %v5684 = vadd.f32 %v5377, %v5582
      %v5685 = vadd.f32 %v5378, %v5584
      %v5686 = vadd.f32 %v5379, %v5587
      %v5687 = vadd.f32 %v5380, %v5589
      %v5688 = vadd.f32 %v5381, %v5592
      %v5689 = vadd.f32 %v5382, %v5594
      %v5690 = vadd.f32 %v5383, %v5597
      %v5691 = vadd.f32 %v5384, %v5599
      %v5692 = vadd.f32 %v5385, %v5602
      %v5693 = vadd.f32 %v5386, %v5604
      %v5694 = vadd.f32 %v5387, %v5607
      %v5695 = vadd.f32 %v5388, %v5609
      %v5696 = vadd.f32 %v5389, %v5612
      %v5697 = vadd.f32 %v5390, %v5614
      %v5698 = vadd.f32 %v5391, %v5617
      %v5699 = vadd.f32 %v5392, %v5619
      %v5700 = vadd.f32 %v5393, %v5622
      %v5701 = vadd.f32 %v5394, %v5624
      %v5702 = vadd.f32 %v5395, %v5627
      %v5703 = vadd.f32 %v5396, %v5629
      %v5704 = vadd.f32 %v5397, %v5632
      %v5705 = vadd.f32 %v5398, %v5634
      %v5706 = vadd.f32 %v5399, %v5637
      %v5707 = vadd.f32 %v5400, %v5639
      %v5708 = vadd.f32 %v5401, %v5642
      %v5709 = vadd.f32 %v5402, %v5644
      %v5710 = vld [vmem:[%s4] sm:$0x1]
      %v5712 = vperm.slane %v5710, 0
      %v5714 = vadd.f32 %v5646, %v5712
      %v5715 = vadd.f32 %v5647, %v5712
      %v5716 = vadd.f32 %v5648, %v5712
      %v5717 = vadd.f32 %v5649, %v5712
      %v5718 = vadd.f32 %v5650, %v5712
      %v5719 = vadd.f32 %v5651, %v5712
      %v5720 = vadd.f32 %v5652, %v5712
      %v5721 = vadd.f32 %v5653, %v5712
      %v5722 = vadd.f32 %v5654, %v5712
      %v5723 = vadd.f32 %v5655, %v5712
      %v5724 = vadd.f32 %v5656, %v5712
      %v5725 = vadd.f32 %v5657, %v5712
      %v5726 = vadd.f32 %v5658, %v5712
      %v5727 = vadd.f32 %v5659, %v5712
      %v5728 = vadd.f32 %v5660, %v5712
      %v5729 = vadd.f32 %v5661, %v5712
      %v5730 = vadd.f32 %v5662, %v5712
      %v5731 = vadd.f32 %v5663, %v5712
      %v5732 = vadd.f32 %v5664, %v5712
      %v5733 = vadd.f32 %v5665, %v5712
      %v5734 = vadd.f32 %v5666, %v5712
      %v5735 = vadd.f32 %v5667, %v5712
      %v5736 = vadd.f32 %v5668, %v5712
      %v5737 = vadd.f32 %v5669, %v5712
      %v5738 = vadd.f32 %v5670, %v5712
      %v5739 = vadd.f32 %v5671, %v5712
      %v5740 = vadd.f32 %v5672, %v5712
      %v5741 = vadd.f32 %v5673, %v5712
      %v5742 = vadd.f32 %v5674, %v5712
      %v5743 = vadd.f32 %v5675, %v5712
      %v5744 = vadd.f32 %v5676, %v5712
      %v5745 = vadd.f32 %v5677, %v5712
      %v5746 = vadd.f32 %v5678, %v5712
      %v5747 = vadd.f32 %v5679, %v5712
      %v5748 = vadd.f32 %v5680, %v5712
      %v5749 = vadd.f32 %v5681, %v5712
      %v5750 = vadd.f32 %v5682, %v5712
      %v5751 = vadd.f32 %v5683, %v5712
      %v5752 = vadd.f32 %v5684, %v5712
      %v5753 = vadd.f32 %v5685, %v5712
      %v5754 = vadd.f32 %v5686, %v5712
      %v5755 = vadd.f32 %v5687, %v5712
      %v5756 = vadd.f32 %v5688, %v5712
      %v5757 = vadd.f32 %v5689, %v5712
      %v5758 = vadd.f32 %v5690, %v5712
      %v5759 = vadd.f32 %v5691, %v5712
      %v5760 = vadd.f32 %v5692, %v5712
      %v5761 = vadd.f32 %v5693, %v5712
      %v5762 = vadd.f32 %v5694, %v5712
      %v5763 = vadd.f32 %v5695, %v5712
      %v5764 = vadd.f32 %v5696, %v5712
      %v5765 = vadd.f32 %v5697, %v5712
      %v5766 = vadd.f32 %v5698, %v5712
      %v5767 = vadd.f32 %v5699, %v5712
      %v5768 = vadd.f32 %v5700, %v5712
      %v5769 = vadd.f32 %v5701, %v5712
      %v5770 = vadd.f32 %v5702, %v5712
      %v5771 = vadd.f32 %v5703, %v5712
      %v5772 = vadd.f32 %v5704, %v5712
      %v5773 = vadd.f32 %v5705, %v5712
      %v5774 = vadd.f32 %v5706, %v5712
      %v5775 = vadd.f32 %v5707, %v5712
      %v5776 = vadd.f32 %v5708, %v5712
      %v5777 = vadd.f32 %v5709, %v5712
      %v5778 = vmax.f32 %v5714, 0.0
      %v5779 = vmax.f32 %v5715, 0.0
      %v5780 = vmax.f32 %v5716, 0.0
      %v5781 = vmax.f32 %v5717, 0.0
      %v5782 = vmax.f32 %v5718, 0.0
      %v5783 = vmax.f32 %v5719, 0.0
      %v5784 = vmax.f32 %v5720, 0.0
      %v5785 = vmax.f32 %v5721, 0.0
      %v5786 = vmax.f32 %v5722, 0.0
      %v5787 = vmax.f32 %v5723, 0.0
      %v5788 = vmax.f32 %v5724, 0.0
      %v5789 = vmax.f32 %v5725, 0.0
      %v5790 = vmax.f32 %v5726, 0.0
      %v5791 = vmax.f32 %v5727, 0.0
      %v5792 = vmax.f32 %v5728, 0.0
      %v5793 = vmax.f32 %v5729, 0.0
      %v5794 = vmax.f32 %v5730, 0.0
      %v5795 = vmax.f32 %v5731, 0.0
      %v5796 = vmax.f32 %v5732, 0.0
      %v5797 = vmax.f32 %v5733, 0.0
      %v5798 = vmax.f32 %v5734, 0.0
      %v5799 = vmax.f32 %v5735, 0.0
      %v5800 = vmax.f32 %v5736, 0.0
      %v5801 = vmax.f32 %v5737, 0.0
      %v5802 = vmax.f32 %v5738, 0.0
      %v5803 = vmax.f32 %v5739, 0.0
      %v5804 = vmax.f32 %v5740, 0.0
      %v5805 = vmax.f32 %v5741, 0.0
      %v5806 = vmax.f32 %v5742, 0.0
      %v5807 = vmax.f32 %v5743, 0.0
      %v5808 = vmax.f32 %v5744, 0.0
      %v5809 = vmax.f32 %v5745, 0.0
      %v5810 = vmax.f32 %v5746, 0.0
      %v5811 = vmax.f32 %v5747, 0.0
      %v5812 = vmax.f32 %v5748, 0.0
      %v5813 = vmax.f32 %v5749, 0.0
      %v5814 = vmax.f32 %v5750, 0.0
      %v5815 = vmax.f32 %v5751, 0.0
      %v5816 = vmax.f32 %v5752, 0.0
      %v5817 = vmax.f32 %v5753, 0.0
      %v5818 = vmax.f32 %v5754, 0.0
      %v5819 = vmax.f32 %v5755, 0.0
      %v5820 = vmax.f32 %v5756, 0.0
      %v5821 = vmax.f32 %v5757, 0.0
      %v5822 = vmax.f32 %v5758, 0.0
      %v5823 = vmax.f32 %v5759, 0.0
      %v5824 = vmax.f32 %v5760, 0.0
      %v5825 = vmax.f32 %v5761, 0.0
      %v5826 = vmax.f32 %v5762, 0.0
      %v5827 = vmax.f32 %v5763, 0.0
      %v5828 = vmax.f32 %v5764, 0.0
      %v5829 = vmax.f32 %v5765, 0.0
      %v5830 = vmax.f32 %v5766, 0.0
      %v5831 = vmax.f32 %v5767, 0.0
      %v5832 = vmax.f32 %v5768, 0.0
      %v5833 = vmax.f32 %v5769, 0.0
      %v5834 = vmax.f32 %v5770, 0.0
      %v5835 = vmax.f32 %v5771, 0.0
      %v5836 = vmax.f32 %v5772, 0.0
      %v5837 = vmax.f32 %v5773, 0.0
      %v5838 = vmax.f32 %v5774, 0.0
      %v5839 = vmax.f32 %v5775, 0.0
      %v5840 = vmax.f32 %v5776, 0.0
      %v5841 = vmax.f32 %v5777, 0.0
      %v5842 = vmax.f32 %v5778, %v5782
      %v5843 = vmax.f32 %v5779, %v5783
      %v5844 = vmax.f32 %v5780, %v5784
      %v5845 = vmax.f32 %v5781, %v5785
      %v5846 = vmax.f32 %v5786, %v5790
      %v5847 = vmax.f32 %v5787, %v5791
      %v5848 = vmax.f32 %v5788, %v5792
      %v5849 = vmax.f32 %v5789, %v5793
      %v5850 = vmax.f32 %v5794, %v5798
      %v5851 = vmax.f32 %v5795, %v5799
      %v5852 = vmax.f32 %v5796, %v5800
      %v5853 = vmax.f32 %v5797, %v5801
      %v5854 = vmax.f32 %v5802, %v5806
      %v5855 = vmax.f32 %v5803, %v5807
      %v5856 = vmax.f32 %v5804, %v5808
      %v5857 = vmax.f32 %v5805, %v5809
      %v5858 = vmax.f32 %v5810, %v5814
      %v5859 = vmax.f32 %v5811, %v5815
      %v5860 = vmax.f32 %v5812, %v5816
      %v5861 = vmax.f32 %v5813, %v5817
      %v5862 = vmax.f32 %v5818, %v5822
      %v5863 = vmax.f32 %v5819, %v5823
      %v5864 = vmax.f32 %v5820, %v5824
      %v5865 = vmax.f32 %v5821, %v5825
      %v5866 = vmax.f32 %v5826, %v5830
      %v5867 = vmax.f32 %v5827, %v5831
      %v5868 = vmax.f32 %v5828, %v5832
      %v5869 = vmax.f32 %v5829, %v5833
      %v5870 = vmax.f32 %v5834, %v5838
      %v5871 = vmax.f32 %v5835, %v5839
      %v5872 = vmax.f32 %v5836, %v5840
      %v5873 = vmax.f32 %v5837, %v5841
      %5874 = vst [vmem:[#allocation4] sm:$0xff] %v5842
      %5875 = vst [vmem:[#allocation4 + $0x8] sm:$0xff] %v5843
      %5876 = vst [vmem:[#allocation4 + $0x10] sm:$0xff] %v5844
      %5877 = vst [vmem:[#allocation4 + $0x18] sm:$0xff] %v5845
      %5878 = vst [vmem:[#allocation4 + $0x20] sm:$0xff] %v5846
      %5879 = vst [vmem:[#allocation4 + $0x28] sm:$0xff] %v5847
      %5880 = vst [vmem:[#allocation4 + $0x30] sm:$0xff] %v5848
      %5881 = vst [vmem:[#allocation4 + $0x38] sm:$0xff] %v5849
      %5882 = vst [vmem:[#allocation4 + $0x40] sm:$0xff] %v5850
      %5883 = vst [vmem:[#allocation4 + $0x48] sm:$0xff] %v5851
      %5884 = vst [vmem:[#allocation4 + $0x50] sm:$0xff] %v5852
      %5885 = vst [vmem:[#allocation4 + $0x58] sm:$0xff] %v5853
      %5886 = vst [vmem:[#allocation4 + $0x60] sm:$0xff] %v5854
      %5887 = vst [vmem:[#allocation4 + $0x68] sm:$0xff] %v5855
      %5888 = vst [vmem:[#allocation4 + $0x70] sm:$0xff] %v5856
      %5889 = vst [vmem:[#allocation4 + $0x78] sm:$0xff] %v5857
      %5890 = vst [vmem:[#allocation4 + $0x80] sm:$0xff] %v5858
      %5891 = vst [vmem:[#allocation4 + $0x88] sm:$0xff] %v5859
      %5892 = vst [vmem:[#allocation4 + $0x90] sm:$0xff] %v5860
      %5893 = vst [vmem:[#allocation4 + $0x98] sm:$0xff] %v5861
      %5894 = vst [vmem:[#allocation4 + $0xa0] sm:$0xff] %v5862
      %5895 = vst [vmem:[#allocation4 + $0xa8] sm:$0xff] %v5863
      %5896 = vst [vmem:[#allocation4 + $0xb0] sm:$0xff] %v5864
      %5897 = vst [vmem:[#allocation4 + $0xb8] sm:$0xff] %v5865
      %5898 = vst [vmem:[#allocation4 + $0xc0] sm:$0xff] %v5866
      %5899 = vst [vmem:[#allocation4 + $0xc8] sm:$0xff] %v5867
      %5900 = vst [vmem:[#allocation4 + $0xd0] sm:$0xff] %v5868
      %5901 = vst [vmem:[#allocation4 + $0xd8] sm:$0xff] %v5869
      %5902 = vst [vmem:[#allocation4 + $0xe0] sm:$0xff] %v5870
      %5903 = vst [vmem:[#allocation4 + $0xe8] sm:$0xff] %v5871
      %5904 = vst [vmem:[#allocation4 + $0xf0] sm:$0xff] %v5872
      %5905 = vst [vmem:[#allocation4 + $0xf8] sm:$0xff] %v5873
      %v5906 = vld [vmem:[#allocation4] ss:$2 sm:$0xff]
      %s5907 = scalar_lea.vmem [#allocation4], 32
      %v5908 = vld [vmem:[%s5907] ss:$2 sm:$0xff]
      %s5909 = scalar_lea.vmem [#allocation4], 64
      %v5910 = vld [vmem:[%s5909] ss:$2 sm:$0xff]
      %s5911 = scalar_lea.vmem [#allocation4], 96
      %v5912 = vld [vmem:[%s5911] ss:$2 sm:$0xff]
      %s5913 = scalar_lea.vmem [#allocation4], 128
      %v5914 = vld [vmem:[%s5913] ss:$2 sm:$0xff]
      %s5915 = scalar_lea.vmem [#allocation4], 160
      %v5916 = vld [vmem:[%s5915] ss:$2 sm:$0xff]
      %s5917 = scalar_lea.vmem [#allocation4], 192
      %v5918 = vld [vmem:[%s5917] ss:$2 sm:$0xff]
      %s5919 = scalar_lea.vmem [#allocation4], 224
      %v5920 = vld [vmem:[%s5919] ss:$2 sm:$0xff]
      %v5921 = vld [vmem:[%s1691] ss:$2 sm:$0xff]
      %v5922 = vld [vmem:[%s1695] ss:$2 sm:$0xff]
      %v5923 = vld [vmem:[%s1699] ss:$2 sm:$0xff]
      %v5924 = vld [vmem:[%s1703] ss:$2 sm:$0xff]
      %v5925 = vld [vmem:[%s1707] ss:$2 sm:$0xff]
      %v5926 = vld [vmem:[%s1711] ss:$2 sm:$0xff]
      %v5927 = vld [vmem:[%s1715] ss:$2 sm:$0xff]
      %v5928 = vld [vmem:[%s1719] ss:$2 sm:$0xff]
      %v5929 = vmax.f32 %v5906, %v5921
      %v5930 = vmax.f32 %v5908, %v5922
      %v5931 = vmax.f32 %v5910, %v5923
      %v5932 = vmax.f32 %v5912, %v5924
      %v5933 = vmax.f32 %v5914, %v5925
      %v5934 = vmax.f32 %v5916, %v5926
      %v5935 = vmax.f32 %v5918, %v5927
      %v5936 = vmax.f32 %v5920, %v5928
      %5937 = vst [vmem:[#allocation3] sm:$0xf] 0
      %5938 = vst [vmem:[#allocation3 + $0x4] sm:$0xf] 0
      %s5939 = scalar_lea.vmem [#allocation3], 72
      %5940 = vst [vmem:[%s5939] sm:$0xf] 0
      %5941 = vst [vmem:[%s5939 + $0x4] sm:$0xf] 0
      %5942 = vst [vmem:[%s5939 + $0x8] sm:$0xf] 0
      %5943 = vst [vmem:[%s5939 + $0xc] sm:$0xf] 0
      %v5944 = vld [vmem:[#allocation3] sm:$0x1]
      %v5945 = vsel %vm1802, 0, %v5944
      %5946 = vst [vmem:[#allocation3] sm:$0x1] %v5945
      %v5947 = vld [vmem:[#allocation3 + $0x8] sm:$0x1]
      %v5948 = vsel %vm1802, 0, %v5947
      %5949 = vst [vmem:[#allocation3 + $0x8] sm:$0x1] %v5948
      %v5950 = vld [vmem:[#allocation3 + $0x10] sm:$0x1]
      %v5951 = vsel %vm1802, 0, %v5950
      %5952 = vst [vmem:[#allocation3 + $0x10] sm:$0x1] %v5951
      %v5953 = vld [vmem:[#allocation3 + $0x18] sm:$0x1]
      %v5954 = vsel %vm1802, 0, %v5953
      %5955 = vst [vmem:[#allocation3 + $0x18] sm:$0x1] %v5954
      %v5956 = vld [vmem:[#allocation3 + $0x20] sm:$0x1]
      %v5957 = vsel %vm1802, 0, %v5956
      %5958 = vst [vmem:[#allocation3 + $0x20] sm:$0x1] %v5957
      %v5959 = vld [vmem:[#allocation3 + $0x28] sm:$0x1]
      %v5960 = vsel %vm1802, 0, %v5959
      %5961 = vst [vmem:[#allocation3 + $0x28] sm:$0x1] %v5960
      %v5962 = vld [vmem:[#allocation3 + $0x30] sm:$0x1]
      %v5963 = vsel %vm1802, 0, %v5962
      %5964 = vst [vmem:[#allocation3 + $0x30] sm:$0x1] %v5963
      %v5965 = vld [vmem:[#allocation3 + $0x38] sm:$0x1]
      %v5966 = vsel %vm1802, 0, %v5965
      %5967 = vst [vmem:[#allocation3 + $0x38] sm:$0x1] %v5966
      %v5968 = vld [vmem:[#allocation3 + $0x40] sm:$0x1]
      %v5969 = vsel %vm1802, 0, %v5968
      %5970 = vst [vmem:[#allocation3 + $0x40] sm:$0x1] %v5969
      %v5971 = vld [vmem:[#allocation3 + $0x48] sm:$0x1]
      %v5972 = vsel %vm1802, 0, %v5971
      %5973 = vst [vmem:[#allocation3 + $0x48] sm:$0x1] %v5972
      %v5974 = vld [vmem:[#allocation3 + $0x50] sm:$0x1]
      %v5975 = vsel %vm1802, 0, %v5974
      %5976 = vst [vmem:[#allocation3 + $0x50] sm:$0x1] %v5975
      %v5977 = vld [vmem:[#allocation3 + $0x4] sm:$0xf]
      %v5978 = vsel %vm1862, 0, %v5977
      %5979 = vst [vmem:[#allocation3 + $0x4] sm:$0xf] %v5978
      %v5980 = vld [vmem:[#allocation3 + $0xc] sm:$0xf]
      %v5981 = vsel %vm1862, 0, %v5980
      %5982 = vst [vmem:[#allocation3 + $0xc] sm:$0xf] %v5981
      %v5983 = vld [vmem:[#allocation3 + $0x14] sm:$0xf]
      %v5984 = vsel %vm1862, 0, %v5983
      %5985 = vst [vmem:[#allocation3 + $0x14] sm:$0xf] %v5984
      %v5986 = vld [vmem:[#allocation3 + $0x1c] sm:$0xf]
      %v5987 = vsel %vm1862, 0, %v5986
      %5988 = vst [vmem:[#allocation3 + $0x1c] sm:$0xf] %v5987
      %v5989 = vld [vmem:[#allocation3 + $0x24] sm:$0xf]
      %v5990 = vsel %vm1862, 0, %v5989
      %5991 = vst [vmem:[#allocation3 + $0x24] sm:$0xf] %v5990
      %v5992 = vld [vmem:[#allocation3 + $0x2c] sm:$0xf]
      %v5993 = vsel %vm1862, 0, %v5992
      %5994 = vst [vmem:[#allocation3 + $0x2c] sm:$0xf] %v5993
      %v5995 = vld [vmem:[#allocation3 + $0x34] sm:$0xf]
      %v5996 = vsel %vm1862, 0, %v5995
      %5997 = vst [vmem:[#allocation3 + $0x34] sm:$0xf] %v5996
      %v5998 = vld [vmem:[#allocation3 + $0x3c] sm:$0xf]
      %v5999 = vsel %vm1862, 0, %v5998
      %6000 = vst [vmem:[#allocation3 + $0x3c] sm:$0xf] %v5999
      %v6001 = vld [vmem:[#allocation3 + $0x44] sm:$0xf]
      %v6002 = vsel %vm1862, 0, %v6001
      %6003 = vst [vmem:[#allocation3 + $0x44] sm:$0xf] %v6002
      %v6004 = vld [vmem:[#allocation3 + $0x4c] sm:$0xf]
      %v6005 = vsel %vm1862, 0, %v6004
      %6006 = vst [vmem:[#allocation3 + $0x4c] sm:$0xf] %v6005
      %v6007 = vld [vmem:[#allocation3 + $0x54] sm:$0xf]
      %v6008 = vsel %vm1862, 0, %v6007
      %6009 = vst [vmem:[#allocation3 + $0x54] sm:$0xf] %v6008
      %v6010 = vpack.c.bf16 %v5929, %v5929
      %v6011 = vpack.c.bf16 %v5930, %v5930
      %v6012 = vpack.c.bf16 %v5931, %v5931
      %v6013 = vpack.c.bf16 %v5932, %v5932
      %v6014 = vpack.c.bf16 %v5933, %v5933
      %v6015 = vpack.c.bf16 %v5934, %v5934
      %v6016 = vpack.c.bf16 %v5935, %v5935
      %v6017 = vpack.c.bf16 %v5936, %v5936
      %v6019 = vshrl.u32 %v6010, 16
      %v6021 = vrot.slane %v6019, 7
      %v6022 = vshll.u32 %v6010, 16
      %v6024 = vor.u32 %v6021, %v6022
      %v6025 = vrot.slane %v6021, 4
      %v6027 = vshrl.u32 %v6011, 16
      %v6029 = vrot.slane %v6027, 7
      %v6030 = vshll.u32 %v6011, 16
      %v6032 = vor.u32 %v6029, %v6030
      %v6033 = vrot.slane %v6029, 4
      %v6035 = vshrl.u32 %v6012, 16
      %v6037 = vrot.slane %v6035, 7
      %v6038 = vshll.u32 %v6012, 16
      %v6040 = vor.u32 %v6037, %v6038
      %v6041 = vrot.slane %v6037, 4
      %v6043 = vshrl.u32 %v6013, 16
      %v6045 = vrot.slane %v6043, 7
      %v6046 = vshll.u32 %v6013, 16
      %v6048 = vor.u32 %v6045, %v6046
      %v6049 = vrot.slane %v6045, 4
      %v6051 = vshrl.u32 %v6014, 16
      %v6053 = vrot.slane %v6051, 7
      %v6054 = vshll.u32 %v6014, 16
      %v6056 = vor.u32 %v6053, %v6054
      %v6057 = vrot.slane %v6053, 4
      %v6059 = vshrl.u32 %v6015, 16
      %v6061 = vrot.slane %v6059, 7
      %v6062 = vshll.u32 %v6015, 16
      %v6064 = vor.u32 %v6061, %v6062
      %v6065 = vrot.slane %v6061, 4
      %v6067 = vshrl.u32 %v6016, 16
      %v6069 = vrot.slane %v6067, 7
      %v6070 = vshll.u32 %v6016, 16
      %v6072 = vor.u32 %v6069, %v6070
      %v6073 = vrot.slane %v6069, 4
      %v6075 = vshrl.u32 %v6017, 16
      %v6077 = vrot.slane %v6075, 7
      %v6078 = vshll.u32 %v6017, 16
      %v6080 = vor.u32 %v6077, %v6078
      %v6081 = vrot.slane %v6077, 4
      %s6098 = scalar_lea.vmem [#allocation3], 8
      %v6099 = vld [vmem:[%s6098] sm:$0xf]
      %v6100 = vsel %vm1862, %v6024, %v6099
      %6101 = vst [vmem:[%s6098] sm:$0xf] %v6100
      %v6102 = vld [vmem:[%s6098 + $0x4] sm:$0x1]
      %v6103 = vsel %vm1802, %v6025, %v6102
      %6104 = vst [vmem:[%s6098 + $0x4] sm:$0x1] %v6103
      %v6105 = vld [vmem:[%s6098 + $0x8] sm:$0xf]
      %v6106 = vsel %vm1862, %v6032, %v6105
      %6107 = vst [vmem:[%s6098 + $0x8] sm:$0xf] %v6106
      %v6108 = vld [vmem:[%s6098 + $0xc] sm:$0x1]
      %v6109 = vsel %vm1802, %v6033, %v6108
      %6110 = vst [vmem:[%s6098 + $0xc] sm:$0x1] %v6109
      %v6111 = vld [vmem:[%s6098 + $0x10] sm:$0xf]
      %v6112 = vsel %vm1862, %v6040, %v6111
      %6113 = vst [vmem:[%s6098 + $0x10] sm:$0xf] %v6112
      %v6114 = vld [vmem:[%s6098 + $0x14] sm:$0x1]
      %v6115 = vsel %vm1802, %v6041, %v6114
      %6116 = vst [vmem:[%s6098 + $0x14] sm:$0x1] %v6115
      %v6117 = vld [vmem:[%s6098 + $0x18] sm:$0xf]
      %v6118 = vsel %vm1862, %v6048, %v6117
      %6119 = vst [vmem:[%s6098 + $0x18] sm:$0xf] %v6118
      %v6120 = vld [vmem:[%s6098 + $0x1c] sm:$0x1]
      %v6121 = vsel %vm1802, %v6049, %v6120
      %6122 = vst [vmem:[%s6098 + $0x1c] sm:$0x1] %v6121
      %v6123 = vld [vmem:[%s6098 + $0x20] sm:$0xf]
      %v6124 = vsel %vm1862, %v6056, %v6123
      %6125 = vst [vmem:[%s6098 + $0x20] sm:$0xf] %v6124
      %v6126 = vld [vmem:[%s6098 + $0x24] sm:$0x1]
      %v6127 = vsel %vm1802, %v6057, %v6126
      %6128 = vst [vmem:[%s6098 + $0x24] sm:$0x1] %v6127
      %v6129 = vld [vmem:[%s6098 + $0x28] sm:$0xf]
      %v6130 = vsel %vm1862, %v6064, %v6129
      %6131 = vst [vmem:[%s6098 + $0x28] sm:$0xf] %v6130
      %v6132 = vld [vmem:[%s6098 + $0x2c] sm:$0x1]
      %v6133 = vsel %vm1802, %v6065, %v6132
      %6134 = vst [vmem:[%s6098 + $0x2c] sm:$0x1] %v6133
      %v6135 = vld [vmem:[%s6098 + $0x30] sm:$0xf]
      %v6136 = vsel %vm1862, %v6072, %v6135
      %6137 = vst [vmem:[%s6098 + $0x30] sm:$0xf] %v6136
      %v6138 = vld [vmem:[%s6098 + $0x34] sm:$0x1]
      %v6139 = vsel %vm1802, %v6073, %v6138
      %6140 = vst [vmem:[%s6098 + $0x34] sm:$0x1] %v6139
      %v6141 = vld [vmem:[%s6098 + $0x38] sm:$0xf]
      %v6142 = vsel %vm1862, %v6080, %v6141
      %6143 = vst [vmem:[%s6098 + $0x38] sm:$0xf] %v6142
      %v6144 = vld [vmem:[%s6098 + $0x3c] sm:$0x1]
      %v6145 = vsel %vm1802, %v6081, %v6144
      %6146 = vst [vmem:[%s6098 + $0x3c] sm:$0x1] %v6145
      %v6147 = vld [vmem:[#allocation3] sm:$0xf]
      %v6148 = vld [vmem:[#allocation3 + $0x4] sm:$0xf]
      %v6149 = vld [vmem:[#allocation3 + $0x8] sm:$0xf]
      %v6150 = vld [vmem:[#allocation3 + $0xc] sm:$0xf]
      %v6151 = vld [vmem:[#allocation3 + $0x10] sm:$0xf]
      %v6152 = vld [vmem:[#allocation3 + $0x14] sm:$0xf]
      %v6153 = vld [vmem:[#allocation3 + $0x18] sm:$0xf]
      %v6154 = vld [vmem:[#allocation3 + $0x1c] sm:$0xf]
      %v6155 = vld [vmem:[#allocation3 + $0x20] sm:$0xf]
      %v6156 = vld [vmem:[#allocation3 + $0x24] sm:$0xf]
      %v6157 = vld [vmem:[#allocation3 + $0x28] sm:$0xf]
      %v6158 = vld [vmem:[#allocation3 + $0x2c] sm:$0xf]
      %v6159 = vld [vmem:[#allocation3 + $0x30] sm:$0xf]
      %v6160 = vld [vmem:[#allocation3 + $0x34] sm:$0xf]
      %v6161 = vld [vmem:[#allocation3 + $0x38] sm:$0xf]
      %v6162 = vld [vmem:[#allocation3 + $0x3c] sm:$0xf]
      %v6163 = vld [vmem:[#allocation3 + $0x40] sm:$0xf]
      %v6164 = vld [vmem:[#allocation3 + $0x44] sm:$0xf]
      %v6165 = vld [vmem:[#allocation3 + $0x48] sm:$0xf]
      %v6166 = vld [vmem:[#allocation3 + $0x4c] sm:$0xf]
      %v6167 = vld [vmem:[#allocation3 + $0x50] sm:$0xf]
      %v6168 = vld [vmem:[%s5] sm:$0xf]
      %v6169 = vld [vmem:[%s5 + $0x4] sm:$0xf]
      %v6170 = vld [vmem:[%s5 + $0x8] sm:$0xf]
      %v6171 = vld [vmem:[%s5 + $0xc] sm:$0xf]
      %v6172 = vld [vmem:[%s5 + $0x10] sm:$0xf]
      %v6173 = vld [vmem:[%s5 + $0x14] sm:$0xf]
      %v6174 = vld [vmem:[%s5 + $0x18] sm:$0xf]
      %v6175 = vld [vmem:[%s5 + $0x1c] sm:$0xf]
      %v6176 = vld [vmem:[%s5 + $0x20] sm:$0xf]
      %v6177 = vld [vmem:[%s5 + $0x24] sm:$0xf]
      %v6178 = vld [vmem:[%s5 + $0x28] sm:$0xf]
      %v6179 = vld [vmem:[%s5 + $0x2c] sm:$0xf]
      %v6180 = vld [vmem:[%s5 + $0x30] sm:$0xf]
      %v6181 = vld [vmem:[%s5 + $0x34] sm:$0xf]
      %v6182 = vld [vmem:[%s5 + $0x38] sm:$0xf]
      %v6183 = vld [vmem:[%s5 + $0x3c] sm:$0xf]
      %s6184 = scalar_lea.vmem %s5, 192
      %v6185 = vld [vmem:[%s6184] sm:$0xf]
      %v6186 = vld [vmem:[%s6184 + $0x4] sm:$0xf]
      %v6187 = vld [vmem:[%s6184 + $0x8] sm:$0xf]
      %v6188 = vld [vmem:[%s6184 + $0xc] sm:$0xf]
      %v6189 = vld [vmem:[%s6184 + $0x10] sm:$0xf]
      %v6190 = vld [vmem:[%s6184 + $0x14] sm:$0xf]
      %v6191 = vld [vmem:[%s6184 + $0x18] sm:$0xf]
      %v6192 = vld [vmem:[%s6184 + $0x1c] sm:$0xf]
      %v6193 = vld [vmem:[%s6184 + $0x20] sm:$0xf]
      %v6194 = vld [vmem:[%s6184 + $0x24] sm:$0xf]
      %v6195 = vld [vmem:[%s6184 + $0x28] sm:$0xf]
      %v6196 = vld [vmem:[%s6184 + $0x2c] sm:$0xf]
      %v6197 = vld [vmem:[%s6184 + $0x30] sm:$0xf]
      %v6198 = vld [vmem:[%s6184 + $0x34] sm:$0xf]
      %v6199 = vld [vmem:[%s6184 + $0x38] sm:$0xf]
      %v6200 = vld [vmem:[%s6184 + $0x3c] sm:$0xf]
      %v6217 = vunpack.c.l.b16 %v6149
      %v6218 = vunpack.c.l.b16 %v6150
      %v6219 = vunpack.c.l.b16 %v6151
      %v6220 = vunpack.c.l.b16 %v6152
      %v6221 = vunpack.c.l.b16 %v6153
      %v6222 = vunpack.c.l.b16 %v6154
      %v6223 = vunpack.c.l.b16 %v6155
      %v6224 = vunpack.c.l.b16 %v6156
      %v6225 = vunpack.c.l.b16 %v6157
      %v6226 = vunpack.c.l.b16 %v6158
      %v6227 = vunpack.c.l.b16 %v6159
      %v6228 = vunpack.c.l.b16 %v6160
      %v6229 = vunpack.c.l.b16 %v6161
      %v6230 = vunpack.c.l.b16 %v6162
      %v6231 = vunpack.c.l.b16 %v6163
      %v6232 = vunpack.c.l.b16 %v6164
      %v6233 = vpack.c.b16 %v6218, %v6217
      %v6234 = vpack.c.b16 %v6220, %v6219
      %v6235 = vpack.c.b16 %v6222, %v6221
      %v6236 = vpack.c.b16 %v6224, %v6223
      %v6237 = vpack.c.b16 %v6226, %v6225
      %v6238 = vpack.c.b16 %v6228, %v6227
      %v6239 = vpack.c.b16 %v6230, %v6229
      %v6240 = vpack.c.b16 %v6232, %v6231
      %v6265 = vunpack.c.l.b16 %v6185
      %v6266 = vunpack.c.l.b16 %v6186
      %v6267 = vunpack.c.l.b16 %v6187
      %v6268 = vunpack.c.l.b16 %v6188
      %v6269 = vunpack.c.l.b16 %v6189
      %v6270 = vunpack.c.l.b16 %v6190
      %v6271 = vunpack.c.l.b16 %v6191
      %v6272 = vunpack.c.l.b16 %v6192
      %v6273 = vunpack.c.l.b16 %v6193
      %v6274 = vunpack.c.l.b16 %v6194
      %v6275 = vunpack.c.l.b16 %v6195
      %v6276 = vunpack.c.l.b16 %v6196
      %v6277 = vunpack.c.l.b16 %v6197
      %v6278 = vunpack.c.l.b16 %v6198
      %v6279 = vunpack.c.l.b16 %v6199
      %v6280 = vunpack.c.l.b16 %v6200
      %v6281 = vpack.c.b16 %v6266, %v6265
      %v6282 = vpack.c.b16 %v6268, %v6267
      %v6283 = vpack.c.b16 %v6270, %v6269
      %v6284 = vpack.c.b16 %v6272, %v6271
      %v6285 = vpack.c.b16 %v6274, %v6273
      %v6286 = vpack.c.b16 %v6276, %v6275
      %v6287 = vpack.c.b16 %v6278, %v6277
      %v6288 = vpack.c.b16 %v6280, %v6279
      %6297 = vmatpush.bf16.msra.mxu0 %v6288
      %6298 = vmatpush.bf16.msra.mxu0 %v6287
      %6299 = vmatpush.bf16.msra.mxu0 %v6286
      %6300 = vmatpush.bf16.msra.mxu0 %v6285
      %6301 = vmatpush.bf16.msra.mxu0 %v6284
      %6302 = vmatpush.bf16.msra.mxu0 %v6283
      %6303 = vmatpush.bf16.msra.mxu0 %v6282
      %6304 = vmatpush.bf16.msra.mxu0 %v6281
      %6305 = vmatmul.bf16.gmra.mxu0 %v6233
      %v6306 = vpop.f32.mrf.mxu0
      %v6307 = vadd.f32 0.0, %v6306
      %v6308 = vpop.f32.mrf.mxu0
      %v6309 = vadd.f32 0.0, %v6308
      %6310 = vmatmul.bf16.gmra.mxu0 %v6234
      %v6311 = vpop.f32.mrf.mxu0
      %v6312 = vadd.f32 0.0, %v6311
      %v6313 = vpop.f32.mrf.mxu0
      %v6314 = vadd.f32 0.0, %v6313
      %6315 = vmatmul.bf16.gmra.mxu0 %v6235
      %v6316 = vpop.f32.mrf.mxu0
      %v6317 = vadd.f32 0.0, %v6316
      %v6318 = vpop.f32.mrf.mxu0
      %v6319 = vadd.f32 0.0, %v6318
      %6320 = vmatmul.bf16.gmra.mxu0 %v6236
      %v6321 = vpop.f32.mrf.mxu0
      %v6322 = vadd.f32 0.0, %v6321
      %v6323 = vpop.f32.mrf.mxu0
      %v6324 = vadd.f32 0.0, %v6323
      %6325 = vmatmul.bf16.gmra.mxu0 %v6237
      %v6326 = vpop.f32.mrf.mxu0
      %v6327 = vadd.f32 0.0, %v6326
      %v6328 = vpop.f32.mrf.mxu0
      %v6329 = vadd.f32 0.0, %v6328
      %6330 = vmatmul.bf16.gmra.mxu0 %v6238
      %v6331 = vpop.f32.mrf.mxu0
      %v6332 = vadd.f32 0.0, %v6331
      %v6333 = vpop.f32.mrf.mxu0
      %v6334 = vadd.f32 0.0, %v6333
      %6335 = vmatmul.bf16.gmra.mxu0 %v6239
      %v6336 = vpop.f32.mrf.mxu0
      %v6337 = vadd.f32 0.0, %v6336
      %v6338 = vpop.f32.mrf.mxu0
      %v6339 = vadd.f32 0.0, %v6338
      %6340 = vmatmul.bf16.gmra.mxu0 %v6240
      %v6341 = vpop.f32.mrf.mxu0
      %v6342 = vadd.f32 0.0, %v6341
      %v6343 = vpop.f32.mrf.mxu0
      %v6344 = vadd.f32 0.0, %v6343
      %6345 = vdwg.mxu0
      %v6348 = vunpack.c.l.b16 %v6147
      %v6349 = vunpack.c.l.b16 %v6148
      %v6350 = vpack.c.b16 %v6349, %v6348
      %v6368 = vunpack.c.l.b16 %v6168
      %v6369 = vunpack.c.l.b16 %v6169
      %v6370 = vunpack.c.l.b16 %v6170
      %v6371 = vunpack.c.l.b16 %v6171
      %v6372 = vunpack.c.l.b16 %v6172
      %v6373 = vunpack.c.l.b16 %v6173
      %v6374 = vunpack.c.l.b16 %v6174
      %v6375 = vunpack.c.l.b16 %v6175
      %v6376 = vunpack.c.l.b16 %v6176
      %v6377 = vunpack.c.l.b16 %v6177
      %v6378 = vunpack.c.l.b16 %v6178
      %v6379 = vunpack.c.l.b16 %v6179
      %v6380 = vunpack.c.l.b16 %v6180
      %v6381 = vunpack.c.l.b16 %v6181
      %v6382 = vunpack.c.l.b16 %v6182
      %v6383 = vunpack.c.l.b16 %v6183
      %v6384 = vpack.c.b16 %v6369, %v6368
      %v6385 = vpack.c.b16 %v6371, %v6370
      %v6386 = vpack.c.b16 %v6373, %v6372
      %v6387 = vpack.c.b16 %v6375, %v6374
      %v6388 = vpack.c.b16 %v6377, %v6376
      %v6389 = vpack.c.b16 %v6379, %v6378
      %v6390 = vpack.c.b16 %v6381, %v6380
      %v6391 = vpack.c.b16 %v6383, %v6382
      %6400 = vmatpush.bf16.msra.mxu0 %v6391
      %6401 = vmatpush.bf16.msra.mxu0 %v6390
      %6402 = vmatpush.bf16.msra.mxu0 %v6389
      %6403 = vmatpush.bf16.msra.mxu0 %v6388
      %6404 = vmatpush.bf16.msra.mxu0 %v6387
      %6405 = vmatpush.bf16.msra.mxu0 %v6386
      %6406 = vmatpush.bf16.msra.mxu0 %v6385
      %6407 = vmatpush.bf16.msra.mxu0 %v6384
      %6408 = vmatmul.bf16.gmra.mxu0 %v6350
      %v6409 = vpop.f32.mrf.mxu0
      %v6410 = vadd.f32 %v6307, %v6409
      %v6411 = vpop.f32.mrf.mxu0
      %v6412 = vadd.f32 %v6309, %v6411
      %6413 = vmatmul.bf16.gmra.mxu0 %v6233
      %v6414 = vpop.f32.mrf.mxu0
      %v6415 = vadd.f32 %v6312, %v6414
      %v6416 = vpop.f32.mrf.mxu0
      %v6417 = vadd.f32 %v6314, %v6416
      %6418 = vmatmul.bf16.gmra.mxu0 %v6234
      %v6419 = vpop.f32.mrf.mxu0
      %v6420 = vadd.f32 %v6317, %v6419
      %v6421 = vpop.f32.mrf.mxu0
      %v6422 = vadd.f32 %v6319, %v6421
      %6423 = vmatmul.bf16.gmra.mxu0 %v6235
      %v6424 = vpop.f32.mrf.mxu0
      %v6425 = vadd.f32 %v6322, %v6424
      %v6426 = vpop.f32.mrf.mxu0
      %v6427 = vadd.f32 %v6324, %v6426
      %6428 = vmatmul.bf16.gmra.mxu0 %v6236
      %v6429 = vpop.f32.mrf.mxu0
      %v6430 = vadd.f32 %v6327, %v6429
      %v6431 = vpop.f32.mrf.mxu0
      %v6432 = vadd.f32 %v6329, %v6431
      %6433 = vmatmul.bf16.gmra.mxu0 %v6237
      %v6434 = vpop.f32.mrf.mxu0
      %v6435 = vadd.f32 %v6332, %v6434
      %v6436 = vpop.f32.mrf.mxu0
      %v6437 = vadd.f32 %v6334, %v6436
      %6438 = vmatmul.bf16.gmra.mxu0 %v6238
      %v6439 = vpop.f32.mrf.mxu0
      %v6440 = vadd.f32 %v6337, %v6439
      %v6441 = vpop.f32.mrf.mxu0
      %v6442 = vadd.f32 %v6339, %v6441
      %6443 = vmatmul.bf16.gmra.mxu0 %v6239
      %v6444 = vpop.f32.mrf.mxu0
      %v6445 = vadd.f32 %v6342, %v6444
      %v6446 = vpop.f32.mrf.mxu0
      %v6447 = vadd.f32 %v6344, %v6446
      %6448 = vdwg.mxu0
      %s6449 = scalar_lea.vmem %s5, 384
      %v6450 = vld [vmem:[%s6449] sm:$0xf]
      %v6451 = vld [vmem:[%s6449 + $0x4] sm:$0xf]
      %v6452 = vld [vmem:[%s6449 + $0x8] sm:$0xf]
      %v6453 = vld [vmem:[%s6449 + $0xc] sm:$0xf]
      %v6454 = vld [vmem:[%s6449 + $0x10] sm:$0xf]
      %v6455 = vld [vmem:[%s6449 + $0x14] sm:$0xf]
      %v6456 = vld [vmem:[%s6449 + $0x18] sm:$0xf]
      %v6457 = vld [vmem:[%s6449 + $0x1c] sm:$0xf]
      %v6458 = vld [vmem:[%s6449 + $0x20] sm:$0xf]
      %v6459 = vld [vmem:[%s6449 + $0x24] sm:$0xf]
      %v6460 = vld [vmem:[%s6449 + $0x28] sm:$0xf]
      %v6461 = vld [vmem:[%s6449 + $0x2c] sm:$0xf]
      %v6462 = vld [vmem:[%s6449 + $0x30] sm:$0xf]
      %v6463 = vld [vmem:[%s6449 + $0x34] sm:$0xf]
      %v6464 = vld [vmem:[%s6449 + $0x38] sm:$0xf]
      %v6465 = vld [vmem:[%s6449 + $0x3c] sm:$0xf]
      %v6468 = vunpack.c.l.b16 %v6165
      %v6469 = vunpack.c.l.b16 %v6166
      %v6470 = vpack.c.b16 %v6469, %v6468
      %v6488 = vunpack.c.l.b16 %v6450
      %v6489 = vunpack.c.l.b16 %v6451
      %v6490 = vunpack.c.l.b16 %v6452
      %v6491 = vunpack.c.l.b16 %v6453
      %v6492 = vunpack.c.l.b16 %v6454
      %v6493 = vunpack.c.l.b16 %v6455
      %v6494 = vunpack.c.l.b16 %v6456
      %v6495 = vunpack.c.l.b16 %v6457
      %v6496 = vunpack.c.l.b16 %v6458
      %v6497 = vunpack.c.l.b16 %v6459
      %v6498 = vunpack.c.l.b16 %v6460
      %v6499 = vunpack.c.l.b16 %v6461
      %v6500 = vunpack.c.l.b16 %v6462
      %v6501 = vunpack.c.l.b16 %v6463
      %v6502 = vunpack.c.l.b16 %v6464
      %v6503 = vunpack.c.l.b16 %v6465
      %v6504 = vpack.c.b16 %v6489, %v6488
      %v6505 = vpack.c.b16 %v6491, %v6490
      %v6506 = vpack.c.b16 %v6493, %v6492
      %v6507 = vpack.c.b16 %v6495, %v6494
      %v6508 = vpack.c.b16 %v6497, %v6496
      %v6509 = vpack.c.b16 %v6499, %v6498
      %v6510 = vpack.c.b16 %v6501, %v6500
      %v6511 = vpack.c.b16 %v6503, %v6502
      %6520 = vmatpush.bf16.msra.mxu0 %v6511
      %6521 = vmatpush.bf16.msra.mxu0 %v6510
      %6522 = vmatpush.bf16.msra.mxu0 %v6509
      %6523 = vmatpush.bf16.msra.mxu0 %v6508
      %6524 = vmatpush.bf16.msra.mxu0 %v6507
      %6525 = vmatpush.bf16.msra.mxu0 %v6506
      %6526 = vmatpush.bf16.msra.mxu0 %v6505
      %6527 = vmatpush.bf16.msra.mxu0 %v6504
      %6528 = vmatmul.bf16.gmra.mxu0 %v6234
      %v6529 = vpop.f32.mrf.mxu0
      %v6530 = vadd.f32 0.0, %v6529
      %v6531 = vpop.f32.mrf.mxu0
      %v6532 = vadd.f32 0.0, %v6531
      %6533 = vmatmul.bf16.gmra.mxu0 %v6235
      %v6534 = vpop.f32.mrf.mxu0
      %v6535 = vadd.f32 0.0, %v6534
      %v6536 = vpop.f32.mrf.mxu0
      %v6537 = vadd.f32 0.0, %v6536
      %6538 = vmatmul.bf16.gmra.mxu0 %v6236
      %v6539 = vpop.f32.mrf.mxu0
      %v6540 = vadd.f32 0.0, %v6539
      %v6541 = vpop.f32.mrf.mxu0
      %v6542 = vadd.f32 0.0, %v6541
      %6543 = vmatmul.bf16.gmra.mxu0 %v6237
      %v6544 = vpop.f32.mrf.mxu0
      %v6545 = vadd.f32 0.0, %v6544
      %v6546 = vpop.f32.mrf.mxu0
      %v6547 = vadd.f32 0.0, %v6546
      %6548 = vmatmul.bf16.gmra.mxu0 %v6238
      %v6549 = vpop.f32.mrf.mxu0
      %v6550 = vadd.f32 0.0, %v6549
      %v6551 = vpop.f32.mrf.mxu0
      %v6552 = vadd.f32 0.0, %v6551
      %6553 = vmatmul.bf16.gmra.mxu0 %v6239
      %v6554 = vpop.f32.mrf.mxu0
      %v6555 = vadd.f32 0.0, %v6554
      %v6556 = vpop.f32.mrf.mxu0
      %v6557 = vadd.f32 0.0, %v6556
      %6558 = vmatmul.bf16.gmra.mxu0 %v6240
      %v6559 = vpop.f32.mrf.mxu0
      %v6560 = vadd.f32 0.0, %v6559
      %v6561 = vpop.f32.mrf.mxu0
      %v6562 = vadd.f32 0.0, %v6561
      %6563 = vmatmul.bf16.gmra.mxu0 %v6470
      %v6564 = vpop.f32.mrf.mxu0
      %v6565 = vadd.f32 0.0, %v6564
      %v6566 = vpop.f32.mrf.mxu0
      %v6567 = vadd.f32 0.0, %v6566
      %6568 = vdwg.mxu0
      %v6569 = vadd.f32 %v6410, %v6530
      %v6570 = vadd.f32 %v6412, %v6532
      %v6571 = vadd.f32 %v6415, %v6535
      %v6572 = vadd.f32 %v6417, %v6537
      %v6573 = vadd.f32 %v6420, %v6540
      %v6574 = vadd.f32 %v6422, %v6542
      %v6575 = vadd.f32 %v6425, %v6545
      %v6576 = vadd.f32 %v6427, %v6547
      %v6577 = vadd.f32 %v6430, %v6550
      %v6578 = vadd.f32 %v6432, %v6552
      %v6579 = vadd.f32 %v6435, %v6555
      %v6580 = vadd.f32 %v6437, %v6557
      %v6581 = vadd.f32 %v6440, %v6560
      %v6582 = vadd.f32 %v6442, %v6562
      %v6583 = vadd.f32 %v6445, %v6565
      %v6584 = vadd.f32 %v6447, %v6567
      %s6585 = scalar_lea.vmem %s5, 64
      %v6586 = vld [vmem:[%s6585] sm:$0xf]
      %v6587 = vld [vmem:[%s6585 + $0x4] sm:$0xf]
      %v6588 = vld [vmem:[%s6585 + $0x8] sm:$0xf]
      %v6589 = vld [vmem:[%s6585 + $0xc] sm:$0xf]
      %v6590 = vld [vmem:[%s6585 + $0x10] sm:$0xf]
      %v6591 = vld [vmem:[%s6585 + $0x14] sm:$0xf]
      %v6592 = vld [vmem:[%s6585 + $0x18] sm:$0xf]
      %v6593 = vld [vmem:[%s6585 + $0x1c] sm:$0xf]
      %v6594 = vld [vmem:[%s6585 + $0x20] sm:$0xf]
      %v6595 = vld [vmem:[%s6585 + $0x24] sm:$0xf]
      %v6596 = vld [vmem:[%s6585 + $0x28] sm:$0xf]
      %v6597 = vld [vmem:[%s6585 + $0x2c] sm:$0xf]
      %v6598 = vld [vmem:[%s6585 + $0x30] sm:$0xf]
      %v6599 = vld [vmem:[%s6585 + $0x34] sm:$0xf]
      %v6600 = vld [vmem:[%s6585 + $0x38] sm:$0xf]
      %v6601 = vld [vmem:[%s6585 + $0x3c] sm:$0xf]
      %v6602 = vpack.c.b16 %v6231, %v6231
      %v6604 = vshrl.u32 %v6350, 16
      %v6606 = vshll.u32 %v6350, 16
      %v6608 = vrot.slane %v6606, 1
      %v6609 = vor.u32 %v6604, %v6608
      %v6611 = vshll.u32 %v6233, 16
      %v6613 = vrot.slane %v6611, 1
      %v6614 = vsel %vm3478, %v6609, %v6613
      %v6615 = vshrl.u32 %v6233, 16
      %v6617 = vor.u32 %v6615, %v6613
      %v6619 = vshll.u32 %v6234, 16
      %v6621 = vrot.slane %v6619, 1
      %v6622 = vsel %vm3478, %v6617, %v6621
      %v6623 = vshrl.u32 %v6234, 16
      %v6625 = vor.u32 %v6623, %v6621
      %v6627 = vshll.u32 %v6235, 16
      %v6629 = vrot.slane %v6627, 1
      %v6630 = vsel %vm3478, %v6625, %v6629
      %v6631 = vshrl.u32 %v6235, 16
      %v6633 = vor.u32 %v6631, %v6629
      %v6635 = vshll.u32 %v6236, 16
      %v6637 = vrot.slane %v6635, 1
      %v6638 = vsel %vm3478, %v6633, %v6637
      %v6639 = vshrl.u32 %v6236, 16
      %v6641 = vor.u32 %v6639, %v6637
      %v6643 = vshll.u32 %v6237, 16
      %v6645 = vrot.slane %v6643, 1
      %v6646 = vsel %vm3478, %v6641, %v6645
      %v6647 = vshrl.u32 %v6237, 16
      %v6649 = vor.u32 %v6647, %v6645
      %v6651 = vshll.u32 %v6238, 16
      %v6653 = vrot.slane %v6651, 1
      %v6654 = vsel %vm3478, %v6649, %v6653
      %v6655 = vshrl.u32 %v6238, 16
      %v6657 = vor.u32 %v6655, %v6653
      %v6659 = vshll.u32 %v6239, 16
      %v6661 = vrot.slane %v6659, 1
      %v6662 = vsel %vm3478, %v6657, %v6661
      %v6663 = vshrl.u32 %v6239, 16
      %v6665 = vor.u32 %v6663, %v6661
      %v6667 = vshll.u32 %v6602, 16
      %v6669 = vrot.slane %v6667, 1
      %v6670 = vsel %vm3478, %v6665, %v6669
      %v6695 = vunpack.c.l.b16 %v6586
      %v6696 = vunpack.c.l.b16 %v6587
      %v6697 = vunpack.c.l.b16 %v6588
      %v6698 = vunpack.c.l.b16 %v6589
      %v6699 = vunpack.c.l.b16 %v6590
      %v6700 = vunpack.c.l.b16 %v6591
      %v6701 = vunpack.c.l.b16 %v6592
      %v6702 = vunpack.c.l.b16 %v6593
      %v6703 = vunpack.c.l.b16 %v6594
      %v6704 = vunpack.c.l.b16 %v6595
      %v6705 = vunpack.c.l.b16 %v6596
      %v6706 = vunpack.c.l.b16 %v6597
      %v6707 = vunpack.c.l.b16 %v6598
      %v6708 = vunpack.c.l.b16 %v6599
      %v6709 = vunpack.c.l.b16 %v6600
      %v6710 = vunpack.c.l.b16 %v6601
      %v6711 = vpack.c.b16 %v6696, %v6695
      %v6712 = vpack.c.b16 %v6698, %v6697
      %v6713 = vpack.c.b16 %v6700, %v6699
      %v6714 = vpack.c.b16 %v6702, %v6701
      %v6715 = vpack.c.b16 %v6704, %v6703
      %v6716 = vpack.c.b16 %v6706, %v6705
      %v6717 = vpack.c.b16 %v6708, %v6707
      %v6718 = vpack.c.b16 %v6710, %v6709
      %6727 = vmatpush.bf16.msra.mxu0 %v6718
      %6728 = vmatpush.bf16.msra.mxu0 %v6717
      %6729 = vmatpush.bf16.msra.mxu0 %v6716
      %6730 = vmatpush.bf16.msra.mxu0 %v6715
      %6731 = vmatpush.bf16.msra.mxu0 %v6714
      %6732 = vmatpush.bf16.msra.mxu0 %v6713
      %6733 = vmatpush.bf16.msra.mxu0 %v6712
      %6734 = vmatpush.bf16.msra.mxu0 %v6711
      %6735 = vmatmul.bf16.gmra.mxu0 %v6614
      %v6736 = vpop.f32.mrf.mxu0
      %v6737 = vadd.f32 0.0, %v6736
      %v6738 = vpop.f32.mrf.mxu0
      %v6739 = vadd.f32 0.0, %v6738
      %6740 = vmatmul.bf16.gmra.mxu0 %v6622
      %v6741 = vpop.f32.mrf.mxu0
      %v6742 = vadd.f32 0.0, %v6741
      %v6743 = vpop.f32.mrf.mxu0
      %v6744 = vadd.f32 0.0, %v6743
      %6745 = vmatmul.bf16.gmra.mxu0 %v6630
      %v6746 = vpop.f32.mrf.mxu0
      %v6747 = vadd.f32 0.0, %v6746
      %v6748 = vpop.f32.mrf.mxu0
      %v6749 = vadd.f32 0.0, %v6748
      %6750 = vmatmul.bf16.gmra.mxu0 %v6638
      %v6751 = vpop.f32.mrf.mxu0
      %v6752 = vadd.f32 0.0, %v6751
      %v6753 = vpop.f32.mrf.mxu0
      %v6754 = vadd.f32 0.0, %v6753
      %6755 = vmatmul.bf16.gmra.mxu0 %v6646
      %v6756 = vpop.f32.mrf.mxu0
      %v6757 = vadd.f32 0.0, %v6756
      %v6758 = vpop.f32.mrf.mxu0
      %v6759 = vadd.f32 0.0, %v6758
      %6760 = vmatmul.bf16.gmra.mxu0 %v6654
      %v6761 = vpop.f32.mrf.mxu0
      %v6762 = vadd.f32 0.0, %v6761
      %v6763 = vpop.f32.mrf.mxu0
      %v6764 = vadd.f32 0.0, %v6763
      %6765 = vmatmul.bf16.gmra.mxu0 %v6662
      %v6766 = vpop.f32.mrf.mxu0
      %v6767 = vadd.f32 0.0, %v6766
      %v6768 = vpop.f32.mrf.mxu0
      %v6769 = vadd.f32 0.0, %v6768
      %6770 = vmatmul.bf16.gmra.mxu0 %v6670
      %v6771 = vpop.f32.mrf.mxu0
      %v6772 = vadd.f32 0.0, %v6771
      %v6773 = vpop.f32.mrf.mxu0
      %v6774 = vadd.f32 0.0, %v6773
      %6775 = vdwg.mxu0
      %v6776 = vadd.f32 %v6569, %v6737
      %v6777 = vadd.f32 %v6570, %v6739
      %v6778 = vadd.f32 %v6571, %v6742
      %v6779 = vadd.f32 %v6572, %v6744
      %v6780 = vadd.f32 %v6573, %v6747
      %v6781 = vadd.f32 %v6574, %v6749
      %v6782 = vadd.f32 %v6575, %v6752
      %v6783 = vadd.f32 %v6576, %v6754
      %v6784 = vadd.f32 %v6577, %v6757
      %v6785 = vadd.f32 %v6578, %v6759
      %v6786 = vadd.f32 %v6579, %v6762
      %v6787 = vadd.f32 %v6580, %v6764
      %v6788 = vadd.f32 %v6581, %v6767
      %v6789 = vadd.f32 %v6582, %v6769
      %v6790 = vadd.f32 %v6583, %v6772
      %v6791 = vadd.f32 %v6584, %v6774
      %s6792 = scalar_lea.vmem %s5, 256
      %v6793 = vld [vmem:[%s6792] sm:$0xf]
      %v6794 = vld [vmem:[%s6792 + $0x4] sm:$0xf]
      %v6795 = vld [vmem:[%s6792 + $0x8] sm:$0xf]
      %v6796 = vld [vmem:[%s6792 + $0xc] sm:$0xf]
      %v6797 = vld [vmem:[%s6792 + $0x10] sm:$0xf]
      %v6798 = vld [vmem:[%s6792 + $0x14] sm:$0xf]
      %v6799 = vld [vmem:[%s6792 + $0x18] sm:$0xf]
      %v6800 = vld [vmem:[%s6792 + $0x1c] sm:$0xf]
      %v6801 = vld [vmem:[%s6792 + $0x20] sm:$0xf]
      %v6802 = vld [vmem:[%s6792 + $0x24] sm:$0xf]
      %v6803 = vld [vmem:[%s6792 + $0x28] sm:$0xf]
      %v6804 = vld [vmem:[%s6792 + $0x2c] sm:$0xf]
      %v6805 = vld [vmem:[%s6792 + $0x30] sm:$0xf]
      %v6806 = vld [vmem:[%s6792 + $0x34] sm:$0xf]
      %v6807 = vld [vmem:[%s6792 + $0x38] sm:$0xf]
      %v6808 = vld [vmem:[%s6792 + $0x3c] sm:$0xf]
      %v6809 = vpack.c.b16 %v6468, %v6468
      %v6811 = vshll.u32 %v6240, 16
      %v6813 = vrot.slane %v6811, 1
      %v6814 = vsel %vm3478, %v6665, %v6813
      %v6815 = vshrl.u32 %v6240, 16
      %v6817 = vor.u32 %v6815, %v6813
      %v6819 = vshll.u32 %v6809, 16
      %v6821 = vrot.slane %v6819, 1
      %v6822 = vsel %vm3478, %v6817, %v6821
      %v6841 = vunpack.c.l.b16 %v6793
      %v6842 = vunpack.c.l.b16 %v6794
      %v6843 = vunpack.c.l.b16 %v6795
      %v6844 = vunpack.c.l.b16 %v6796
      %v6845 = vunpack.c.l.b16 %v6797
      %v6846 = vunpack.c.l.b16 %v6798
      %v6847 = vunpack.c.l.b16 %v6799
      %v6848 = vunpack.c.l.b16 %v6800
      %v6849 = vunpack.c.l.b16 %v6801
      %v6850 = vunpack.c.l.b16 %v6802
      %v6851 = vunpack.c.l.b16 %v6803
      %v6852 = vunpack.c.l.b16 %v6804
      %v6853 = vunpack.c.l.b16 %v6805
      %v6854 = vunpack.c.l.b16 %v6806
      %v6855 = vunpack.c.l.b16 %v6807
      %v6856 = vunpack.c.l.b16 %v6808
      %v6857 = vpack.c.b16 %v6842, %v6841
      %v6858 = vpack.c.b16 %v6844, %v6843
      %v6859 = vpack.c.b16 %v6846, %v6845
      %v6860 = vpack.c.b16 %v6848, %v6847
      %v6861 = vpack.c.b16 %v6850, %v6849
      %v6862 = vpack.c.b16 %v6852, %v6851
      %v6863 = vpack.c.b16 %v6854, %v6853
      %v6864 = vpack.c.b16 %v6856, %v6855
      %6873 = vmatpush.bf16.msra.mxu0 %v6864
      %6874 = vmatpush.bf16.msra.mxu0 %v6863
      %6875 = vmatpush.bf16.msra.mxu0 %v6862
      %6876 = vmatpush.bf16.msra.mxu0 %v6861
      %6877 = vmatpush.bf16.msra.mxu0 %v6860
      %6878 = vmatpush.bf16.msra.mxu0 %v6859
      %6879 = vmatpush.bf16.msra.mxu0 %v6858
      %6880 = vmatpush.bf16.msra.mxu0 %v6857
      %6881 = vmatmul.bf16.gmra.mxu0 %v6622
      %v6882 = vpop.f32.mrf.mxu0
      %v6883 = vadd.f32 0.0, %v6882
      %v6884 = vpop.f32.mrf.mxu0
      %v6885 = vadd.f32 0.0, %v6884
      %6886 = vmatmul.bf16.gmra.mxu0 %v6630
      %v6887 = vpop.f32.mrf.mxu0
      %v6888 = vadd.f32 0.0, %v6887
      %v6889 = vpop.f32.mrf.mxu0
      %v6890 = vadd.f32 0.0, %v6889
      %6891 = vmatmul.bf16.gmra.mxu0 %v6638
      %v6892 = vpop.f32.mrf.mxu0
      %v6893 = vadd.f32 0.0, %v6892
      %v6894 = vpop.f32.mrf.mxu0
      %v6895 = vadd.f32 0.0, %v6894
      %6896 = vmatmul.bf16.gmra.mxu0 %v6646
      %v6897 = vpop.f32.mrf.mxu0
      %v6898 = vadd.f32 0.0, %v6897
      %v6899 = vpop.f32.mrf.mxu0
      %v6900 = vadd.f32 0.0, %v6899
      %6901 = vmatmul.bf16.gmra.mxu0 %v6654
      %v6902 = vpop.f32.mrf.mxu0
      %v6903 = vadd.f32 0.0, %v6902
      %v6904 = vpop.f32.mrf.mxu0
      %v6905 = vadd.f32 0.0, %v6904
      %6906 = vmatmul.bf16.gmra.mxu0 %v6662
      %v6907 = vpop.f32.mrf.mxu0
      %v6908 = vadd.f32 0.0, %v6907
      %v6909 = vpop.f32.mrf.mxu0
      %v6910 = vadd.f32 0.0, %v6909
      %6911 = vmatmul.bf16.gmra.mxu0 %v6814
      %v6912 = vpop.f32.mrf.mxu0
      %v6913 = vadd.f32 0.0, %v6912
      %v6914 = vpop.f32.mrf.mxu0
      %v6915 = vadd.f32 0.0, %v6914
      %6916 = vmatmul.bf16.gmra.mxu0 %v6822
      %v6917 = vpop.f32.mrf.mxu0
      %v6918 = vadd.f32 0.0, %v6917
      %v6919 = vpop.f32.mrf.mxu0
      %v6920 = vadd.f32 0.0, %v6919
      %6921 = vdwg.mxu0
      %v6922 = vadd.f32 %v6776, %v6883
      %v6923 = vadd.f32 %v6777, %v6885
      %v6924 = vadd.f32 %v6778, %v6888
      %v6925 = vadd.f32 %v6779, %v6890
      %v6926 = vadd.f32 %v6780, %v6893
      %v6927 = vadd.f32 %v6781, %v6895
      %v6928 = vadd.f32 %v6782, %v6898
      %v6929 = vadd.f32 %v6783, %v6900
      %v6930 = vadd.f32 %v6784, %v6903
      %v6931 = vadd.f32 %v6785, %v6905
      %v6932 = vadd.f32 %v6786, %v6908
      %v6933 = vadd.f32 %v6787, %v6910
      %v6934 = vadd.f32 %v6788, %v6913
      %v6935 = vadd.f32 %v6789, %v6915
      %v6936 = vadd.f32 %v6790, %v6918
      %v6937 = vadd.f32 %v6791, %v6920
      %s6938 = scalar_lea.vmem %s5, 448
      %v6939 = vld [vmem:[%s6938] sm:$0xf]
      %v6940 = vld [vmem:[%s6938 + $0x4] sm:$0xf]
      %v6941 = vld [vmem:[%s6938 + $0x8] sm:$0xf]
      %v6942 = vld [vmem:[%s6938 + $0xc] sm:$0xf]
      %v6943 = vld [vmem:[%s6938 + $0x10] sm:$0xf]
      %v6944 = vld [vmem:[%s6938 + $0x14] sm:$0xf]
      %v6945 = vld [vmem:[%s6938 + $0x18] sm:$0xf]
      %v6946 = vld [vmem:[%s6938 + $0x1c] sm:$0xf]
      %v6947 = vld [vmem:[%s6938 + $0x20] sm:$0xf]
      %v6948 = vld [vmem:[%s6938 + $0x24] sm:$0xf]
      %v6949 = vld [vmem:[%s6938 + $0x28] sm:$0xf]
      %v6950 = vld [vmem:[%s6938 + $0x2c] sm:$0xf]
      %v6951 = vld [vmem:[%s6938 + $0x30] sm:$0xf]
      %v6952 = vld [vmem:[%s6938 + $0x34] sm:$0xf]
      %v6953 = vld [vmem:[%s6938 + $0x38] sm:$0xf]
      %v6954 = vld [vmem:[%s6938 + $0x3c] sm:$0xf]
      %v6956 = vunpack.c.l.b16 %v6167
      %v6957 = vpack.c.b16 %v6956, %v6956
      %v6959 = vshll.u32 %v6470, 16
      %v6961 = vrot.slane %v6959, 1
      %v6962 = vsel %vm3478, %v6817, %v6961
      %v6963 = vshrl.u32 %v6470, 16
      %v6965 = vor.u32 %v6963, %v6961
      %v6967 = vshll.u32 %v6957, 16
      %v6969 = vrot.slane %v6967, 1
      %v6970 = vsel %vm3478, %v6965, %v6969
      %v6989 = vunpack.c.l.b16 %v6939
      %v6990 = vunpack.c.l.b16 %v6940
      %v6991 = vunpack.c.l.b16 %v6941
      %v6992 = vunpack.c.l.b16 %v6942
      %v6993 = vunpack.c.l.b16 %v6943
      %v6994 = vunpack.c.l.b16 %v6944
      %v6995 = vunpack.c.l.b16 %v6945
      %v6996 = vunpack.c.l.b16 %v6946
      %v6997 = vunpack.c.l.b16 %v6947
      %v6998 = vunpack.c.l.b16 %v6948
      %v6999 = vunpack.c.l.b16 %v6949
      %v7000 = vunpack.c.l.b16 %v6950
      %v7001 = vunpack.c.l.b16 %v6951
      %v7002 = vunpack.c.l.b16 %v6952
      %v7003 = vunpack.c.l.b16 %v6953
      %v7004 = vunpack.c.l.b16 %v6954
      %v7005 = vpack.c.b16 %v6990, %v6989
      %v7006 = vpack.c.b16 %v6992, %v6991
      %v7007 = vpack.c.b16 %v6994, %v6993
      %v7008 = vpack.c.b16 %v6996, %v6995
      %v7009 = vpack.c.b16 %v6998, %v6997
      %v7010 = vpack.c.b16 %v7000, %v6999
      %v7011 = vpack.c.b16 %v7002, %v7001
      %v7012 = vpack.c.b16 %v7004, %v7003
      %7021 = vmatpush.bf16.msra.mxu0 %v7012
      %7022 = vmatpush.bf16.msra.mxu0 %v7011
      %7023 = vmatpush.bf16.msra.mxu0 %v7010
      %7024 = vmatpush.bf16.msra.mxu0 %v7009
      %7025 = vmatpush.bf16.msra.mxu0 %v7008
      %7026 = vmatpush.bf16.msra.mxu0 %v7007
      %7027 = vmatpush.bf16.msra.mxu0 %v7006
      %7028 = vmatpush.bf16.msra.mxu0 %v7005
      %7029 = vmatmul.bf16.gmra.mxu0 %v6630
      %v7030 = vpop.f32.mrf.mxu0
      %v7031 = vadd.f32 0.0, %v7030
      %v7032 = vpop.f32.mrf.mxu0
      %v7033 = vadd.f32 0.0, %v7032
      %7034 = vmatmul.bf16.gmra.mxu0 %v6638
      %v7035 = vpop.f32.mrf.mxu0
      %v7036 = vadd.f32 0.0, %v7035
      %v7037 = vpop.f32.mrf.mxu0
      %v7038 = vadd.f32 0.0, %v7037
      %7039 = vmatmul.bf16.gmra.mxu0 %v6646
      %v7040 = vpop.f32.mrf.mxu0
      %v7041 = vadd.f32 0.0, %v7040
      %v7042 = vpop.f32.mrf.mxu0
      %v7043 = vadd.f32 0.0, %v7042
      %7044 = vmatmul.bf16.gmra.mxu0 %v6654
      %v7045 = vpop.f32.mrf.mxu0
      %v7046 = vadd.f32 0.0, %v7045
      %v7047 = vpop.f32.mrf.mxu0
      %v7048 = vadd.f32 0.0, %v7047
      %7049 = vmatmul.bf16.gmra.mxu0 %v6662
      %v7050 = vpop.f32.mrf.mxu0
      %v7051 = vadd.f32 0.0, %v7050
      %v7052 = vpop.f32.mrf.mxu0
      %v7053 = vadd.f32 0.0, %v7052
      %7054 = vmatmul.bf16.gmra.mxu0 %v6814
      %v7055 = vpop.f32.mrf.mxu0
      %v7056 = vadd.f32 0.0, %v7055
      %v7057 = vpop.f32.mrf.mxu0
      %v7058 = vadd.f32 0.0, %v7057
      %7059 = vmatmul.bf16.gmra.mxu0 %v6962
      %v7060 = vpop.f32.mrf.mxu0
      %v7061 = vadd.f32 0.0, %v7060
      %v7062 = vpop.f32.mrf.mxu0
      %v7063 = vadd.f32 0.0, %v7062
      %7064 = vmatmul.bf16.gmra.mxu0 %v6970
      %v7065 = vpop.f32.mrf.mxu0
      %v7066 = vadd.f32 0.0, %v7065
      %v7067 = vpop.f32.mrf.mxu0
      %v7068 = vadd.f32 0.0, %v7067
      %7069 = vdwg.mxu0
      %v7070 = vadd.f32 %v6922, %v7031
      %v7071 = vadd.f32 %v6923, %v7033
      %v7072 = vadd.f32 %v6924, %v7036
      %v7073 = vadd.f32 %v6925, %v7038
      %v7074 = vadd.f32 %v6926, %v7041
      %v7075 = vadd.f32 %v6927, %v7043
      %v7076 = vadd.f32 %v6928, %v7046
      %v7077 = vadd.f32 %v6929, %v7048
      %v7078 = vadd.f32 %v6930, %v7051
      %v7079 = vadd.f32 %v6931, %v7053
      %v7080 = vadd.f32 %v6932, %v7056
      %v7081 = vadd.f32 %v6933, %v7058
      %v7082 = vadd.f32 %v6934, %v7061
      %v7083 = vadd.f32 %v6935, %v7063
      %v7084 = vadd.f32 %v6936, %v7066
      %v7085 = vadd.f32 %v6937, %v7068
      %s7086 = scalar_lea.vmem %s5, 128
      %v7087 = vld [vmem:[%s7086] sm:$0xf]
      %v7088 = vld [vmem:[%s7086 + $0x4] sm:$0xf]
      %v7089 = vld [vmem:[%s7086 + $0x8] sm:$0xf]
      %v7090 = vld [vmem:[%s7086 + $0xc] sm:$0xf]
      %v7091 = vld [vmem:[%s7086 + $0x10] sm:$0xf]
      %v7092 = vld [vmem:[%s7086 + $0x14] sm:$0xf]
      %v7093 = vld [vmem:[%s7086 + $0x18] sm:$0xf]
      %v7094 = vld [vmem:[%s7086 + $0x1c] sm:$0xf]
      %v7095 = vld [vmem:[%s7086 + $0x20] sm:$0xf]
      %v7096 = vld [vmem:[%s7086 + $0x24] sm:$0xf]
      %v7097 = vld [vmem:[%s7086 + $0x28] sm:$0xf]
      %v7098 = vld [vmem:[%s7086 + $0x2c] sm:$0xf]
      %v7099 = vld [vmem:[%s7086 + $0x30] sm:$0xf]
      %v7100 = vld [vmem:[%s7086 + $0x34] sm:$0xf]
      %v7101 = vld [vmem:[%s7086 + $0x38] sm:$0xf]
      %v7102 = vld [vmem:[%s7086 + $0x3c] sm:$0xf]
      %v7103 = vrot.slane %v6350, 1
      %v7104 = vrot.slane %v6233, 1
      %v7105 = vsel %vm4717, %v7103, %v7104
      %v7106 = vrot.slane %v6234, 1
      %v7107 = vsel %vm4717, %v7104, %v7106
      %v7108 = vrot.slane %v6235, 1
      %v7109 = vsel %vm4717, %v7106, %v7108
      %v7110 = vrot.slane %v6236, 1
      %v7111 = vsel %vm4717, %v7108, %v7110
      %v7112 = vrot.slane %v6237, 1
      %v7113 = vsel %vm4717, %v7110, %v7112
      %v7114 = vrot.slane %v6238, 1
      %v7115 = vsel %vm4717, %v7112, %v7114
      %v7116 = vrot.slane %v6239, 1
      %v7117 = vsel %vm4717, %v7114, %v7116
      %v7118 = vrot.slane %v6602, 1
      %v7119 = vsel %vm4717, %v7116, %v7118
      %v7144 = vunpack.c.l.b16 %v7087
      %v7145 = vunpack.c.l.b16 %v7088
      %v7146 = vunpack.c.l.b16 %v7089
      %v7147 = vunpack.c.l.b16 %v7090
      %v7148 = vunpack.c.l.b16 %v7091
      %v7149 = vunpack.c.l.b16 %v7092
      %v7150 = vunpack.c.l.b16 %v7093
      %v7151 = vunpack.c.l.b16 %v7094
      %v7152 = vunpack.c.l.b16 %v7095
      %v7153 = vunpack.c.l.b16 %v7096
      %v7154 = vunpack.c.l.b16 %v7097
      %v7155 = vunpack.c.l.b16 %v7098
      %v7156 = vunpack.c.l.b16 %v7099
      %v7157 = vunpack.c.l.b16 %v7100
      %v7158 = vunpack.c.l.b16 %v7101
      %v7159 = vunpack.c.l.b16 %v7102
      %v7160 = vpack.c.b16 %v7145, %v7144
      %v7161 = vpack.c.b16 %v7147, %v7146
      %v7162 = vpack.c.b16 %v7149, %v7148
      %v7163 = vpack.c.b16 %v7151, %v7150
      %v7164 = vpack.c.b16 %v7153, %v7152
      %v7165 = vpack.c.b16 %v7155, %v7154
      %v7166 = vpack.c.b16 %v7157, %v7156
      %v7167 = vpack.c.b16 %v7159, %v7158
      %7176 = vmatpush.bf16.msra.mxu0 %v7167
      %7177 = vmatpush.bf16.msra.mxu0 %v7166
      %7178 = vmatpush.bf16.msra.mxu0 %v7165
      %7179 = vmatpush.bf16.msra.mxu0 %v7164
      %7180 = vmatpush.bf16.msra.mxu0 %v7163
      %7181 = vmatpush.bf16.msra.mxu0 %v7162
      %7182 = vmatpush.bf16.msra.mxu0 %v7161
      %7183 = vmatpush.bf16.msra.mxu0 %v7160
      %7184 = vmatmul.bf16.gmra.mxu0 %v7105
      %v7185 = vpop.f32.mrf.mxu0
      %v7186 = vadd.f32 0.0, %v7185
      %v7187 = vpop.f32.mrf.mxu0
      %v7188 = vadd.f32 0.0, %v7187
      %7189 = vmatmul.bf16.gmra.mxu0 %v7107
      %v7190 = vpop.f32.mrf.mxu0
      %v7191 = vadd.f32 0.0, %v7190
      %v7192 = vpop.f32.mrf.mxu0
      %v7193 = vadd.f32 0.0, %v7192
      %7194 = vmatmul.bf16.gmra.mxu0 %v7109
      %v7195 = vpop.f32.mrf.mxu0
      %v7196 = vadd.f32 0.0, %v7195
      %v7197 = vpop.f32.mrf.mxu0
      %v7198 = vadd.f32 0.0, %v7197
      %7199 = vmatmul.bf16.gmra.mxu0 %v7111
      %v7200 = vpop.f32.mrf.mxu0
      %v7201 = vadd.f32 0.0, %v7200
      %v7202 = vpop.f32.mrf.mxu0
      %v7203 = vadd.f32 0.0, %v7202
      %7204 = vmatmul.bf16.gmra.mxu0 %v7113
      %v7205 = vpop.f32.mrf.mxu0
      %v7206 = vadd.f32 0.0, %v7205
      %v7207 = vpop.f32.mrf.mxu0
      %v7208 = vadd.f32 0.0, %v7207
      %7209 = vmatmul.bf16.gmra.mxu0 %v7115
      %v7210 = vpop.f32.mrf.mxu0
      %v7211 = vadd.f32 0.0, %v7210
      %v7212 = vpop.f32.mrf.mxu0
      %v7213 = vadd.f32 0.0, %v7212
      %7214 = vmatmul.bf16.gmra.mxu0 %v7117
      %v7215 = vpop.f32.mrf.mxu0
      %v7216 = vadd.f32 0.0, %v7215
      %v7217 = vpop.f32.mrf.mxu0
      %v7218 = vadd.f32 0.0, %v7217
      %7219 = vmatmul.bf16.gmra.mxu0 %v7119
      %v7220 = vpop.f32.mrf.mxu0
      %v7221 = vadd.f32 0.0, %v7220
      %v7222 = vpop.f32.mrf.mxu0
      %v7223 = vadd.f32 0.0, %v7222
      %7224 = vdwg.mxu0
      %v7225 = vadd.f32 %v7070, %v7186
      %v7226 = vadd.f32 %v7071, %v7188
      %v7227 = vadd.f32 %v7072, %v7191
      %v7228 = vadd.f32 %v7073, %v7193
      %v7229 = vadd.f32 %v7074, %v7196
      %v7230 = vadd.f32 %v7075, %v7198
      %v7231 = vadd.f32 %v7076, %v7201
      %v7232 = vadd.f32 %v7077, %v7203
      %v7233 = vadd.f32 %v7078, %v7206
      %v7234 = vadd.f32 %v7079, %v7208
      %v7235 = vadd.f32 %v7080, %v7211
      %v7236 = vadd.f32 %v7081, %v7213
      %v7237 = vadd.f32 %v7082, %v7216
      %v7238 = vadd.f32 %v7083, %v7218
      %v7239 = vadd.f32 %v7084, %v7221
      %v7240 = vadd.f32 %v7085, %v7223
      %s7241 = scalar_lea.vmem %s5, 320
      %v7242 = vld [vmem:[%s7241] sm:$0xf]
      %v7243 = vld [vmem:[%s7241 + $0x4] sm:$0xf]
      %v7244 = vld [vmem:[%s7241 + $0x8] sm:$0xf]
      %v7245 = vld [vmem:[%s7241 + $0xc] sm:$0xf]
      %v7246 = vld [vmem:[%s7241 + $0x10] sm:$0xf]
      %v7247 = vld [vmem:[%s7241 + $0x14] sm:$0xf]
      %v7248 = vld [vmem:[%s7241 + $0x18] sm:$0xf]
      %v7249 = vld [vmem:[%s7241 + $0x1c] sm:$0xf]
      %v7250 = vld [vmem:[%s7241 + $0x20] sm:$0xf]
      %v7251 = vld [vmem:[%s7241 + $0x24] sm:$0xf]
      %v7252 = vld [vmem:[%s7241 + $0x28] sm:$0xf]
      %v7253 = vld [vmem:[%s7241 + $0x2c] sm:$0xf]
      %v7254 = vld [vmem:[%s7241 + $0x30] sm:$0xf]
      %v7255 = vld [vmem:[%s7241 + $0x34] sm:$0xf]
      %v7256 = vld [vmem:[%s7241 + $0x38] sm:$0xf]
      %v7257 = vld [vmem:[%s7241 + $0x3c] sm:$0xf]
      %v7258 = vrot.slane %v6240, 1
      %v7259 = vsel %vm4717, %v7116, %v7258
      %v7260 = vrot.slane %v6809, 1
      %v7261 = vsel %vm4717, %v7258, %v7260
      %v7280 = vunpack.c.l.b16 %v7242
      %v7281 = vunpack.c.l.b16 %v7243
      %v7282 = vunpack.c.l.b16 %v7244
      %v7283 = vunpack.c.l.b16 %v7245
      %v7284 = vunpack.c.l.b16 %v7246
      %v7285 = vunpack.c.l.b16 %v7247
      %v7286 = vunpack.c.l.b16 %v7248
      %v7287 = vunpack.c.l.b16 %v7249
      %v7288 = vunpack.c.l.b16 %v7250
      %v7289 = vunpack.c.l.b16 %v7251
      %v7290 = vunpack.c.l.b16 %v7252
      %v7291 = vunpack.c.l.b16 %v7253
      %v7292 = vunpack.c.l.b16 %v7254
      %v7293 = vunpack.c.l.b16 %v7255
      %v7294 = vunpack.c.l.b16 %v7256
      %v7295 = vunpack.c.l.b16 %v7257
      %v7296 = vpack.c.b16 %v7281, %v7280
      %v7297 = vpack.c.b16 %v7283, %v7282
      %v7298 = vpack.c.b16 %v7285, %v7284
      %v7299 = vpack.c.b16 %v7287, %v7286
      %v7300 = vpack.c.b16 %v7289, %v7288
      %v7301 = vpack.c.b16 %v7291, %v7290
      %v7302 = vpack.c.b16 %v7293, %v7292
      %v7303 = vpack.c.b16 %v7295, %v7294
      %7312 = vmatpush.bf16.msra.mxu0 %v7303
      %7313 = vmatpush.bf16.msra.mxu0 %v7302
      %7314 = vmatpush.bf16.msra.mxu0 %v7301
      %7315 = vmatpush.bf16.msra.mxu0 %v7300
      %7316 = vmatpush.bf16.msra.mxu0 %v7299
      %7317 = vmatpush.bf16.msra.mxu0 %v7298
      %7318 = vmatpush.bf16.msra.mxu0 %v7297
      %7319 = vmatpush.bf16.msra.mxu0 %v7296
      %7320 = vmatmul.bf16.gmra.mxu0 %v7107
      %v7321 = vpop.f32.mrf.mxu0
      %v7322 = vadd.f32 0.0, %v7321
      %v7323 = vpop.f32.mrf.mxu0
      %v7324 = vadd.f32 0.0, %v7323
      %7325 = vmatmul.bf16.gmra.mxu0 %v7109
      %v7326 = vpop.f32.mrf.mxu0
      %v7327 = vadd.f32 0.0, %v7326
      %v7328 = vpop.f32.mrf.mxu0
      %v7329 = vadd.f32 0.0, %v7328
      %7330 = vmatmul.bf16.gmra.mxu0 %v7111
      %v7331 = vpop.f32.mrf.mxu0
      %v7332 = vadd.f32 0.0, %v7331
      %v7333 = vpop.f32.mrf.mxu0
      %v7334 = vadd.f32 0.0, %v7333
      %7335 = vmatmul.bf16.gmra.mxu0 %v7113
      %v7336 = vpop.f32.mrf.mxu0
      %v7337 = vadd.f32 0.0, %v7336
      %v7338 = vpop.f32.mrf.mxu0
      %v7339 = vadd.f32 0.0, %v7338
      %7340 = vmatmul.bf16.gmra.mxu0 %v7115
      %v7341 = vpop.f32.mrf.mxu0
      %v7342 = vadd.f32 0.0, %v7341
      %v7343 = vpop.f32.mrf.mxu0
      %v7344 = vadd.f32 0.0, %v7343
      %7345 = vmatmul.bf16.gmra.mxu0 %v7117
      %v7346 = vpop.f32.mrf.mxu0
      %v7347 = vadd.f32 0.0, %v7346
      %v7348 = vpop.f32.mrf.mxu0
      %v7349 = vadd.f32 0.0, %v7348
      %7350 = vmatmul.bf16.gmra.mxu0 %v7259
      %v7351 = vpop.f32.mrf.mxu0
      %v7352 = vadd.f32 0.0, %v7351
      %v7353 = vpop.f32.mrf.mxu0
      %v7354 = vadd.f32 0.0, %v7353
      %7355 = vmatmul.bf16.gmra.mxu0 %v7261
      %v7356 = vpop.f32.mrf.mxu0
      %v7357 = vadd.f32 0.0, %v7356
      %v7358 = vpop.f32.mrf.mxu0
      %v7359 = vadd.f32 0.0, %v7358
      %7360 = vdwg.mxu0
      %v7361 = vadd.f32 %v7225, %v7322
      %v7362 = vadd.f32 %v7226, %v7324
      %v7363 = vadd.f32 %v7227, %v7327
      %v7364 = vadd.f32 %v7228, %v7329
      %v7365 = vadd.f32 %v7229, %v7332
      %v7366 = vadd.f32 %v7230, %v7334
      %v7367 = vadd.f32 %v7231, %v7337
      %v7368 = vadd.f32 %v7232, %v7339
      %v7369 = vadd.f32 %v7233, %v7342
      %v7370 = vadd.f32 %v7234, %v7344
      %v7371 = vadd.f32 %v7235, %v7347
      %v7372 = vadd.f32 %v7236, %v7349
      %v7373 = vadd.f32 %v7237, %v7352
      %v7374 = vadd.f32 %v7238, %v7354
      %v7375 = vadd.f32 %v7239, %v7357
      %v7376 = vadd.f32 %v7240, %v7359
      %s7377 = scalar_lea.vmem %s5, 512
      %v7378 = vld [vmem:[%s7377] sm:$0xf]
      %v7379 = vld [vmem:[%s7377 + $0x4] sm:$0xf]
      %v7380 = vld [vmem:[%s7377 + $0x8] sm:$0xf]
      %v7381 = vld [vmem:[%s7377 + $0xc] sm:$0xf]
      %v7382 = vld [vmem:[%s7377 + $0x10] sm:$0xf]
      %v7383 = vld [vmem:[%s7377 + $0x14] sm:$0xf]
      %v7384 = vld [vmem:[%s7377 + $0x18] sm:$0xf]
      %v7385 = vld [vmem:[%s7377 + $0x1c] sm:$0xf]
      %v7386 = vld [vmem:[%s7377 + $0x20] sm:$0xf]
      %v7387 = vld [vmem:[%s7377 + $0x24] sm:$0xf]
      %v7388 = vld [vmem:[%s7377 + $0x28] sm:$0xf]
      %v7389 = vld [vmem:[%s7377 + $0x2c] sm:$0xf]
      %v7390 = vld [vmem:[%s7377 + $0x30] sm:$0xf]
      %v7391 = vld [vmem:[%s7377 + $0x34] sm:$0xf]
      %v7392 = vld [vmem:[%s7377 + $0x38] sm:$0xf]
      %v7393 = vld [vmem:[%s7377 + $0x3c] sm:$0xf]
      %v7394 = vrot.slane %v6470, 1
      %v7395 = vsel %vm4717, %v7258, %v7394
      %v7396 = vrot.slane %v6957, 1
      %v7397 = vsel %vm4717, %v7394, %v7396
      %v7416 = vunpack.c.l.b16 %v7378
      %v7417 = vunpack.c.l.b16 %v7379
      %v7418 = vunpack.c.l.b16 %v7380
      %v7419 = vunpack.c.l.b16 %v7381
      %v7420 = vunpack.c.l.b16 %v7382
      %v7421 = vunpack.c.l.b16 %v7383
      %v7422 = vunpack.c.l.b16 %v7384
      %v7423 = vunpack.c.l.b16 %v7385
      %v7424 = vunpack.c.l.b16 %v7386
      %v7425 = vunpack.c.l.b16 %v7387
      %v7426 = vunpack.c.l.b16 %v7388
      %v7427 = vunpack.c.l.b16 %v7389
      %v7428 = vunpack.c.l.b16 %v7390
      %v7429 = vunpack.c.l.b16 %v7391
      %v7430 = vunpack.c.l.b16 %v7392
      %v7431 = vunpack.c.l.b16 %v7393
      %v7432 = vpack.c.b16 %v7417, %v7416
      %v7433 = vpack.c.b16 %v7419, %v7418
      %v7434 = vpack.c.b16 %v7421, %v7420
      %v7435 = vpack.c.b16 %v7423, %v7422
      %v7436 = vpack.c.b16 %v7425, %v7424
      %v7437 = vpack.c.b16 %v7427, %v7426
      %v7438 = vpack.c.b16 %v7429, %v7428
      %v7439 = vpack.c.b16 %v7431, %v7430
      %7448 = vmatpush.bf16.msra.mxu0 %v7439
      %7449 = vmatpush.bf16.msra.mxu0 %v7438
      %7450 = vmatpush.bf16.msra.mxu0 %v7437
      %7451 = vmatpush.bf16.msra.mxu0 %v7436
      %7452 = vmatpush.bf16.msra.mxu0 %v7435
      %7453 = vmatpush.bf16.msra.mxu0 %v7434
      %7454 = vmatpush.bf16.msra.mxu0 %v7433
      %7455 = vmatpush.bf16.msra.mxu0 %v7432
      %7456 = vmatmul.bf16.gmra.mxu0 %v7109
      %v7457 = vpop.f32.mrf.mxu0
      %v7458 = vadd.f32 0.0, %v7457
      %v7459 = vpop.f32.mrf.mxu0
      %v7460 = vadd.f32 0.0, %v7459
      %7461 = vmatmul.bf16.gmra.mxu0 %v7111
      %v7462 = vpop.f32.mrf.mxu0
      %v7463 = vadd.f32 0.0, %v7462
      %v7464 = vpop.f32.mrf.mxu0
      %v7465 = vadd.f32 0.0, %v7464
      %7466 = vmatmul.bf16.gmra.mxu0 %v7113
      %v7467 = vpop.f32.mrf.mxu0
      %v7468 = vadd.f32 0.0, %v7467
      %v7469 = vpop.f32.mrf.mxu0
      %v7470 = vadd.f32 0.0, %v7469
      %7471 = vmatmul.bf16.gmra.mxu0 %v7115
      %v7472 = vpop.f32.mrf.mxu0
      %v7473 = vadd.f32 0.0, %v7472
      %v7474 = vpop.f32.mrf.mxu0
      %v7475 = vadd.f32 0.0, %v7474
      %7476 = vmatmul.bf16.gmra.mxu0 %v7117
      %v7477 = vpop.f32.mrf.mxu0
      %v7478 = vadd.f32 0.0, %v7477
      %v7479 = vpop.f32.mrf.mxu0
      %v7480 = vadd.f32 0.0, %v7479
      %7481 = vmatmul.bf16.gmra.mxu0 %v7259
      %v7482 = vpop.f32.mrf.mxu0
      %v7483 = vadd.f32 0.0, %v7482
      %v7484 = vpop.f32.mrf.mxu0
      %v7485 = vadd.f32 0.0, %v7484
      %7486 = vmatmul.bf16.gmra.mxu0 %v7395
      %v7487 = vpop.f32.mrf.mxu0
      %v7488 = vadd.f32 0.0, %v7487
      %v7489 = vpop.f32.mrf.mxu0
      %v7490 = vadd.f32 0.0, %v7489
      %7491 = vmatmul.bf16.gmra.mxu0 %v7397
      %v7492 = vpop.f32.mrf.mxu0
      %v7493 = vadd.f32 0.0, %v7492
      %v7494 = vpop.f32.mrf.mxu0
      %v7495 = vadd.f32 0.0, %v7494
      %7496 = vdwg.mxu0
      %v7497 = vadd.f32 %v7361, %v7458
      %v7498 = vadd.f32 %v7362, %v7460
      %v7499 = vadd.f32 %v7363, %v7463
      %v7500 = vadd.f32 %v7364, %v7465
      %v7501 = vadd.f32 %v7365, %v7468
      %v7502 = vadd.f32 %v7366, %v7470
      %v7503 = vadd.f32 %v7367, %v7473
      %v7504 = vadd.f32 %v7368, %v7475
      %v7505 = vadd.f32 %v7369, %v7478
      %v7506 = vadd.f32 %v7370, %v7480
      %v7507 = vadd.f32 %v7371, %v7483
      %v7508 = vadd.f32 %v7372, %v7485
      %v7509 = vadd.f32 %v7373, %v7488
      %v7510 = vadd.f32 %v7374, %v7490
      %v7511 = vadd.f32 %v7375, %v7493
      %v7512 = vadd.f32 %v7376, %v7495
      %v7513 = vld [vmem:[%s6] sm:$0x1]
      %v7515 = vperm.slane %v7513, 0
      %v7517 = vadd.f32 %v7497, %v7515
      %v7518 = vadd.f32 %v7498, %v7515
      %v7519 = vadd.f32 %v7499, %v7515
      %v7520 = vadd.f32 %v7500, %v7515
      %v7521 = vadd.f32 %v7501, %v7515
      %v7522 = vadd.f32 %v7502, %v7515
      %v7523 = vadd.f32 %v7503, %v7515
      %v7524 = vadd.f32 %v7504, %v7515
      %v7525 = vadd.f32 %v7505, %v7515
      %v7526 = vadd.f32 %v7506, %v7515
      %v7527 = vadd.f32 %v7507, %v7515
      %v7528 = vadd.f32 %v7508, %v7515
      %v7529 = vadd.f32 %v7509, %v7515
      %v7530 = vadd.f32 %v7510, %v7515
      %v7531 = vadd.f32 %v7511, %v7515
      %v7532 = vadd.f32 %v7512, %v7515
      %v7533 = vmax.f32 %v7517, 0.0
      %v7534 = vmax.f32 %v7518, 0.0
      %v7535 = vmax.f32 %v7519, 0.0
      %v7536 = vmax.f32 %v7520, 0.0
      %v7537 = vmax.f32 %v7521, 0.0
      %v7538 = vmax.f32 %v7522, 0.0
      %v7539 = vmax.f32 %v7523, 0.0
      %v7540 = vmax.f32 %v7524, 0.0
      %v7541 = vmax.f32 %v7525, 0.0
      %v7542 = vmax.f32 %v7526, 0.0
      %v7543 = vmax.f32 %v7527, 0.0
      %v7544 = vmax.f32 %v7528, 0.0
      %v7545 = vmax.f32 %v7529, 0.0
      %v7546 = vmax.f32 %v7530, 0.0
      %v7547 = vmax.f32 %v7531, 0.0
      %v7548 = vmax.f32 %v7532, 0.0
      %v7549 = vmax.f32 %v7533, %v7535
      %v7550 = vmax.f32 %v7534, %v7536
      %v7551 = vmax.f32 %v7537, %v7539
      %v7552 = vmax.f32 %v7538, %v7540
      %v7553 = vmax.f32 %v7541, %v7543
      %v7554 = vmax.f32 %v7542, %v7544
      %v7555 = vmax.f32 %v7545, %v7547
      %v7556 = vmax.f32 %v7546, %v7548
      %7557 = vst [vmem:[#allocation4] sm:$0xff] %v7549
      %7558 = vst [vmem:[#allocation4 + $0x8] sm:$0xff] %v7550
      %7559 = vst [vmem:[#allocation4 + $0x10] sm:$0xff] %v7551
      %7560 = vst [vmem:[#allocation4 + $0x18] sm:$0xff] %v7552
      %7561 = vst [vmem:[#allocation4 + $0x20] sm:$0xff] %v7553
      %7562 = vst [vmem:[#allocation4 + $0x28] sm:$0xff] %v7554
      %7563 = vst [vmem:[#allocation4 + $0x30] sm:$0xff] %v7555
      %7564 = vst [vmem:[#allocation4 + $0x38] sm:$0xff] %v7556
      %v7565 = vld [vmem:[#allocation4] ss:$2 sm:$0xff]
      %s7566 = scalar_lea.vmem [#allocation4], 16
      %v7567 = vld [vmem:[%s7566] ss:$2 sm:$0xff]
      %v7568 = vld [vmem:[%s5907] ss:$2 sm:$0xff]
      %s7569 = scalar_lea.vmem [#allocation4], 48
      %v7570 = vld [vmem:[%s7569] ss:$2 sm:$0xff]
      %v7571 = vld [vmem:[%s1691] ss:$2 sm:$0xff]
      %v7572 = vld [vmem:[%s1693] ss:$2 sm:$0xff]
      %v7573 = vld [vmem:[%s1695] ss:$2 sm:$0xff]
      %v7574 = vld [vmem:[%s1697] ss:$2 sm:$0xff]
      %v7575 = vmax.f32 %v7565, %v7571
      %v7576 = vmax.f32 %v7567, %v7572
      %v7577 = vmax.f32 %v7568, %v7573
      %v7578 = vmax.f32 %v7570, %v7574
      %v7579 = vlaneseq
      %v7580 = vshrl.u32 %v7579, 7
      %vm7581 = vcmp.lt.s32.totalorder %v7580, 4
      %v7582 = vsel %vm7581, 1, 0
      %vm7583 = vcmp.eq.s32.totalorder %v7582, 1
      %v7584 = vsel %vm7583, %v7575, 0.0
      %v7585 = vsel %vm7583, %v7576, 0.0
      %v7586 = vsel %vm7583, %v7577, 0.0
      %v7587 = vsel %vm7583, %v7578, 0.0
      %v7588 = vadd.f32 %v7584, %v7585
      %v7589 = vadd.f32 %v7588, %v7586
      %v7590 = vadd.f32 %v7589, %v7587
      %v7591 = vrot.slane %v7590, 4
      %v7592 = vadd.f32 %v7590, %v7591
      %v7593 = vrot.slane %v7592, 2
      %v7594 = vadd.f32 %v7592, %v7593
      %v7595 = vrot.slane %v7594, 1
      %v7596 = vadd.f32 %v7594, %v7595
      %v7597 = vrcp.pop 16.0
      %v7598 = vmul.f32 16.0, %v7597
      %v7599 = vsub.f32 1.0, %v7598
      %v7600 = vmul.f32 %v7597, %v7599
      %v7601 = vadd.f32 %v7597, %v7600
      %vm7602 = vweird.f32 %v7597
      %v7603 = vsel %vm7602, %v7597, %v7601
      %v7604 = vmul.f32 %v7596, %v7603
      %v7605 = vpack.c.bf16 %v7604, %v7604
      %v7606 = vld [vmem:[%s7] sm:$0xf]
      %v7607 = vld [vmem:[%s7 + $0x4] sm:$0xf]
      %v7608 = vld [vmem:[%s7 + $0x8] sm:$0xf]
      %v7609 = vld [vmem:[%s7 + $0xc] sm:$0xf]
      %v7610 = vld [vmem:[%s7 + $0x10] sm:$0xf]
      %v7611 = vld [vmem:[%s7 + $0x14] sm:$0xf]
      %v7612 = vld [vmem:[%s7 + $0x18] sm:$0xf]
      %v7613 = vld [vmem:[%s7 + $0x1c] sm:$0xf]
      %v7614 = vld [vmem:[%s7 + $0x20] sm:$0xf]
      %v7615 = vld [vmem:[%s7 + $0x24] sm:$0xf]
      %v7616 = vld [vmem:[%s7 + $0x28] sm:$0xf]
      %v7617 = vld [vmem:[%s7 + $0x2c] sm:$0xf]
      %v7618 = vld [vmem:[%s7 + $0x30] sm:$0xf]
      %v7619 = vld [vmem:[%s7 + $0x34] sm:$0xf]
      %v7620 = vld [vmem:[%s7 + $0x38] sm:$0xf]
      %v7621 = vld [vmem:[%s7 + $0x3c] sm:$0xf]
      %v7622 = vld [vmem:[%s8] sm:$0x1]
      %v7639 = vunpack.c.l.b16 %v7606
      %v7640 = vunpack.c.l.b16 %v7607
      %v7641 = vunpack.c.l.b16 %v7608
      %v7642 = vunpack.c.l.b16 %v7609
      %v7643 = vunpack.c.l.b16 %v7610
      %v7644 = vunpack.c.l.b16 %v7611
      %v7645 = vunpack.c.l.b16 %v7612
      %v7646 = vunpack.c.l.b16 %v7613
      %v7647 = vunpack.c.l.b16 %v7614
      %v7648 = vunpack.c.l.b16 %v7615
      %v7649 = vunpack.c.l.b16 %v7616
      %v7650 = vunpack.c.l.b16 %v7617
      %v7651 = vunpack.c.l.b16 %v7618
      %v7652 = vunpack.c.l.b16 %v7619
      %v7653 = vunpack.c.l.b16 %v7620
      %v7654 = vunpack.c.l.b16 %v7621
      %v7655 = vpack.c.b16 %v7640, %v7639
      %v7656 = vpack.c.b16 %v7642, %v7641
      %v7657 = vpack.c.b16 %v7644, %v7643
      %v7658 = vpack.c.b16 %v7646, %v7645
      %v7659 = vpack.c.b16 %v7648, %v7647
      %v7660 = vpack.c.b16 %v7650, %v7649
      %v7661 = vpack.c.b16 %v7652, %v7651
      %v7662 = vpack.c.b16 %v7654, %v7653
      %7671 = vmatpush.bf16.msra.mxu0 %v7662
      %7672 = vmatpush.bf16.msra.mxu0 %v7661
      %7673 = vmatpush.bf16.msra.mxu0 %v7660
      %7674 = vmatpush.bf16.msra.mxu0 %v7659
      %7675 = vmatpush.bf16.msra.mxu0 %v7658
      %7676 = vmatpush.bf16.msra.mxu0 %v7657
      %7677 = vmatpush.bf16.msra.mxu0 %v7656
      %7678 = vmatpush.bf16.msra.mxu0 %v7655
      %7679 = vmatmul.bf16.gmra.mxu0 %v7605
      %v7680 = vpop.f32.mrf.mxu0
      %v7681 = vadd.f32 %v7622, %v7680
      %v7682 = vpop.f32.mrf.mxu0
      %7683 = vdwg.mxu0
      %v7684 = vmax.f32 %v7681, 0.0
      %v7685 = vpack.c.bf16 %v7684, %v7684
      %v7686 = vld [vmem:[%s9] sm:$0xf]
      %v7687 = vld [vmem:[%s9 + $0x4] sm:$0xf]
      %v7688 = vld [vmem:[%s9 + $0x8] sm:$0xf]
      %v7689 = vld [vmem:[%s9 + $0xc] sm:$0xf]
      %v7690 = vld [vmem:[%s9 + $0x10] sm:$0xf]
      %v7691 = vld [vmem:[%s9 + $0x14] sm:$0xf]
      %v7692 = vld [vmem:[%s9 + $0x18] sm:$0xf]
      %v7693 = vld [vmem:[%s9 + $0x1c] sm:$0xf]
      %v7694 = vld [vmem:[%s9 + $0x20] sm:$0xf]
      %v7695 = vld [vmem:[%s9 + $0x24] sm:$0xf]
      %v7696 = vld [vmem:[%s9 + $0x28] sm:$0xf]
      %v7697 = vld [vmem:[%s9 + $0x2c] sm:$0xf]
      %v7698 = vld [vmem:[%s9 + $0x30] sm:$0xf]
      %v7699 = vld [vmem:[%s9 + $0x34] sm:$0xf]
      %v7700 = vld [vmem:[%s9 + $0x38] sm:$0xf]
      %v7701 = vld [vmem:[%s9 + $0x3c] sm:$0xf]
      %v7702 = vld [vmem:[%s10] sm:$0x1]
      %v7719 = vunpack.c.l.b16 %v7686
      %v7720 = vunpack.c.l.b16 %v7687
      %v7721 = vunpack.c.l.b16 %v7688
      %v7722 = vunpack.c.l.b16 %v7689
      %v7723 = vunpack.c.l.b16 %v7690
      %v7724 = vunpack.c.l.b16 %v7691
      %v7725 = vunpack.c.l.b16 %v7692
      %v7726 = vunpack.c.l.b16 %v7693
      %v7727 = vunpack.c.l.b16 %v7694
      %v7728 = vunpack.c.l.b16 %v7695
      %v7729 = vunpack.c.l.b16 %v7696
      %v7730 = vunpack.c.l.b16 %v7697
      %v7731 = vunpack.c.l.b16 %v7698
      %v7732 = vunpack.c.l.b16 %v7699
      %v7733 = vunpack.c.l.b16 %v7700
      %v7734 = vunpack.c.l.b16 %v7701
      %v7735 = vpack.c.b16 %v7720, %v7719
      %v7736 = vpack.c.b16 %v7722, %v7721
      %v7737 = vpack.c.b16 %v7724, %v7723
      %v7738 = vpack.c.b16 %v7726, %v7725
      %v7739 = vpack.c.b16 %v7728, %v7727
      %v7740 = vpack.c.b16 %v7730, %v7729
      %v7741 = vpack.c.b16 %v7732, %v7731
      %v7742 = vpack.c.b16 %v7734, %v7733
      %7751 = vmatpush.bf16.msra.mxu0 %v7742
      %7752 = vmatpush.bf16.msra.mxu0 %v7741
      %7753 = vmatpush.bf16.msra.mxu0 %v7740
      %7754 = vmatpush.bf16.msra.mxu0 %v7739
      %7755 = vmatpush.bf16.msra.mxu0 %v7738
      %7756 = vmatpush.bf16.msra.mxu0 %v7737
      %7757 = vmatpush.bf16.msra.mxu0 %v7736
      %7758 = vmatpush.bf16.msra.mxu0 %v7735
      %7759 = vmatmul.bf16.gmra.mxu0 %v7685
      %v7760 = vpop.f32.mrf.mxu0
      %v7761 = vadd.f32 %v7702, %v7760
      %v7762 = vpop.f32.mrf.mxu0
      %7763 = vdwg.mxu0
      %7764 = vst [vmem:[%s382] sm:$0x1] %v7761
      %p7765 = scmp.lt.s32.totalorder %s22, 1
      %s7766 = scalar_select %p7765, %s22, 1
      %s7767 = scalar_lea.vmem %s11, %s7766
      // Predicated region
      $region65: #{cnn_forward.1} parent=63 // pred_check
        %p7768 = pneg %p276
      $region66: #{cnn_forward.1} parent=63 // pred_check_branch
        %7770 = sbr.rel (%p7768) target = $region68
      $region67: #{cnn_forward.1} parent=63 // pred_region
        _
      $region68: #{cnn_forward.1} parent=63 // pred_fallthru
        _
    $region64: #{cnn_forward.1} parent=5 // pred_fallthru
      _
    %p7771 = scmp.le.s32.totalorder 2, %s17
    // Predicated region
    $region69: #{cnn_forward.1} parent=5 // pred_check
      %p7772 = pneg %p7771
    $region70: #{cnn_forward.1} parent=5 // pred_check_branch
      %7774 = sbr.rel (%p7772) target = $region72
    $region71: #{cnn_forward.1} parent=5 // pred_region
      %s7775 = ssub.s32 %s17, 2
      // Predicated region
      $region73: #{cnn_forward.1} parent=71 // pred_check
        %p7776 = pneg %p282
      $region74: #{cnn_forward.1} parent=71 // pred_check_branch
        %7778 = sbr.rel (%p7776) target = $region76
      $region75: #{cnn_forward.1} parent=71 // pred_region
        %p7779 = scmp.lt.s32.totalorder %s23, 1
        %s7780 = scalar_select %p7779, %s23, 1
        %s7781 = scalar_lea.vmem %s11, %s7780
      $region76: #{cnn_forward.1} parent=71 // pred_fallthru
        _
    $region72: #{cnn_forward.1} parent=5 // pred_fallthru
      _
  $region6: #{cnn_forward.1} parent=0 // loop_footer
    %s21 = sadd.s32 1, %s17
  $region7: #{cnn_forward.1} parent=0 // loop_footer_branch
    %16 = sbr.rel target = $region3
  $region8: #{cnn_forward.1} parent=0 // loop_exit
    _

</llo_original>
